<compile_context>
chip_gen: v7x
topology: tpu7x:2x2x1
jax: 0.10.0
libtpu: 0.0.40
codegen_flags: <defaults>
</compile_context>

<pallas_src>
import functools

import jax
import jax.numpy as jnp
from jax.experimental import pallas as pl
from jax.experimental.pallas import tpu as pltpu

HYPER_PARAM1 = 0.25
EPS = 1e-5  # torch.nn.InstanceNorm2d default


# ----------------------------------------------------------------------------
# In-kernel helpers (all ops: static lane/sublane slices, concats, ref
# loads/stores, one 2-D dot per conv, axis-1 reductions, elementwise).
# ----------------------------------------------------------------------------
def _reflect_idx(i, n):
    """ReflectionPad2d index math (Python ints, resolved at trace time)."""
    if i < 0:
        return -i
    if i >= n:
        return 2 * n - 2 - i
    return i


def _fill_padded(pad_ref, y, H, W, p):
    """Write the reflection-padded image, flattened row-major, into scratch.

    y : (Cin, H*W) flat activation (lane-dense, row stride W).
    Scratch layout: lanes [M, M + Hp*Wp) hold the padded image with row
    stride Wp (Hp = H+2p, Wp = W+2p, M = p*Wp + p).  The M-lane margins on
    both sides are don't-care: taps reading them only feed border outputs
    that are discarded after the conv.
    """
    Cin = y.shape[0]
    Hp, Wp = H + 2 * p, W + 2 * p
    M = p * Wp + p
    for ip in range(Hp):
        r = _reflect_idx(ip - p, H)
        base = r * W
        pieces = ([y[:, base + p - j:base + p - j + 1] for j in range(p)]
                  + [y[:, base:base + W]]
                  + [y[:, base + W - 2 - t:base + W - 1 - t] for t in range(p)])
        row = jnp.concatenate(pieces, axis=1)                 # (Cin, Wp)
        start = M + ip * Wp
        pad_ref[0:Cin, start:start + Wp] = row


def _conv_flat(pad_ref, y, w2, H, W, K, bias=None):
    """Reflection-padded KxK stride-1 conv, fully lane-dense.

    y    : (Cin, H*W) f32 activation
    w2   : (Cout, K*K*Cin) f32 weights, flattened (kh, kw) major / ci minor
    bias : optional (Cout, 1)
    returns (Cout, H*W) f32 (valid region only).
    """
    Cin = y.shape[0]
    p = K // 2
    Hp, Wp = H + 2 * p, W + 2 * p
    N = Hp * Wp
    M = p * Wp + p

    _fill_padded(pad_ref, y, H, W, p)
    xe = pad_ref[0:Cin, 0:N + 2 * M]                          # (Cin, N + 2M)

    # Tap (kh, kw) for padded-grid output q needs xp_flat[q + (kh-p)*Wp +
    # (kw-p)] = xe[q + kh*Wp + kw]: a pure lane shift (static slice).
    slabs = [xe[:, kh * Wp + kw:kh * Wp + kw + N]
             for kh in range(K) for kw in range(K)]           # each (Cin, N)
    patches = jnp.concatenate(slabs, axis=0)                  # (K*K*Cin, N)

    out = jax.lax.dot_general(                                # (Cout, N)
        w2, patches,
        dimension_numbers=(((1,), (0,)), ((), ())),
        preferred_element_type=jnp.float32)
    if bias is not None:
        out = out + bias

    # Gather the valid rows back into a dense lane-major (Cout, H*W) slab.
    rows = [out[:, (p + i) * Wp + p:(p + i) * Wp + p + W] for i in range(H)]
    return jnp.concatenate(rows, axis=1)


def _instance_norm(y, gamma, beta, eps):
    """Affine InstanceNorm2d (biased variance) on lane-dense (C, H*W) data."""
    mean = jnp.mean(y, axis=1, keepdims=True)                 # (C, 1)
    cen = y - mean
    var = jnp.mean(cen * cen, axis=1, keepdims=True)          # (C, 1)
    return cen * jax.lax.rsqrt(var + eps) * gamma + beta


# ----------------------------------------------------------------------------
# Fused whole-forward kernel: one batch block per grid step.
# ----------------------------------------------------------------------------
def _forward_kernel(x_ref, w1_ref, wr1_ref, wr2_ref, w3_ref, pp_ref,
                    o_ref, pad_ref, *, H, W, bt, eps):
    w1 = w1_ref[...]
    wr1 = wr1_ref[...]
    wr2 = wr2_ref[...]
    w3 = w3_ref[...]
    pp = pp_ref[...]                                          # (c_mid, 7)
    g1, be1 = pp[:, 0:1], pp[:, 1:2]
    gr1, ber1 = pp[:, 2:3], pp[:, 3:4]
    gr2, ber2 = pp[:, 4:5], pp[:, 5:6]
    b3 = pp[0:3, 6:7]                                         # deconv3 bias

    for b in range(bt):                                       # static unroll
        x = x_ref[b].astype(jnp.float32)                      # (3, H*W)

        # y = relu(in1(conv1(X)))      7x7, 3 -> c_mid (bias cancelled by IN)
        y = _conv_flat(pad_ref, x, w1, H, W, K=7)
        y = jnp.maximum(_instance_norm(y, g1, be1, eps), 0.0)

        # residual block: two 3x3 convs, c_mid -> c_mid
        res = y
        z = _conv_flat(pad_ref, y, wr1, H, W, K=3)
        z = jnp.maximum(_instance_norm(z, gr1, ber1, eps), 0.0)
        z = _conv_flat(pad_ref, z, wr2, H, W, K=3)
        z = _instance_norm(z, gr2, ber2, eps) + res           # no ReLU here

        # deconv3: 7x7, c_mid -> 3 (bias kept, no norm)
        out = _conv_flat(pad_ref, z, w3, H, W, K=7, bias=b3)  # (3, H*W)
        o_ref[b] = out.astype(o_ref.dtype)                    # lane-dense store


# ----------------------------------------------------------------------------
# Host wrapper.
# ----------------------------------------------------------------------------
def _flatten_conv_w(w):
    """(KH,KW,Cin,Cout) -> (Cout, KH*KW*Cin) matching in-kernel tap order."""
    KH, KW, Cin, Cout = w.shape
    return jnp.transpose(w, (3, 0, 1, 2)).reshape(Cout, KH * KW * Cin)


def _full_spec(a):
    zeros = (0,) * a.ndim
    return pl.BlockSpec(a.shape, lambda i, z=zeros: z)


def _pick_batch_block(B):
    # Fold images per grid step to amortize per-step overhead, but keep >= 2
    # grid steps so both v7x TensorCores get work.
    if B >= 4 and B % 2 == 0:
        return B // 2
    return 1


def _vmem_limit_bytes():
    # Per-generation VMEM budget: ~80% of physical, capped (review item).
    try:
        cap = int(pltpu.get_tpu_info().vmem_capacity_bytes)
        return max(32 * 1024 * 1024, min(int(cap * 0.8), 112 * 1024 * 1024))
    except Exception:
        return 32 * 1024 * 1024


@jax.jit
def transformer_net_forward(x_nchw, params):
    B, Cin, H, W = x_nchw.shape
    HW = H * W
    c_mid = params["in1"][0].shape[0]
    assert c_mid >= 3
    bt = _pick_batch_block(B)
    assert B % bt == 0

    # NCHW is already channel-major; just flatten the spatial axis (free).
    x = x_nchw.reshape(B, Cin, HW).astype(jnp.float32)

    # Conv weights flattened to (Cout, K*K*Cin); pre-IN biases dropped
    # (exactly cancelled by the InstanceNorm mean subtraction).
    w1 = _flatten_conv_w(params["conv1"][0])        # (c_mid, 7*7*3)
    wr1 = _flatten_conv_w(params["res_conv1"][0])   # (c_mid, 3*3*c_mid)
    wr2 = _flatten_conv_w(params["res_conv2"][0])   # (c_mid, 3*3*c_mid)
    w3 = _flatten_conv_w(params["deconv3"][0])      # (3,     7*7*c_mid)
    b3 = params["deconv3"][1]

    # Pack all per-channel scalars into one (c_mid, 7) slab:
    # cols = [g1, b1, g_r1, b_r1, g_r2, b_r2, deconv3 bias (rows 0:3)].
    b3_pad = jnp.zeros((c_mid,), jnp.float32).at[:3].set(b3)
    pp = jnp.stack([params["in1"][0], params["in1"][1],
                    params["res_in1"][0], params["res_in1"][1],
                    params["res_in2"][0], params["res_in2"][1],
                    b3_pad], axis=1).astype(jnp.float32)       # (c_mid, 7)

    # Padded-image scratch: flattened (rows, N + 2M) for the largest conv (7x7).
    Wp7, Hp7 = W + 6, H + 6
    pad_lanes = Hp7 * Wp7 + 2 * (3 * Wp7 + 3)
    pad_rows = max(c_mid, Cin)

    kern = functools.partial(_forward_kernel, H=H, W=W, bt=bt, eps=EPS)
    out = pl.pallas_call(
        kern,
        out_shape=jax.ShapeDtypeStruct((B, 3, HW), jnp.float32),
        grid_spec=pltpu.PrefetchScalarGridSpec(
            num_scalar_prefetch=0,
            grid=(B // bt,),
            in_specs=[pl.BlockSpec((bt, Cin, HW), lambda i: (i, 0, 0))]
                     + [_full_spec(p) for p in (w1, wr1, wr2, w3, pp)],
            out_specs=pl.BlockSpec((bt, 3, HW), lambda i: (i, 0, 0)),
            scratch_shapes=[pltpu.VMEM((pad_rows, pad_lanes), jnp.float32)],
        ),
        compiler_params=pltpu.CompilerParams(
            dimension_semantics=("parallel",),
            vmem_limit_bytes=_vmem_limit_bytes()),
    )(x, w1, wr1, wr2, w3, pp)

    # (B, 3, H*W) is already channel-major; just unflatten the spatial axis.
    return out.reshape(B, 3, H, W)


# ----------------------------------------------------------------------------
# Pure-XLA reference (for the correctness sanity check in __main__).
# ----------------------------------------------------------------------------
def _ref_conv(x, w, b):
    p = w.shape[0] // 2
    xp = jnp.pad(x, ((0, 0), (p, p), (p, p), (0, 0)), mode="reflect")
    out = jax.lax.conv_general_dilated(
        xp, w, window_strides=(1, 1), padding="VALID",
        dimension_numbers=("NHWC", "HWIO", "NHWC"))
    return out + b


def _ref_instance_norm(x, gamma, beta, relu=False, eps=EPS):
    mean = jnp.mean(x, axis=(1, 2), keepdims=True)
    var = jnp.mean((x - mean) ** 2, axis=(1, 2), keepdims=True)
    y = (x - mean) * jax.lax.rsqrt(var + eps) * gamma + beta
    return jnp.maximum(y, 0.0) if relu else y


@jax.jit
def transformer_net_reference(x_nchw, params):
    x = jnp.transpose(x_nchw, (0, 2, 3, 1)).astype(jnp.float32)
    w, b = params["conv1"]
    y = _ref_instance_norm(_ref_conv(x, w, b), *params["in1"], relu=True)
    res = y
    w, b = params["res_conv1"]
    z = _ref_instance_norm(_ref_conv(y, w, b), *params["res_in1"], relu=True)
    w, b = params["res_conv2"]
    z = _ref_instance_norm(_ref_conv(z, w, b), *params["res_in2"]) + res
    w, b = params["deconv3"]
    out = _ref_conv(z, w, b)
    return jnp.transpose(out, (0, 3, 1, 2))


# ----------------------------------------------------------------------------
# Deterministic synthetic parameters (shapes from TransformerNet.__init__).
# Conv weights stored as (KH, KW, Cin, Cout) == torch (Cout,Cin,KH,KW) permuted.
# ----------------------------------------------------------------------------
def _conv_params(key, kh, kw, cin, cout):
    k1, k2 = jax.random.split(key)
    fan_in = kh * kw * cin
    w = jax.random.normal(k1, (kh, kw, cin, cout), jnp.float32) / jnp.sqrt(float(fan_in))
    b = 0.01 * jax.random.normal(k2, (cout,), jnp.float32)
    return w, b


def _in_params(key, c):
    k1, k2 = jax.random.split(key)
    gamma = 1.0 + 0.1 * jax.random.normal(k1, (c,), jnp.float32)
    beta = 0.1 * jax.random.normal(k2, (c,), jnp.float32)
    return gamma, beta


def make_params(key):
    c_mid = int(32 * HYPER_PARAM1)  # = 8
    ks = jax.random.split(key, 7)
    return {
        "conv1": _conv_params(ks[0], 7, 7, 3, c_mid),
        "in1": _in_params(ks[1], c_mid),
        "res_conv1": _conv_params(ks[2], 3, 3, c_mid, c_mid),
        "res_in1": _in_params(ks[3], c_mid),
        "res_conv2": _conv_params(ks[4], 3, 3, c_mid, c_mid),
        "res_in2": _in_params(ks[5], c_mid),
        "deconv3": _conv_params(ks[6], 7, 7, c_mid, 3),
    }


if __name__ == "__main__":
    key = jax.random.PRNGKey(0)
    k_params, k_x = jax.random.split(key)
    params = make_params(k_params)

    # TransformerNet expects 3-channel images (NCHW).
    x = jax.random.normal(k_x, (2, 3, 16, 16), jnp.float32)

    y = transformer_net_forward(x, params)
    y = jax.block_until_ready(y)
    assert y.shape == (2, 3, 16, 16), y.shape
    assert bool(jnp.all(jnp.isfinite(y)))

    # Sanity check vs. pure-XLA reference (loose tol: default MXU precision).
    y_ref = transformer_net_reference(x, params)
    max_err = float(jnp.max(jnp.abs(y - y_ref)))
    assert max_err < 5e-2, f"max abs err vs reference: {max_err}"

    print("KERNEL_OK")
</pallas_src>

<mosaic_0001>
module attributes {stable_mosaic.version = 11 : i64} {
  func.func @_forward_kernel(%arg0: i32, %arg1: memref<1x3x256xf32, #tpu.memory_space<vmem>>, %arg2: memref<8x147xf32, #tpu.memory_space<vmem>>, %arg3: memref<8x72xf32, #tpu.memory_space<vmem>>, %arg4: memref<8x72xf32, #tpu.memory_space<vmem>>, %arg5: memref<3x392xf32, #tpu.memory_space<vmem>>, %arg6: memref<8x7xf32, #tpu.memory_space<vmem>>, %arg7: memref<1x3x256xf32, #tpu.memory_space<vmem>>, %arg8: memref<8x622xf32, #tpu.memory_space<vmem>>) attributes {dimension_semantics = [#tpu.dimension_semantics<parallel>], iteration_bounds = array<i64: 2>, scalar_prefetch = 0 : i64, scratch_operands = 1 : i64, tpu.core_type = #tpu.core_type<tc>, window_params = [{transform_indices = @transform_0, window_bounds = array<i64: 1, 3, 256>}, {pipeline_mode = #tpu.pipeline_mode<synchronous>, transform_indices = @transform_1, window_bounds = array<i64: 8, 147>}, {pipeline_mode = #tpu.pipeline_mode<synchronous>, transform_indices = @transform_2, window_bounds = array<i64: 8, 72>}, {pipeline_mode = #tpu.pipeline_mode<synchronous>, transform_indices = @transform_3, window_bounds = array<i64: 8, 72>}, {pipeline_mode = #tpu.pipeline_mode<synchronous>, transform_indices = @transform_4, window_bounds = array<i64: 3, 392>}, {pipeline_mode = #tpu.pipeline_mode<synchronous>, transform_indices = @transform_5, window_bounds = array<i64: 8, 7>}, {transform_indices = @transform_6, window_bounds = array<i64: 1, 3, 256>}]} {
    %c0 = arith.constant 0 : index
    %c0_0 = arith.constant 0 : index
    %0 = vector.load %arg2[%c0, %c0_0] : memref<8x147xf32, #tpu.memory_space<vmem>>, vector<8x147xf32>
    %c0_1 = arith.constant 0 : index
    %c0_2 = arith.constant 0 : index
    %1 = vector.load %arg3[%c0_1, %c0_2] : memref<8x72xf32, #tpu.memory_space<vmem>>, vector<8x72xf32>
    %c0_3 = arith.constant 0 : index
    %c0_4 = arith.constant 0 : index
    %2 = vector.load %arg4[%c0_3, %c0_4] : memref<8x72xf32, #tpu.memory_space<vmem>>, vector<8x72xf32>
    %c0_5 = arith.constant 0 : index
    %c0_6 = arith.constant 0 : index
    %3 = vector.load %arg5[%c0_5, %c0_6] : memref<3x392xf32, #tpu.memory_space<vmem>>, vector<3x392xf32>
    %c0_7 = arith.constant 0 : index
    %c0_8 = arith.constant 0 : index
    %4 = vector.load %arg6[%c0_7, %c0_8] : memref<8x7xf32, #tpu.memory_space<vmem>>, vector<8x7xf32>
    %5 = vector.extract_strided_slice %4 {offsets = [0, 0], sizes = [8, 1], strides = [1, 1]} : vector<8x7xf32> to vector<8x1xf32>
    %6 = vector.extract_strided_slice %4 {offsets = [0, 1], sizes = [8, 1], strides = [1, 1]} : vector<8x7xf32> to vector<8x1xf32>
    %7 = vector.extract_strided_slice %4 {offsets = [0, 2], sizes = [8, 1], strides = [1, 1]} : vector<8x7xf32> to vector<8x1xf32>
    %8 = vector.extract_strided_slice %4 {offsets = [0, 3], sizes = [8, 1], strides = [1, 1]} : vector<8x7xf32> to vector<8x1xf32>
    %9 = vector.extract_strided_slice %4 {offsets = [0, 4], sizes = [8, 1], strides = [1, 1]} : vector<8x7xf32> to vector<8x1xf32>
    %10 = vector.extract_strided_slice %4 {offsets = [0, 5], sizes = [8, 1], strides = [1, 1]} : vector<8x7xf32> to vector<8x1xf32>
    %11 = vector.extract_strided_slice %4 {offsets = [0, 6], sizes = [3, 1], strides = [1, 1]} : vector<8x7xf32> to vector<3x1xf32>
    %c0_9 = arith.constant 0 : index
    %c0_10 = arith.constant 0 : index
    %c0_11 = arith.constant 0 : index
    %12 = vector.load %arg1[%c0_9, %c0_10, %c0_11] : memref<1x3x256xf32, #tpu.memory_space<vmem>>, vector<1x3x256xf32>
    %13 = vector.shape_cast %12 : vector<1x3x256xf32> to vector<3x256xf32>
    %14 = vector.extract_strided_slice %13 {offsets = [0, 51], sizes = [3, 1], strides = [1, 1]} : vector<3x256xf32> to vector<3x1xf32>
    %15 = vector.extract_strided_slice %13 {offsets = [0, 50], sizes = [3, 1], strides = [1, 1]} : vector<3x256xf32> to vector<3x1xf32>
    %16 = vector.extract_strided_slice %13 {offsets = [0, 49], sizes = [3, 1], strides = [1, 1]} : vector<3x256xf32> to vector<3x1xf32>
    %17 = vector.extract_strided_slice %13 {offsets = [0, 48], sizes = [3, 16], strides = [1, 1]} : vector<3x256xf32> to vector<3x16xf32>
    %18 = vector.extract_strided_slice %13 {offsets = [0, 62], sizes = [3, 1], strides = [1, 1]} : vector<3x256xf32> to vector<3x1xf32>
    %19 = vector.extract_strided_slice %13 {offsets = [0, 61], sizes = [3, 1], strides = [1, 1]} : vector<3x256xf32> to vector<3x1xf32>
    %20 = vector.extract_strided_slice %13 {offsets = [0, 60], sizes = [3, 1], strides = [1, 1]} : vector<3x256xf32> to vector<3x1xf32>
    %21 = tpu.concatenate %14, %15, %16, %17, %18, %19, %20 in 1 : vector<3x1xf32>, vector<3x1xf32>, vector<3x1xf32>, vector<3x16xf32>, vector<3x1xf32>, vector<3x1xf32>, vector<3x1xf32> -> vector<3x22xf32>
    %c0_12 = arith.constant 0 : index
    %c69 = arith.constant 69 : index
    %22 = vector.load %arg8[%c0_12, %c69] : memref<8x622xf32, #tpu.memory_space<vmem>>, vector<3x22xf32>
    tpu.vector_store %arg8[%c0_12, %c69], %21 {strides = array<i32>} : memref<8x622xf32, #tpu.memory_space<vmem>>, vector<3x22xf32>,
    %23 = vector.extract_strided_slice %13 {offsets = [0, 35], sizes = [3, 1], strides = [1, 1]} : vector<3x256xf32> to vector<3x1xf32>
    %24 = vector.extract_strided_slice %13 {offsets = [0, 34], sizes = [3, 1], strides = [1, 1]} : vector<3x256xf32> to vector<3x1xf32>
    %25 = vector.extract_strided_slice %13 {offsets = [0, 33], sizes = [3, 1], strides = [1, 1]} : vector<3x256xf32> to vector<3x1xf32>
    %26 = vector.extract_strided_slice %13 {offsets = [0, 32], sizes = [3, 16], strides = [1, 1]} : vector<3x256xf32> to vector<3x16xf32>
    %27 = vector.extract_strided_slice %13 {offsets = [0, 46], sizes = [3, 1], strides = [1, 1]} : vector<3x256xf32> to vector<3x1xf32>
    %28 = vector.extract_strided_slice %13 {offsets = [0, 45], sizes = [3, 1], strides = [1, 1]} : vector<3x256xf32> to vector<3x1xf32>
    %29 = vector.extract_strided_slice %13 {offsets = [0, 44], sizes = [3, 1], strides = [1, 1]} : vector<3x256xf32> to vector<3x1xf32>
    %30 = tpu.concatenate %23, %24, %25, %26, %27, %28, %29 in 1 : vector<3x1xf32>, vector<3x1xf32>, vector<3x1xf32>, vector<3x16xf32>, vector<3x1xf32>, vector<3x1xf32>, vector<3x1xf32> -> vector<3x22xf32>
    %c0_13 = arith.constant 0 : index
    %c91 = arith.constant 91 : index
    %31 = vector.load %arg8[%c0_13, %c91] : memref<8x622xf32, #tpu.memory_space<vmem>>, vector<3x22xf32>
    tpu.vector_store %arg8[%c0_13, %c91], %30 {strides = array<i32>} : memref<8x622xf32, #tpu.memory_space<vmem>>, vector<3x22xf32>,
    %32 = vector.extract_strided_slice %13 {offsets = [0, 19], sizes = [3, 1], strides = [1, 1]} : vector<3x256xf32> to vector<3x1xf32>
    %33 = vector.extract_strided_slice %13 {offsets = [0, 18], sizes = [3, 1], strides = [1, 1]} : vector<3x256xf32> to vector<3x1xf32>
    %34 = vector.extract_strided_slice %13 {offsets = [0, 17], sizes = [3, 1], strides = [1, 1]} : vector<3x256xf32> to vector<3x1xf32>
    %35 = vector.extract_strided_slice %13 {offsets = [0, 16], sizes = [3, 16], strides = [1, 1]} : vector<3x256xf32> to vector<3x16xf32>
    %36 = vector.extract_strided_slice %13 {offsets = [0, 30], sizes = [3, 1], strides = [1, 1]} : vector<3x256xf32> to vector<3x1xf32>
    %37 = vector.extract_strided_slice %13 {offsets = [0, 29], sizes = [3, 1], strides = [1, 1]} : vector<3x256xf32> to vector<3x1xf32>
    %38 = vector.extract_strided_slice %13 {offsets = [0, 28], sizes = [3, 1], strides = [1, 1]} : vector<3x256xf32> to vector<3x1xf32>
    %39 = tpu.concatenate %32, %33, %34, %35, %36, %37, %38 in 1 : vector<3x1xf32>, vector<3x1xf32>, vector<3x1xf32>, vector<3x16xf32>, vector<3x1xf32>, vector<3x1xf32>, vector<3x1xf32> -> vector<3x22xf32>
    %c0_14 = arith.constant 0 : index
    %c113 = arith.constant 113 : index
    %40 = vector.load %arg8[%c0_14, %c113] : memref<8x622xf32, #tpu.memory_space<vmem>>, vector<3x22xf32>
    tpu.vector_store %arg8[%c0_14, %c113], %39 {strides = array<i32>} : memref<8x622xf32, #tpu.memory_space<vmem>>, vector<3x22xf32>,
    %41 = vector.extract_strided_slice %13 {offsets = [0, 3], sizes = [3, 1], strides = [1, 1]} : vector<3x256xf32> to vector<3x1xf32>
    %42 = vector.extract_strided_slice %13 {offsets = [0, 2], sizes = [3, 1], strides = [1, 1]} : vector<3x256xf32> to vector<3x1xf32>
    %43 = vector.extract_strided_slice %13 {offsets = [0, 1], sizes = [3, 1], strides = [1, 1]} : vector<3x256xf32> to vector<3x1xf32>
    %44 = vector.extract_strided_slice %13 {offsets = [0, 0], sizes = [3, 16], strides = [1, 1]} : vector<3x256xf32> to vector<3x16xf32>
    %45 = vector.extract_strided_slice %13 {offsets = [0, 14], sizes = [3, 1], strides = [1, 1]} : vector<3x256xf32> to vector<3x1xf32>
    %46 = vector.extract_strided_slice %13 {offsets = [0, 13], sizes = [3, 1], strides = [1, 1]} : vector<3x256xf32> to vector<3x1xf32>
    %47 = vector.extract_strided_slice %13 {offsets = [0, 12], sizes = [3, 1], strides = [1, 1]} : vector<3x256xf32> to vector<3x1xf32>
    %48 = tpu.concatenate %41, %42, %43, %44, %45, %46, %47 in 1 : vector<3x1xf32>, vector<3x1xf32>, vector<3x1xf32>, vector<3x16xf32>, vector<3x1xf32>, vector<3x1xf32>, vector<3x1xf32> -> vector<3x22xf32>
    %c0_15 = arith.constant 0 : index
    %c135 = arith.constant 135 : index
    %49 = vector.load %arg8[%c0_15, %c135] : memref<8x622xf32, #tpu.memory_space<vmem>>, vector<3x22xf32>
    tpu.vector_store %arg8[%c0_15, %c135], %48 {strides = array<i32>} : memref<8x622xf32, #tpu.memory_space<vmem>>, vector<3x22xf32>,
    %50 = vector.extract_strided_slice %13 {offsets = [0, 19], sizes = [3, 1], strides = [1, 1]} : vector<3x256xf32> to vector<3x1xf32>
    %51 = vector.extract_strided_slice %13 {offsets = [0, 18], sizes = [3, 1], strides = [1, 1]} : vector<3x256xf32> to vector<3x1xf32>
    %52 = vector.extract_strided_slice %13 {offsets = [0, 17], sizes = [3, 1], strides = [1, 1]} : vector<3x256xf32> to vector<3x1xf32>
    %53 = vector.extract_strided_slice %13 {offsets = [0, 16], sizes = [3, 16], strides = [1, 1]} : vector<3x256xf32> to vector<3x16xf32>
    %54 = vector.extract_strided_slice %13 {offsets = [0, 30], sizes = [3, 1], strides = [1, 1]} : vector<3x256xf32> to vector<3x1xf32>
    %55 = vector.extract_strided_slice %13 {offsets = [0, 29], sizes = [3, 1], strides = [1, 1]} : vector<3x256xf32> to vector<3x1xf32>
    %56 = vector.extract_strided_slice %13 {offsets = [0, 28], sizes = [3, 1], strides = [1, 1]} : vector<3x256xf32> to vector<3x1xf32>
    %57 = tpu.concatenate %50, %51, %52, %53, %54, %55, %56 in 1 : vector<3x1xf32>, vector<3x1xf32>, vector<3x1xf32>, vector<3x16xf32>, vector<3x1xf32>, vector<3x1xf32>, vector<3x1xf32> -> vector<3x22xf32>
    %c0_16 = arith.constant 0 : index
    %c157 = arith.constant 157 : index
    %58 = vector.load %arg8[%c0_16, %c157] : memref<8x622xf32, #tpu.memory_space<vmem>>, vector<3x22xf32>
    tpu.vector_store %arg8[%c0_16, %c157], %57 {strides = array<i32>} : memref<8x622xf32, #tpu.memory_space<vmem>>, vector<3x22xf32>,
    %59 = vector.extract_strided_slice %13 {offsets = [0, 35], sizes = [3, 1], strides = [1, 1]} : vector<3x256xf32> to vector<3x1xf32>
    %60 = vector.extract_strided_slice %13 {offsets = [0, 34], sizes = [3, 1], strides = [1, 1]} : vector<3x256xf32> to vector<3x1xf32>
    %61 = vector.extract_strided_slice %13 {offsets = [0, 33], sizes = [3, 1], strides = [1, 1]} : vector<3x256xf32> to vector<3x1xf32>
    %62 = vector.extract_strided_slice %13 {offsets = [0, 32], sizes = [3, 16], strides = [1, 1]} : vector<3x256xf32> to vector<3x16xf32>
    %63 = vector.extract_strided_slice %13 {offsets = [0, 46], sizes = [3, 1], strides = [1, 1]} : vector<3x256xf32> to vector<3x1xf32>
    %64 = vector.extract_strided_slice %13 {offsets = [0, 45], sizes = [3, 1], strides = [1, 1]} : vector<3x256xf32> to vector<3x1xf32>
    %65 = vector.extract_strided_slice %13 {offsets = [0, 44], sizes = [3, 1], strides = [1, 1]} : vector<3x256xf32> to vector<3x1xf32>
    %66 = tpu.concatenate %59, %60, %61, %62, %63, %64, %65 in 1 : vector<3x1xf32>, vector<3x1xf32>, vector<3x1xf32>, vector<3x16xf32>, vector<3x1xf32>, vector<3x1xf32>, vector<3x1xf32> -> vector<3x22xf32>
    %c0_17 = arith.constant 0 : index
    %c179 = arith.constant 179 : index
    %67 = vector.load %arg8[%c0_17, %c179] : memref<8x622xf32, #tpu.memory_space<vmem>>, vector<3x22xf32>
    tpu.vector_store %arg8[%c0_17, %c179], %66 {strides = array<i32>} : memref<8x622xf32, #tpu.memory_space<vmem>>, vector<3x22xf32>,
    %68 = vector.extract_strided_slice %13 {offsets = [0, 51], sizes = [3, 1], strides = [1, 1]} : vector<3x256xf32> to vector<3x1xf32>
    %69 = vector.extract_strided_slice %13 {offsets = [0, 50], sizes = [3, 1], strides = [1, 1]} : vector<3x256xf32> to vector<3x1xf32>
    %70 = vector.extract_strided_slice %13 {offsets = [0, 49], sizes = [3, 1], strides = [1, 1]} : vector<3x256xf32> to vector<3x1xf32>
    %71 = vector.extract_strided_slice %13 {offsets = [0, 48], sizes = [3, 16], strides = [1, 1]} : vector<3x256xf32> to vector<3x16xf32>
    %72 = vector.extract_strided_slice %13 {offsets = [0, 62], sizes = [3, 1], strides = [1, 1]} : vector<3x256xf32> to vector<3x1xf32>
    %73 = vector.extract_strided_slice %13 {offsets = [0, 61], sizes = [3, 1], strides = [1, 1]} : vector<3x256xf32> to vector<3x1xf32>
    %74 = vector.extract_strided_slice %13 {offsets = [0, 60], sizes = [3, 1], strides = [1, 1]} : vector<3x256xf32> to vector<3x1xf32>
    %75 = tpu.concatenate %68, %69, %70, %71, %72, %73, %74 in 1 : vector<3x1xf32>, vector<3x1xf32>, vector<3x1xf32>, vector<3x16xf32>, vector<3x1xf32>, vector<3x1xf32>, vector<3x1xf32> -> vector<3x22xf32>
    %c0_18 = arith.constant 0 : index
    %c201 = arith.constant 201 : index
    %76 = vector.load %arg8[%c0_18, %c201] : memref<8x622xf32, #tpu.memory_space<vmem>>, vector<3x22xf32>
    tpu.vector_store %arg8[%c0_18, %c201], %75 {strides = array<i32>} : memref<8x622xf32, #tpu.memory_space<vmem>>, vector<3x22xf32>,
    %77 = vector.extract_strided_slice %13 {offsets = [0, 67], sizes = [3, 1], strides = [1, 1]} : vector<3x256xf32> to vector<3x1xf32>
    %78 = vector.extract_strided_slice %13 {offsets = [0, 66], sizes = [3, 1], strides = [1, 1]} : vector<3x256xf32> to vector<3x1xf32>
    %79 = vector.extract_strided_slice %13 {offsets = [0, 65], sizes = [3, 1], strides = [1, 1]} : vector<3x256xf32> to vector<3x1xf32>
    %80 = vector.extract_strided_slice %13 {offsets = [0, 64], sizes = [3, 16], strides = [1, 1]} : vector<3x256xf32> to vector<3x16xf32>
    %81 = vector.extract_strided_slice %13 {offsets = [0, 78], sizes = [3, 1], strides = [1, 1]} : vector<3x256xf32> to vector<3x1xf32>
    %82 = vector.extract_strided_slice %13 {offsets = [0, 77], sizes = [3, 1], strides = [1, 1]} : vector<3x256xf32> to vector<3x1xf32>
    %83 = vector.extract_strided_slice %13 {offsets = [0, 76], sizes = [3, 1], strides = [1, 1]} : vector<3x256xf32> to vector<3x1xf32>
    %84 = tpu.concatenate %77, %78, %79, %80, %81, %82, %83 in 1 : vector<3x1xf32>, vector<3x1xf32>, vector<3x1xf32>, vector<3x16xf32>, vector<3x1xf32>, vector<3x1xf32>, vector<3x1xf32> -> vector<3x22xf32>
    %c0_19 = arith.constant 0 : index
    %c223 = arith.constant 223 : index
    %85 = vector.load %arg8[%c0_19, %c223] : memref<8x622xf32, #tpu.memory_space<vmem>>, vector<3x22xf32>
    tpu.vector_store %arg8[%c0_19, %c223], %84 {strides = array<i32>} : memref<8x622xf32, #tpu.memory_space<vmem>>, vector<3x22xf32>,
    %86 = vector.extract_strided_slice %13 {offsets = [0, 83], sizes = [3, 1], strides = [1, 1]} : vector<3x256xf32> to vector<3x1xf32>
    %87 = vector.extract_strided_slice %13 {offsets = [0, 82], sizes = [3, 1], strides = [1, 1]} : vector<3x256xf32> to vector<3x1xf32>
    %88 = vector.extract_strided_slice %13 {offsets = [0, 81], sizes = [3, 1], strides = [1, 1]} : vector<3x256xf32> to vector<3x1xf32>
    %89 = vector.extract_strided_slice %13 {offsets = [0, 80], sizes = [3, 16], strides = [1, 1]} : vector<3x256xf32> to vector<3x16xf32>
    %90 = vector.extract_strided_slice %13 {offsets = [0, 94], sizes = [3, 1], strides = [1, 1]} : vector<3x256xf32> to vector<3x1xf32>
    %91 = vector.extract_strided_slice %13 {offsets = [0, 93], sizes = [3, 1], strides = [1, 1]} : vector<3x256xf32> to vector<3x1xf32>
    %92 = vector.extract_strided_slice %13 {offsets = [0, 92], sizes = [3, 1], strides = [1, 1]} : vector<3x256xf32> to vector<3x1xf32>
    %93 = tpu.concatenate %86, %87, %88, %89, %90, %91, %92 in 1 : vector<3x1xf32>, vector<3x1xf32>, vector<3x1xf32>, vector<3x16xf32>, vector<3x1xf32>, vector<3x1xf32>, vector<3x1xf32> -> vector<3x22xf32>
    %c0_20 = arith.constant 0 : index
    %c245 = arith.constant 245 : index
    %94 = vector.load %arg8[%c0_20, %c245] : memref<8x622xf32, #tpu.memory_space<vmem>>, vector<3x22xf32>
    tpu.vector_store %arg8[%c0_20, %c245], %93 {strides = array<i32>} : memref<8x622xf32, #tpu.memory_space<vmem>>, vector<3x22xf32>,
    %95 = vector.extract_strided_slice %13 {offsets = [0, 99], sizes = [3, 1], strides = [1, 1]} : vector<3x256xf32> to vector<3x1xf32>
    %96 = vector.extract_strided_slice %13 {offsets = [0, 98], sizes = [3, 1], strides = [1, 1]} : vector<3x256xf32> to vector<3x1xf32>
    %97 = vector.extract_strided_slice %13 {offsets = [0, 97], sizes = [3, 1], strides = [1, 1]} : vector<3x256xf32> to vector<3x1xf32>
    %98 = vector.extract_strided_slice %13 {offsets = [0, 96], sizes = [3, 16], strides = [1, 1]} : vector<3x256xf32> to vector<3x16xf32>
    %99 = vector.extract_strided_slice %13 {offsets = [0, 110], sizes = [3, 1], strides = [1, 1]} : vector<3x256xf32> to vector<3x1xf32>
    %100 = vector.extract_strided_slice %13 {offsets = [0, 109], sizes = [3, 1], strides = [1, 1]} : vector<3x256xf32> to vector<3x1xf32>
    %101 = vector.extract_strided_slice %13 {offsets = [0, 108], sizes = [3, 1], strides = [1, 1]} : vector<3x256xf32> to vector<3x1xf32>
    %102 = tpu.concatenate %95, %96, %97, %98, %99, %100, %101 in 1 : vector<3x1xf32>, vector<3x1xf32>, vector<3x1xf32>, vector<3x16xf32>, vector<3x1xf32>, vector<3x1xf32>, vector<3x1xf32> -> vector<3x22xf32>
    %c0_21 = arith.constant 0 : index
    %c267 = arith.constant 267 : index
    %103 = vector.load %arg8[%c0_21, %c267] : memref<8x622xf32, #tpu.memory_space<vmem>>, vector<3x22xf32>
    tpu.vector_store %arg8[%c0_21, %c267], %102 {strides = array<i32>} : memref<8x622xf32, #tpu.memory_space<vmem>>, vector<3x22xf32>,
    %104 = vector.extract_strided_slice %13 {offsets = [0, 115], sizes = [3, 1], strides = [1, 1]} : vector<3x256xf32> to vector<3x1xf32>
    %105 = vector.extract_strided_slice %13 {offsets = [0, 114], sizes = [3, 1], strides = [1, 1]} : vector<3x256xf32> to vector<3x1xf32>
    %106 = vector.extract_strided_slice %13 {offsets = [0, 113], sizes = [3, 1], strides = [1, 1]} : vector<3x256xf32> to vector<3x1xf32>
    %107 = vector.extract_strided_slice %13 {offsets = [0, 112], sizes = [3, 16], strides = [1, 1]} : vector<3x256xf32> to vector<3x16xf32>
    %108 = vector.extract_strided_slice %13 {offsets = [0, 126], sizes = [3, 1], strides = [1, 1]} : vector<3x256xf32> to vector<3x1xf32>
    %109 = vector.extract_strided_slice %13 {offsets = [0, 125], sizes = [3, 1], strides = [1, 1]} : vector<3x256xf32> to vector<3x1xf32>
    %110 = vector.extract_strided_slice %13 {offsets = [0, 124], sizes = [3, 1], strides = [1, 1]} : vector<3x256xf32> to vector<3x1xf32>
    %111 = tpu.concatenate %104, %105, %106, %107, %108, %109, %110 in 1 : vector<3x1xf32>, vector<3x1xf32>, vector<3x1xf32>, vector<3x16xf32>, vector<3x1xf32>, vector<3x1xf32>, vector<3x1xf32> -> vector<3x22xf32>
    %c0_22 = arith.constant 0 : index
    %c289 = arith.constant 289 : index
    %112 = vector.load %arg8[%c0_22, %c289] : memref<8x622xf32, #tpu.memory_space<vmem>>, vector<3x22xf32>
    tpu.vector_store %arg8[%c0_22, %c289], %111 {strides = array<i32>} : memref<8x622xf32, #tpu.memory_space<vmem>>, vector<3x22xf32>,
    %113 = vector.extract_strided_slice %13 {offsets = [0, 131], sizes = [3, 1], strides = [1, 1]} : vector<3x256xf32> to vector<3x1xf32>
    %114 = vector.extract_strided_slice %13 {offsets = [0, 130], sizes = [3, 1], strides = [1, 1]} : vector<3x256xf32> to vector<3x1xf32>
    %115 = vector.extract_strided_slice %13 {offsets = [0, 129], sizes = [3, 1], strides = [1, 1]} : vector<3x256xf32> to vector<3x1xf32>
    %116 = vector.extract_strided_slice %13 {offsets = [0, 128], sizes = [3, 16], strides = [1, 1]} : vector<3x256xf32> to vector<3x16xf32>
    %117 = vector.extract_strided_slice %13 {offsets = [0, 142], sizes = [3, 1], strides = [1, 1]} : vector<3x256xf32> to vector<3x1xf32>
    %118 = vector.extract_strided_slice %13 {offsets = [0, 141], sizes = [3, 1], strides = [1, 1]} : vector<3x256xf32> to vector<3x1xf32>
    %119 = vector.extract_strided_slice %13 {offsets = [0, 140], sizes = [3, 1], strides = [1, 1]} : vector<3x256xf32> to vector<3x1xf32>
    %120 = tpu.concatenate %113, %114, %115, %116, %117, %118, %119 in 1 : vector<3x1xf32>, vector<3x1xf32>, vector<3x1xf32>, vector<3x16xf32>, vector<3x1xf32>, vector<3x1xf32>, vector<3x1xf32> -> vector<3x22xf32>
    %c0_23 = arith.constant 0 : index
    %c311 = arith.constant 311 : index
    %121 = vector.load %arg8[%c0_23, %c311] : memref<8x622xf32, #tpu.memory_space<vmem>>, vector<3x22xf32>
    tpu.vector_store %arg8[%c0_23, %c311], %120 {strides = array<i32>} : memref<8x622xf32, #tpu.memory_space<vmem>>, vector<3x22xf32>,
    %122 = vector.extract_strided_slice %13 {offsets = [0, 147], sizes = [3, 1], strides = [1, 1]} : vector<3x256xf32> to vector<3x1xf32>
    %123 = vector.extract_strided_slice %13 {offsets = [0, 146], sizes = [3, 1], strides = [1, 1]} : vector<3x256xf32> to vector<3x1xf32>
    %124 = vector.extract_strided_slice %13 {offsets = [0, 145], sizes = [3, 1], strides = [1, 1]} : vector<3x256xf32> to vector<3x1xf32>
    %125 = vector.extract_strided_slice %13 {offsets = [0, 144], sizes = [3, 16], strides = [1, 1]} : vector<3x256xf32> to vector<3x16xf32>
    %126 = vector.extract_strided_slice %13 {offsets = [0, 158], sizes = [3, 1], strides = [1, 1]} : vector<3x256xf32> to vector<3x1xf32>
    %127 = vector.extract_strided_slice %13 {offsets = [0, 157], sizes = [3, 1], strides = [1, 1]} : vector<3x256xf32> to vector<3x1xf32>
    %128 = vector.extract_strided_slice %13 {offsets = [0, 156], sizes = [3, 1], strides = [1, 1]} : vector<3x256xf32> to vector<3x1xf32>
    %129 = tpu.concatenate %122, %123, %124, %125, %126, %127, %128 in 1 : vector<3x1xf32>, vector<3x1xf32>, vector<3x1xf32>, vector<3x16xf32>, vector<3x1xf32>, vector<3x1xf32>, vector<3x1xf32> -> vector<3x22xf32>
    %c0_24 = arith.constant 0 : index
    %c333 = arith.constant 333 : index
    %130 = vector.load %arg8[%c0_24, %c333] : memref<8x622xf32, #tpu.memory_space<vmem>>, vector<3x22xf32>
    tpu.vector_store %arg8[%c0_24, %c333], %129 {strides = array<i32>} : memref<8x622xf32, #tpu.memory_space<vmem>>, vector<3x22xf32>,
    %131 = vector.extract_strided_slice %13 {offsets = [0, 163], sizes = [3, 1], strides = [1, 1]} : vector<3x256xf32> to vector<3x1xf32>
    %132 = vector.extract_strided_slice %13 {offsets = [0, 162], sizes = [3, 1], strides = [1, 1]} : vector<3x256xf32> to vector<3x1xf32>
    %133 = vector.extract_strided_slice %13 {offsets = [0, 161], sizes = [3, 1], strides = [1, 1]} : vector<3x256xf32> to vector<3x1xf32>
    %134 = vector.extract_strided_slice %13 {offsets = [0, 160], sizes = [3, 16], strides = [1, 1]} : vector<3x256xf32> to vector<3x16xf32>
    %135 = vector.extract_strided_slice %13 {offsets = [0, 174], sizes = [3, 1], strides = [1, 1]} : vector<3x256xf32> to vector<3x1xf32>
    %136 = vector.extract_strided_slice %13 {offsets = [0, 173], sizes = [3, 1], strides = [1, 1]} : vector<3x256xf32> to vector<3x1xf32>
    %137 = vector.extract_strided_slice %13 {offsets = [0, 172], sizes = [3, 1], strides = [1, 1]} : vector<3x256xf32> to vector<3x1xf32>
    %138 = tpu.concatenate %131, %132, %133, %134, %135, %136, %137 in 1 : vector<3x1xf32>, vector<3x1xf32>, vector<3x1xf32>, vector<3x16xf32>, vector<3x1xf32>, vector<3x1xf32>, vector<3x1xf32> -> vector<3x22xf32>
    %c0_25 = arith.constant 0 : index
    %c355 = arith.constant 355 : index
    %139 = vector.load %arg8[%c0_25, %c355] : memref<8x622xf32, #tpu.memory_space<vmem>>, vector<3x22xf32>
    tpu.vector_store %arg8[%c0_25, %c355], %138 {strides = array<i32>} : memref<8x622xf32, #tpu.memory_space<vmem>>, vector<3x22xf32>,
    %140 = vector.extract_strided_slice %13 {offsets = [0, 179], sizes = [3, 1], strides = [1, 1]} : vector<3x256xf32> to vector<3x1xf32>
    %141 = vector.extract_strided_slice %13 {offsets = [0, 178], sizes = [3, 1], strides = [1, 1]} : vector<3x256xf32> to vector<3x1xf32>
    %142 = vector.extract_strided_slice %13 {offsets = [0, 177], sizes = [3, 1], strides = [1, 1]} : vector<3x256xf32> to vector<3x1xf32>
    %143 = vector.extract_strided_slice %13 {offsets = [0, 176], sizes = [3, 16], strides = [1, 1]} : vector<3x256xf32> to vector<3x16xf32>
    %144 = vector.extract_strided_slice %13 {offsets = [0, 190], sizes = [3, 1], strides = [1, 1]} : vector<3x256xf32> to vector<3x1xf32>
    %145 = vector.extract_strided_slice %13 {offsets = [0, 189], sizes = [3, 1], strides = [1, 1]} : vector<3x256xf32> to vector<3x1xf32>
    %146 = vector.extract_strided_slice %13 {offsets = [0, 188], sizes = [3, 1], strides = [1, 1]} : vector<3x256xf32> to vector<3x1xf32>
    %147 = tpu.concatenate %140, %141, %142, %143, %144, %145, %146 in 1 : vector<3x1xf32>, vector<3x1xf32>, vector<3x1xf32>, vector<3x16xf32>, vector<3x1xf32>, vector<3x1xf32>, vector<3x1xf32> -> vector<3x22xf32>
    %c0_26 = arith.constant 0 : index
    %c377 = arith.constant 377 : index
    %148 = vector.load %arg8[%c0_26, %c377] : memref<8x622xf32, #tpu.memory_space<vmem>>, vector<3x22xf32>
    tpu.vector_store %arg8[%c0_26, %c377], %147 {strides = array<i32>} : memref<8x622xf32, #tpu.memory_space<vmem>>, vector<3x22xf32>,
    %149 = vector.extract_strided_slice %13 {offsets = [0, 195], sizes = [3, 1], strides = [1, 1]} : vector<3x256xf32> to vector<3x1xf32>
    %150 = vector.extract_strided_slice %13 {offsets = [0, 194], sizes = [3, 1], strides = [1, 1]} : vector<3x256xf32> to vector<3x1xf32>
    %151 = vector.extract_strided_slice %13 {offsets = [0, 193], sizes = [3, 1], strides = [1, 1]} : vector<3x256xf32> to vector<3x1xf32>
    %152 = vector.extract_strided_slice %13 {offsets = [0, 192], sizes = [3, 16], strides = [1, 1]} : vector<3x256xf32> to vector<3x16xf32>
    %153 = vector.extract_strided_slice %13 {offsets = [0, 206], sizes = [3, 1], strides = [1, 1]} : vector<3x256xf32> to vector<3x1xf32>
    %154 = vector.extract_strided_slice %13 {offsets = [0, 205], sizes = [3, 1], strides = [1, 1]} : vector<3x256xf32> to vector<3x1xf32>
    %155 = vector.extract_strided_slice %13 {offsets = [0, 204], sizes = [3, 1], strides = [1, 1]} : vector<3x256xf32> to vector<3x1xf32>
    %156 = tpu.concatenate %149, %150, %151, %152, %153, %154, %155 in 1 : vector<3x1xf32>, vector<3x1xf32>, vector<3x1xf32>, vector<3x16xf32>, vector<3x1xf32>, vector<3x1xf32>, vector<3x1xf32> -> vector<3x22xf32>
    %c0_27 = arith.constant 0 : index
    %c399 = arith.constant 399 : index
    %157 = vector.load %arg8[%c0_27, %c399] : memref<8x622xf32, #tpu.memory_space<vmem>>, vector<3x22xf32>
    tpu.vector_store %arg8[%c0_27, %c399], %156 {strides = array<i32>} : memref<8x622xf32, #tpu.memory_space<vmem>>, vector<3x22xf32>,
    %158 = vector.extract_strided_slice %13 {offsets = [0, 211], sizes = [3, 1], strides = [1, 1]} : vector<3x256xf32> to vector<3x1xf32>
    %159 = vector.extract_strided_slice %13 {offsets = [0, 210], sizes = [3, 1], strides = [1, 1]} : vector<3x256xf32> to vector<3x1xf32>
    %160 = vector.extract_strided_slice %13 {offsets = [0, 209], sizes = [3, 1], strides = [1, 1]} : vector<3x256xf32> to vector<3x1xf32>
    %161 = vector.extract_strided_slice %13 {offsets = [0, 208], sizes = [3, 16], strides = [1, 1]} : vector<3x256xf32> to vector<3x16xf32>
    %162 = vector.extract_strided_slice %13 {offsets = [0, 222], sizes = [3, 1], strides = [1, 1]} : vector<3x256xf32> to vector<3x1xf32>
    %163 = vector.extract_strided_slice %13 {offsets = [0, 221], sizes = [3, 1], strides = [1, 1]} : vector<3x256xf32> to vector<3x1xf32>
    %164 = vector.extract_strided_slice %13 {offsets = [0, 220], sizes = [3, 1], strides = [1, 1]} : vector<3x256xf32> to vector<3x1xf32>
    %165 = tpu.concatenate %158, %159, %160, %161, %162, %163, %164 in 1 : vector<3x1xf32>, vector<3x1xf32>, vector<3x1xf32>, vector<3x16xf32>, vector<3x1xf32>, vector<3x1xf32>, vector<3x1xf32> -> vector<3x22xf32>
    %c0_28 = arith.constant 0 : index
    %c421 = arith.constant 421 : index
    %166 = vector.load %arg8[%c0_28, %c421] : memref<8x622xf32, #tpu.memory_space<vmem>>, vector<3x22xf32>
    tpu.vector_store %arg8[%c0_28, %c421], %165 {strides = array<i32>} : memref<8x622xf32, #tpu.memory_space<vmem>>, vector<3x22xf32>,
    %167 = vector.extract_strided_slice %13 {offsets = [0, 227], sizes = [3, 1], strides = [1, 1]} : vector<3x256xf32> to vector<3x1xf32>
    %168 = vector.extract_strided_slice %13 {offsets = [0, 226], sizes = [3, 1], strides = [1, 1]} : vector<3x256xf32> to vector<3x1xf32>
    %169 = vector.extract_strided_slice %13 {offsets = [0, 225], sizes = [3, 1], strides = [1, 1]} : vector<3x256xf32> to vector<3x1xf32>
    %170 = vector.extract_strided_slice %13 {offsets = [0, 224], sizes = [3, 16], strides = [1, 1]} : vector<3x256xf32> to vector<3x16xf32>
    %171 = vector.extract_strided_slice %13 {offsets = [0, 238], sizes = [3, 1], strides = [1, 1]} : vector<3x256xf32> to vector<3x1xf32>
    %172 = vector.extract_strided_slice %13 {offsets = [0, 237], sizes = [3, 1], strides = [1, 1]} : vector<3x256xf32> to vector<3x1xf32>
    %173 = vector.extract_strided_slice %13 {offsets = [0, 236], sizes = [3, 1], strides = [1, 1]} : vector<3x256xf32> to vector<3x1xf32>
    %174 = tpu.concatenate %167, %168, %169, %170, %171, %172, %173 in 1 : vector<3x1xf32>, vector<3x1xf32>, vector<3x1xf32>, vector<3x16xf32>, vector<3x1xf32>, vector<3x1xf32>, vector<3x1xf32> -> vector<3x22xf32>
    %c0_29 = arith.constant 0 : index
    %c443 = arith.constant 443 : index
    %175 = vector.load %arg8[%c0_29, %c443] : memref<8x622xf32, #tpu.memory_space<vmem>>, vector<3x22xf32>
    tpu.vector_store %arg8[%c0_29, %c443], %174 {strides = array<i32>} : memref<8x622xf32, #tpu.memory_space<vmem>>, vector<3x22xf32>,
    %176 = vector.extract_strided_slice %13 {offsets = [0, 243], sizes = [3, 1], strides = [1, 1]} : vector<3x256xf32> to vector<3x1xf32>
    %177 = vector.extract_strided_slice %13 {offsets = [0, 242], sizes = [3, 1], strides = [1, 1]} : vector<3x256xf32> to vector<3x1xf32>
    %178 = vector.extract_strided_slice %13 {offsets = [0, 241], sizes = [3, 1], strides = [1, 1]} : vector<3x256xf32> to vector<3x1xf32>
    %179 = vector.extract_strided_slice %13 {offsets = [0, 240], sizes = [3, 16], strides = [1, 1]} : vector<3x256xf32> to vector<3x16xf32>
    %180 = vector.extract_strided_slice %13 {offsets = [0, 254], sizes = [3, 1], strides = [1, 1]} : vector<3x256xf32> to vector<3x1xf32>
    %181 = vector.extract_strided_slice %13 {offsets = [0, 253], sizes = [3, 1], strides = [1, 1]} : vector<3x256xf32> to vector<3x1xf32>
    %182 = vector.extract_strided_slice %13 {offsets = [0, 252], sizes = [3, 1], strides = [1, 1]} : vector<3x256xf32> to vector<3x1xf32>
    %183 = tpu.concatenate %176, %177, %178, %179, %180, %181, %182 in 1 : vector<3x1xf32>, vector<3x1xf32>, vector<3x1xf32>, vector<3x16xf32>, vector<3x1xf32>, vector<3x1xf32>, vector<3x1xf32> -> vector<3x22xf32>
    %c0_30 = arith.constant 0 : index
    %c465 = arith.constant 465 : index
    %184 = vector.load %arg8[%c0_30, %c465] : memref<8x622xf32, #tpu.memory_space<vmem>>, vector<3x22xf32>
    tpu.vector_store %arg8[%c0_30, %c465], %183 {strides = array<i32>} : memref<8x622xf32, #tpu.memory_space<vmem>>, vector<3x22xf32>,
    %185 = vector.extract_strided_slice %13 {offsets = [0, 227], sizes = [3, 1], strides = [1, 1]} : vector<3x256xf32> to vector<3x1xf32>
    %186 = vector.extract_strided_slice %13 {offsets = [0, 226], sizes = [3, 1], strides = [1, 1]} : vector<3x256xf32> to vector<3x1xf32>
    %187 = vector.extract_strided_slice %13 {offsets = [0, 225], sizes = [3, 1], strides = [1, 1]} : vector<3x256xf32> to vector<3x1xf32>
    %188 = vector.extract_strided_slice %13 {offsets = [0, 224], sizes = [3, 16], strides = [1, 1]} : vector<3x256xf32> to vector<3x16xf32>
    %189 = vector.extract_strided_slice %13 {offsets = [0, 238], sizes = [3, 1], strides = [1, 1]} : vector<3x256xf32> to vector<3x1xf32>
    %190 = vector.extract_strided_slice %13 {offsets = [0, 237], sizes = [3, 1], strides = [1, 1]} : vector<3x256xf32> to vector<3x1xf32>
    %191 = vector.extract_strided_slice %13 {offsets = [0, 236], sizes = [3, 1], strides = [1, 1]} : vector<3x256xf32> to vector<3x1xf32>
    %192 = tpu.concatenate %185, %186, %187, %188, %189, %190, %191 in 1 : vector<3x1xf32>, vector<3x1xf32>, vector<3x1xf32>, vector<3x16xf32>, vector<3x1xf32>, vector<3x1xf32>, vector<3x1xf32> -> vector<3x22xf32>
    %c0_31 = arith.constant 0 : index
    %c487 = arith.constant 487 : index
    %193 = vector.load %arg8[%c0_31, %c487] : memref<8x622xf32, #tpu.memory_space<vmem>>, vector<3x22xf32>
    tpu.vector_store %arg8[%c0_31, %c487], %192 {strides = array<i32>} : memref<8x622xf32, #tpu.memory_space<vmem>>, vector<3x22xf32>,
    %194 = vector.extract_strided_slice %13 {offsets = [0, 211], sizes = [3, 1], strides = [1, 1]} : vector<3x256xf32> to vector<3x1xf32>
    %195 = vector.extract_strided_slice %13 {offsets = [0, 210], sizes = [3, 1], strides = [1, 1]} : vector<3x256xf32> to vector<3x1xf32>
    %196 = vector.extract_strided_slice %13 {offsets = [0, 209], sizes = [3, 1], strides = [1, 1]} : vector<3x256xf32> to vector<3x1xf32>
    %197 = vector.extract_strided_slice %13 {offsets = [0, 208], sizes = [3, 16], strides = [1, 1]} : vector<3x256xf32> to vector<3x16xf32>
    %198 = vector.extract_strided_slice %13 {offsets = [0, 222], sizes = [3, 1], strides = [1, 1]} : vector<3x256xf32> to vector<3x1xf32>
    %199 = vector.extract_strided_slice %13 {offsets = [0, 221], sizes = [3, 1], strides = [1, 1]} : vector<3x256xf32> to vector<3x1xf32>
    %200 = vector.extract_strided_slice %13 {offsets = [0, 220], sizes = [3, 1], strides = [1, 1]} : vector<3x256xf32> to vector<3x1xf32>
    %201 = tpu.concatenate %194, %195, %196, %197, %198, %199, %200 in 1 : vector<3x1xf32>, vector<3x1xf32>, vector<3x1xf32>, vector<3x16xf32>, vector<3x1xf32>, vector<3x1xf32>, vector<3x1xf32> -> vector<3x22xf32>
    %c0_32 = arith.constant 0 : index
    %c509 = arith.constant 509 : index
    %202 = vector.load %arg8[%c0_32, %c509] : memref<8x622xf32, #tpu.memory_space<vmem>>, vector<3x22xf32>
    tpu.vector_store %arg8[%c0_32, %c509], %201 {strides = array<i32>} : memref<8x622xf32, #tpu.memory_space<vmem>>, vector<3x22xf32>,
    %203 = vector.extract_strided_slice %13 {offsets = [0, 195], sizes = [3, 1], strides = [1, 1]} : vector<3x256xf32> to vector<3x1xf32>
    %204 = vector.extract_strided_slice %13 {offsets = [0, 194], sizes = [3, 1], strides = [1, 1]} : vector<3x256xf32> to vector<3x1xf32>
    %205 = vector.extract_strided_slice %13 {offsets = [0, 193], sizes = [3, 1], strides = [1, 1]} : vector<3x256xf32> to vector<3x1xf32>
    %206 = vector.extract_strided_slice %13 {offsets = [0, 192], sizes = [3, 16], strides = [1, 1]} : vector<3x256xf32> to vector<3x16xf32>
    %207 = vector.extract_strided_slice %13 {offsets = [0, 206], sizes = [3, 1], strides = [1, 1]} : vector<3x256xf32> to vector<3x1xf32>
    %208 = vector.extract_strided_slice %13 {offsets = [0, 205], sizes = [3, 1], strides = [1, 1]} : vector<3x256xf32> to vector<3x1xf32>
    %209 = vector.extract_strided_slice %13 {offsets = [0, 204], sizes = [3, 1], strides = [1, 1]} : vector<3x256xf32> to vector<3x1xf32>
    %210 = tpu.concatenate %203, %204, %205, %206, %207, %208, %209 in 1 : vector<3x1xf32>, vector<3x1xf32>, vector<3x1xf32>, vector<3x16xf32>, vector<3x1xf32>, vector<3x1xf32>, vector<3x1xf32> -> vector<3x22xf32>
    %c0_33 = arith.constant 0 : index
    %c531 = arith.constant 531 : index
    %211 = vector.load %arg8[%c0_33, %c531] : memref<8x622xf32, #tpu.memory_space<vmem>>, vector<3x22xf32>
    tpu.vector_store %arg8[%c0_33, %c531], %210 {strides = array<i32>} : memref<8x622xf32, #tpu.memory_space<vmem>>, vector<3x22xf32>,
    %c0_34 = arith.constant 0 : index
    %c0_35 = arith.constant 0 : index
    %212 = vector.load %arg8[%c0_34, %c0_35] : memref<8x622xf32, #tpu.memory_space<vmem>>, vector<3x622xf32>
    %213 = vector.extract_strided_slice %212 {offsets = [0, 0], sizes = [3, 484], strides = [1, 1]} : vector<3x622xf32> to vector<3x484xf32>
    %214 = vector.extract_strided_slice %212 {offsets = [0, 1], sizes = [3, 484], strides = [1, 1]} : vector<3x622xf32> to vector<3x484xf32>
    %215 = vector.extract_strided_slice %212 {offsets = [0, 2], sizes = [3, 484], strides = [1, 1]} : vector<3x622xf32> to vector<3x484xf32>
    %216 = vector.extract_strided_slice %212 {offsets = [0, 3], sizes = [3, 484], strides = [1, 1]} : vector<3x622xf32> to vector<3x484xf32>
    %217 = vector.extract_strided_slice %212 {offsets = [0, 4], sizes = [3, 484], strides = [1, 1]} : vector<3x622xf32> to vector<3x484xf32>
    %218 = vector.extract_strided_slice %212 {offsets = [0, 5], sizes = [3, 484], strides = [1, 1]} : vector<3x622xf32> to vector<3x484xf32>
    %219 = vector.extract_strided_slice %212 {offsets = [0, 6], sizes = [3, 484], strides = [1, 1]} : vector<3x622xf32> to vector<3x484xf32>
    %220 = vector.extract_strided_slice %212 {offsets = [0, 22], sizes = [3, 484], strides = [1, 1]} : vector<3x622xf32> to vector<3x484xf32>
    %221 = vector.extract_strided_slice %212 {offsets = [0, 23], sizes = [3, 484], strides = [1, 1]} : vector<3x622xf32> to vector<3x484xf32>
    %222 = vector.extract_strided_slice %212 {offsets = [0, 24], sizes = [3, 484], strides = [1, 1]} : vector<3x622xf32> to vector<3x484xf32>
    %223 = vector.extract_strided_slice %212 {offsets = [0, 25], sizes = [3, 484], strides = [1, 1]} : vector<3x622xf32> to vector<3x484xf32>
    %224 = vector.extract_strided_slice %212 {offsets = [0, 26], sizes = [3, 484], strides = [1, 1]} : vector<3x622xf32> to vector<3x484xf32>
    %225 = vector.extract_strided_slice %212 {offsets = [0, 27], sizes = [3, 484], strides = [1, 1]} : vector<3x622xf32> to vector<3x484xf32>
    %226 = vector.extract_strided_slice %212 {offsets = [0, 28], sizes = [3, 484], strides = [1, 1]} : vector<3x622xf32> to vector<3x484xf32>
    %227 = vector.extract_strided_slice %212 {offsets = [0, 44], sizes = [3, 484], strides = [1, 1]} : vector<3x622xf32> to vector<3x484xf32>
    %228 = vector.extract_strided_slice %212 {offsets = [0, 45], sizes = [3, 484], strides = [1, 1]} : vector<3x622xf32> to vector<3x484xf32>
    %229 = vector.extract_strided_slice %212 {offsets = [0, 46], sizes = [3, 484], strides = [1, 1]} : vector<3x622xf32> to vector<3x484xf32>
    %230 = vector.extract_strided_slice %212 {offsets = [0, 47], sizes = [3, 484], strides = [1, 1]} : vector<3x622xf32> to vector<3x484xf32>
    %231 = vector.extract_strided_slice %212 {offsets = [0, 48], sizes = [3, 484], strides = [1, 1]} : vector<3x622xf32> to vector<3x484xf32>
    %232 = vector.extract_strided_slice %212 {offsets = [0, 49], sizes = [3, 484], strides = [1, 1]} : vector<3x622xf32> to vector<3x484xf32>
    %233 = vector.extract_strided_slice %212 {offsets = [0, 50], sizes = [3, 484], strides = [1, 1]} : vector<3x622xf32> to vector<3x484xf32>
    %234 = vector.extract_strided_slice %212 {offsets = [0, 66], sizes = [3, 484], strides = [1, 1]} : vector<3x622xf32> to vector<3x484xf32>
    %235 = vector.extract_strided_slice %212 {offsets = [0, 67], sizes = [3, 484], strides = [1, 1]} : vector<3x622xf32> to vector<3x484xf32>
    %236 = vector.extract_strided_slice %212 {offsets = [0, 68], sizes = [3, 484], strides = [1, 1]} : vector<3x622xf32> to vector<3x484xf32>
    %237 = vector.extract_strided_slice %212 {offsets = [0, 69], sizes = [3, 484], strides = [1, 1]} : vector<3x622xf32> to vector<3x484xf32>
    %238 = vector.extract_strided_slice %212 {offsets = [0, 70], sizes = [3, 484], strides = [1, 1]} : vector<3x622xf32> to vector<3x484xf32>
    %239 = vector.extract_strided_slice %212 {offsets = [0, 71], sizes = [3, 484], strides = [1, 1]} : vector<3x622xf32> to vector<3x484xf32>
    %240 = vector.extract_strided_slice %212 {offsets = [0, 72], sizes = [3, 484], strides = [1, 1]} : vector<3x622xf32> to vector<3x484xf32>
    %241 = vector.extract_strided_slice %212 {offsets = [0, 88], sizes = [3, 484], strides = [1, 1]} : vector<3x622xf32> to vector<3x484xf32>
    %242 = vector.extract_strided_slice %212 {offsets = [0, 89], sizes = [3, 484], strides = [1, 1]} : vector<3x622xf32> to vector<3x484xf32>
    %243 = vector.extract_strided_slice %212 {offsets = [0, 90], sizes = [3, 484], strides = [1, 1]} : vector<3x622xf32> to vector<3x484xf32>
    %244 = vector.extract_strided_slice %212 {offsets = [0, 91], sizes = [3, 484], strides = [1, 1]} : vector<3x622xf32> to vector<3x484xf32>
    %245 = vector.extract_strided_slice %212 {offsets = [0, 92], sizes = [3, 484], strides = [1, 1]} : vector<3x622xf32> to vector<3x484xf32>
    %246 = vector.extract_strided_slice %212 {offsets = [0, 93], sizes = [3, 484], strides = [1, 1]} : vector<3x622xf32> to vector<3x484xf32>
    %247 = vector.extract_strided_slice %212 {offsets = [0, 94], sizes = [3, 484], strides = [1, 1]} : vector<3x622xf32> to vector<3x484xf32>
    %248 = vector.extract_strided_slice %212 {offsets = [0, 110], sizes = [3, 484], strides = [1, 1]} : vector<3x622xf32> to vector<3x484xf32>
    %249 = vector.extract_strided_slice %212 {offsets = [0, 111], sizes = [3, 484], strides = [1, 1]} : vector<3x622xf32> to vector<3x484xf32>
    %250 = vector.extract_strided_slice %212 {offsets = [0, 112], sizes = [3, 484], strides = [1, 1]} : vector<3x622xf32> to vector<3x484xf32>
    %251 = vector.extract_strided_slice %212 {offsets = [0, 113], sizes = [3, 484], strides = [1, 1]} : vector<3x622xf32> to vector<3x484xf32>
    %252 = vector.extract_strided_slice %212 {offsets = [0, 114], sizes = [3, 484], strides = [1, 1]} : vector<3x622xf32> to vector<3x484xf32>
    %253 = vector.extract_strided_slice %212 {offsets = [0, 115], sizes = [3, 484], strides = [1, 1]} : vector<3x622xf32> to vector<3x484xf32>
    %254 = vector.extract_strided_slice %212 {offsets = [0, 116], sizes = [3, 484], strides = [1, 1]} : vector<3x622xf32> to vector<3x484xf32>
    %255 = vector.extract_strided_slice %212 {offsets = [0, 132], sizes = [3, 484], strides = [1, 1]} : vector<3x622xf32> to vector<3x484xf32>
    %256 = vector.extract_strided_slice %212 {offsets = [0, 133], sizes = [3, 484], strides = [1, 1]} : vector<3x622xf32> to vector<3x484xf32>
    %257 = vector.extract_strided_slice %212 {offsets = [0, 134], sizes = [3, 484], strides = [1, 1]} : vector<3x622xf32> to vector<3x484xf32>
    %258 = vector.extract_strided_slice %212 {offsets = [0, 135], sizes = [3, 484], strides = [1, 1]} : vector<3x622xf32> to vector<3x484xf32>
    %259 = vector.extract_strided_slice %212 {offsets = [0, 136], sizes = [3, 484], strides = [1, 1]} : vector<3x622xf32> to vector<3x484xf32>
    %260 = vector.extract_strided_slice %212 {offsets = [0, 137], sizes = [3, 484], strides = [1, 1]} : vector<3x622xf32> to vector<3x484xf32>
    %261 = vector.extract_strided_slice %212 {offsets = [0, 138], sizes = [3, 484], strides = [1, 1]} : vector<3x622xf32> to vector<3x484xf32>
    %262 = tpu.concatenate %213, %214, %215, %216, %217, %218, %219, %220, %221, %222, %223, %224, %225, %226, %227, %228 in 0 : vector<3x484xf32>, vector<3x484xf32>, vector<3x484xf32>, vector<3x484xf32>, vector<3x484xf32>, vector<3x484xf32>, vector<3x484xf32>, vector<3x484xf32>, vector<3x484xf32>, vector<3x484xf32>, vector<3x484xf32>, vector<3x484xf32>, vector<3x484xf32>, vector<3x484xf32>, vector<3x484xf32>, vector<3x484xf32> -> vector<48x484xf32>
    %263 = tpu.concatenate %229, %230, %231, %232, %233, %234, %235, %236, %237, %238, %239, %240, %241, %242, %243, %244 in 0 : vector<3x484xf32>, vector<3x484xf32>, vector<3x484xf32>, vector<3x484xf32>, vector<3x484xf32>, vector<3x484xf32>, vector<3x484xf32>, vector<3x484xf32>, vector<3x484xf32>, vector<3x484xf32>, vector<3x484xf32>, vector<3x484xf32>, vector<3x484xf32>, vector<3x484xf32>, vector<3x484xf32>, vector<3x484xf32> -> vector<48x484xf32>
    %264 = tpu.concatenate %245, %246, %247, %248, %249, %250, %251, %252, %253, %254, %255, %256, %257, %258, %259, %260 in 0 : vector<3x484xf32>, vector<3x484xf32>, vector<3x484xf32>, vector<3x484xf32>, vector<3x484xf32>, vector<3x484xf32>, vector<3x484xf32>, vector<3x484xf32>, vector<3x484xf32>, vector<3x484xf32>, vector<3x484xf32>, vector<3x484xf32>, vector<3x484xf32>, vector<3x484xf32>, vector<3x484xf32>, vector<3x484xf32> -> vector<48x484xf32>
    %265 = tpu.concatenate %262, %263, %264, %261 in 0 : vector<48x484xf32>, vector<48x484xf32>, vector<48x484xf32>, vector<3x484xf32> -> vector<147x484xf32>
    %cst = arith.constant dense<0.000000e+00> : vector<8x484xf32>
    %266 = tpu.matmul %0, %265, %cst {dimension_numbers = #tpu.dot_dimension_numbers<[1], [0], [0], [1], [0, 0, 1, 1], [], []>} : vector<8x147xf32>, vector<147x484xf32>, vector<8x484xf32> -> vector<8x484xf32>
    %267 = vector.extract_strided_slice %266 {offsets = [0, 69], sizes = [8, 16], strides = [1, 1]} : vector<8x484xf32> to vector<8x16xf32>
    %268 = vector.extract_strided_slice %266 {offsets = [0, 91], sizes = [8, 16], strides = [1, 1]} : vector<8x484xf32> to vector<8x16xf32>
    %269 = vector.extract_strided_slice %266 {offsets = [0, 113], sizes = [8, 16], strides = [1, 1]} : vector<8x484xf32> to vector<8x16xf32>
    %270 = vector.extract_strided_slice %266 {offsets = [0, 135], sizes = [8, 16], strides = [1, 1]} : vector<8x484xf32> to vector<8x16xf32>
    %271 = vector.extract_strided_slice %266 {offsets = [0, 157], sizes = [8, 16], strides = [1, 1]} : vector<8x484xf32> to vector<8x16xf32>
    %272 = vector.extract_strided_slice %266 {offsets = [0, 179], sizes = [8, 16], strides = [1, 1]} : vector<8x484xf32> to vector<8x16xf32>
    %273 = vector.extract_strided_slice %266 {offsets = [0, 201], sizes = [8, 16], strides = [1, 1]} : vector<8x484xf32> to vector<8x16xf32>
    %274 = vector.extract_strided_slice %266 {offsets = [0, 223], sizes = [8, 16], strides = [1, 1]} : vector<8x484xf32> to vector<8x16xf32>
    %275 = vector.extract_strided_slice %266 {offsets = [0, 245], sizes = [8, 16], strides = [1, 1]} : vector<8x484xf32> to vector<8x16xf32>
    %276 = vector.extract_strided_slice %266 {offsets = [0, 267], sizes = [8, 16], strides = [1, 1]} : vector<8x484xf32> to vector<8x16xf32>
    %277 = vector.extract_strided_slice %266 {offsets = [0, 289], sizes = [8, 16], strides = [1, 1]} : vector<8x484xf32> to vector<8x16xf32>
    %278 = vector.extract_strided_slice %266 {offsets = [0, 311], sizes = [8, 16], strides = [1, 1]} : vector<8x484xf32> to vector<8x16xf32>
    %279 = vector.extract_strided_slice %266 {offsets = [0, 333], sizes = [8, 16], strides = [1, 1]} : vector<8x484xf32> to vector<8x16xf32>
    %280 = vector.extract_strided_slice %266 {offsets = [0, 355], sizes = [8, 16], strides = [1, 1]} : vector<8x484xf32> to vector<8x16xf32>
    %281 = vector.extract_strided_slice %266 {offsets = [0, 377], sizes = [8, 16], strides = [1, 1]} : vector<8x484xf32> to vector<8x16xf32>
    %282 = vector.extract_strided_slice %266 {offsets = [0, 399], sizes = [8, 16], strides = [1, 1]} : vector<8x484xf32> to vector<8x16xf32>
    %283 = tpu.concatenate %267, %268, %269, %270, %271, %272, %273, %274, %275, %276, %277, %278, %279, %280, %281, %282 in 1 : vector<8x16xf32>, vector<8x16xf32>, vector<8x16xf32>, vector<8x16xf32>, vector<8x16xf32>, vector<8x16xf32>, vector<8x16xf32>, vector<8x16xf32>, vector<8x16xf32>, vector<8x16xf32>, vector<8x16xf32>, vector<8x16xf32>, vector<8x16xf32>, vector<8x16xf32>, vector<8x16xf32>, vector<8x16xf32> -> vector<8x256xf32>
    %cst_36 = arith.constant dense<0.000000e+00> : vector<8xf32>
    %284 = vector.multi_reduction <add>, %283, %cst_36 [1] : vector<8x256xf32> to vector<8xf32>
    %285 = vector.shape_cast %284 : vector<8xf32> to vector<8x1xf32>
    %cst_37 = arith.constant 2.560000e+02 : f32
    %286 = vector.broadcast %cst_37 : f32 to vector<8x1xf32>
    %287 = arith.divf %285, %286 : vector<8x1xf32>
    %288 = vector.broadcast %287 : vector<8x1xf32> to vector<8x256xf32>
    %289 = arith.subf %283, %288 : vector<8x256xf32>
    %290 = arith.mulf %289, %289 : vector<8x256xf32>
    %cst_38 = arith.constant dense<0.000000e+00> : vector<8xf32>
    %291 = vector.multi_reduction <add>, %290, %cst_38 [1] : vector<8x256xf32> to vector<8xf32>
    %292 = vector.shape_cast %291 : vector<8xf32> to vector<8x1xf32>
    %cst_39 = arith.constant 2.560000e+02 : f32
    %293 = vector.broadcast %cst_39 : f32 to vector<8x1xf32>
    %294 = arith.divf %292, %293 : vector<8x1xf32>
    %cst_40 = arith.constant 9.99999974E-6 : f32
    %295 = vector.broadcast %cst_40 : f32 to vector<8x1xf32>
    %296 = arith.addf %294, %295 : vector<8x1xf32>
    %297 = math.rsqrt %296 : vector<8x1xf32>
    %298 = vector.broadcast %297 : vector<8x1xf32> to vector<8x256xf32>
    %299 = arith.mulf %289, %298 : vector<8x256xf32>
    %300 = vector.broadcast %5 : vector<8x1xf32> to vector<8x256xf32>
    %301 = arith.mulf %299, %300 : vector<8x256xf32>
    %302 = vector.broadcast %6 : vector<8x1xf32> to vector<8x256xf32>
    %303 = arith.addf %301, %302 : vector<8x256xf32>
    %cst_41 = arith.constant 0.000000e+00 : f32
    %304 = vector.broadcast %cst_41 : f32 to vector<8x256xf32>
    %305 = arith.maximumf %303, %304 : vector<8x256xf32>
    %306 = vector.extract_strided_slice %305 {offsets = [0, 17], sizes = [8, 1], strides = [1, 1]} : vector<8x256xf32> to vector<8x1xf32>
    %307 = vector.extract_strided_slice %305 {offsets = [0, 16], sizes = [8, 16], strides = [1, 1]} : vector<8x256xf32> to vector<8x16xf32>
    %308 = vector.extract_strided_slice %305 {offsets = [0, 30], sizes = [8, 1], strides = [1, 1]} : vector<8x256xf32> to vector<8x1xf32>
    %309 = tpu.concatenate %306, %307, %308 in 1 : vector<8x1xf32>, vector<8x16xf32>, vector<8x1xf32> -> vector<8x18xf32>
    %c0_42 = arith.constant 0 : index
    %c19 = arith.constant 19 : index
    %310 = vector.load %arg8[%c0_42, %c19] : memref<8x622xf32, #tpu.memory_space<vmem>>, vector<8x18xf32>
    tpu.vector_store %arg8[%c0_42, %c19], %309 {strides = array<i32>} : memref<8x622xf32, #tpu.memory_space<vmem>>, vector<8x18xf32>,
    %311 = vector.extract_strided_slice %305 {offsets = [0, 1], sizes = [8, 1], strides = [1, 1]} : vector<8x256xf32> to vector<8x1xf32>
    %312 = vector.extract_strided_slice %305 {offsets = [0, 0], sizes = [8, 16], strides = [1, 1]} : vector<8x256xf32> to vector<8x16xf32>
    %313 = vector.extract_strided_slice %305 {offsets = [0, 14], sizes = [8, 1], strides = [1, 1]} : vector<8x256xf32> to vector<8x1xf32>
    %314 = tpu.concatenate %311, %312, %313 in 1 : vector<8x1xf32>, vector<8x16xf32>, vector<8x1xf32> -> vector<8x18xf32>
    %c0_43 = arith.constant 0 : index
    %c37 = arith.constant 37 : index
    %315 = vector.load %arg8[%c0_43, %c37] : memref<8x622xf32, #tpu.memory_space<vmem>>, vector<8x18xf32>
    tpu.vector_store %arg8[%c0_43, %c37], %314 {strides = array<i32>} : memref<8x622xf32, #tpu.memory_space<vmem>>, vector<8x18xf32>,
    %316 = vector.extract_strided_slice %305 {offsets = [0, 17], sizes = [8, 1], strides = [1, 1]} : vector<8x256xf32> to vector<8x1xf32>
    %317 = vector.extract_strided_slice %305 {offsets = [0, 16], sizes = [8, 16], strides = [1, 1]} : vector<8x256xf32> to vector<8x16xf32>
    %318 = vector.extract_strided_slice %305 {offsets = [0, 30], sizes = [8, 1], strides = [1, 1]} : vector<8x256xf32> to vector<8x1xf32>
    %319 = tpu.concatenate %316, %317, %318 in 1 : vector<8x1xf32>, vector<8x16xf32>, vector<8x1xf32> -> vector<8x18xf32>
    %c0_44 = arith.constant 0 : index
    %c55 = arith.constant 55 : index
    %320 = vector.load %arg8[%c0_44, %c55] : memref<8x622xf32, #tpu.memory_space<vmem>>, vector<8x18xf32>
    tpu.vector_store %arg8[%c0_44, %c55], %319 {strides = array<i32>} : memref<8x622xf32, #tpu.memory_space<vmem>>, vector<8x18xf32>,
    %321 = vector.extract_strided_slice %305 {offsets = [0, 33], sizes = [8, 1], strides = [1, 1]} : vector<8x256xf32> to vector<8x1xf32>
    %322 = vector.extract_strided_slice %305 {offsets = [0, 32], sizes = [8, 16], strides = [1, 1]} : vector<8x256xf32> to vector<8x16xf32>
    %323 = vector.extract_strided_slice %305 {offsets = [0, 46], sizes = [8, 1], strides = [1, 1]} : vector<8x256xf32> to vector<8x1xf32>
    %324 = tpu.concatenate %321, %322, %323 in 1 : vector<8x1xf32>, vector<8x16xf32>, vector<8x1xf32> -> vector<8x18xf32>
    %c0_45 = arith.constant 0 : index
    %c73 = arith.constant 73 : index
    %325 = vector.load %arg8[%c0_45, %c73] : memref<8x622xf32, #tpu.memory_space<vmem>>, vector<8x18xf32>
    tpu.vector_store %arg8[%c0_45, %c73], %324 {strides = array<i32>} : memref<8x622xf32, #tpu.memory_space<vmem>>, vector<8x18xf32>,
    %326 = vector.extract_strided_slice %305 {offsets = [0, 49], sizes = [8, 1], strides = [1, 1]} : vector<8x256xf32> to vector<8x1xf32>
    %327 = vector.extract_strided_slice %305 {offsets = [0, 48], sizes = [8, 16], strides = [1, 1]} : vector<8x256xf32> to vector<8x16xf32>
    %328 = vector.extract_strided_slice %305 {offsets = [0, 62], sizes = [8, 1], strides = [1, 1]} : vector<8x256xf32> to vector<8x1xf32>
    %329 = tpu.concatenate %326, %327, %328 in 1 : vector<8x1xf32>, vector<8x16xf32>, vector<8x1xf32> -> vector<8x18xf32>
    %c0_46 = arith.constant 0 : index
    %c91_47 = arith.constant 91 : index
    %330 = vector.load %arg8[%c0_46, %c91_47] : memref<8x622xf32, #tpu.memory_space<vmem>>, vector<8x18xf32>
    tpu.vector_store %arg8[%c0_46, %c91_47], %329 {strides = array<i32>} : memref<8x622xf32, #tpu.memory_space<vmem>>, vector<8x18xf32>,
    %331 = vector.extract_strided_slice %305 {offsets = [0, 65], sizes = [8, 1], strides = [1, 1]} : vector<8x256xf32> to vector<8x1xf32>
    %332 = vector.extract_strided_slice %305 {offsets = [0, 64], sizes = [8, 16], strides = [1, 1]} : vector<8x256xf32> to vector<8x16xf32>
    %333 = vector.extract_strided_slice %305 {offsets = [0, 78], sizes = [8, 1], strides = [1, 1]} : vector<8x256xf32> to vector<8x1xf32>
    %334 = tpu.concatenate %331, %332, %333 in 1 : vector<8x1xf32>, vector<8x16xf32>, vector<8x1xf32> -> vector<8x18xf32>
    %c0_48 = arith.constant 0 : index
    %c109 = arith.constant 109 : index
    %335 = vector.load %arg8[%c0_48, %c109] : memref<8x622xf32, #tpu.memory_space<vmem>>, vector<8x18xf32>
    tpu.vector_store %arg8[%c0_48, %c109], %334 {strides = array<i32>} : memref<8x622xf32, #tpu.memory_space<vmem>>, vector<8x18xf32>,
    %336 = vector.extract_strided_slice %305 {offsets = [0, 81], sizes = [8, 1], strides = [1, 1]} : vector<8x256xf32> to vector<8x1xf32>
    %337 = vector.extract_strided_slice %305 {offsets = [0, 80], sizes = [8, 16], strides = [1, 1]} : vector<8x256xf32> to vector<8x16xf32>
    %338 = vector.extract_strided_slice %305 {offsets = [0, 94], sizes = [8, 1], strides = [1, 1]} : vector<8x256xf32> to vector<8x1xf32>
    %339 = tpu.concatenate %336, %337, %338 in 1 : vector<8x1xf32>, vector<8x16xf32>, vector<8x1xf32> -> vector<8x18xf32>
    %c0_49 = arith.constant 0 : index
    %c127 = arith.constant 127 : index
    %340 = vector.load %arg8[%c0_49, %c127] : memref<8x622xf32, #tpu.memory_space<vmem>>, vector<8x18xf32>
    tpu.vector_store %arg8[%c0_49, %c127], %339 {strides = array<i32>} : memref<8x622xf32, #tpu.memory_space<vmem>>, vector<8x18xf32>,
    %341 = vector.extract_strided_slice %305 {offsets = [0, 97], sizes = [8, 1], strides = [1, 1]} : vector<8x256xf32> to vector<8x1xf32>
    %342 = vector.extract_strided_slice %305 {offsets = [0, 96], sizes = [8, 16], strides = [1, 1]} : vector<8x256xf32> to vector<8x16xf32>
    %343 = vector.extract_strided_slice %305 {offsets = [0, 110], sizes = [8, 1], strides = [1, 1]} : vector<8x256xf32> to vector<8x1xf32>
    %344 = tpu.concatenate %341, %342, %343 in 1 : vector<8x1xf32>, vector<8x16xf32>, vector<8x1xf32> -> vector<8x18xf32>
    %c0_50 = arith.constant 0 : index
    %c145 = arith.constant 145 : index
    %345 = vector.load %arg8[%c0_50, %c145] : memref<8x622xf32, #tpu.memory_space<vmem>>, vector<8x18xf32>
    tpu.vector_store %arg8[%c0_50, %c145], %344 {strides = array<i32>} : memref<8x622xf32, #tpu.memory_space<vmem>>, vector<8x18xf32>,
    %346 = vector.extract_strided_slice %305 {offsets = [0, 113], sizes = [8, 1], strides = [1, 1]} : vector<8x256xf32> to vector<8x1xf32>
    %347 = vector.extract_strided_slice %305 {offsets = [0, 112], sizes = [8, 16], strides = [1, 1]} : vector<8x256xf32> to vector<8x16xf32>
    %348 = vector.extract_strided_slice %305 {offsets = [0, 126], sizes = [8, 1], strides = [1, 1]} : vector<8x256xf32> to vector<8x1xf32>
    %349 = tpu.concatenate %346, %347, %348 in 1 : vector<8x1xf32>, vector<8x16xf32>, vector<8x1xf32> -> vector<8x18xf32>
    %c0_51 = arith.constant 0 : index
    %c163 = arith.constant 163 : index
    %350 = vector.load %arg8[%c0_51, %c163] : memref<8x622xf32, #tpu.memory_space<vmem>>, vector<8x18xf32>
    tpu.vector_store %arg8[%c0_51, %c163], %349 {strides = array<i32>} : memref<8x622xf32, #tpu.memory_space<vmem>>, vector<8x18xf32>,
    %351 = vector.extract_strided_slice %305 {offsets = [0, 129], sizes = [8, 1], strides = [1, 1]} : vector<8x256xf32> to vector<8x1xf32>
    %352 = vector.extract_strided_slice %305 {offsets = [0, 128], sizes = [8, 16], strides = [1, 1]} : vector<8x256xf32> to vector<8x16xf32>
    %353 = vector.extract_strided_slice %305 {offsets = [0, 142], sizes = [8, 1], strides = [1, 1]} : vector<8x256xf32> to vector<8x1xf32>
    %354 = tpu.concatenate %351, %352, %353 in 1 : vector<8x1xf32>, vector<8x16xf32>, vector<8x1xf32> -> vector<8x18xf32>
    %c0_52 = arith.constant 0 : index
    %c181 = arith.constant 181 : index
    %355 = vector.load %arg8[%c0_52, %c181] : memref<8x622xf32, #tpu.memory_space<vmem>>, vector<8x18xf32>
    tpu.vector_store %arg8[%c0_52, %c181], %354 {strides = array<i32>} : memref<8x622xf32, #tpu.memory_space<vmem>>, vector<8x18xf32>,
    %356 = vector.extract_strided_slice %305 {offsets = [0, 145], sizes = [8, 1], strides = [1, 1]} : vector<8x256xf32> to vector<8x1xf32>
    %357 = vector.extract_strided_slice %305 {offsets = [0, 144], sizes = [8, 16], strides = [1, 1]} : vector<8x256xf32> to vector<8x16xf32>
    %358 = vector.extract_strided_slice %305 {offsets = [0, 158], sizes = [8, 1], strides = [1, 1]} : vector<8x256xf32> to vector<8x1xf32>
    %359 = tpu.concatenate %356, %357, %358 in 1 : vector<8x1xf32>, vector<8x16xf32>, vector<8x1xf32> -> vector<8x18xf32>
    %c0_53 = arith.constant 0 : index
    %c199 = arith.constant 199 : index
    %360 = vector.load %arg8[%c0_53, %c199] : memref<8x622xf32, #tpu.memory_space<vmem>>, vector<8x18xf32>
    tpu.vector_store %arg8[%c0_53, %c199], %359 {strides = array<i32>} : memref<8x622xf32, #tpu.memory_space<vmem>>, vector<8x18xf32>,
    %361 = vector.extract_strided_slice %305 {offsets = [0, 161], sizes = [8, 1], strides = [1, 1]} : vector<8x256xf32> to vector<8x1xf32>
    %362 = vector.extract_strided_slice %305 {offsets = [0, 160], sizes = [8, 16], strides = [1, 1]} : vector<8x256xf32> to vector<8x16xf32>
    %363 = vector.extract_strided_slice %305 {offsets = [0, 174], sizes = [8, 1], strides = [1, 1]} : vector<8x256xf32> to vector<8x1xf32>
    %364 = tpu.concatenate %361, %362, %363 in 1 : vector<8x1xf32>, vector<8x16xf32>, vector<8x1xf32> -> vector<8x18xf32>
    %c0_54 = arith.constant 0 : index
    %c217 = arith.constant 217 : index
    %365 = vector.load %arg8[%c0_54, %c217] : memref<8x622xf32, #tpu.memory_space<vmem>>, vector<8x18xf32>
    tpu.vector_store %arg8[%c0_54, %c217], %364 {strides = array<i32>} : memref<8x622xf32, #tpu.memory_space<vmem>>, vector<8x18xf32>,
    %366 = vector.extract_strided_slice %305 {offsets = [0, 177], sizes = [8, 1], strides = [1, 1]} : vector<8x256xf32> to vector<8x1xf32>
    %367 = vector.extract_strided_slice %305 {offsets = [0, 176], sizes = [8, 16], strides = [1, 1]} : vector<8x256xf32> to vector<8x16xf32>
    %368 = vector.extract_strided_slice %305 {offsets = [0, 190], sizes = [8, 1], strides = [1, 1]} : vector<8x256xf32> to vector<8x1xf32>
    %369 = tpu.concatenate %366, %367, %368 in 1 : vector<8x1xf32>, vector<8x16xf32>, vector<8x1xf32> -> vector<8x18xf32>
    %c0_55 = arith.constant 0 : index
    %c235 = arith.constant 235 : index
    %370 = vector.load %arg8[%c0_55, %c235] : memref<8x622xf32, #tpu.memory_space<vmem>>, vector<8x18xf32>
    tpu.vector_store %arg8[%c0_55, %c235], %369 {strides = array<i32>} : memref<8x622xf32, #tpu.memory_space<vmem>>, vector<8x18xf32>,
    %371 = vector.extract_strided_slice %305 {offsets = [0, 193], sizes = [8, 1], strides = [1, 1]} : vector<8x256xf32> to vector<8x1xf32>
    %372 = vector.extract_strided_slice %305 {offsets = [0, 192], sizes = [8, 16], strides = [1, 1]} : vector<8x256xf32> to vector<8x16xf32>
    %373 = vector.extract_strided_slice %305 {offsets = [0, 206], sizes = [8, 1], strides = [1, 1]} : vector<8x256xf32> to vector<8x1xf32>
    %374 = tpu.concatenate %371, %372, %373 in 1 : vector<8x1xf32>, vector<8x16xf32>, vector<8x1xf32> -> vector<8x18xf32>
    %c0_56 = arith.constant 0 : index
    %c253 = arith.constant 253 : index
    %375 = vector.load %arg8[%c0_56, %c253] : memref<8x622xf32, #tpu.memory_space<vmem>>, vector<8x18xf32>
    tpu.vector_store %arg8[%c0_56, %c253], %374 {strides = array<i32>} : memref<8x622xf32, #tpu.memory_space<vmem>>, vector<8x18xf32>,
    %376 = vector.extract_strided_slice %305 {offsets = [0, 209], sizes = [8, 1], strides = [1, 1]} : vector<8x256xf32> to vector<8x1xf32>
    %377 = vector.extract_strided_slice %305 {offsets = [0, 208], sizes = [8, 16], strides = [1, 1]} : vector<8x256xf32> to vector<8x16xf32>
    %378 = vector.extract_strided_slice %305 {offsets = [0, 222], sizes = [8, 1], strides = [1, 1]} : vector<8x256xf32> to vector<8x1xf32>
    %379 = tpu.concatenate %376, %377, %378 in 1 : vector<8x1xf32>, vector<8x16xf32>, vector<8x1xf32> -> vector<8x18xf32>
    %c0_57 = arith.constant 0 : index
    %c271 = arith.constant 271 : index
    %380 = vector.load %arg8[%c0_57, %c271] : memref<8x622xf32, #tpu.memory_space<vmem>>, vector<8x18xf32>
    tpu.vector_store %arg8[%c0_57, %c271], %379 {strides = array<i32>} : memref<8x622xf32, #tpu.memory_space<vmem>>, vector<8x18xf32>,
    %381 = vector.extract_strided_slice %305 {offsets = [0, 225], sizes = [8, 1], strides = [1, 1]} : vector<8x256xf32> to vector<8x1xf32>
    %382 = vector.extract_strided_slice %305 {offsets = [0, 224], sizes = [8, 16], strides = [1, 1]} : vector<8x256xf32> to vector<8x16xf32>
    %383 = vector.extract_strided_slice %305 {offsets = [0, 238], sizes = [8, 1], strides = [1, 1]} : vector<8x256xf32> to vector<8x1xf32>
    %384 = tpu.concatenate %381, %382, %383 in 1 : vector<8x1xf32>, vector<8x16xf32>, vector<8x1xf32> -> vector<8x18xf32>
    %c0_58 = arith.constant 0 : index
    %c289_59 = arith.constant 289 : index
    %385 = vector.load %arg8[%c0_58, %c289_59] : memref<8x622xf32, #tpu.memory_space<vmem>>, vector<8x18xf32>
    tpu.vector_store %arg8[%c0_58, %c289_59], %384 {strides = array<i32>} : memref<8x622xf32, #tpu.memory_space<vmem>>, vector<8x18xf32>,
    %386 = vector.extract_strided_slice %305 {offsets = [0, 241], sizes = [8, 1], strides = [1, 1]} : vector<8x256xf32> to vector<8x1xf32>
    %387 = vector.extract_strided_slice %305 {offsets = [0, 240], sizes = [8, 16], strides = [1, 1]} : vector<8x256xf32> to vector<8x16xf32>
    %388 = vector.extract_strided_slice %305 {offsets = [0, 254], sizes = [8, 1], strides = [1, 1]} : vector<8x256xf32> to vector<8x1xf32>
    %389 = tpu.concatenate %386, %387, %388 in 1 : vector<8x1xf32>, vector<8x16xf32>, vector<8x1xf32> -> vector<8x18xf32>
    %c0_60 = arith.constant 0 : index
    %c307 = arith.constant 307 : index
    %390 = vector.load %arg8[%c0_60, %c307] : memref<8x622xf32, #tpu.memory_space<vmem>>, vector<8x18xf32>
    tpu.vector_store %arg8[%c0_60, %c307], %389 {strides = array<i32>} : memref<8x622xf32, #tpu.memory_space<vmem>>, vector<8x18xf32>,
    %391 = vector.extract_strided_slice %305 {offsets = [0, 225], sizes = [8, 1], strides = [1, 1]} : vector<8x256xf32> to vector<8x1xf32>
    %392 = vector.extract_strided_slice %305 {offsets = [0, 224], sizes = [8, 16], strides = [1, 1]} : vector<8x256xf32> to vector<8x16xf32>
    %393 = vector.extract_strided_slice %305 {offsets = [0, 238], sizes = [8, 1], strides = [1, 1]} : vector<8x256xf32> to vector<8x1xf32>
    %394 = tpu.concatenate %391, %392, %393 in 1 : vector<8x1xf32>, vector<8x16xf32>, vector<8x1xf32> -> vector<8x18xf32>
    %c0_61 = arith.constant 0 : index
    %c325 = arith.constant 325 : index
    %395 = vector.load %arg8[%c0_61, %c325] : memref<8x622xf32, #tpu.memory_space<vmem>>, vector<8x18xf32>
    tpu.vector_store %arg8[%c0_61, %c325], %394 {strides = array<i32>} : memref<8x622xf32, #tpu.memory_space<vmem>>, vector<8x18xf32>,
    %c0_62 = arith.constant 0 : index
    %c0_63 = arith.constant 0 : index
    %396 = vector.load %arg8[%c0_62, %c0_63] : memref<8x622xf32, #tpu.memory_space<vmem>>, vector<8x362xf32>
    %397 = vector.extract_strided_slice %396 {offsets = [0, 0], sizes = [8, 324], strides = [1, 1]} : vector<8x362xf32> to vector<8x324xf32>
    %398 = vector.extract_strided_slice %396 {offsets = [0, 1], sizes = [8, 324], strides = [1, 1]} : vector<8x362xf32> to vector<8x324xf32>
    %399 = vector.extract_strided_slice %396 {offsets = [0, 2], sizes = [8, 324], strides = [1, 1]} : vector<8x362xf32> to vector<8x324xf32>
    %400 = vector.extract_strided_slice %396 {offsets = [0, 18], sizes = [8, 324], strides = [1, 1]} : vector<8x362xf32> to vector<8x324xf32>
    %401 = vector.extract_strided_slice %396 {offsets = [0, 19], sizes = [8, 324], strides = [1, 1]} : vector<8x362xf32> to vector<8x324xf32>
    %402 = vector.extract_strided_slice %396 {offsets = [0, 20], sizes = [8, 324], strides = [1, 1]} : vector<8x362xf32> to vector<8x324xf32>
    %403 = vector.extract_strided_slice %396 {offsets = [0, 36], sizes = [8, 324], strides = [1, 1]} : vector<8x362xf32> to vector<8x324xf32>
    %404 = vector.extract_strided_slice %396 {offsets = [0, 37], sizes = [8, 324], strides = [1, 1]} : vector<8x362xf32> to vector<8x324xf32>
    %405 = vector.extract_strided_slice %396 {offsets = [0, 38], sizes = [8, 324], strides = [1, 1]} : vector<8x362xf32> to vector<8x324xf32>
    %406 = tpu.concatenate %397, %398, %399, %400, %401, %402, %403, %404, %405 in 0 : vector<8x324xf32>, vector<8x324xf32>, vector<8x324xf32>, vector<8x324xf32>, vector<8x324xf32>, vector<8x324xf32>, vector<8x324xf32>, vector<8x324xf32>, vector<8x324xf32> -> vector<72x324xf32>
    %cst_64 = arith.constant dense<0.000000e+00> : vector<8x324xf32>
    %407 = tpu.matmul %1, %406, %cst_64 {dimension_numbers = #tpu.dot_dimension_numbers<[1], [0], [0], [1], [0, 0, 1, 1], [], []>} : vector<8x72xf32>, vector<72x324xf32>, vector<8x324xf32> -> vector<8x324xf32>
    %408 = vector.extract_strided_slice %407 {offsets = [0, 19], sizes = [8, 16], strides = [1, 1]} : vector<8x324xf32> to vector<8x16xf32>
    %409 = vector.extract_strided_slice %407 {offsets = [0, 37], sizes = [8, 16], strides = [1, 1]} : vector<8x324xf32> to vector<8x16xf32>
    %410 = vector.extract_strided_slice %407 {offsets = [0, 55], sizes = [8, 16], strides = [1, 1]} : vector<8x324xf32> to vector<8x16xf32>
    %411 = vector.extract_strided_slice %407 {offsets = [0, 73], sizes = [8, 16], strides = [1, 1]} : vector<8x324xf32> to vector<8x16xf32>
    %412 = vector.extract_strided_slice %407 {offsets = [0, 91], sizes = [8, 16], strides = [1, 1]} : vector<8x324xf32> to vector<8x16xf32>
    %413 = vector.extract_strided_slice %407 {offsets = [0, 109], sizes = [8, 16], strides = [1, 1]} : vector<8x324xf32> to vector<8x16xf32>
    %414 = vector.extract_strided_slice %407 {offsets = [0, 127], sizes = [8, 16], strides = [1, 1]} : vector<8x324xf32> to vector<8x16xf32>
    %415 = vector.extract_strided_slice %407 {offsets = [0, 145], sizes = [8, 16], strides = [1, 1]} : vector<8x324xf32> to vector<8x16xf32>
    %416 = vector.extract_strided_slice %407 {offsets = [0, 163], sizes = [8, 16], strides = [1, 1]} : vector<8x324xf32> to vector<8x16xf32>
    %417 = vector.extract_strided_slice %407 {offsets = [0, 181], sizes = [8, 16], strides = [1, 1]} : vector<8x324xf32> to vector<8x16xf32>
    %418 = vector.extract_strided_slice %407 {offsets = [0, 199], sizes = [8, 16], strides = [1, 1]} : vector<8x324xf32> to vector<8x16xf32>
    %419 = vector.extract_strided_slice %407 {offsets = [0, 217], sizes = [8, 16], strides = [1, 1]} : vector<8x324xf32> to vector<8x16xf32>
    %420 = vector.extract_strided_slice %407 {offsets = [0, 235], sizes = [8, 16], strides = [1, 1]} : vector<8x324xf32> to vector<8x16xf32>
    %421 = vector.extract_strided_slice %407 {offsets = [0, 253], sizes = [8, 16], strides = [1, 1]} : vector<8x324xf32> to vector<8x16xf32>
    %422 = vector.extract_strided_slice %407 {offsets = [0, 271], sizes = [8, 16], strides = [1, 1]} : vector<8x324xf32> to vector<8x16xf32>
    %423 = vector.extract_strided_slice %407 {offsets = [0, 289], sizes = [8, 16], strides = [1, 1]} : vector<8x324xf32> to vector<8x16xf32>
    %424 = tpu.concatenate %408, %409, %410, %411, %412, %413, %414, %415, %416, %417, %418, %419, %420, %421, %422, %423 in 1 : vector<8x16xf32>, vector<8x16xf32>, vector<8x16xf32>, vector<8x16xf32>, vector<8x16xf32>, vector<8x16xf32>, vector<8x16xf32>, vector<8x16xf32>, vector<8x16xf32>, vector<8x16xf32>, vector<8x16xf32>, vector<8x16xf32>, vector<8x16xf32>, vector<8x16xf32>, vector<8x16xf32>, vector<8x16xf32> -> vector<8x256xf32>
    %cst_65 = arith.constant dense<0.000000e+00> : vector<8xf32>
    %425 = vector.multi_reduction <add>, %424, %cst_65 [1] : vector<8x256xf32> to vector<8xf32>
    %426 = vector.shape_cast %425 : vector<8xf32> to vector<8x1xf32>
    %cst_66 = arith.constant 2.560000e+02 : f32
    %427 = vector.broadcast %cst_66 : f32 to vector<8x1xf32>
    %428 = arith.divf %426, %427 : vector<8x1xf32>
    %429 = vector.broadcast %428 : vector<8x1xf32> to vector<8x256xf32>
    %430 = arith.subf %424, %429 : vector<8x256xf32>
    %431 = arith.mulf %430, %430 : vector<8x256xf32>
    %cst_67 = arith.constant dense<0.000000e+00> : vector<8xf32>
    %432 = vector.multi_reduction <add>, %431, %cst_67 [1] : vector<8x256xf32> to vector<8xf32>
    %433 = vector.shape_cast %432 : vector<8xf32> to vector<8x1xf32>
    %cst_68 = arith.constant 2.560000e+02 : f32
    %434 = vector.broadcast %cst_68 : f32 to vector<8x1xf32>
    %435 = arith.divf %433, %434 : vector<8x1xf32>
    %cst_69 = arith.constant 9.99999974E-6 : f32
    %436 = vector.broadcast %cst_69 : f32 to vector<8x1xf32>
    %437 = arith.addf %435, %436 : vector<8x1xf32>
    %438 = math.rsqrt %437 : vector<8x1xf32>
    %439 = vector.broadcast %438 : vector<8x1xf32> to vector<8x256xf32>
    %440 = arith.mulf %430, %439 : vector<8x256xf32>
    %441 = vector.broadcast %7 : vector<8x1xf32> to vector<8x256xf32>
    %442 = arith.mulf %440, %441 : vector<8x256xf32>
    %443 = vector.broadcast %8 : vector<8x1xf32> to vector<8x256xf32>
    %444 = arith.addf %442, %443 : vector<8x256xf32>
    %cst_70 = arith.constant 0.000000e+00 : f32
    %445 = vector.broadcast %cst_70 : f32 to vector<8x256xf32>
    %446 = arith.maximumf %444, %445 : vector<8x256xf32>
    %447 = vector.extract_strided_slice %446 {offsets = [0, 17], sizes = [8, 1], strides = [1, 1]} : vector<8x256xf32> to vector<8x1xf32>
    %448 = vector.extract_strided_slice %446 {offsets = [0, 16], sizes = [8, 16], strides = [1, 1]} : vector<8x256xf32> to vector<8x16xf32>
    %449 = vector.extract_strided_slice %446 {offsets = [0, 30], sizes = [8, 1], strides = [1, 1]} : vector<8x256xf32> to vector<8x1xf32>
    %450 = tpu.concatenate %447, %448, %449 in 1 : vector<8x1xf32>, vector<8x16xf32>, vector<8x1xf32> -> vector<8x18xf32>
    %c0_71 = arith.constant 0 : index
    %c19_72 = arith.constant 19 : index
    %451 = vector.load %arg8[%c0_71, %c19_72] : memref<8x622xf32, #tpu.memory_space<vmem>>, vector<8x18xf32>
    tpu.vector_store %arg8[%c0_71, %c19_72], %450 {strides = array<i32>} : memref<8x622xf32, #tpu.memory_space<vmem>>, vector<8x18xf32>,
    %452 = vector.extract_strided_slice %446 {offsets = [0, 1], sizes = [8, 1], strides = [1, 1]} : vector<8x256xf32> to vector<8x1xf32>
    %453 = vector.extract_strided_slice %446 {offsets = [0, 0], sizes = [8, 16], strides = [1, 1]} : vector<8x256xf32> to vector<8x16xf32>
    %454 = vector.extract_strided_slice %446 {offsets = [0, 14], sizes = [8, 1], strides = [1, 1]} : vector<8x256xf32> to vector<8x1xf32>
    %455 = tpu.concatenate %452, %453, %454 in 1 : vector<8x1xf32>, vector<8x16xf32>, vector<8x1xf32> -> vector<8x18xf32>
    %c0_73 = arith.constant 0 : index
    %c37_74 = arith.constant 37 : index
    %456 = vector.load %arg8[%c0_73, %c37_74] : memref<8x622xf32, #tpu.memory_space<vmem>>, vector<8x18xf32>
    tpu.vector_store %arg8[%c0_73, %c37_74], %455 {strides = array<i32>} : memref<8x622xf32, #tpu.memory_space<vmem>>, vector<8x18xf32>,
    %457 = vector.extract_strided_slice %446 {offsets = [0, 17], sizes = [8, 1], strides = [1, 1]} : vector<8x256xf32> to vector<8x1xf32>
    %458 = vector.extract_strided_slice %446 {offsets = [0, 16], sizes = [8, 16], strides = [1, 1]} : vector<8x256xf32> to vector<8x16xf32>
    %459 = vector.extract_strided_slice %446 {offsets = [0, 30], sizes = [8, 1], strides = [1, 1]} : vector<8x256xf32> to vector<8x1xf32>
    %460 = tpu.concatenate %457, %458, %459 in 1 : vector<8x1xf32>, vector<8x16xf32>, vector<8x1xf32> -> vector<8x18xf32>
    %c0_75 = arith.constant 0 : index
    %c55_76 = arith.constant 55 : index
    %461 = vector.load %arg8[%c0_75, %c55_76] : memref<8x622xf32, #tpu.memory_space<vmem>>, vector<8x18xf32>
    tpu.vector_store %arg8[%c0_75, %c55_76], %460 {strides = array<i32>} : memref<8x622xf32, #tpu.memory_space<vmem>>, vector<8x18xf32>,
    %462 = vector.extract_strided_slice %446 {offsets = [0, 33], sizes = [8, 1], strides = [1, 1]} : vector<8x256xf32> to vector<8x1xf32>
    %463 = vector.extract_strided_slice %446 {offsets = [0, 32], sizes = [8, 16], strides = [1, 1]} : vector<8x256xf32> to vector<8x16xf32>
    %464 = vector.extract_strided_slice %446 {offsets = [0, 46], sizes = [8, 1], strides = [1, 1]} : vector<8x256xf32> to vector<8x1xf32>
    %465 = tpu.concatenate %462, %463, %464 in 1 : vector<8x1xf32>, vector<8x16xf32>, vector<8x1xf32> -> vector<8x18xf32>
    %c0_77 = arith.constant 0 : index
    %c73_78 = arith.constant 73 : index
    %466 = vector.load %arg8[%c0_77, %c73_78] : memref<8x622xf32, #tpu.memory_space<vmem>>, vector<8x18xf32>
    tpu.vector_store %arg8[%c0_77, %c73_78], %465 {strides = array<i32>} : memref<8x622xf32, #tpu.memory_space<vmem>>, vector<8x18xf32>,
    %467 = vector.extract_strided_slice %446 {offsets = [0, 49], sizes = [8, 1], strides = [1, 1]} : vector<8x256xf32> to vector<8x1xf32>
    %468 = vector.extract_strided_slice %446 {offsets = [0, 48], sizes = [8, 16], strides = [1, 1]} : vector<8x256xf32> to vector<8x16xf32>
    %469 = vector.extract_strided_slice %446 {offsets = [0, 62], sizes = [8, 1], strides = [1, 1]} : vector<8x256xf32> to vector<8x1xf32>
    %470 = tpu.concatenate %467, %468, %469 in 1 : vector<8x1xf32>, vector<8x16xf32>, vector<8x1xf32> -> vector<8x18xf32>
    %c0_79 = arith.constant 0 : index
    %c91_80 = arith.constant 91 : index
    %471 = vector.load %arg8[%c0_79, %c91_80] : memref<8x622xf32, #tpu.memory_space<vmem>>, vector<8x18xf32>
    tpu.vector_store %arg8[%c0_79, %c91_80], %470 {strides = array<i32>} : memref<8x622xf32, #tpu.memory_space<vmem>>, vector<8x18xf32>,
    %472 = vector.extract_strided_slice %446 {offsets = [0, 65], sizes = [8, 1], strides = [1, 1]} : vector<8x256xf32> to vector<8x1xf32>
    %473 = vector.extract_strided_slice %446 {offsets = [0, 64], sizes = [8, 16], strides = [1, 1]} : vector<8x256xf32> to vector<8x16xf32>
    %474 = vector.extract_strided_slice %446 {offsets = [0, 78], sizes = [8, 1], strides = [1, 1]} : vector<8x256xf32> to vector<8x1xf32>
    %475 = tpu.concatenate %472, %473, %474 in 1 : vector<8x1xf32>, vector<8x16xf32>, vector<8x1xf32> -> vector<8x18xf32>
    %c0_81 = arith.constant 0 : index
    %c109_82 = arith.constant 109 : index
    %476 = vector.load %arg8[%c0_81, %c109_82] : memref<8x622xf32, #tpu.memory_space<vmem>>, vector<8x18xf32>
    tpu.vector_store %arg8[%c0_81, %c109_82], %475 {strides = array<i32>} : memref<8x622xf32, #tpu.memory_space<vmem>>, vector<8x18xf32>,
    %477 = vector.extract_strided_slice %446 {offsets = [0, 81], sizes = [8, 1], strides = [1, 1]} : vector<8x256xf32> to vector<8x1xf32>
    %478 = vector.extract_strided_slice %446 {offsets = [0, 80], sizes = [8, 16], strides = [1, 1]} : vector<8x256xf32> to vector<8x16xf32>
    %479 = vector.extract_strided_slice %446 {offsets = [0, 94], sizes = [8, 1], strides = [1, 1]} : vector<8x256xf32> to vector<8x1xf32>
    %480 = tpu.concatenate %477, %478, %479 in 1 : vector<8x1xf32>, vector<8x16xf32>, vector<8x1xf32> -> vector<8x18xf32>
    %c0_83 = arith.constant 0 : index
    %c127_84 = arith.constant 127 : index
    %481 = vector.load %arg8[%c0_83, %c127_84] : memref<8x622xf32, #tpu.memory_space<vmem>>, vector<8x18xf32>
    tpu.vector_store %arg8[%c0_83, %c127_84], %480 {strides = array<i32>} : memref<8x622xf32, #tpu.memory_space<vmem>>, vector<8x18xf32>,
    %482 = vector.extract_strided_slice %446 {offsets = [0, 97], sizes = [8, 1], strides = [1, 1]} : vector<8x256xf32> to vector<8x1xf32>
    %483 = vector.extract_strided_slice %446 {offsets = [0, 96], sizes = [8, 16], strides = [1, 1]} : vector<8x256xf32> to vector<8x16xf32>
    %484 = vector.extract_strided_slice %446 {offsets = [0, 110], sizes = [8, 1], strides = [1, 1]} : vector<8x256xf32> to vector<8x1xf32>
    %485 = tpu.concatenate %482, %483, %484 in 1 : vector<8x1xf32>, vector<8x16xf32>, vector<8x1xf32> -> vector<8x18xf32>
    %c0_85 = arith.constant 0 : index
    %c145_86 = arith.constant 145 : index
    %486 = vector.load %arg8[%c0_85, %c145_86] : memref<8x622xf32, #tpu.memory_space<vmem>>, vector<8x18xf32>
    tpu.vector_store %arg8[%c0_85, %c145_86], %485 {strides = array<i32>} : memref<8x622xf32, #tpu.memory_space<vmem>>, vector<8x18xf32>,
    %487 = vector.extract_strided_slice %446 {offsets = [0, 113], sizes = [8, 1], strides = [1, 1]} : vector<8x256xf32> to vector<8x1xf32>
    %488 = vector.extract_strided_slice %446 {offsets = [0, 112], sizes = [8, 16], strides = [1, 1]} : vector<8x256xf32> to vector<8x16xf32>
    %489 = vector.extract_strided_slice %446 {offsets = [0, 126], sizes = [8, 1], strides = [1, 1]} : vector<8x256xf32> to vector<8x1xf32>
    %490 = tpu.concatenate %487, %488, %489 in 1 : vector<8x1xf32>, vector<8x16xf32>, vector<8x1xf32> -> vector<8x18xf32>
    %c0_87 = arith.constant 0 : index
    %c163_88 = arith.constant 163 : index
    %491 = vector.load %arg8[%c0_87, %c163_88] : memref<8x622xf32, #tpu.memory_space<vmem>>, vector<8x18xf32>
    tpu.vector_store %arg8[%c0_87, %c163_88], %490 {strides = array<i32>} : memref<8x622xf32, #tpu.memory_space<vmem>>, vector<8x18xf32>,
    %492 = vector.extract_strided_slice %446 {offsets = [0, 129], sizes = [8, 1], strides = [1, 1]} : vector<8x256xf32> to vector<8x1xf32>
    %493 = vector.extract_strided_slice %446 {offsets = [0, 128], sizes = [8, 16], strides = [1, 1]} : vector<8x256xf32> to vector<8x16xf32>
    %494 = vector.extract_strided_slice %446 {offsets = [0, 142], sizes = [8, 1], strides = [1, 1]} : vector<8x256xf32> to vector<8x1xf32>
    %495 = tpu.concatenate %492, %493, %494 in 1 : vector<8x1xf32>, vector<8x16xf32>, vector<8x1xf32> -> vector<8x18xf32>
    %c0_89 = arith.constant 0 : index
    %c181_90 = arith.constant 181 : index
    %496 = vector.load %arg8[%c0_89, %c181_90] : memref<8x622xf32, #tpu.memory_space<vmem>>, vector<8x18xf32>
    tpu.vector_store %arg8[%c0_89, %c181_90], %495 {strides = array<i32>} : memref<8x622xf32, #tpu.memory_space<vmem>>, vector<8x18xf32>,
    %497 = vector.extract_strided_slice %446 {offsets = [0, 145], sizes = [8, 1], strides = [1, 1]} : vector<8x256xf32> to vector<8x1xf32>
    %498 = vector.extract_strided_slice %446 {offsets = [0, 144], sizes = [8, 16], strides = [1, 1]} : vector<8x256xf32> to vector<8x16xf32>
    %499 = vector.extract_strided_slice %446 {offsets = [0, 158], sizes = [8, 1], strides = [1, 1]} : vector<8x256xf32> to vector<8x1xf32>
    %500 = tpu.concatenate %497, %498, %499 in 1 : vector<8x1xf32>, vector<8x16xf32>, vector<8x1xf32> -> vector<8x18xf32>
    %c0_91 = arith.constant 0 : index
    %c199_92 = arith.constant 199 : index
    %501 = vector.load %arg8[%c0_91, %c199_92] : memref<8x622xf32, #tpu.memory_space<vmem>>, vector<8x18xf32>
    tpu.vector_store %arg8[%c0_91, %c199_92], %500 {strides = array<i32>} : memref<8x622xf32, #tpu.memory_space<vmem>>, vector<8x18xf32>,
    %502 = vector.extract_strided_slice %446 {offsets = [0, 161], sizes = [8, 1], strides = [1, 1]} : vector<8x256xf32> to vector<8x1xf32>
    %503 = vector.extract_strided_slice %446 {offsets = [0, 160], sizes = [8, 16], strides = [1, 1]} : vector<8x256xf32> to vector<8x16xf32>
    %504 = vector.extract_strided_slice %446 {offsets = [0, 174], sizes = [8, 1], strides = [1, 1]} : vector<8x256xf32> to vector<8x1xf32>
    %505 = tpu.concatenate %502, %503, %504 in 1 : vector<8x1xf32>, vector<8x16xf32>, vector<8x1xf32> -> vector<8x18xf32>
    %c0_93 = arith.constant 0 : index
    %c217_94 = arith.constant 217 : index
    %506 = vector.load %arg8[%c0_93, %c217_94] : memref<8x622xf32, #tpu.memory_space<vmem>>, vector<8x18xf32>
    tpu.vector_store %arg8[%c0_93, %c217_94], %505 {strides = array<i32>} : memref<8x622xf32, #tpu.memory_space<vmem>>, vector<8x18xf32>,
    %507 = vector.extract_strided_slice %446 {offsets = [0, 177], sizes = [8, 1], strides = [1, 1]} : vector<8x256xf32> to vector<8x1xf32>
    %508 = vector.extract_strided_slice %446 {offsets = [0, 176], sizes = [8, 16], strides = [1, 1]} : vector<8x256xf32> to vector<8x16xf32>
    %509 = vector.extract_strided_slice %446 {offsets = [0, 190], sizes = [8, 1], strides = [1, 1]} : vector<8x256xf32> to vector<8x1xf32>
    %510 = tpu.concatenate %507, %508, %509 in 1 : vector<8x1xf32>, vector<8x16xf32>, vector<8x1xf32> -> vector<8x18xf32>
    %c0_95 = arith.constant 0 : index
    %c235_96 = arith.constant 235 : index
    %511 = vector.load %arg8[%c0_95, %c235_96] : memref<8x622xf32, #tpu.memory_space<vmem>>, vector<8x18xf32>
    tpu.vector_store %arg8[%c0_95, %c235_96], %510 {strides = array<i32>} : memref<8x622xf32, #tpu.memory_space<vmem>>, vector<8x18xf32>,
    %512 = vector.extract_strided_slice %446 {offsets = [0, 193], sizes = [8, 1], strides = [1, 1]} : vector<8x256xf32> to vector<8x1xf32>
    %513 = vector.extract_strided_slice %446 {offsets = [0, 192], sizes = [8, 16], strides = [1, 1]} : vector<8x256xf32> to vector<8x16xf32>
    %514 = vector.extract_strided_slice %446 {offsets = [0, 206], sizes = [8, 1], strides = [1, 1]} : vector<8x256xf32> to vector<8x1xf32>
    %515 = tpu.concatenate %512, %513, %514 in 1 : vector<8x1xf32>, vector<8x16xf32>, vector<8x1xf32> -> vector<8x18xf32>
    %c0_97 = arith.constant 0 : index
    %c253_98 = arith.constant 253 : index
    %516 = vector.load %arg8[%c0_97, %c253_98] : memref<8x622xf32, #tpu.memory_space<vmem>>, vector<8x18xf32>
    tpu.vector_store %arg8[%c0_97, %c253_98], %515 {strides = array<i32>} : memref<8x622xf32, #tpu.memory_space<vmem>>, vector<8x18xf32>,
    %517 = vector.extract_strided_slice %446 {offsets = [0, 209], sizes = [8, 1], strides = [1, 1]} : vector<8x256xf32> to vector<8x1xf32>
    %518 = vector.extract_strided_slice %446 {offsets = [0, 208], sizes = [8, 16], strides = [1, 1]} : vector<8x256xf32> to vector<8x16xf32>
    %519 = vector.extract_strided_slice %446 {offsets = [0, 222], sizes = [8, 1], strides = [1, 1]} : vector<8x256xf32> to vector<8x1xf32>
    %520 = tpu.concatenate %517, %518, %519 in 1 : vector<8x1xf32>, vector<8x16xf32>, vector<8x1xf32> -> vector<8x18xf32>
    %c0_99 = arith.constant 0 : index
    %c271_100 = arith.constant 271 : index
    %521 = vector.load %arg8[%c0_99, %c271_100] : memref<8x622xf32, #tpu.memory_space<vmem>>, vector<8x18xf32>
    tpu.vector_store %arg8[%c0_99, %c271_100], %520 {strides = array<i32>} : memref<8x622xf32, #tpu.memory_space<vmem>>, vector<8x18xf32>,
    %522 = vector.extract_strided_slice %446 {offsets = [0, 225], sizes = [8, 1], strides = [1, 1]} : vector<8x256xf32> to vector<8x1xf32>
    %523 = vector.extract_strided_slice %446 {offsets = [0, 224], sizes = [8, 16], strides = [1, 1]} : vector<8x256xf32> to vector<8x16xf32>
    %524 = vector.extract_strided_slice %446 {offsets = [0, 238], sizes = [8, 1], strides = [1, 1]} : vector<8x256xf32> to vector<8x1xf32>
    %525 = tpu.concatenate %522, %523, %524 in 1 : vector<8x1xf32>, vector<8x16xf32>, vector<8x1xf32> -> vector<8x18xf32>
    %c0_101 = arith.constant 0 : index
    %c289_102 = arith.constant 289 : index
    %526 = vector.load %arg8[%c0_101, %c289_102] : memref<8x622xf32, #tpu.memory_space<vmem>>, vector<8x18xf32>
    tpu.vector_store %arg8[%c0_101, %c289_102], %525 {strides = array<i32>} : memref<8x622xf32, #tpu.memory_space<vmem>>, vector<8x18xf32>,
    %527 = vector.extract_strided_slice %446 {offsets = [0, 241], sizes = [8, 1], strides = [1, 1]} : vector<8x256xf32> to vector<8x1xf32>
    %528 = vector.extract_strided_slice %446 {offsets = [0, 240], sizes = [8, 16], strides = [1, 1]} : vector<8x256xf32> to vector<8x16xf32>
    %529 = vector.extract_strided_slice %446 {offsets = [0, 254], sizes = [8, 1], strides = [1, 1]} : vector<8x256xf32> to vector<8x1xf32>
    %530 = tpu.concatenate %527, %528, %529 in 1 : vector<8x1xf32>, vector<8x16xf32>, vector<8x1xf32> -> vector<8x18xf32>
    %c0_103 = arith.constant 0 : index
    %c307_104 = arith.constant 307 : index
    %531 = vector.load %arg8[%c0_103, %c307_104] : memref<8x622xf32, #tpu.memory_space<vmem>>, vector<8x18xf32>
    tpu.vector_store %arg8[%c0_103, %c307_104], %530 {strides = array<i32>} : memref<8x622xf32, #tpu.memory_space<vmem>>, vector<8x18xf32>,
    %532 = vector.extract_strided_slice %446 {offsets = [0, 225], sizes = [8, 1], strides = [1, 1]} : vector<8x256xf32> to vector<8x1xf32>
    %533 = vector.extract_strided_slice %446 {offsets = [0, 224], sizes = [8, 16], strides = [1, 1]} : vector<8x256xf32> to vector<8x16xf32>
    %534 = vector.extract_strided_slice %446 {offsets = [0, 238], sizes = [8, 1], strides = [1, 1]} : vector<8x256xf32> to vector<8x1xf32>
    %535 = tpu.concatenate %532, %533, %534 in 1 : vector<8x1xf32>, vector<8x16xf32>, vector<8x1xf32> -> vector<8x18xf32>
    %c0_105 = arith.constant 0 : index
    %c325_106 = arith.constant 325 : index
    %536 = vector.load %arg8[%c0_105, %c325_106] : memref<8x622xf32, #tpu.memory_space<vmem>>, vector<8x18xf32>
    tpu.vector_store %arg8[%c0_105, %c325_106], %535 {strides = array<i32>} : memref<8x622xf32, #tpu.memory_space<vmem>>, vector<8x18xf32>,
    %c0_107 = arith.constant 0 : index
    %c0_108 = arith.constant 0 : index
    %537 = vector.load %arg8[%c0_107, %c0_108] : memref<8x622xf32, #tpu.memory_space<vmem>>, vector<8x362xf32>
    %538 = vector.extract_strided_slice %537 {offsets = [0, 0], sizes = [8, 324], strides = [1, 1]} : vector<8x362xf32> to vector<8x324xf32>
    %539 = vector.extract_strided_slice %537 {offsets = [0, 1], sizes = [8, 324], strides = [1, 1]} : vector<8x362xf32> to vector<8x324xf32>
    %540 = vector.extract_strided_slice %537 {offsets = [0, 2], sizes = [8, 324], strides = [1, 1]} : vector<8x362xf32> to vector<8x324xf32>
    %541 = vector.extract_strided_slice %537 {offsets = [0, 18], sizes = [8, 324], strides = [1, 1]} : vector<8x362xf32> to vector<8x324xf32>
    %542 = vector.extract_strided_slice %537 {offsets = [0, 19], sizes = [8, 324], strides = [1, 1]} : vector<8x362xf32> to vector<8x324xf32>
    %543 = vector.extract_strided_slice %537 {offsets = [0, 20], sizes = [8, 324], strides = [1, 1]} : vector<8x362xf32> to vector<8x324xf32>
    %544 = vector.extract_strided_slice %537 {offsets = [0, 36], sizes = [8, 324], strides = [1, 1]} : vector<8x362xf32> to vector<8x324xf32>
    %545 = vector.extract_strided_slice %537 {offsets = [0, 37], sizes = [8, 324], strides = [1, 1]} : vector<8x362xf32> to vector<8x324xf32>
    %546 = vector.extract_strided_slice %537 {offsets = [0, 38], sizes = [8, 324], strides = [1, 1]} : vector<8x362xf32> to vector<8x324xf32>
    %547 = tpu.concatenate %538, %539, %540, %541, %542, %543, %544, %545, %546 in 0 : vector<8x324xf32>, vector<8x324xf32>, vector<8x324xf32>, vector<8x324xf32>, vector<8x324xf32>, vector<8x324xf32>, vector<8x324xf32>, vector<8x324xf32>, vector<8x324xf32> -> vector<72x324xf32>
    %cst_109 = arith.constant dense<0.000000e+00> : vector<8x324xf32>
    %548 = tpu.matmul %2, %547, %cst_109 {dimension_numbers = #tpu.dot_dimension_numbers<[1], [0], [0], [1], [0, 0, 1, 1], [], []>} : vector<8x72xf32>, vector<72x324xf32>, vector<8x324xf32> -> vector<8x324xf32>
    %549 = vector.extract_strided_slice %548 {offsets = [0, 19], sizes = [8, 16], strides = [1, 1]} : vector<8x324xf32> to vector<8x16xf32>
    %550 = vector.extract_strided_slice %548 {offsets = [0, 37], sizes = [8, 16], strides = [1, 1]} : vector<8x324xf32> to vector<8x16xf32>
    %551 = vector.extract_strided_slice %548 {offsets = [0, 55], sizes = [8, 16], strides = [1, 1]} : vector<8x324xf32> to vector<8x16xf32>
    %552 = vector.extract_strided_slice %548 {offsets = [0, 73], sizes = [8, 16], strides = [1, 1]} : vector<8x324xf32> to vector<8x16xf32>
    %553 = vector.extract_strided_slice %548 {offsets = [0, 91], sizes = [8, 16], strides = [1, 1]} : vector<8x324xf32> to vector<8x16xf32>
    %554 = vector.extract_strided_slice %548 {offsets = [0, 109], sizes = [8, 16], strides = [1, 1]} : vector<8x324xf32> to vector<8x16xf32>
    %555 = vector.extract_strided_slice %548 {offsets = [0, 127], sizes = [8, 16], strides = [1, 1]} : vector<8x324xf32> to vector<8x16xf32>
    %556 = vector.extract_strided_slice %548 {offsets = [0, 145], sizes = [8, 16], strides = [1, 1]} : vector<8x324xf32> to vector<8x16xf32>
    %557 = vector.extract_strided_slice %548 {offsets = [0, 163], sizes = [8, 16], strides = [1, 1]} : vector<8x324xf32> to vector<8x16xf32>
    %558 = vector.extract_strided_slice %548 {offsets = [0, 181], sizes = [8, 16], strides = [1, 1]} : vector<8x324xf32> to vector<8x16xf32>
    %559 = vector.extract_strided_slice %548 {offsets = [0, 199], sizes = [8, 16], strides = [1, 1]} : vector<8x324xf32> to vector<8x16xf32>
    %560 = vector.extract_strided_slice %548 {offsets = [0, 217], sizes = [8, 16], strides = [1, 1]} : vector<8x324xf32> to vector<8x16xf32>
    %561 = vector.extract_strided_slice %548 {offsets = [0, 235], sizes = [8, 16], strides = [1, 1]} : vector<8x324xf32> to vector<8x16xf32>
    %562 = vector.extract_strided_slice %548 {offsets = [0, 253], sizes = [8, 16], strides = [1, 1]} : vector<8x324xf32> to vector<8x16xf32>
    %563 = vector.extract_strided_slice %548 {offsets = [0, 271], sizes = [8, 16], strides = [1, 1]} : vector<8x324xf32> to vector<8x16xf32>
    %564 = vector.extract_strided_slice %548 {offsets = [0, 289], sizes = [8, 16], strides = [1, 1]} : vector<8x324xf32> to vector<8x16xf32>
    %565 = tpu.concatenate %549, %550, %551, %552, %553, %554, %555, %556, %557, %558, %559, %560, %561, %562, %563, %564 in 1 : vector<8x16xf32>, vector<8x16xf32>, vector<8x16xf32>, vector<8x16xf32>, vector<8x16xf32>, vector<8x16xf32>, vector<8x16xf32>, vector<8x16xf32>, vector<8x16xf32>, vector<8x16xf32>, vector<8x16xf32>, vector<8x16xf32>, vector<8x16xf32>, vector<8x16xf32>, vector<8x16xf32>, vector<8x16xf32> -> vector<8x256xf32>
    %cst_110 = arith.constant dense<0.000000e+00> : vector<8xf32>
    %566 = vector.multi_reduction <add>, %565, %cst_110 [1] : vector<8x256xf32> to vector<8xf32>
    %567 = vector.shape_cast %566 : vector<8xf32> to vector<8x1xf32>
    %cst_111 = arith.constant 2.560000e+02 : f32
    %568 = vector.broadcast %cst_111 : f32 to vector<8x1xf32>
    %569 = arith.divf %567, %568 : vector<8x1xf32>
    %570 = vector.broadcast %569 : vector<8x1xf32> to vector<8x256xf32>
    %571 = arith.subf %565, %570 : vector<8x256xf32>
    %572 = arith.mulf %571, %571 : vector<8x256xf32>
    %cst_112 = arith.constant dense<0.000000e+00> : vector<8xf32>
    %573 = vector.multi_reduction <add>, %572, %cst_112 [1] : vector<8x256xf32> to vector<8xf32>
    %574 = vector.shape_cast %573 : vector<8xf32> to vector<8x1xf32>
    %cst_113 = arith.constant 2.560000e+02 : f32
    %575 = vector.broadcast %cst_113 : f32 to vector<8x1xf32>
    %576 = arith.divf %574, %575 : vector<8x1xf32>
    %cst_114 = arith.constant 9.99999974E-6 : f32
    %577 = vector.broadcast %cst_114 : f32 to vector<8x1xf32>
    %578 = arith.addf %576, %577 : vector<8x1xf32>
    %579 = math.rsqrt %578 : vector<8x1xf32>
    %580 = vector.broadcast %579 : vector<8x1xf32> to vector<8x256xf32>
    %581 = arith.mulf %571, %580 : vector<8x256xf32>
    %582 = vector.broadcast %9 : vector<8x1xf32> to vector<8x256xf32>
    %583 = arith.mulf %581, %582 : vector<8x256xf32>
    %584 = vector.broadcast %10 : vector<8x1xf32> to vector<8x256xf32>
    %585 = arith.addf %583, %584 : vector<8x256xf32>
    %586 = arith.addf %585, %305 : vector<8x256xf32>
    %587 = vector.extract_strided_slice %586 {offsets = [0, 51], sizes = [8, 1], strides = [1, 1]} : vector<8x256xf32> to vector<8x1xf32>
    %588 = vector.extract_strided_slice %586 {offsets = [0, 50], sizes = [8, 1], strides = [1, 1]} : vector<8x256xf32> to vector<8x1xf32>
    %589 = vector.extract_strided_slice %586 {offsets = [0, 49], sizes = [8, 1], strides = [1, 1]} : vector<8x256xf32> to vector<8x1xf32>
    %590 = vector.extract_strided_slice %586 {offsets = [0, 48], sizes = [8, 16], strides = [1, 1]} : vector<8x256xf32> to vector<8x16xf32>
    %591 = vector.extract_strided_slice %586 {offsets = [0, 62], sizes = [8, 1], strides = [1, 1]} : vector<8x256xf32> to vector<8x1xf32>
    %592 = vector.extract_strided_slice %586 {offsets = [0, 61], sizes = [8, 1], strides = [1, 1]} : vector<8x256xf32> to vector<8x1xf32>
    %593 = vector.extract_strided_slice %586 {offsets = [0, 60], sizes = [8, 1], strides = [1, 1]} : vector<8x256xf32> to vector<8x1xf32>
    %594 = tpu.concatenate %587, %588, %589, %590, %591, %592, %593 in 1 : vector<8x1xf32>, vector<8x1xf32>, vector<8x1xf32>, vector<8x16xf32>, vector<8x1xf32>, vector<8x1xf32>, vector<8x1xf32> -> vector<8x22xf32>
    %c0_115 = arith.constant 0 : index
    %c69_116 = arith.constant 69 : index
    %595 = vector.load %arg8[%c0_115, %c69_116] : memref<8x622xf32, #tpu.memory_space<vmem>>, vector<8x22xf32>
    tpu.vector_store %arg8[%c0_115, %c69_116], %594 {strides = array<i32>} : memref<8x622xf32, #tpu.memory_space<vmem>>, vector<8x22xf32>,
    %596 = vector.extract_strided_slice %586 {offsets = [0, 35], sizes = [8, 1], strides = [1, 1]} : vector<8x256xf32> to vector<8x1xf32>
    %597 = vector.extract_strided_slice %586 {offsets = [0, 34], sizes = [8, 1], strides = [1, 1]} : vector<8x256xf32> to vector<8x1xf32>
    %598 = vector.extract_strided_slice %586 {offsets = [0, 33], sizes = [8, 1], strides = [1, 1]} : vector<8x256xf32> to vector<8x1xf32>
    %599 = vector.extract_strided_slice %586 {offsets = [0, 32], sizes = [8, 16], strides = [1, 1]} : vector<8x256xf32> to vector<8x16xf32>
    %600 = vector.extract_strided_slice %586 {offsets = [0, 46], sizes = [8, 1], strides = [1, 1]} : vector<8x256xf32> to vector<8x1xf32>
    %601 = vector.extract_strided_slice %586 {offsets = [0, 45], sizes = [8, 1], strides = [1, 1]} : vector<8x256xf32> to vector<8x1xf32>
    %602 = vector.extract_strided_slice %586 {offsets = [0, 44], sizes = [8, 1], strides = [1, 1]} : vector<8x256xf32> to vector<8x1xf32>
    %603 = tpu.concatenate %596, %597, %598, %599, %600, %601, %602 in 1 : vector<8x1xf32>, vector<8x1xf32>, vector<8x1xf32>, vector<8x16xf32>, vector<8x1xf32>, vector<8x1xf32>, vector<8x1xf32> -> vector<8x22xf32>
    %c0_117 = arith.constant 0 : index
    %c91_118 = arith.constant 91 : index
    %604 = vector.load %arg8[%c0_117, %c91_118] : memref<8x622xf32, #tpu.memory_space<vmem>>, vector<8x22xf32>
    tpu.vector_store %arg8[%c0_117, %c91_118], %603 {strides = array<i32>} : memref<8x622xf32, #tpu.memory_space<vmem>>, vector<8x22xf32>,
    %605 = vector.extract_strided_slice %586 {offsets = [0, 19], sizes = [8, 1], strides = [1, 1]} : vector<8x256xf32> to vector<8x1xf32>
    %606 = vector.extract_strided_slice %586 {offsets = [0, 18], sizes = [8, 1], strides = [1, 1]} : vector<8x256xf32> to vector<8x1xf32>
    %607 = vector.extract_strided_slice %586 {offsets = [0, 17], sizes = [8, 1], strides = [1, 1]} : vector<8x256xf32> to vector<8x1xf32>
    %608 = vector.extract_strided_slice %586 {offsets = [0, 16], sizes = [8, 16], strides = [1, 1]} : vector<8x256xf32> to vector<8x16xf32>
    %609 = vector.extract_strided_slice %586 {offsets = [0, 30], sizes = [8, 1], strides = [1, 1]} : vector<8x256xf32> to vector<8x1xf32>
    %610 = vector.extract_strided_slice %586 {offsets = [0, 29], sizes = [8, 1], strides = [1, 1]} : vector<8x256xf32> to vector<8x1xf32>
    %611 = vector.extract_strided_slice %586 {offsets = [0, 28], sizes = [8, 1], strides = [1, 1]} : vector<8x256xf32> to vector<8x1xf32>
    %612 = tpu.concatenate %605, %606, %607, %608, %609, %610, %611 in 1 : vector<8x1xf32>, vector<8x1xf32>, vector<8x1xf32>, vector<8x16xf32>, vector<8x1xf32>, vector<8x1xf32>, vector<8x1xf32> -> vector<8x22xf32>
    %c0_119 = arith.constant 0 : index
    %c113_120 = arith.constant 113 : index
    %613 = vector.load %arg8[%c0_119, %c113_120] : memref<8x622xf32, #tpu.memory_space<vmem>>, vector<8x22xf32>
    tpu.vector_store %arg8[%c0_119, %c113_120], %612 {strides = array<i32>} : memref<8x622xf32, #tpu.memory_space<vmem>>, vector<8x22xf32>,
    %614 = vector.extract_strided_slice %586 {offsets = [0, 3], sizes = [8, 1], strides = [1, 1]} : vector<8x256xf32> to vector<8x1xf32>
    %615 = vector.extract_strided_slice %586 {offsets = [0, 2], sizes = [8, 1], strides = [1, 1]} : vector<8x256xf32> to vector<8x1xf32>
    %616 = vector.extract_strided_slice %586 {offsets = [0, 1], sizes = [8, 1], strides = [1, 1]} : vector<8x256xf32> to vector<8x1xf32>
    %617 = vector.extract_strided_slice %586 {offsets = [0, 0], sizes = [8, 16], strides = [1, 1]} : vector<8x256xf32> to vector<8x16xf32>
    %618 = vector.extract_strided_slice %586 {offsets = [0, 14], sizes = [8, 1], strides = [1, 1]} : vector<8x256xf32> to vector<8x1xf32>
    %619 = vector.extract_strided_slice %586 {offsets = [0, 13], sizes = [8, 1], strides = [1, 1]} : vector<8x256xf32> to vector<8x1xf32>
    %620 = vector.extract_strided_slice %586 {offsets = [0, 12], sizes = [8, 1], strides = [1, 1]} : vector<8x256xf32> to vector<8x1xf32>
    %621 = tpu.concatenate %614, %615, %616, %617, %618, %619, %620 in 1 : vector<8x1xf32>, vector<8x1xf32>, vector<8x1xf32>, vector<8x16xf32>, vector<8x1xf32>, vector<8x1xf32>, vector<8x1xf32> -> vector<8x22xf32>
    %c0_121 = arith.constant 0 : index
    %c135_122 = arith.constant 135 : index
    %622 = vector.load %arg8[%c0_121, %c135_122] : memref<8x622xf32, #tpu.memory_space<vmem>>, vector<8x22xf32>
    tpu.vector_store %arg8[%c0_121, %c135_122], %621 {strides = array<i32>} : memref<8x622xf32, #tpu.memory_space<vmem>>, vector<8x22xf32>,
    %623 = vector.extract_strided_slice %586 {offsets = [0, 19], sizes = [8, 1], strides = [1, 1]} : vector<8x256xf32> to vector<8x1xf32>
    %624 = vector.extract_strided_slice %586 {offsets = [0, 18], sizes = [8, 1], strides = [1, 1]} : vector<8x256xf32> to vector<8x1xf32>
    %625 = vector.extract_strided_slice %586 {offsets = [0, 17], sizes = [8, 1], strides = [1, 1]} : vector<8x256xf32> to vector<8x1xf32>
    %626 = vector.extract_strided_slice %586 {offsets = [0, 16], sizes = [8, 16], strides = [1, 1]} : vector<8x256xf32> to vector<8x16xf32>
    %627 = vector.extract_strided_slice %586 {offsets = [0, 30], sizes = [8, 1], strides = [1, 1]} : vector<8x256xf32> to vector<8x1xf32>
    %628 = vector.extract_strided_slice %586 {offsets = [0, 29], sizes = [8, 1], strides = [1, 1]} : vector<8x256xf32> to vector<8x1xf32>
    %629 = vector.extract_strided_slice %586 {offsets = [0, 28], sizes = [8, 1], strides = [1, 1]} : vector<8x256xf32> to vector<8x1xf32>
    %630 = tpu.concatenate %623, %624, %625, %626, %627, %628, %629 in 1 : vector<8x1xf32>, vector<8x1xf32>, vector<8x1xf32>, vector<8x16xf32>, vector<8x1xf32>, vector<8x1xf32>, vector<8x1xf32> -> vector<8x22xf32>
    %c0_123 = arith.constant 0 : index
    %c157_124 = arith.constant 157 : index
    %631 = vector.load %arg8[%c0_123, %c157_124] : memref<8x622xf32, #tpu.memory_space<vmem>>, vector<8x22xf32>
    tpu.vector_store %arg8[%c0_123, %c157_124], %630 {strides = array<i32>} : memref<8x622xf32, #tpu.memory_space<vmem>>, vector<8x22xf32>,
    %632 = vector.extract_strided_slice %586 {offsets = [0, 35], sizes = [8, 1], strides = [1, 1]} : vector<8x256xf32> to vector<8x1xf32>
    %633 = vector.extract_strided_slice %586 {offsets = [0, 34], sizes = [8, 1], strides = [1, 1]} : vector<8x256xf32> to vector<8x1xf32>
    %634 = vector.extract_strided_slice %586 {offsets = [0, 33], sizes = [8, 1], strides = [1, 1]} : vector<8x256xf32> to vector<8x1xf32>
    %635 = vector.extract_strided_slice %586 {offsets = [0, 32], sizes = [8, 16], strides = [1, 1]} : vector<8x256xf32> to vector<8x16xf32>
    %636 = vector.extract_strided_slice %586 {offsets = [0, 46], sizes = [8, 1], strides = [1, 1]} : vector<8x256xf32> to vector<8x1xf32>
    %637 = vector.extract_strided_slice %586 {offsets = [0, 45], sizes = [8, 1], strides = [1, 1]} : vector<8x256xf32> to vector<8x1xf32>
    %638 = vector.extract_strided_slice %586 {offsets = [0, 44], sizes = [8, 1], strides = [1, 1]} : vector<8x256xf32> to vector<8x1xf32>
    %639 = tpu.concatenate %632, %633, %634, %635, %636, %637, %638 in 1 : vector<8x1xf32>, vector<8x1xf32>, vector<8x1xf32>, vector<8x16xf32>, vector<8x1xf32>, vector<8x1xf32>, vector<8x1xf32> -> vector<8x22xf32>
    %c0_125 = arith.constant 0 : index
    %c179_126 = arith.constant 179 : index
    %640 = vector.load %arg8[%c0_125, %c179_126] : memref<8x622xf32, #tpu.memory_space<vmem>>, vector<8x22xf32>
    tpu.vector_store %arg8[%c0_125, %c179_126], %639 {strides = array<i32>} : memref<8x622xf32, #tpu.memory_space<vmem>>, vector<8x22xf32>,
    %641 = vector.extract_strided_slice %586 {offsets = [0, 51], sizes = [8, 1], strides = [1, 1]} : vector<8x256xf32> to vector<8x1xf32>
    %642 = vector.extract_strided_slice %586 {offsets = [0, 50], sizes = [8, 1], strides = [1, 1]} : vector<8x256xf32> to vector<8x1xf32>
    %643 = vector.extract_strided_slice %586 {offsets = [0, 49], sizes = [8, 1], strides = [1, 1]} : vector<8x256xf32> to vector<8x1xf32>
    %644 = vector.extract_strided_slice %586 {offsets = [0, 48], sizes = [8, 16], strides = [1, 1]} : vector<8x256xf32> to vector<8x16xf32>
    %645 = vector.extract_strided_slice %586 {offsets = [0, 62], sizes = [8, 1], strides = [1, 1]} : vector<8x256xf32> to vector<8x1xf32>
    %646 = vector.extract_strided_slice %586 {offsets = [0, 61], sizes = [8, 1], strides = [1, 1]} : vector<8x256xf32> to vector<8x1xf32>
    %647 = vector.extract_strided_slice %586 {offsets = [0, 60], sizes = [8, 1], strides = [1, 1]} : vector<8x256xf32> to vector<8x1xf32>
    %648 = tpu.concatenate %641, %642, %643, %644, %645, %646, %647 in 1 : vector<8x1xf32>, vector<8x1xf32>, vector<8x1xf32>, vector<8x16xf32>, vector<8x1xf32>, vector<8x1xf32>, vector<8x1xf32> -> vector<8x22xf32>
    %c0_127 = arith.constant 0 : index
    %c201_128 = arith.constant 201 : index
    %649 = vector.load %arg8[%c0_127, %c201_128] : memref<8x622xf32, #tpu.memory_space<vmem>>, vector<8x22xf32>
    tpu.vector_store %arg8[%c0_127, %c201_128], %648 {strides = array<i32>} : memref<8x622xf32, #tpu.memory_space<vmem>>, vector<8x22xf32>,
    %650 = vector.extract_strided_slice %586 {offsets = [0, 67], sizes = [8, 1], strides = [1, 1]} : vector<8x256xf32> to vector<8x1xf32>
    %651 = vector.extract_strided_slice %586 {offsets = [0, 66], sizes = [8, 1], strides = [1, 1]} : vector<8x256xf32> to vector<8x1xf32>
    %652 = vector.extract_strided_slice %586 {offsets = [0, 65], sizes = [8, 1], strides = [1, 1]} : vector<8x256xf32> to vector<8x1xf32>
    %653 = vector.extract_strided_slice %586 {offsets = [0, 64], sizes = [8, 16], strides = [1, 1]} : vector<8x256xf32> to vector<8x16xf32>
    %654 = vector.extract_strided_slice %586 {offsets = [0, 78], sizes = [8, 1], strides = [1, 1]} : vector<8x256xf32> to vector<8x1xf32>
    %655 = vector.extract_strided_slice %586 {offsets = [0, 77], sizes = [8, 1], strides = [1, 1]} : vector<8x256xf32> to vector<8x1xf32>
    %656 = vector.extract_strided_slice %586 {offsets = [0, 76], sizes = [8, 1], strides = [1, 1]} : vector<8x256xf32> to vector<8x1xf32>
    %657 = tpu.concatenate %650, %651, %652, %653, %654, %655, %656 in 1 : vector<8x1xf32>, vector<8x1xf32>, vector<8x1xf32>, vector<8x16xf32>, vector<8x1xf32>, vector<8x1xf32>, vector<8x1xf32> -> vector<8x22xf32>
    %c0_129 = arith.constant 0 : index
    %c223_130 = arith.constant 223 : index
    %658 = vector.load %arg8[%c0_129, %c223_130] : memref<8x622xf32, #tpu.memory_space<vmem>>, vector<8x22xf32>
    tpu.vector_store %arg8[%c0_129, %c223_130], %657 {strides = array<i32>} : memref<8x622xf32, #tpu.memory_space<vmem>>, vector<8x22xf32>,
    %659 = vector.extract_strided_slice %586 {offsets = [0, 83], sizes = [8, 1], strides = [1, 1]} : vector<8x256xf32> to vector<8x1xf32>
    %660 = vector.extract_strided_slice %586 {offsets = [0, 82], sizes = [8, 1], strides = [1, 1]} : vector<8x256xf32> to vector<8x1xf32>
    %661 = vector.extract_strided_slice %586 {offsets = [0, 81], sizes = [8, 1], strides = [1, 1]} : vector<8x256xf32> to vector<8x1xf32>
    %662 = vector.extract_strided_slice %586 {offsets = [0, 80], sizes = [8, 16], strides = [1, 1]} : vector<8x256xf32> to vector<8x16xf32>
    %663 = vector.extract_strided_slice %586 {offsets = [0, 94], sizes = [8, 1], strides = [1, 1]} : vector<8x256xf32> to vector<8x1xf32>
    %664 = vector.extract_strided_slice %586 {offsets = [0, 93], sizes = [8, 1], strides = [1, 1]} : vector<8x256xf32> to vector<8x1xf32>
    %665 = vector.extract_strided_slice %586 {offsets = [0, 92], sizes = [8, 1], strides = [1, 1]} : vector<8x256xf32> to vector<8x1xf32>
    %666 = tpu.concatenate %659, %660, %661, %662, %663, %664, %665 in 1 : vector<8x1xf32>, vector<8x1xf32>, vector<8x1xf32>, vector<8x16xf32>, vector<8x1xf32>, vector<8x1xf32>, vector<8x1xf32> -> vector<8x22xf32>
    %c0_131 = arith.constant 0 : index
    %c245_132 = arith.constant 245 : index
    %667 = vector.load %arg8[%c0_131, %c245_132] : memref<8x622xf32, #tpu.memory_space<vmem>>, vector<8x22xf32>
    tpu.vector_store %arg8[%c0_131, %c245_132], %666 {strides = array<i32>} : memref<8x622xf32, #tpu.memory_space<vmem>>, vector<8x22xf32>,
    %668 = vector.extract_strided_slice %586 {offsets = [0, 99], sizes = [8, 1], strides = [1, 1]} : vector<8x256xf32> to vector<8x1xf32>
    %669 = vector.extract_strided_slice %586 {offsets = [0, 98], sizes = [8, 1], strides = [1, 1]} : vector<8x256xf32> to vector<8x1xf32>
    %670 = vector.extract_strided_slice %586 {offsets = [0, 97], sizes = [8, 1], strides = [1, 1]} : vector<8x256xf32> to vector<8x1xf32>
    %671 = vector.extract_strided_slice %586 {offsets = [0, 96], sizes = [8, 16], strides = [1, 1]} : vector<8x256xf32> to vector<8x16xf32>
    %672 = vector.extract_strided_slice %586 {offsets = [0, 110], sizes = [8, 1], strides = [1, 1]} : vector<8x256xf32> to vector<8x1xf32>
    %673 = vector.extract_strided_slice %586 {offsets = [0, 109], sizes = [8, 1], strides = [1, 1]} : vector<8x256xf32> to vector<8x1xf32>
    %674 = vector.extract_strided_slice %586 {offsets = [0, 108], sizes = [8, 1], strides = [1, 1]} : vector<8x256xf32> to vector<8x1xf32>
    %675 = tpu.concatenate %668, %669, %670, %671, %672, %673, %674 in 1 : vector<8x1xf32>, vector<8x1xf32>, vector<8x1xf32>, vector<8x16xf32>, vector<8x1xf32>, vector<8x1xf32>, vector<8x1xf32> -> vector<8x22xf32>
    %c0_133 = arith.constant 0 : index
    %c267_134 = arith.constant 267 : index
    %676 = vector.load %arg8[%c0_133, %c267_134] : memref<8x622xf32, #tpu.memory_space<vmem>>, vector<8x22xf32>
    tpu.vector_store %arg8[%c0_133, %c267_134], %675 {strides = array<i32>} : memref<8x622xf32, #tpu.memory_space<vmem>>, vector<8x22xf32>,
    %677 = vector.extract_strided_slice %586 {offsets = [0, 115], sizes = [8, 1], strides = [1, 1]} : vector<8x256xf32> to vector<8x1xf32>
    %678 = vector.extract_strided_slice %586 {offsets = [0, 114], sizes = [8, 1], strides = [1, 1]} : vector<8x256xf32> to vector<8x1xf32>
    %679 = vector.extract_strided_slice %586 {offsets = [0, 113], sizes = [8, 1], strides = [1, 1]} : vector<8x256xf32> to vector<8x1xf32>
    %680 = vector.extract_strided_slice %586 {offsets = [0, 112], sizes = [8, 16], strides = [1, 1]} : vector<8x256xf32> to vector<8x16xf32>
    %681 = vector.extract_strided_slice %586 {offsets = [0, 126], sizes = [8, 1], strides = [1, 1]} : vector<8x256xf32> to vector<8x1xf32>
    %682 = vector.extract_strided_slice %586 {offsets = [0, 125], sizes = [8, 1], strides = [1, 1]} : vector<8x256xf32> to vector<8x1xf32>
    %683 = vector.extract_strided_slice %586 {offsets = [0, 124], sizes = [8, 1], strides = [1, 1]} : vector<8x256xf32> to vector<8x1xf32>
    %684 = tpu.concatenate %677, %678, %679, %680, %681, %682, %683 in 1 : vector<8x1xf32>, vector<8x1xf32>, vector<8x1xf32>, vector<8x16xf32>, vector<8x1xf32>, vector<8x1xf32>, vector<8x1xf32> -> vector<8x22xf32>
    %c0_135 = arith.constant 0 : index
    %c289_136 = arith.constant 289 : index
    %685 = vector.load %arg8[%c0_135, %c289_136] : memref<8x622xf32, #tpu.memory_space<vmem>>, vector<8x22xf32>
    tpu.vector_store %arg8[%c0_135, %c289_136], %684 {strides = array<i32>} : memref<8x622xf32, #tpu.memory_space<vmem>>, vector<8x22xf32>,
    %686 = vector.extract_strided_slice %586 {offsets = [0, 131], sizes = [8, 1], strides = [1, 1]} : vector<8x256xf32> to vector<8x1xf32>
    %687 = vector.extract_strided_slice %586 {offsets = [0, 130], sizes = [8, 1], strides = [1, 1]} : vector<8x256xf32> to vector<8x1xf32>
    %688 = vector.extract_strided_slice %586 {offsets = [0, 129], sizes = [8, 1], strides = [1, 1]} : vector<8x256xf32> to vector<8x1xf32>
    %689 = vector.extract_strided_slice %586 {offsets = [0, 128], sizes = [8, 16], strides = [1, 1]} : vector<8x256xf32> to vector<8x16xf32>
    %690 = vector.extract_strided_slice %586 {offsets = [0, 142], sizes = [8, 1], strides = [1, 1]} : vector<8x256xf32> to vector<8x1xf32>
    %691 = vector.extract_strided_slice %586 {offsets = [0, 141], sizes = [8, 1], strides = [1, 1]} : vector<8x256xf32> to vector<8x1xf32>
    %692 = vector.extract_strided_slice %586 {offsets = [0, 140], sizes = [8, 1], strides = [1, 1]} : vector<8x256xf32> to vector<8x1xf32>
    %693 = tpu.concatenate %686, %687, %688, %689, %690, %691, %692 in 1 : vector<8x1xf32>, vector<8x1xf32>, vector<8x1xf32>, vector<8x16xf32>, vector<8x1xf32>, vector<8x1xf32>, vector<8x1xf32> -> vector<8x22xf32>
    %c0_137 = arith.constant 0 : index
    %c311_138 = arith.constant 311 : index
    %694 = vector.load %arg8[%c0_137, %c311_138] : memref<8x622xf32, #tpu.memory_space<vmem>>, vector<8x22xf32>
    tpu.vector_store %arg8[%c0_137, %c311_138], %693 {strides = array<i32>} : memref<8x622xf32, #tpu.memory_space<vmem>>, vector<8x22xf32>,
    %695 = vector.extract_strided_slice %586 {offsets = [0, 147], sizes = [8, 1], strides = [1, 1]} : vector<8x256xf32> to vector<8x1xf32>
    %696 = vector.extract_strided_slice %586 {offsets = [0, 146], sizes = [8, 1], strides = [1, 1]} : vector<8x256xf32> to vector<8x1xf32>
    %697 = vector.extract_strided_slice %586 {offsets = [0, 145], sizes = [8, 1], strides = [1, 1]} : vector<8x256xf32> to vector<8x1xf32>
    %698 = vector.extract_strided_slice %586 {offsets = [0, 144], sizes = [8, 16], strides = [1, 1]} : vector<8x256xf32> to vector<8x16xf32>
    %699 = vector.extract_strided_slice %586 {offsets = [0, 158], sizes = [8, 1], strides = [1, 1]} : vector<8x256xf32> to vector<8x1xf32>
    %700 = vector.extract_strided_slice %586 {offsets = [0, 157], sizes = [8, 1], strides = [1, 1]} : vector<8x256xf32> to vector<8x1xf32>
    %701 = vector.extract_strided_slice %586 {offsets = [0, 156], sizes = [8, 1], strides = [1, 1]} : vector<8x256xf32> to vector<8x1xf32>
    %702 = tpu.concatenate %695, %696, %697, %698, %699, %700, %701 in 1 : vector<8x1xf32>, vector<8x1xf32>, vector<8x1xf32>, vector<8x16xf32>, vector<8x1xf32>, vector<8x1xf32>, vector<8x1xf32> -> vector<8x22xf32>
    %c0_139 = arith.constant 0 : index
    %c333_140 = arith.constant 333 : index
    %703 = vector.load %arg8[%c0_139, %c333_140] : memref<8x622xf32, #tpu.memory_space<vmem>>, vector<8x22xf32>
    tpu.vector_store %arg8[%c0_139, %c333_140], %702 {strides = array<i32>} : memref<8x622xf32, #tpu.memory_space<vmem>>, vector<8x22xf32>,
    %704 = vector.extract_strided_slice %586 {offsets = [0, 163], sizes = [8, 1], strides = [1, 1]} : vector<8x256xf32> to vector<8x1xf32>
    %705 = vector.extract_strided_slice %586 {offsets = [0, 162], sizes = [8, 1], strides = [1, 1]} : vector<8x256xf32> to vector<8x1xf32>
    %706 = vector.extract_strided_slice %586 {offsets = [0, 161], sizes = [8, 1], strides = [1, 1]} : vector<8x256xf32> to vector<8x1xf32>
    %707 = vector.extract_strided_slice %586 {offsets = [0, 160], sizes = [8, 16], strides = [1, 1]} : vector<8x256xf32> to vector<8x16xf32>
    %708 = vector.extract_strided_slice %586 {offsets = [0, 174], sizes = [8, 1], strides = [1, 1]} : vector<8x256xf32> to vector<8x1xf32>
    %709 = vector.extract_strided_slice %586 {offsets = [0, 173], sizes = [8, 1], strides = [1, 1]} : vector<8x256xf32> to vector<8x1xf32>
    %710 = vector.extract_strided_slice %586 {offsets = [0, 172], sizes = [8, 1], strides = [1, 1]} : vector<8x256xf32> to vector<8x1xf32>
    %711 = tpu.concatenate %704, %705, %706, %707, %708, %709, %710 in 1 : vector<8x1xf32>, vector<8x1xf32>, vector<8x1xf32>, vector<8x16xf32>, vector<8x1xf32>, vector<8x1xf32>, vector<8x1xf32> -> vector<8x22xf32>
    %c0_141 = arith.constant 0 : index
    %c355_142 = arith.constant 355 : index
    %712 = vector.load %arg8[%c0_141, %c355_142] : memref<8x622xf32, #tpu.memory_space<vmem>>, vector<8x22xf32>
    tpu.vector_store %arg8[%c0_141, %c355_142], %711 {strides = array<i32>} : memref<8x622xf32, #tpu.memory_space<vmem>>, vector<8x22xf32>,
    %713 = vector.extract_strided_slice %586 {offsets = [0, 179], sizes = [8, 1], strides = [1, 1]} : vector<8x256xf32> to vector<8x1xf32>
    %714 = vector.extract_strided_slice %586 {offsets = [0, 178], sizes = [8, 1], strides = [1, 1]} : vector<8x256xf32> to vector<8x1xf32>
    %715 = vector.extract_strided_slice %586 {offsets = [0, 177], sizes = [8, 1], strides = [1, 1]} : vector<8x256xf32> to vector<8x1xf32>
    %716 = vector.extract_strided_slice %586 {offsets = [0, 176], sizes = [8, 16], strides = [1, 1]} : vector<8x256xf32> to vector<8x16xf32>
    %717 = vector.extract_strided_slice %586 {offsets = [0, 190], sizes = [8, 1], strides = [1, 1]} : vector<8x256xf32> to vector<8x1xf32>
    %718 = vector.extract_strided_slice %586 {offsets = [0, 189], sizes = [8, 1], strides = [1, 1]} : vector<8x256xf32> to vector<8x1xf32>
    %719 = vector.extract_strided_slice %586 {offsets = [0, 188], sizes = [8, 1], strides = [1, 1]} : vector<8x256xf32> to vector<8x1xf32>
    %720 = tpu.concatenate %713, %714, %715, %716, %717, %718, %719 in 1 : vector<8x1xf32>, vector<8x1xf32>, vector<8x1xf32>, vector<8x16xf32>, vector<8x1xf32>, vector<8x1xf32>, vector<8x1xf32> -> vector<8x22xf32>
    %c0_143 = arith.constant 0 : index
    %c377_144 = arith.constant 377 : index
    %721 = vector.load %arg8[%c0_143, %c377_144] : memref<8x622xf32, #tpu.memory_space<vmem>>, vector<8x22xf32>
    tpu.vector_store %arg8[%c0_143, %c377_144], %720 {strides = array<i32>} : memref<8x622xf32, #tpu.memory_space<vmem>>, vector<8x22xf32>,
    %722 = vector.extract_strided_slice %586 {offsets = [0, 195], sizes = [8, 1], strides = [1, 1]} : vector<8x256xf32> to vector<8x1xf32>
    %723 = vector.extract_strided_slice %586 {offsets = [0, 194], sizes = [8, 1], strides = [1, 1]} : vector<8x256xf32> to vector<8x1xf32>
    %724 = vector.extract_strided_slice %586 {offsets = [0, 193], sizes = [8, 1], strides = [1, 1]} : vector<8x256xf32> to vector<8x1xf32>
    %725 = vector.extract_strided_slice %586 {offsets = [0, 192], sizes = [8, 16], strides = [1, 1]} : vector<8x256xf32> to vector<8x16xf32>
    %726 = vector.extract_strided_slice %586 {offsets = [0, 206], sizes = [8, 1], strides = [1, 1]} : vector<8x256xf32> to vector<8x1xf32>
    %727 = vector.extract_strided_slice %586 {offsets = [0, 205], sizes = [8, 1], strides = [1, 1]} : vector<8x256xf32> to vector<8x1xf32>
    %728 = vector.extract_strided_slice %586 {offsets = [0, 204], sizes = [8, 1], strides = [1, 1]} : vector<8x256xf32> to vector<8x1xf32>
    %729 = tpu.concatenate %722, %723, %724, %725, %726, %727, %728 in 1 : vector<8x1xf32>, vector<8x1xf32>, vector<8x1xf32>, vector<8x16xf32>, vector<8x1xf32>, vector<8x1xf32>, vector<8x1xf32> -> vector<8x22xf32>
    %c0_145 = arith.constant 0 : index
    %c399_146 = arith.constant 399 : index
    %730 = vector.load %arg8[%c0_145, %c399_146] : memref<8x622xf32, #tpu.memory_space<vmem>>, vector<8x22xf32>
    tpu.vector_store %arg8[%c0_145, %c399_146], %729 {strides = array<i32>} : memref<8x622xf32, #tpu.memory_space<vmem>>, vector<8x22xf32>,
    %731 = vector.extract_strided_slice %586 {offsets = [0, 211], sizes = [8, 1], strides = [1, 1]} : vector<8x256xf32> to vector<8x1xf32>
    %732 = vector.extract_strided_slice %586 {offsets = [0, 210], sizes = [8, 1], strides = [1, 1]} : vector<8x256xf32> to vector<8x1xf32>
    %733 = vector.extract_strided_slice %586 {offsets = [0, 209], sizes = [8, 1], strides = [1, 1]} : vector<8x256xf32> to vector<8x1xf32>
    %734 = vector.extract_strided_slice %586 {offsets = [0, 208], sizes = [8, 16], strides = [1, 1]} : vector<8x256xf32> to vector<8x16xf32>
    %735 = vector.extract_strided_slice %586 {offsets = [0, 222], sizes = [8, 1], strides = [1, 1]} : vector<8x256xf32> to vector<8x1xf32>
    %736 = vector.extract_strided_slice %586 {offsets = [0, 221], sizes = [8, 1], strides = [1, 1]} : vector<8x256xf32> to vector<8x1xf32>
    %737 = vector.extract_strided_slice %586 {offsets = [0, 220], sizes = [8, 1], strides = [1, 1]} : vector<8x256xf32> to vector<8x1xf32>
    %738 = tpu.concatenate %731, %732, %733, %734, %735, %736, %737 in 1 : vector<8x1xf32>, vector<8x1xf32>, vector<8x1xf32>, vector<8x16xf32>, vector<8x1xf32>, vector<8x1xf32>, vector<8x1xf32> -> vector<8x22xf32>
    %c0_147 = arith.constant 0 : index
    %c421_148 = arith.constant 421 : index
    %739 = vector.load %arg8[%c0_147, %c421_148] : memref<8x622xf32, #tpu.memory_space<vmem>>, vector<8x22xf32>
    tpu.vector_store %arg8[%c0_147, %c421_148], %738 {strides = array<i32>} : memref<8x622xf32, #tpu.memory_space<vmem>>, vector<8x22xf32>,
    %740 = vector.extract_strided_slice %586 {offsets = [0, 227], sizes = [8, 1], strides = [1, 1]} : vector<8x256xf32> to vector<8x1xf32>
    %741 = vector.extract_strided_slice %586 {offsets = [0, 226], sizes = [8, 1], strides = [1, 1]} : vector<8x256xf32> to vector<8x1xf32>
    %742 = vector.extract_strided_slice %586 {offsets = [0, 225], sizes = [8, 1], strides = [1, 1]} : vector<8x256xf32> to vector<8x1xf32>
    %743 = vector.extract_strided_slice %586 {offsets = [0, 224], sizes = [8, 16], strides = [1, 1]} : vector<8x256xf32> to vector<8x16xf32>
    %744 = vector.extract_strided_slice %586 {offsets = [0, 238], sizes = [8, 1], strides = [1, 1]} : vector<8x256xf32> to vector<8x1xf32>
    %745 = vector.extract_strided_slice %586 {offsets = [0, 237], sizes = [8, 1], strides = [1, 1]} : vector<8x256xf32> to vector<8x1xf32>
    %746 = vector.extract_strided_slice %586 {offsets = [0, 236], sizes = [8, 1], strides = [1, 1]} : vector<8x256xf32> to vector<8x1xf32>
    %747 = tpu.concatenate %740, %741, %742, %743, %744, %745, %746 in 1 : vector<8x1xf32>, vector<8x1xf32>, vector<8x1xf32>, vector<8x16xf32>, vector<8x1xf32>, vector<8x1xf32>, vector<8x1xf32> -> vector<8x22xf32>
    %c0_149 = arith.constant 0 : index
    %c443_150 = arith.constant 443 : index
    %748 = vector.load %arg8[%c0_149, %c443_150] : memref<8x622xf32, #tpu.memory_space<vmem>>, vector<8x22xf32>
    tpu.vector_store %arg8[%c0_149, %c443_150], %747 {strides = array<i32>} : memref<8x622xf32, #tpu.memory_space<vmem>>, vector<8x22xf32>,
    %749 = vector.extract_strided_slice %586 {offsets = [0, 243], sizes = [8, 1], strides = [1, 1]} : vector<8x256xf32> to vector<8x1xf32>
    %750 = vector.extract_strided_slice %586 {offsets = [0, 242], sizes = [8, 1], strides = [1, 1]} : vector<8x256xf32> to vector<8x1xf32>
    %751 = vector.extract_strided_slice %586 {offsets = [0, 241], sizes = [8, 1], strides = [1, 1]} : vector<8x256xf32> to vector<8x1xf32>
    %752 = vector.extract_strided_slice %586 {offsets = [0, 240], sizes = [8, 16], strides = [1, 1]} : vector<8x256xf32> to vector<8x16xf32>
    %753 = vector.extract_strided_slice %586 {offsets = [0, 254], sizes = [8, 1], strides = [1, 1]} : vector<8x256xf32> to vector<8x1xf32>
    %754 = vector.extract_strided_slice %586 {offsets = [0, 253], sizes = [8, 1], strides = [1, 1]} : vector<8x256xf32> to vector<8x1xf32>
    %755 = vector.extract_strided_slice %586 {offsets = [0, 252], sizes = [8, 1], strides = [1, 1]} : vector<8x256xf32> to vector<8x1xf32>
    %756 = tpu.concatenate %749, %750, %751, %752, %753, %754, %755 in 1 : vector<8x1xf32>, vector<8x1xf32>, vector<8x1xf32>, vector<8x16xf32>, vector<8x1xf32>, vector<8x1xf32>, vector<8x1xf32> -> vector<8x22xf32>
    %c0_151 = arith.constant 0 : index
    %c465_152 = arith.constant 465 : index
    %757 = vector.load %arg8[%c0_151, %c465_152] : memref<8x622xf32, #tpu.memory_space<vmem>>, vector<8x22xf32>
    tpu.vector_store %arg8[%c0_151, %c465_152], %756 {strides = array<i32>} : memref<8x622xf32, #tpu.memory_space<vmem>>, vector<8x22xf32>,
    %758 = vector.extract_strided_slice %586 {offsets = [0, 227], sizes = [8, 1], strides = [1, 1]} : vector<8x256xf32> to vector<8x1xf32>
    %759 = vector.extract_strided_slice %586 {offsets = [0, 226], sizes = [8, 1], strides = [1, 1]} : vector<8x256xf32> to vector<8x1xf32>
    %760 = vector.extract_strided_slice %586 {offsets = [0, 225], sizes = [8, 1], strides = [1, 1]} : vector<8x256xf32> to vector<8x1xf32>
    %761 = vector.extract_strided_slice %586 {offsets = [0, 224], sizes = [8, 16], strides = [1, 1]} : vector<8x256xf32> to vector<8x16xf32>
    %762 = vector.extract_strided_slice %586 {offsets = [0, 238], sizes = [8, 1], strides = [1, 1]} : vector<8x256xf32> to vector<8x1xf32>
    %763 = vector.extract_strided_slice %586 {offsets = [0, 237], sizes = [8, 1], strides = [1, 1]} : vector<8x256xf32> to vector<8x1xf32>
    %764 = vector.extract_strided_slice %586 {offsets = [0, 236], sizes = [8, 1], strides = [1, 1]} : vector<8x256xf32> to vector<8x1xf32>
    %765 = tpu.concatenate %758, %759, %760, %761, %762, %763, %764 in 1 : vector<8x1xf32>, vector<8x1xf32>, vector<8x1xf32>, vector<8x16xf32>, vector<8x1xf32>, vector<8x1xf32>, vector<8x1xf32> -> vector<8x22xf32>
    %c0_153 = arith.constant 0 : index
    %c487_154 = arith.constant 487 : index
    %766 = vector.load %arg8[%c0_153, %c487_154] : memref<8x622xf32, #tpu.memory_space<vmem>>, vector<8x22xf32>
    tpu.vector_store %arg8[%c0_153, %c487_154], %765 {strides = array<i32>} : memref<8x622xf32, #tpu.memory_space<vmem>>, vector<8x22xf32>,
    %767 = vector.extract_strided_slice %586 {offsets = [0, 211], sizes = [8, 1], strides = [1, 1]} : vector<8x256xf32> to vector<8x1xf32>
    %768 = vector.extract_strided_slice %586 {offsets = [0, 210], sizes = [8, 1], strides = [1, 1]} : vector<8x256xf32> to vector<8x1xf32>
    %769 = vector.extract_strided_slice %586 {offsets = [0, 209], sizes = [8, 1], strides = [1, 1]} : vector<8x256xf32> to vector<8x1xf32>
    %770 = vector.extract_strided_slice %586 {offsets = [0, 208], sizes = [8, 16], strides = [1, 1]} : vector<8x256xf32> to vector<8x16xf32>
    %771 = vector.extract_strided_slice %586 {offsets = [0, 222], sizes = [8, 1], strides = [1, 1]} : vector<8x256xf32> to vector<8x1xf32>
    %772 = vector.extract_strided_slice %586 {offsets = [0, 221], sizes = [8, 1], strides = [1, 1]} : vector<8x256xf32> to vector<8x1xf32>
    %773 = vector.extract_strided_slice %586 {offsets = [0, 220], sizes = [8, 1], strides = [1, 1]} : vector<8x256xf32> to vector<8x1xf32>
    %774 = tpu.concatenate %767, %768, %769, %770, %771, %772, %773 in 1 : vector<8x1xf32>, vector<8x1xf32>, vector<8x1xf32>, vector<8x16xf32>, vector<8x1xf32>, vector<8x1xf32>, vector<8x1xf32> -> vector<8x22xf32>
    %c0_155 = arith.constant 0 : index
    %c509_156 = arith.constant 509 : index
    %775 = vector.load %arg8[%c0_155, %c509_156] : memref<8x622xf32, #tpu.memory_space<vmem>>, vector<8x22xf32>
    tpu.vector_store %arg8[%c0_155, %c509_156], %774 {strides = array<i32>} : memref<8x622xf32, #tpu.memory_space<vmem>>, vector<8x22xf32>,
    %776 = vector.extract_strided_slice %586 {offsets = [0, 195], sizes = [8, 1], strides = [1, 1]} : vector<8x256xf32> to vector<8x1xf32>
    %777 = vector.extract_strided_slice %586 {offsets = [0, 194], sizes = [8, 1], strides = [1, 1]} : vector<8x256xf32> to vector<8x1xf32>
    %778 = vector.extract_strided_slice %586 {offsets = [0, 193], sizes = [8, 1], strides = [1, 1]} : vector<8x256xf32> to vector<8x1xf32>
    %779 = vector.extract_strided_slice %586 {offsets = [0, 192], sizes = [8, 16], strides = [1, 1]} : vector<8x256xf32> to vector<8x16xf32>
    %780 = vector.extract_strided_slice %586 {offsets = [0, 206], sizes = [8, 1], strides = [1, 1]} : vector<8x256xf32> to vector<8x1xf32>
    %781 = vector.extract_strided_slice %586 {offsets = [0, 205], sizes = [8, 1], strides = [1, 1]} : vector<8x256xf32> to vector<8x1xf32>
    %782 = vector.extract_strided_slice %586 {offsets = [0, 204], sizes = [8, 1], strides = [1, 1]} : vector<8x256xf32> to vector<8x1xf32>
    %783 = tpu.concatenate %776, %777, %778, %779, %780, %781, %782 in 1 : vector<8x1xf32>, vector<8x1xf32>, vector<8x1xf32>, vector<8x16xf32>, vector<8x1xf32>, vector<8x1xf32>, vector<8x1xf32> -> vector<8x22xf32>
    %c0_157 = arith.constant 0 : index
    %c531_158 = arith.constant 531 : index
    %784 = vector.load %arg8[%c0_157, %c531_158] : memref<8x622xf32, #tpu.memory_space<vmem>>, vector<8x22xf32>
    tpu.vector_store %arg8[%c0_157, %c531_158], %783 {strides = array<i32>} : memref<8x622xf32, #tpu.memory_space<vmem>>, vector<8x22xf32>,
    %c0_159 = arith.constant 0 : index
    %c0_160 = arith.constant 0 : index
    %785 = vector.load %arg8[%c0_159, %c0_160] : memref<8x622xf32, #tpu.memory_space<vmem>>, vector<8x622xf32>
    %786 = vector.extract_strided_slice %785 {offsets = [0, 0], sizes = [8, 484], strides = [1, 1]} : vector<8x622xf32> to vector<8x484xf32>
    %787 = vector.extract_strided_slice %785 {offsets = [0, 1], sizes = [8, 484], strides = [1, 1]} : vector<8x622xf32> to vector<8x484xf32>
    %788 = vector.extract_strided_slice %785 {offsets = [0, 2], sizes = [8, 484], strides = [1, 1]} : vector<8x622xf32> to vector<8x484xf32>
    %789 = vector.extract_strided_slice %785 {offsets = [0, 3], sizes = [8, 484], strides = [1, 1]} : vector<8x622xf32> to vector<8x484xf32>
    %790 = vector.extract_strided_slice %785 {offsets = [0, 4], sizes = [8, 484], strides = [1, 1]} : vector<8x622xf32> to vector<8x484xf32>
    %791 = vector.extract_strided_slice %785 {offsets = [0, 5], sizes = [8, 484], strides = [1, 1]} : vector<8x622xf32> to vector<8x484xf32>
    %792 = vector.extract_strided_slice %785 {offsets = [0, 6], sizes = [8, 484], strides = [1, 1]} : vector<8x622xf32> to vector<8x484xf32>
    %793 = vector.extract_strided_slice %785 {offsets = [0, 22], sizes = [8, 484], strides = [1, 1]} : vector<8x622xf32> to vector<8x484xf32>
    %794 = vector.extract_strided_slice %785 {offsets = [0, 23], sizes = [8, 484], strides = [1, 1]} : vector<8x622xf32> to vector<8x484xf32>
    %795 = vector.extract_strided_slice %785 {offsets = [0, 24], sizes = [8, 484], strides = [1, 1]} : vector<8x622xf32> to vector<8x484xf32>
    %796 = vector.extract_strided_slice %785 {offsets = [0, 25], sizes = [8, 484], strides = [1, 1]} : vector<8x622xf32> to vector<8x484xf32>
    %797 = vector.extract_strided_slice %785 {offsets = [0, 26], sizes = [8, 484], strides = [1, 1]} : vector<8x622xf32> to vector<8x484xf32>
    %798 = vector.extract_strided_slice %785 {offsets = [0, 27], sizes = [8, 484], strides = [1, 1]} : vector<8x622xf32> to vector<8x484xf32>
    %799 = vector.extract_strided_slice %785 {offsets = [0, 28], sizes = [8, 484], strides = [1, 1]} : vector<8x622xf32> to vector<8x484xf32>
    %800 = vector.extract_strided_slice %785 {offsets = [0, 44], sizes = [8, 484], strides = [1, 1]} : vector<8x622xf32> to vector<8x484xf32>
    %801 = vector.extract_strided_slice %785 {offsets = [0, 45], sizes = [8, 484], strides = [1, 1]} : vector<8x622xf32> to vector<8x484xf32>
    %802 = vector.extract_strided_slice %785 {offsets = [0, 46], sizes = [8, 484], strides = [1, 1]} : vector<8x622xf32> to vector<8x484xf32>
    %803 = vector.extract_strided_slice %785 {offsets = [0, 47], sizes = [8, 484], strides = [1, 1]} : vector<8x622xf32> to vector<8x484xf32>
    %804 = vector.extract_strided_slice %785 {offsets = [0, 48], sizes = [8, 484], strides = [1, 1]} : vector<8x622xf32> to vector<8x484xf32>
    %805 = vector.extract_strided_slice %785 {offsets = [0, 49], sizes = [8, 484], strides = [1, 1]} : vector<8x622xf32> to vector<8x484xf32>
    %806 = vector.extract_strided_slice %785 {offsets = [0, 50], sizes = [8, 484], strides = [1, 1]} : vector<8x622xf32> to vector<8x484xf32>
    %807 = vector.extract_strided_slice %785 {offsets = [0, 66], sizes = [8, 484], strides = [1, 1]} : vector<8x622xf32> to vector<8x484xf32>
    %808 = vector.extract_strided_slice %785 {offsets = [0, 67], sizes = [8, 484], strides = [1, 1]} : vector<8x622xf32> to vector<8x484xf32>
    %809 = vector.extract_strided_slice %785 {offsets = [0, 68], sizes = [8, 484], strides = [1, 1]} : vector<8x622xf32> to vector<8x484xf32>
    %810 = vector.extract_strided_slice %785 {offsets = [0, 69], sizes = [8, 484], strides = [1, 1]} : vector<8x622xf32> to vector<8x484xf32>
    %811 = vector.extract_strided_slice %785 {offsets = [0, 70], sizes = [8, 484], strides = [1, 1]} : vector<8x622xf32> to vector<8x484xf32>
    %812 = vector.extract_strided_slice %785 {offsets = [0, 71], sizes = [8, 484], strides = [1, 1]} : vector<8x622xf32> to vector<8x484xf32>
    %813 = vector.extract_strided_slice %785 {offsets = [0, 72], sizes = [8, 484], strides = [1, 1]} : vector<8x622xf32> to vector<8x484xf32>
    %814 = vector.extract_strided_slice %785 {offsets = [0, 88], sizes = [8, 484], strides = [1, 1]} : vector<8x622xf32> to vector<8x484xf32>
    %815 = vector.extract_strided_slice %785 {offsets = [0, 89], sizes = [8, 484], strides = [1, 1]} : vector<8x622xf32> to vector<8x484xf32>
    %816 = vector.extract_strided_slice %785 {offsets = [0, 90], sizes = [8, 484], strides = [1, 1]} : vector<8x622xf32> to vector<8x484xf32>
    %817 = vector.extract_strided_slice %785 {offsets = [0, 91], sizes = [8, 484], strides = [1, 1]} : vector<8x622xf32> to vector<8x484xf32>
    %818 = vector.extract_strided_slice %785 {offsets = [0, 92], sizes = [8, 484], strides = [1, 1]} : vector<8x622xf32> to vector<8x484xf32>
    %819 = vector.extract_strided_slice %785 {offsets = [0, 93], sizes = [8, 484], strides = [1, 1]} : vector<8x622xf32> to vector<8x484xf32>
    %820 = vector.extract_strided_slice %785 {offsets = [0, 94], sizes = [8, 484], strides = [1, 1]} : vector<8x622xf32> to vector<8x484xf32>
    %821 = vector.extract_strided_slice %785 {offsets = [0, 110], sizes = [8, 484], strides = [1, 1]} : vector<8x622xf32> to vector<8x484xf32>
    %822 = vector.extract_strided_slice %785 {offsets = [0, 111], sizes = [8, 484], strides = [1, 1]} : vector<8x622xf32> to vector<8x484xf32>
    %823 = vector.extract_strided_slice %785 {offsets = [0, 112], sizes = [8, 484], strides = [1, 1]} : vector<8x622xf32> to vector<8x484xf32>
    %824 = vector.extract_strided_slice %785 {offsets = [0, 113], sizes = [8, 484], strides = [1, 1]} : vector<8x622xf32> to vector<8x484xf32>
    %825 = vector.extract_strided_slice %785 {offsets = [0, 114], sizes = [8, 484], strides = [1, 1]} : vector<8x622xf32> to vector<8x484xf32>
    %826 = vector.extract_strided_slice %785 {offsets = [0, 115], sizes = [8, 484], strides = [1, 1]} : vector<8x622xf32> to vector<8x484xf32>
    %827 = vector.extract_strided_slice %785 {offsets = [0, 116], sizes = [8, 484], strides = [1, 1]} : vector<8x622xf32> to vector<8x484xf32>
    %828 = vector.extract_strided_slice %785 {offsets = [0, 132], sizes = [8, 484], strides = [1, 1]} : vector<8x622xf32> to vector<8x484xf32>
    %829 = vector.extract_strided_slice %785 {offsets = [0, 133], sizes = [8, 484], strides = [1, 1]} : vector<8x622xf32> to vector<8x484xf32>
    %830 = vector.extract_strided_slice %785 {offsets = [0, 134], sizes = [8, 484], strides = [1, 1]} : vector<8x622xf32> to vector<8x484xf32>
    %831 = vector.extract_strided_slice %785 {offsets = [0, 135], sizes = [8, 484], strides = [1, 1]} : vector<8x622xf32> to vector<8x484xf32>
    %832 = vector.extract_strided_slice %785 {offsets = [0, 136], sizes = [8, 484], strides = [1, 1]} : vector<8x622xf32> to vector<8x484xf32>
    %833 = vector.extract_strided_slice %785 {offsets = [0, 137], sizes = [8, 484], strides = [1, 1]} : vector<8x622xf32> to vector<8x484xf32>
    %834 = vector.extract_strided_slice %785 {offsets = [0, 138], sizes = [8, 484], strides = [1, 1]} : vector<8x622xf32> to vector<8x484xf32>
    %835 = tpu.concatenate %786, %787, %788, %789, %790, %791, %792, %793, %794, %795, %796, %797, %798, %799, %800, %801 in 0 : vector<8x484xf32>, vector<8x484xf32>, vector<8x484xf32>, vector<8x484xf32>, vector<8x484xf32>, vector<8x484xf32>, vector<8x484xf32>, vector<8x484xf32>, vector<8x484xf32>, vector<8x484xf32>, vector<8x484xf32>, vector<8x484xf32>, vector<8x484xf32>, vector<8x484xf32>, vector<8x484xf32>, vector<8x484xf32> -> vector<128x484xf32>
    %836 = tpu.concatenate %802, %803, %804, %805, %806, %807, %808, %809, %810, %811, %812, %813, %814, %815, %816, %817 in 0 : vector<8x484xf32>, vector<8x484xf32>, vector<8x484xf32>, vector<8x484xf32>, vector<8x484xf32>, vector<8x484xf32>, vector<8x484xf32>, vector<8x484xf32>, vector<8x484xf32>, vector<8x484xf32>, vector<8x484xf32>, vector<8x484xf32>, vector<8x484xf32>, vector<8x484xf32>, vector<8x484xf32>, vector<8x484xf32> -> vector<128x484xf32>
    %837 = tpu.concatenate %818, %819, %820, %821, %822, %823, %824, %825, %826, %827, %828, %829, %830, %831, %832, %833 in 0 : vector<8x484xf32>, vector<8x484xf32>, vector<8x484xf32>, vector<8x484xf32>, vector<8x484xf32>, vector<8x484xf32>, vector<8x484xf32>, vector<8x484xf32>, vector<8x484xf32>, vector<8x484xf32>, vector<8x484xf32>, vector<8x484xf32>, vector<8x484xf32>, vector<8x484xf32>, vector<8x484xf32>, vector<8x484xf32> -> vector<128x484xf32>
    %838 = tpu.concatenate %835, %836, %837, %834 in 0 : vector<128x484xf32>, vector<128x484xf32>, vector<128x484xf32>, vector<8x484xf32> -> vector<392x484xf32>
    %cst_161 = arith.constant dense<0.000000e+00> : vector<3x484xf32>
    %839 = tpu.matmul %3, %838, %cst_161 {dimension_numbers = #tpu.dot_dimension_numbers<[1], [0], [0], [1], [0, 0, 1, 1], [], []>} : vector<3x392xf32>, vector<392x484xf32>, vector<3x484xf32> -> vector<3x484xf32>
    %840 = vector.broadcast %11 : vector<3x1xf32> to vector<3x484xf32>
    %841 = arith.addf %839, %840 : vector<3x484xf32>
    %842 = vector.extract_strided_slice %841 {offsets = [0, 69], sizes = [3, 16], strides = [1, 1]} : vector<3x484xf32> to vector<3x16xf32>
    %843 = vector.extract_strided_slice %841 {offsets = [0, 91], sizes = [3, 16], strides = [1, 1]} : vector<3x484xf32> to vector<3x16xf32>
    %844 = vector.extract_strided_slice %841 {offsets = [0, 113], sizes = [3, 16], strides = [1, 1]} : vector<3x484xf32> to vector<3x16xf32>
    %845 = vector.extract_strided_slice %841 {offsets = [0, 135], sizes = [3, 16], strides = [1, 1]} : vector<3x484xf32> to vector<3x16xf32>
    %846 = vector.extract_strided_slice %841 {offsets = [0, 157], sizes = [3, 16], strides = [1, 1]} : vector<3x484xf32> to vector<3x16xf32>
    %847 = vector.extract_strided_slice %841 {offsets = [0, 179], sizes = [3, 16], strides = [1, 1]} : vector<3x484xf32> to vector<3x16xf32>
    %848 = vector.extract_strided_slice %841 {offsets = [0, 201], sizes = [3, 16], strides = [1, 1]} : vector<3x484xf32> to vector<3x16xf32>
    %849 = vector.extract_strided_slice %841 {offsets = [0, 223], sizes = [3, 16], strides = [1, 1]} : vector<3x484xf32> to vector<3x16xf32>
    %850 = vector.extract_strided_slice %841 {offsets = [0, 245], sizes = [3, 16], strides = [1, 1]} : vector<3x484xf32> to vector<3x16xf32>
    %851 = vector.extract_strided_slice %841 {offsets = [0, 267], sizes = [3, 16], strides = [1, 1]} : vector<3x484xf32> to vector<3x16xf32>
    %852 = vector.extract_strided_slice %841 {offsets = [0, 289], sizes = [3, 16], strides = [1, 1]} : vector<3x484xf32> to vector<3x16xf32>
    %853 = vector.extract_strided_slice %841 {offsets = [0, 311], sizes = [3, 16], strides = [1, 1]} : vector<3x484xf32> to vector<3x16xf32>
    %854 = vector.extract_strided_slice %841 {offsets = [0, 333], sizes = [3, 16], strides = [1, 1]} : vector<3x484xf32> to vector<3x16xf32>
    %855 = vector.extract_strided_slice %841 {offsets = [0, 355], sizes = [3, 16], strides = [1, 1]} : vector<3x484xf32> to vector<3x16xf32>
    %856 = vector.extract_strided_slice %841 {offsets = [0, 377], sizes = [3, 16], strides = [1, 1]} : vector<3x484xf32> to vector<3x16xf32>
    %857 = vector.extract_strided_slice %841 {offsets = [0, 399], sizes = [3, 16], strides = [1, 1]} : vector<3x484xf32> to vector<3x16xf32>
    %858 = tpu.concatenate %842, %843, %844, %845, %846, %847, %848, %849, %850, %851, %852, %853, %854, %855, %856, %857 in 1 : vector<3x16xf32>, vector<3x16xf32>, vector<3x16xf32>, vector<3x16xf32>, vector<3x16xf32>, vector<3x16xf32>, vector<3x16xf32>, vector<3x16xf32>, vector<3x16xf32>, vector<3x16xf32>, vector<3x16xf32>, vector<3x16xf32>, vector<3x16xf32>, vector<3x16xf32>, vector<3x16xf32>, vector<3x16xf32> -> vector<3x256xf32>
    %c0_162 = arith.constant 0 : index
    %c0_163 = arith.constant 0 : index
    %c0_164 = arith.constant 0 : index
    %859 = vector.load %arg7[%c0_162, %c0_163, %c0_164] : memref<1x3x256xf32, #tpu.memory_space<vmem>>, vector<1x3x256xf32>
    %860 = vector.shape_cast %859 : vector<1x3x256xf32> to vector<3x256xf32>
    %861 = vector.shape_cast %858 : vector<3x256xf32> to vector<1x3x256xf32>
    tpu.vector_store %arg7[%c0_162, %c0_163, %c0_164], %861 {strides = array<i32>} : memref<1x3x256xf32, #tpu.memory_space<vmem>>, vector<1x3x256xf32>,
    return
  }
  func.func @transform_0(%arg0: i32) -> (i32, i32, i32) {
    %c0_i32 = arith.constant 0 : i32
    %c0_i32_0 = arith.constant 0 : i32
    %c0_i32_1 = arith.constant 0 : i32
    return %arg0, %c0_i32, %c0_i32_0 : i32, i32, i32
  }
  func.func @transform_1(%arg0: i32) -> (i32, i32) {
    %c0_i32 = arith.constant 0 : i32
    %c0_i32_0 = arith.constant 0 : i32
    %c0_i32_1 = arith.constant 0 : i32
    return %c0_i32, %c0_i32_0 : i32, i32
  }
  func.func @transform_2(%arg0: i32) -> (i32, i32) {
    %c0_i32 = arith.constant 0 : i32
    %c0_i32_0 = arith.constant 0 : i32
    %c0_i32_1 = arith.constant 0 : i32
    return %c0_i32, %c0_i32_0 : i32, i32
  }
  func.func @transform_3(%arg0: i32) -> (i32, i32) {
    %c0_i32 = arith.constant 0 : i32
    %c0_i32_0 = arith.constant 0 : i32
    %c0_i32_1 = arith.constant 0 : i32
    return %c0_i32, %c0_i32_0 : i32, i32
  }
  func.func @transform_4(%arg0: i32) -> (i32, i32) {
    %c0_i32 = arith.constant 0 : i32
    %c0_i32_0 = arith.constant 0 : i32
    %c0_i32_1 = arith.constant 0 : i32
    return %c0_i32, %c0_i32_0 : i32, i32
  }
  func.func @transform_5(%arg0: i32) -> (i32, i32) {
    %c0_i32 = arith.constant 0 : i32
    %c0_i32_0 = arith.constant 0 : i32
    %c0_i32_1 = arith.constant 0 : i32
    return %c0_i32, %c0_i32_0 : i32, i32
  }
  func.func @transform_6(%arg0: i32) -> (i32, i32, i32) {
    %c0_i32 = arith.constant 0 : i32
    %c0_i32_0 = arith.constant 0 : i32
    %c0_i32_1 = arith.constant 0 : i32
    return %arg0, %c0_i32, %c0_i32_0 : i32, i32, i32
  }
}

</mosaic_0001>

<llo_original>
// kernel: transformer_net_forward.1
$region0: #{transformer_net_forward.1}
  #allocation0 [shape = 'u32[]', space=smem, size = 0x4, offset = 0x4, fixed_abs, tag = 'smem constant byte address 0x4 - core index']
  #allocation1 [shape = 'u32[144,128]{1,0:T(1,128)}', space=vmem, size = 0x12000, scoped, tag = 'internal scratch']
  #allocation2 [shape = 'f32[8,622]{1,0:T(8,128)}', space=vmem, size = 0x5000, scoped, tag = 'scratch operand']
  %s0 = inlined_call_operand.vmem [shape: f32[2,3,256], index: 0, kind: input, shape index: {}]
  %s1 = inlined_call_operand.vmem [shape: f32[8,147], index: 1, kind: input, shape index: {}]
  %s2 = inlined_call_operand.vmem [shape: f32[8,72], index: 2, kind: input, shape index: {}]
  %s3 = inlined_call_operand.vmem [shape: f32[8,72], index: 3, kind: input, shape index: {}]
  %s4 = inlined_call_operand.vmem [shape: f32[3,392], index: 4, kind: input, shape index: {}]
  %s5 = inlined_call_operand.vmem [shape: f32[8,7], index: 5, kind: input, shape index: {}]
  %s6 = inlined_call_operand.vmem [shape: f32[2,3,256], index: 6, kind: output, shape index: {}]
  %s7 = sld [smem:[#allocation0]]
  $region57: #{transformer_net_forward.1} parent=0
    _
  %s9 = ssub.s32 1, %s7
  %s10 = scalar_select 0, %s9, %s7
  loop: start=0, step=1, limit=4
  $region2: #{transformer_net_forward.1} parent=0 // loop_pre_header
    _
  $region3: #{transformer_net_forward.1} parent=0 // loop_header
    %s12 = sphi 0, %s16
    %p13 = scmp.ge.s32.totalorder %s12, 4
    %s22 = sphi 0, %s24
    %s25 = sphi 0, %s22
    %s26 = sphi 0, %s25
    %s42 = sphi 0, %s26
    %s46 = sphi 0, %s46
    %s48 = sphi 0, %s46
    %s49 = sphi 0, %s48
    %s63 = sphi 0, %s49
    %s67 = sphi 0, %s67
    %s69 = sphi 0, %s67
    %s70 = sphi 0, %s69
    %s84 = sphi 0, %s70
    %s88 = sphi 0, %s88
    %s90 = sphi 0, %s88
    %s91 = sphi 0, %s90
    %s105 = sphi 0, %s91
    %s109 = sphi 0, %s109
    %s111 = sphi 0, %s109
    %s112 = sphi 0, %s111
    %s126 = sphi 0, %s112
    %s130 = sphi 0, %s130
    %s132 = sphi 0, %s130
    %s133 = sphi 0, %s132
    %s147 = sphi 0, %s133
    %s153 = sphi 0, %s155
    %s156 = sphi 0, %s153
    %s157 = sphi 0, %s156
    %s173 = sphi 0, %s157
  $region4: #{transformer_net_forward.1} parent=0 // loop_header_branch
    %15 = sbr.rel (%p13) target = $region8
  $region5: #{transformer_net_forward.1} parent=0 // loop_body
    %s17 = ssub.s32 %s12, 1
    %s18 = ssub.s32 %s12, 2
    %s19 = sadd.s32 %s12, 1
    %s20 = ssub.s32 %s12, %s19
    %p21 = scmp.eq.s32.totalorder %s20, 0
    %s23 = sadd.s32 %s22, 1
    %s24 = scalar_select %p21, %s22, %s23
    %p27 = pneg %p21
    %p28 = scmp.eq.s32.totalorder %s12, 1
    %p29 = por %p27, %p28
    %p30 = scmp.ne.s32.totalorder %s22, %s25
    %p31 = scmp.eq.s32.totalorder %s12, 0
    %p32 = por %p30, %p31
    %p33 = scmp.ne.s32.totalorder %s22, %s25
    %p34 = scmp.eq.s32.totalorder %s17, 1
    %p35 = por %p33, %p34
    %p36 = scmp.ne.s32.totalorder %s25, %s26
    %p37 = scmp.eq.s32.totalorder %s17, 0
    %p38 = por %p36, %p37
    %p39 = scmp.ne.s32.totalorder %s25, %s26
    %p40 = scmp.eq.s32.totalorder %s18, 1
    %p41 = por %p39, %p40
    %p43 = scmp.ne.s32.totalorder %s26, %s42
    %p44 = scmp.eq.s32.totalorder %s18, 0
    %p45 = por %p43, %p44
    %s47 = sadd.s32 %s46, 1
    %p50 = scmp.eq.s32.totalorder %s12, 1
    %p51 = scmp.ne.s32.totalorder %s46, %s48
    %p52 = scmp.eq.s32.totalorder %s12, 0
    %p53 = por %p51, %p52
    %p54 = scmp.ne.s32.totalorder %s46, %s48
    %p55 = scmp.eq.s32.totalorder %s17, 1
    %p56 = por %p54, %p55
    %p57 = scmp.ne.s32.totalorder %s48, %s49
    %p58 = scmp.eq.s32.totalorder %s17, 0
    %p59 = por %p57, %p58
    %p60 = scmp.ne.s32.totalorder %s48, %s49
    %p61 = scmp.eq.s32.totalorder %s18, 1
    %p62 = por %p60, %p61
    %p64 = scmp.ne.s32.totalorder %s49, %s63
    %p65 = scmp.eq.s32.totalorder %s18, 0
    %p66 = por %p64, %p65
    %s68 = sadd.s32 %s67, 1
    %p71 = scmp.eq.s32.totalorder %s12, 1
    %p72 = scmp.ne.s32.totalorder %s67, %s69
    %p73 = scmp.eq.s32.totalorder %s12, 0
    %p74 = por %p72, %p73
    %p75 = scmp.ne.s32.totalorder %s67, %s69
    %p76 = scmp.eq.s32.totalorder %s17, 1
    %p77 = por %p75, %p76
    %p78 = scmp.ne.s32.totalorder %s69, %s70
    %p79 = scmp.eq.s32.totalorder %s17, 0
    %p80 = por %p78, %p79
    %p81 = scmp.ne.s32.totalorder %s69, %s70
    %p82 = scmp.eq.s32.totalorder %s18, 1
    %p83 = por %p81, %p82
    %p85 = scmp.ne.s32.totalorder %s70, %s84
    %p86 = scmp.eq.s32.totalorder %s18, 0
    %p87 = por %p85, %p86
    %s89 = sadd.s32 %s88, 1
    %p92 = scmp.eq.s32.totalorder %s12, 1
    %p93 = scmp.ne.s32.totalorder %s88, %s90
    %p94 = scmp.eq.s32.totalorder %s12, 0
    %p95 = por %p93, %p94
    %p96 = scmp.ne.s32.totalorder %s88, %s90
    %p97 = scmp.eq.s32.totalorder %s17, 1
    %p98 = por %p96, %p97
    %p99 = scmp.ne.s32.totalorder %s90, %s91
    %p100 = scmp.eq.s32.totalorder %s17, 0
    %p101 = por %p99, %p100
    %p102 = scmp.ne.s32.totalorder %s90, %s91
    %p103 = scmp.eq.s32.totalorder %s18, 1
    %p104 = por %p102, %p103
    %p106 = scmp.ne.s32.totalorder %s91, %s105
    %p107 = scmp.eq.s32.totalorder %s18, 0
    %p108 = por %p106, %p107
    %s110 = sadd.s32 %s109, 1
    %p113 = scmp.eq.s32.totalorder %s12, 1
    %p114 = scmp.ne.s32.totalorder %s109, %s111
    %p115 = scmp.eq.s32.totalorder %s12, 0
    %p116 = por %p114, %p115
    %p117 = scmp.ne.s32.totalorder %s109, %s111
    %p118 = scmp.eq.s32.totalorder %s17, 1
    %p119 = por %p117, %p118
    %p120 = scmp.ne.s32.totalorder %s111, %s112
    %p121 = scmp.eq.s32.totalorder %s17, 0
    %p122 = por %p120, %p121
    %p123 = scmp.ne.s32.totalorder %s111, %s112
    %p124 = scmp.eq.s32.totalorder %s18, 1
    %p125 = por %p123, %p124
    %p127 = scmp.ne.s32.totalorder %s112, %s126
    %p128 = scmp.eq.s32.totalorder %s18, 0
    %p129 = por %p127, %p128
    %s131 = sadd.s32 %s130, 1
    %p134 = scmp.eq.s32.totalorder %s12, 1
    %p135 = scmp.ne.s32.totalorder %s130, %s132
    %p136 = scmp.eq.s32.totalorder %s12, 0
    %p137 = por %p135, %p136
    %p138 = scmp.ne.s32.totalorder %s130, %s132
    %p139 = scmp.eq.s32.totalorder %s17, 1
    %p140 = por %p138, %p139
    %p141 = scmp.ne.s32.totalorder %s132, %s133
    %p142 = scmp.eq.s32.totalorder %s17, 0
    %p143 = por %p141, %p142
    %p144 = scmp.ne.s32.totalorder %s132, %s133
    %p145 = scmp.eq.s32.totalorder %s18, 1
    %p146 = por %p144, %p145
    %p148 = scmp.ne.s32.totalorder %s133, %s147
    %p149 = scmp.eq.s32.totalorder %s18, 0
    %p150 = por %p148, %p149
    %s151 = ssub.s32 %s12, %s19
    %p152 = scmp.eq.s32.totalorder %s151, 0
    %s154 = sadd.s32 %s153, 1
    %s155 = scalar_select %p152, %s153, %s154
    %p158 = pneg %p152
    %p159 = scmp.eq.s32.totalorder %s12, 1
    %p160 = por %p158, %p159
    %p161 = scmp.ne.s32.totalorder %s153, %s156
    %p162 = scmp.eq.s32.totalorder %s12, 0
    %p163 = por %p161, %p162
    %p164 = scmp.ne.s32.totalorder %s153, %s156
    %p165 = scmp.eq.s32.totalorder %s17, 1
    %p166 = por %p164, %p165
    %p167 = scmp.ne.s32.totalorder %s156, %s157
    %p168 = scmp.eq.s32.totalorder %s17, 0
    %p169 = por %p167, %p168
    %p170 = scmp.ne.s32.totalorder %s156, %s157
    %p171 = scmp.eq.s32.totalorder %s18, 1
    %p172 = por %p170, %p171
    %p174 = scmp.ne.s32.totalorder %s157, %s173
    %p175 = scmp.eq.s32.totalorder %s18, 0
    %p176 = por %p174, %p175
    %p177 = scmp.le.s32.totalorder 1, %s12
    %p178 = scmp.lt.s32.totalorder %s12, 3
    %p179 = pnand %p177, %p178
    %p180 = pneg %p179
    // Predicated region
    $region9: #{transformer_net_forward.1} parent=5 // pred_check
      _
    $region10: #{transformer_net_forward.1} parent=5 // pred_check_branch
      %182 = sbr.rel (%p179) target = $region12
    $region11: #{transformer_net_forward.1} parent=5 // pred_region
      %s183 = ssub.s32 %s12, 1
      // Predicated region
      $region13: #{transformer_net_forward.1} parent=11 // pred_check
        %p184 = pneg %p59
      $region14: #{transformer_net_forward.1} parent=11 // pred_check_branch
        %186 = sbr.rel (%p184) target = $region16
      $region15: #{transformer_net_forward.1} parent=11 // pred_region
        _
      $region16: #{transformer_net_forward.1} parent=11 // pred_fallthru
        _
      // Predicated region
      $region17: #{transformer_net_forward.1} parent=11 // pred_check
        %p187 = pneg %p80
      $region18: #{transformer_net_forward.1} parent=11 // pred_check_branch
        %189 = sbr.rel (%p187) target = $region20
      $region19: #{transformer_net_forward.1} parent=11 // pred_region
        _
      $region20: #{transformer_net_forward.1} parent=11 // pred_fallthru
        _
      // Predicated region
      $region21: #{transformer_net_forward.1} parent=11 // pred_check
        %p190 = pneg %p101
      $region22: #{transformer_net_forward.1} parent=11 // pred_check_branch
        %192 = sbr.rel (%p190) target = $region24
      $region23: #{transformer_net_forward.1} parent=11 // pred_region
        _
      $region24: #{transformer_net_forward.1} parent=11 // pred_fallthru
        _
      // Predicated region
      $region25: #{transformer_net_forward.1} parent=11 // pred_check
        %p193 = pneg %p122
      $region26: #{transformer_net_forward.1} parent=11 // pred_check_branch
        %195 = sbr.rel (%p193) target = $region28
      $region27: #{transformer_net_forward.1} parent=11 // pred_region
        _
      $region28: #{transformer_net_forward.1} parent=11 // pred_fallthru
        _
      // Predicated region
      $region29: #{transformer_net_forward.1} parent=11 // pred_check
        %p196 = pneg %p143
      $region30: #{transformer_net_forward.1} parent=11 // pred_check_branch
        %198 = sbr.rel (%p196) target = $region32
      $region31: #{transformer_net_forward.1} parent=11 // pred_region
        _
      $region32: #{transformer_net_forward.1} parent=11 // pred_fallthru
        _
    $region12: #{transformer_net_forward.1} parent=5 // pred_fallthru
      _
    %p199 = scmp.lt.s32.totalorder %s12, 2
    // Predicated region
    $region33: #{transformer_net_forward.1} parent=5 // pred_check
      %p200 = pneg %p199
    $region34: #{transformer_net_forward.1} parent=5 // pred_check_branch
      %202 = sbr.rel (%p200) target = $region36
    $region35: #{transformer_net_forward.1} parent=5 // pred_region
      // Predicated region
      $region37: #{transformer_net_forward.1} parent=35 // pred_check
        %p203 = pneg %p32
      $region38: #{transformer_net_forward.1} parent=35 // pred_check_branch
        %205 = sbr.rel (%p203) target = $region40
      $region39: #{transformer_net_forward.1} parent=35 // pred_region
        %p206 = scmp.lt.s32.totalorder %s12, 1
        %s207 = scalar_select %p206, %s12, 1
        %s208 = smul.addr %s207, 2
        %s209 = smul.addr %s208, 4
        %s210 = scalar_lea.vmem %s0, %s209
      $region40: #{transformer_net_forward.1} parent=35 // pred_fallthru
        _
    $region36: #{transformer_net_forward.1} parent=5 // pred_fallthru
      _
    %p211 = scmp.le.s32.totalorder 1, %s12
    %p212 = scmp.lt.s32.totalorder %s12, 3
    %p213 = pnand %p211, %p212
    %p214 = pneg %p213
    // Predicated region
    $region41: #{transformer_net_forward.1} parent=5 // pred_check
      _
    $region42: #{transformer_net_forward.1} parent=5 // pred_check_branch
      %216 = sbr.rel (%p213) target = $region44
    $region43: #{transformer_net_forward.1} parent=5 // pred_region
      %s217 = ssub.s32 %s12, 1
      %p218 = scmp.lt.s32.totalorder %s17, 1
      %s219 = scalar_select %p218, %s17, 1
      %s220 = smul.addr %s219, 2
      %s221 = smul.addr %s220, 4
      %s222 = scalar_lea.vmem %s0, %s221
      %p223 = pneg %p38
      %p224 = pneg %p35
      %p225 = pneg %p59
      %p226 = pneg %p56
      %p227 = pneg %p80
      %p228 = pneg %p77
      %p229 = pneg %p101
      %p230 = pneg %p98
      %p231 = pneg %p122
      %p232 = pneg %p119
      %p233 = pneg %p143
      %p234 = pneg %p140
      %p235 = pneg %p169
      %p236 = pneg %p166
      %p237 = scmp.lt.s32.totalorder %s17, 1
      %s238 = scalar_select %p237, %s17, 1
      %s239 = smul.addr %s238, 2
      %s240 = smul.addr %s239, 4
      %s241 = scalar_lea.vmem %s6, %s240
      %p242 = scmp.lt.s32.totalorder %s17, 1
      %s243 = scalar_select %p242, %s17, 1
      %s244 = smul.addr %s243, 2
      %s245 = smul.addr %s244, 4
      %s246 = scalar_lea.vmem %s0, %s245
      %p247 = scmp.lt.s32.totalorder %s17, 1
      %s248 = scalar_select %p247, %s17, 1
      %s249 = smul.addr %s248, 2
      %s250 = smul.addr %s249, 4
      %s251 = scalar_lea.vmem %s6, %s250
      %v252 = vld [vmem:[%s1] sm:$0xff]
      %v253 = vld [vmem:[%s1 + $0x8] sm:$0xff]
      %v254 = vld [vmem:[%s2] sm:$0xff]
      %v255 = vld [vmem:[%s3] sm:$0xff]
      %v256 = vld [vmem:[%s4] sm:$0x77]
      %v257 = vld [vmem:[%s4 + $0x8] sm:$0x77]
      %v258 = vld [vmem:[%s5] sm:$0xff]
      %v259 = vld [vmem:[%s246] sm:$0x77]
      %261 = vrot.lane.b32.xlu0 %v259, 77
      %v262 = vpop.permute.xlu0 %261
      %264 = vrot.lane.b32.xlu0 %v259, 79
      %v265 = vpop.permute.xlu0 %264
      %267 = vrot.lane.b32.xlu0 %v259, 81
      %v268 = vpop.permute.xlu0 %267
      %270 = vrot.lane.b32.xlu0 %v259, 83
      %v271 = vpop.permute.xlu0 %270
      %273 = vrot.lane.b32.xlu0 %v259, 85
      %v274 = vpop.permute.xlu0 %273
      %276 = vrot.lane.b32.xlu0 %v259, 87
      %v277 = vpop.permute.xlu0 %276
      %279 = vrot.lane.b32.xlu0 %v259, 89
      %v280 = vpop.permute.xlu0 %279
      %vm282 = vcmask 7168
      %v283 = vsel %vm282, %v262, %v265
      %vm284 = vcmask 15360
      %v285 = vsel %vm284, %v283, %v268
      %vm286 = vcmask 23552
      %v287 = vsel %vm286, %v285, %v271
      %vm288 = vcmask 154624
      %v289 = vsel %vm288, %v287, %v274
      %vm290 = vcmask 162816
      %v291 = vsel %vm290, %v289, %v277
      %vm292 = vcmask 171008
      %v293 = vsel %vm292, %v291, %v280
      %295 = vrot.lane.b32.xlu0 %v293, 69
      %v296 = vpop.permute.xlu0 %295
      %vm298 = vcmask 739880
      %299 = vst.msk [vmem:[#allocation2] sm:$0x7] %vm298, %v296
      %300 = vrot.lane.b32.xlu0 %v259, 93
      %v301 = vpop.permute.xlu0 %300
      %303 = vrot.lane.b32.xlu0 %v259, 95
      %v304 = vpop.permute.xlu0 %303
      %306 = vrot.lane.b32.xlu0 %v259, 97
      %v307 = vpop.permute.xlu0 %306
      %309 = vrot.lane.b32.xlu0 %v259, 99
      %v310 = vpop.permute.xlu0 %309
      %312 = vrot.lane.b32.xlu0 %v259, 101
      %v313 = vpop.permute.xlu0 %312
      %315 = vrot.lane.b32.xlu0 %v259, 103
      %v316 = vpop.permute.xlu0 %315
      %318 = vrot.lane.b32.xlu0 %v259, 105
      %v319 = vpop.permute.xlu0 %318
      %v321 = vsel %vm282, %v301, %v304
      %v322 = vsel %vm284, %v321, %v307
      %v323 = vsel %vm286, %v322, %v310
      %v324 = vsel %vm288, %v323, %v313
      %v325 = vsel %vm290, %v324, %v316
      %v326 = vsel %vm292, %v325, %v319
      %328 = vrot.lane.b32.xlu0 %v326, 91
      %v329 = vpop.permute.xlu0 %328
      %vm331 = vcmask 920280
      %332 = vst.msk [vmem:[#allocation2] sm:$0x7] %vm331, %v329
      %333 = vrot.lane.b32.xlu0 %v259, 109
      %v334 = vpop.permute.xlu0 %333
      %336 = vrot.lane.b32.xlu0 %v259, 111
      %v337 = vpop.permute.xlu0 %336
      %339 = vrot.lane.b32.xlu0 %v259, 113
      %v340 = vpop.permute.xlu0 %339
      %342 = vrot.lane.b32.xlu0 %v259, 115
      %v343 = vpop.permute.xlu0 %342
      %345 = vrot.lane.b32.xlu0 %v259, 117
      %v346 = vpop.permute.xlu0 %345
      %348 = vrot.lane.b32.xlu0 %v259, 119
      %v349 = vpop.permute.xlu0 %348
      %351 = vrot.lane.b32.xlu0 %v259, 121
      %v352 = vpop.permute.xlu0 %351
      %v354 = vsel %vm282, %v334, %v337
      %v355 = vsel %vm284, %v354, %v340
      %v356 = vsel %vm286, %v355, %v343
      %v357 = vsel %vm288, %v356, %v346
      %v358 = vsel %vm290, %v357, %v349
      %v359 = vsel %vm292, %v358, %v352
      %361 = vrot.lane.b32.xlu0 %v359, 113
      %v362 = vpop.permute.xlu0 %361
      %vm364 = vcmask 1043336
      %365 = vst.msk [vmem:[#allocation2] sm:$0x7] %vm364, %v362
      %vm366 = vcmask 51200
      %367 = vst.msk [vmem:[#allocation2 + $0x8] sm:$0x7] %vm366, %v362
      %368 = vrot.lane.b32.xlu0 %v259, 125
      %v369 = vpop.permute.xlu0 %368
      %371 = vrot.lane.b32.xlu0 %v259, 127
      %v372 = vpop.permute.xlu0 %371
      %374 = vrot.lane.b32.xlu0 %v259, 1
      %v375 = vpop.permute.xlu0 %374
      %377 = vrot.lane.b32.xlu0 %v259, 3
      %v378 = vpop.permute.xlu0 %377
      %380 = vrot.lane.b32.xlu0 %v259, 5
      %v381 = vpop.permute.xlu0 %380
      %383 = vrot.lane.b32.xlu0 %v259, 7
      %v384 = vpop.permute.xlu0 %383
      %386 = vrot.lane.b32.xlu0 %v259, 9
      %v387 = vpop.permute.xlu0 %386
      %v389 = vsel %vm282, %v369, %v372
      %v390 = vsel %vm284, %v389, %v375
      %v391 = vsel %vm286, %v390, %v378
      %v392 = vsel %vm288, %v391, %v381
      %v393 = vsel %vm290, %v392, %v384
      %v394 = vsel %vm292, %v393, %v387
      %396 = vrot.lane.b32.xlu0 %v394, 7
      %v397 = vpop.permute.xlu0 %396
      %vm399 = vcmask 231480
      %400 = vst.msk [vmem:[#allocation2 + $0x8] sm:$0x7] %vm399, %v397
      %401 = vrot.lane.b32.xlu0 %v359, 29
      %v402 = vpop.permute.xlu0 %401
      %vm404 = vcmask 411880
      %405 = vst.msk [vmem:[#allocation2 + $0x8] sm:$0x7] %vm404, %v402
      %406 = vrot.lane.b32.xlu0 %v326, 51
      %v407 = vpop.permute.xlu0 %406
      %vm409 = vcmask 592280
      %410 = vst.msk [vmem:[#allocation2 + $0x8] sm:$0x7] %vm409, %v407
      %411 = vrot.lane.b32.xlu0 %v293, 73
      %v412 = vpop.permute.xlu0 %411
      %vm414 = vcmask 772680
      %415 = vst.msk [vmem:[#allocation2 + $0x8] sm:$0x7] %vm414, %v412
      %416 = vrot.lane.b32.xlu0 %v259, 61
      %v417 = vpop.permute.xlu0 %416
      %419 = vrot.lane.b32.xlu0 %v259, 63
      %v420 = vpop.permute.xlu0 %419
      %422 = vrot.lane.b32.xlu0 %v259, 65
      %v423 = vpop.permute.xlu0 %422
      %425 = vrot.lane.b32.xlu0 %v259, 67
      %v426 = vpop.permute.xlu0 %425
      %428 = vrot.lane.b32.xlu0 %v259, 69
      %v429 = vpop.permute.xlu0 %428
      %431 = vrot.lane.b32.xlu0 %v259, 71
      %v432 = vpop.permute.xlu0 %431
      %434 = vrot.lane.b32.xlu0 %v259, 73
      %v435 = vpop.permute.xlu0 %434
      %v437 = vsel %vm282, %v417, %v420
      %v438 = vsel %vm284, %v437, %v423
      %v439 = vsel %vm286, %v438, %v426
      %v440 = vsel %vm288, %v439, %v429
      %v441 = vsel %vm290, %v440, %v432
      %v442 = vsel %vm292, %v441, %v435
      %444 = vrot.lane.b32.xlu0 %v442, 95
      %v445 = vpop.permute.xlu0 %444
      %vm447 = vcmask 953080
      %448 = vst.msk [vmem:[#allocation2 + $0x8] sm:$0x7] %vm447, %v445
      %449 = vrot.lane.b32.xlu0 %v259, 45
      %v450 = vpop.permute.xlu0 %449
      %452 = vrot.lane.b32.xlu0 %v259, 47
      %v453 = vpop.permute.xlu0 %452
      %455 = vrot.lane.b32.xlu0 %v259, 49
      %v456 = vpop.permute.xlu0 %455
      %458 = vrot.lane.b32.xlu0 %v259, 51
      %v459 = vpop.permute.xlu0 %458
      %461 = vrot.lane.b32.xlu0 %v259, 53
      %v462 = vpop.permute.xlu0 %461
      %464 = vrot.lane.b32.xlu0 %v259, 55
      %v465 = vpop.permute.xlu0 %464
      %467 = vrot.lane.b32.xlu0 %v259, 57
      %v468 = vpop.permute.xlu0 %467
      %v470 = vsel %vm282, %v450, %v453
      %v471 = vsel %vm284, %v470, %v456
      %v472 = vsel %vm286, %v471, %v459
      %v473 = vsel %vm288, %v472, %v462
      %v474 = vsel %vm290, %v473, %v465
      %v475 = vsel %vm292, %v474, %v468
      %477 = vrot.lane.b32.xlu0 %v475, 117
      %v478 = vpop.permute.xlu0 %477
      %vm480 = vcmask 1043368
      %481 = vst.msk [vmem:[#allocation2 + $0x8] sm:$0x7] %vm480, %v478
      %vm482 = vcmask 83968
      %483 = vst.msk [vmem:[#allocation2 + $0x10] sm:$0x7] %vm482, %v478
      %484 = vrot.lane.b32.xlu0 %v259, 29
      %v485 = vpop.permute.xlu0 %484
      %487 = vrot.lane.b32.xlu0 %v259, 31
      %v488 = vpop.permute.xlu0 %487
      %490 = vrot.lane.b32.xlu0 %v259, 33
      %v491 = vpop.permute.xlu0 %490
      %493 = vrot.lane.b32.xlu0 %v259, 35
      %v494 = vpop.permute.xlu0 %493
      %496 = vrot.lane.b32.xlu0 %v259, 37
      %v497 = vpop.permute.xlu0 %496
      %499 = vrot.lane.b32.xlu0 %v259, 39
      %v500 = vpop.permute.xlu0 %499
      %502 = vrot.lane.b32.xlu0 %v259, 41
      %v503 = vpop.permute.xlu0 %502
      %v505 = vsel %vm282, %v485, %v488
      %v506 = vsel %vm284, %v505, %v491
      %v507 = vsel %vm286, %v506, %v494
      %v508 = vsel %vm288, %v507, %v497
      %v509 = vsel %vm290, %v508, %v500
      %v510 = vsel %vm292, %v509, %v503
      %512 = vrot.lane.b32.xlu0 %v510, 11
      %v513 = vpop.permute.xlu0 %512
      %vm515 = vcmask 264280
      %516 = vst.msk [vmem:[#allocation2 + $0x10] sm:$0x7] %vm515, %v513
      %517 = vrot.lane.b32.xlu0 %v259, 13
      %v518 = vpop.permute.xlu0 %517
      %520 = vrot.lane.b32.xlu0 %v259, 15
      %v521 = vpop.permute.xlu0 %520
      %523 = vrot.lane.b32.xlu0 %v259, 17
      %v524 = vpop.permute.xlu0 %523
      %526 = vrot.lane.b32.xlu0 %v259, 19
      %v527 = vpop.permute.xlu0 %526
      %529 = vrot.lane.b32.xlu0 %v259, 21
      %v530 = vpop.permute.xlu0 %529
      %532 = vrot.lane.b32.xlu0 %v259, 23
      %v533 = vpop.permute.xlu0 %532
      %535 = vrot.lane.b32.xlu0 %v259, 25
      %v536 = vpop.permute.xlu0 %535
      %v538 = vsel %vm282, %v518, %v521
      %v539 = vsel %vm284, %v538, %v524
      %v540 = vsel %vm286, %v539, %v527
      %v541 = vsel %vm288, %v540, %v530
      %v542 = vsel %vm290, %v541, %v533
      %v543 = vsel %vm292, %v542, %v536
      %545 = vrot.lane.b32.xlu0 %v543, 33
      %v546 = vpop.permute.xlu0 %545
      %vm548 = vcmask 444680
      %549 = vst.msk [vmem:[#allocation2 + $0x10] sm:$0x7] %vm548, %v546
      %v550 = vcombine.high %v259, %v259
      %551 = vrot.lane.b32.xlu0 %v550, 125
      %v552 = vpop.permute.xlu0 %551
      %554 = vrot.lane.b32.xlu0 %v550, 127
      %v555 = vpop.permute.xlu0 %554
      %557 = vrot.lane.b32.xlu0 %v550, 1
      %v558 = vpop.permute.xlu0 %557
      %560 = vrot.lane.b32.xlu0 %v550, 3
      %v561 = vpop.permute.xlu0 %560
      %563 = vrot.lane.b32.xlu0 %v550, 5
      %v564 = vpop.permute.xlu0 %563
      %566 = vrot.lane.b32.xlu0 %v550, 7
      %v567 = vpop.permute.xlu0 %566
      %569 = vrot.lane.b32.xlu0 %v550, 9
      %v570 = vpop.permute.xlu0 %569
      %v572 = vsel %vm282, %v552, %v555
      %v573 = vsel %vm284, %v572, %v558
      %v574 = vsel %vm286, %v573, %v561
      %v575 = vsel %vm288, %v574, %v564
      %v576 = vsel %vm290, %v575, %v567
      %v577 = vsel %vm292, %v576, %v570
      %579 = vrot.lane.b32.xlu0 %v577, 55
      %v580 = vpop.permute.xlu0 %579
      %vm582 = vcmask 625080
      %583 = vst.msk [vmem:[#allocation2 + $0x10] sm:$0x7] %vm582, %v580
      %584 = vrot.lane.b32.xlu0 %v550, 109
      %v585 = vpop.permute.xlu0 %584
      %587 = vrot.lane.b32.xlu0 %v550, 111
      %v588 = vpop.permute.xlu0 %587
      %590 = vrot.lane.b32.xlu0 %v550, 113
      %v591 = vpop.permute.xlu0 %590
      %593 = vrot.lane.b32.xlu0 %v550, 115
      %v594 = vpop.permute.xlu0 %593
      %596 = vrot.lane.b32.xlu0 %v550, 117
      %v597 = vpop.permute.xlu0 %596
      %599 = vrot.lane.b32.xlu0 %v550, 119
      %v600 = vpop.permute.xlu0 %599
      %602 = vrot.lane.b32.xlu0 %v550, 121
      %v603 = vpop.permute.xlu0 %602
      %v605 = vsel %vm282, %v585, %v588
      %v606 = vsel %vm284, %v605, %v591
      %v607 = vsel %vm286, %v606, %v594
      %v608 = vsel %vm288, %v607, %v597
      %v609 = vsel %vm290, %v608, %v600
      %v610 = vsel %vm292, %v609, %v603
      %612 = vrot.lane.b32.xlu0 %v610, 77
      %v613 = vpop.permute.xlu0 %612
      %vm615 = vcmask 805480
      %616 = vst.msk [vmem:[#allocation2 + $0x10] sm:$0x7] %vm615, %v613
      %617 = vrot.lane.b32.xlu0 %v550, 93
      %v618 = vpop.permute.xlu0 %617
      %620 = vrot.lane.b32.xlu0 %v550, 95
      %v621 = vpop.permute.xlu0 %620
      %623 = vrot.lane.b32.xlu0 %v550, 97
      %v624 = vpop.permute.xlu0 %623
      %626 = vrot.lane.b32.xlu0 %v550, 99
      %v627 = vpop.permute.xlu0 %626
      %629 = vrot.lane.b32.xlu0 %v550, 101
      %v630 = vpop.permute.xlu0 %629
      %632 = vrot.lane.b32.xlu0 %v550, 103
      %v633 = vpop.permute.xlu0 %632
      %635 = vrot.lane.b32.xlu0 %v550, 105
      %v636 = vpop.permute.xlu0 %635
      %v638 = vsel %vm282, %v618, %v621
      %v639 = vsel %vm284, %v638, %v624
      %v640 = vsel %vm286, %v639, %v627
      %v641 = vsel %vm288, %v640, %v630
      %v642 = vsel %vm290, %v641, %v633
      %v643 = vsel %vm292, %v642, %v636
      %645 = vrot.lane.b32.xlu0 %v643, 99
      %v646 = vpop.permute.xlu0 %645
      %vm648 = vcmask 985880
      %649 = vst.msk [vmem:[#allocation2 + $0x10] sm:$0x7] %vm648, %v646
      %650 = vrot.lane.b32.xlu0 %v550, 77
      %v651 = vpop.permute.xlu0 %650
      %653 = vrot.lane.b32.xlu0 %v550, 79
      %v654 = vpop.permute.xlu0 %653
      %656 = vrot.lane.b32.xlu0 %v550, 81
      %v657 = vpop.permute.xlu0 %656
      %659 = vrot.lane.b32.xlu0 %v550, 83
      %v660 = vpop.permute.xlu0 %659
      %662 = vrot.lane.b32.xlu0 %v550, 85
      %v663 = vpop.permute.xlu0 %662
      %665 = vrot.lane.b32.xlu0 %v550, 87
      %v666 = vpop.permute.xlu0 %665
      %668 = vrot.lane.b32.xlu0 %v550, 89
      %v669 = vpop.permute.xlu0 %668
      %v671 = vsel %vm282, %v651, %v654
      %v672 = vsel %vm284, %v671, %v657
      %v673 = vsel %vm286, %v672, %v660
      %v674 = vsel %vm288, %v673, %v663
      %v675 = vsel %vm290, %v674, %v666
      %v676 = vsel %vm292, %v675, %v669
      %678 = vrot.lane.b32.xlu0 %v676, 121
      %v679 = vpop.permute.xlu0 %678
      %vm681 = vcmask 1043400
      %682 = vst.msk [vmem:[#allocation2 + $0x10] sm:$0x7] %vm681, %v679
      %vm683 = vcmask 116736
      %684 = vst.msk [vmem:[#allocation2 + $0x18] sm:$0x7] %vm683, %v679
      %685 = vrot.lane.b32.xlu0 %v550, 61
      %v686 = vpop.permute.xlu0 %685
      %688 = vrot.lane.b32.xlu0 %v550, 63
      %v689 = vpop.permute.xlu0 %688
      %691 = vrot.lane.b32.xlu0 %v550, 65
      %v692 = vpop.permute.xlu0 %691
      %694 = vrot.lane.b32.xlu0 %v550, 67
      %v695 = vpop.permute.xlu0 %694
      %697 = vrot.lane.b32.xlu0 %v550, 69
      %v698 = vpop.permute.xlu0 %697
      %700 = vrot.lane.b32.xlu0 %v550, 71
      %v701 = vpop.permute.xlu0 %700
      %703 = vrot.lane.b32.xlu0 %v550, 73
      %v704 = vpop.permute.xlu0 %703
      %v706 = vsel %vm282, %v686, %v689
      %v707 = vsel %vm284, %v706, %v692
      %v708 = vsel %vm286, %v707, %v695
      %v709 = vsel %vm288, %v708, %v698
      %v710 = vsel %vm290, %v709, %v701
      %v711 = vsel %vm292, %v710, %v704
      %713 = vrot.lane.b32.xlu0 %v711, 15
      %v714 = vpop.permute.xlu0 %713
      %vm716 = vcmask 297080
      %717 = vst.msk [vmem:[#allocation2 + $0x18] sm:$0x7] %vm716, %v714
      %718 = vrot.lane.b32.xlu0 %v550, 45
      %v719 = vpop.permute.xlu0 %718
      %721 = vrot.lane.b32.xlu0 %v550, 47
      %v722 = vpop.permute.xlu0 %721
      %724 = vrot.lane.b32.xlu0 %v550, 49
      %v725 = vpop.permute.xlu0 %724
      %727 = vrot.lane.b32.xlu0 %v550, 51
      %v728 = vpop.permute.xlu0 %727
      %730 = vrot.lane.b32.xlu0 %v550, 53
      %v731 = vpop.permute.xlu0 %730
      %733 = vrot.lane.b32.xlu0 %v550, 55
      %v734 = vpop.permute.xlu0 %733
      %736 = vrot.lane.b32.xlu0 %v550, 57
      %v737 = vpop.permute.xlu0 %736
      %v739 = vsel %vm282, %v719, %v722
      %v740 = vsel %vm284, %v739, %v725
      %v741 = vsel %vm286, %v740, %v728
      %v742 = vsel %vm288, %v741, %v731
      %v743 = vsel %vm290, %v742, %v734
      %v744 = vsel %vm292, %v743, %v737
      %746 = vrot.lane.b32.xlu0 %v744, 37
      %v747 = vpop.permute.xlu0 %746
      %vm749 = vcmask 477480
      %750 = vst.msk [vmem:[#allocation2 + $0x18] sm:$0x7] %vm749, %v747
      %751 = vrot.lane.b32.xlu0 %v550, 29
      %v752 = vpop.permute.xlu0 %751
      %754 = vrot.lane.b32.xlu0 %v550, 31
      %v755 = vpop.permute.xlu0 %754
      %757 = vrot.lane.b32.xlu0 %v550, 33
      %v758 = vpop.permute.xlu0 %757
      %760 = vrot.lane.b32.xlu0 %v550, 35
      %v761 = vpop.permute.xlu0 %760
      %763 = vrot.lane.b32.xlu0 %v550, 37
      %v764 = vpop.permute.xlu0 %763
      %766 = vrot.lane.b32.xlu0 %v550, 39
      %v767 = vpop.permute.xlu0 %766
      %769 = vrot.lane.b32.xlu0 %v550, 41
      %v770 = vpop.permute.xlu0 %769
      %v772 = vsel %vm282, %v752, %v755
      %v773 = vsel %vm284, %v772, %v758
      %v774 = vsel %vm286, %v773, %v761
      %v775 = vsel %vm288, %v774, %v764
      %v776 = vsel %vm290, %v775, %v767
      %v777 = vsel %vm292, %v776, %v770
      %779 = vrot.lane.b32.xlu0 %v777, 59
      %v780 = vpop.permute.xlu0 %779
      %vm782 = vcmask 657880
      %783 = vst.msk [vmem:[#allocation2 + $0x18] sm:$0x7] %vm782, %v780
      %784 = vrot.lane.b32.xlu0 %v550, 13
      %v785 = vpop.permute.xlu0 %784
      %787 = vrot.lane.b32.xlu0 %v550, 15
      %v788 = vpop.permute.xlu0 %787
      %790 = vrot.lane.b32.xlu0 %v550, 17
      %v791 = vpop.permute.xlu0 %790
      %793 = vrot.lane.b32.xlu0 %v550, 19
      %v794 = vpop.permute.xlu0 %793
      %796 = vrot.lane.b32.xlu0 %v550, 21
      %v797 = vpop.permute.xlu0 %796
      %799 = vrot.lane.b32.xlu0 %v550, 23
      %v800 = vpop.permute.xlu0 %799
      %802 = vrot.lane.b32.xlu0 %v550, 25
      %v803 = vpop.permute.xlu0 %802
      %v805 = vsel %vm282, %v785, %v788
      %v806 = vsel %vm284, %v805, %v791
      %v807 = vsel %vm286, %v806, %v794
      %v808 = vsel %vm288, %v807, %v797
      %v809 = vsel %vm290, %v808, %v800
      %v810 = vsel %vm292, %v809, %v803
      %812 = vrot.lane.b32.xlu0 %v810, 81
      %v813 = vpop.permute.xlu0 %812
      %vm815 = vcmask 838280
      %816 = vst.msk [vmem:[#allocation2 + $0x18] sm:$0x7] %vm815, %v813
      %817 = vrot.lane.b32.xlu0 %v777, 103
      %v818 = vpop.permute.xlu0 %817
      %vm820 = vcmask 1018680
      %821 = vst.msk [vmem:[#allocation2 + $0x18] sm:$0x7] %vm820, %v818
      %822 = vrot.lane.b32.xlu0 %v744, 125
      %v823 = vpop.permute.xlu0 %822
      %vm825 = vcmask 1043432
      %826 = vst.msk [vmem:[#allocation2 + $0x18] sm:$0x7] %vm825, %v823
      %vm827 = vcmask 149504
      %828 = vst.msk [vmem:[#allocation2 + $0x20] sm:$0x7] %vm827, %v823
      %829 = vrot.lane.b32.xlu0 %v711, 19
      %v830 = vpop.permute.xlu0 %829
      %vm832 = vcmask 329880
      %833 = vst.msk [vmem:[#allocation2 + $0x20] sm:$0x7] %vm832, %v830
      %v834 = vld [vmem:[#allocation2] sm:$0x7]
      %v835 = vld [vmem:[#allocation2 + $0x8] sm:$0x7]
      %v836 = vld [vmem:[#allocation2 + $0x10] sm:$0x7]
      %v837 = vld [vmem:[#allocation2 + $0x18] sm:$0x7]
      %v838 = vld [vmem:[#allocation2 + $0x20] sm:$0x7]
      %v843 = vrot.slane %v834, 5
      %v844 = vrot.slane %v835, 5
      %v845 = vrot.slane %v836, 5
      %v846 = vrot.slane %v837, 5
      %847 = vrot.lane.b32.xlu0 %v843, 127
      %v848 = vpop.permute.xlu0 %847
      %849 = vrot.lane.b32.xlu0 %v844, 127
      %v850 = vpop.permute.xlu0 %849
      %851 = vrot.lane.b32.xlu0 %v845, 127
      %v852 = vpop.permute.xlu0 %851
      %853 = vrot.lane.b32.xlu0 %v846, 127
      %v854 = vpop.permute.xlu0 %853
      %vm855 = vcmask 1039360
      %v856 = vsel %vm855, %v848, %v850
      %v857 = vsel %vm855, %v850, %v852
      %v858 = vsel %vm855, %v852, %v854
      %v863 = vrot.slane %v834, 2
      %v864 = vrot.slane %v835, 2
      %v865 = vrot.slane %v836, 2
      %v866 = vrot.slane %v837, 2
      %867 = vrot.lane.b32.xlu0 %v863, 126
      %v868 = vpop.permute.xlu0 %867
      %869 = vrot.lane.b32.xlu0 %v864, 126
      %v870 = vpop.permute.xlu0 %869
      %871 = vrot.lane.b32.xlu0 %v865, 126
      %v872 = vpop.permute.xlu0 %871
      %873 = vrot.lane.b32.xlu0 %v866, 126
      %v874 = vpop.permute.xlu0 %873
      %vm875 = vcmask 1031168
      %v876 = vsel %vm875, %v868, %v870
      %v877 = vsel %vm875, %v870, %v872
      %v878 = vsel %vm875, %v872, %v874
      %v883 = vrot.slane %v834, 7
      %v884 = vrot.slane %v835, 7
      %v885 = vrot.slane %v836, 7
      %v886 = vrot.slane %v837, 7
      %887 = vrot.lane.b32.xlu0 %v883, 125
      %v888 = vpop.permute.xlu0 %887
      %889 = vrot.lane.b32.xlu0 %v884, 125
      %v890 = vpop.permute.xlu0 %889
      %891 = vrot.lane.b32.xlu0 %v885, 125
      %v892 = vpop.permute.xlu0 %891
      %893 = vrot.lane.b32.xlu0 %v886, 125
      %v894 = vpop.permute.xlu0 %893
      %vm895 = vcmask 1022976
      %v896 = vsel %vm895, %v888, %v890
      %v897 = vsel %vm895, %v890, %v892
      %v898 = vsel %vm895, %v892, %v894
      %v903 = vrot.slane %v834, 4
      %v904 = vrot.slane %v835, 4
      %v905 = vrot.slane %v836, 4
      %v906 = vrot.slane %v837, 4
      %907 = vrot.lane.b32.xlu0 %v903, 124
      %v908 = vpop.permute.xlu0 %907
      %909 = vrot.lane.b32.xlu0 %v904, 124
      %v910 = vpop.permute.xlu0 %909
      %911 = vrot.lane.b32.xlu0 %v905, 124
      %v912 = vpop.permute.xlu0 %911
      %913 = vrot.lane.b32.xlu0 %v906, 124
      %v914 = vpop.permute.xlu0 %913
      %vm915 = vcmask 1014784
      %v916 = vsel %vm915, %v908, %v910
      %v917 = vsel %vm915, %v910, %v912
      %v918 = vsel %vm915, %v912, %v914
      %v923 = vrot.slane %v834, 1
      %v924 = vrot.slane %v835, 1
      %v925 = vrot.slane %v836, 1
      %v926 = vrot.slane %v837, 1
      %927 = vrot.lane.b32.xlu0 %v923, 123
      %v928 = vpop.permute.xlu0 %927
      %929 = vrot.lane.b32.xlu0 %v924, 123
      %v930 = vpop.permute.xlu0 %929
      %931 = vrot.lane.b32.xlu0 %v925, 123
      %v932 = vpop.permute.xlu0 %931
      %933 = vrot.lane.b32.xlu0 %v926, 123
      %v934 = vpop.permute.xlu0 %933
      %vm935 = vcmask 1006592
      %v936 = vsel %vm935, %v928, %v930
      %v937 = vsel %vm935, %v930, %v932
      %v938 = vsel %vm935, %v932, %v934
      %v943 = vrot.slane %v834, 6
      %v944 = vrot.slane %v835, 6
      %v945 = vrot.slane %v836, 6
      %v946 = vrot.slane %v837, 6
      %947 = vrot.lane.b32.xlu0 %v943, 122
      %v948 = vpop.permute.xlu0 %947
      %949 = vrot.lane.b32.xlu0 %v944, 122
      %v950 = vpop.permute.xlu0 %949
      %951 = vrot.lane.b32.xlu0 %v945, 122
      %v952 = vpop.permute.xlu0 %951
      %953 = vrot.lane.b32.xlu0 %v946, 122
      %v954 = vpop.permute.xlu0 %953
      %vm955 = vcmask 998400
      %v956 = vsel %vm955, %v948, %v950
      %v957 = vsel %vm955, %v950, %v952
      %v958 = vsel %vm955, %v952, %v954
      %v963 = vrot.slane %v834, 3
      %v964 = vrot.slane %v835, 3
      %v965 = vrot.slane %v836, 3
      %v966 = vrot.slane %v837, 3
      %967 = vrot.lane.b32.xlu0 %v963, 106
      %v968 = vpop.permute.xlu0 %967
      %969 = vrot.lane.b32.xlu0 %v964, 106
      %v970 = vpop.permute.xlu0 %969
      %971 = vrot.lane.b32.xlu0 %v965, 106
      %v972 = vpop.permute.xlu0 %971
      %973 = vrot.lane.b32.xlu0 %v966, 106
      %v974 = vpop.permute.xlu0 %973
      %vm975 = vcmask 867328
      %v976 = vsel %vm975, %v968, %v970
      %v977 = vsel %vm975, %v970, %v972
      %v978 = vsel %vm975, %v972, %v974
      %983 = vrot.lane.b32.xlu0 %v834, 105
      %v984 = vpop.permute.xlu0 %983
      %985 = vrot.lane.b32.xlu0 %v835, 105
      %v986 = vpop.permute.xlu0 %985
      %987 = vrot.lane.b32.xlu0 %v836, 105
      %v988 = vpop.permute.xlu0 %987
      %989 = vrot.lane.b32.xlu0 %v837, 105
      %v990 = vpop.permute.xlu0 %989
      %vm991 = vcmask 859136
      %v992 = vsel %vm991, %v984, %v986
      %v993 = vsel %vm991, %v986, %v988
      %v994 = vsel %vm991, %v988, %v990
      %999 = vrot.lane.b32.xlu0 %v843, 104
      %v1000 = vpop.permute.xlu0 %999
      %1001 = vrot.lane.b32.xlu0 %v844, 104
      %v1002 = vpop.permute.xlu0 %1001
      %1003 = vrot.lane.b32.xlu0 %v845, 104
      %v1004 = vpop.permute.xlu0 %1003
      %1005 = vrot.lane.b32.xlu0 %v846, 104
      %v1006 = vpop.permute.xlu0 %1005
      %vm1007 = vcmask 850944
      %v1008 = vsel %vm1007, %v1000, %v1002
      %v1009 = vsel %vm1007, %v1002, %v1004
      %v1010 = vsel %vm1007, %v1004, %v1006
      %1015 = vrot.lane.b32.xlu0 %v863, 103
      %v1016 = vpop.permute.xlu0 %1015
      %1017 = vrot.lane.b32.xlu0 %v864, 103
      %v1018 = vpop.permute.xlu0 %1017
      %1019 = vrot.lane.b32.xlu0 %v865, 103
      %v1020 = vpop.permute.xlu0 %1019
      %1021 = vrot.lane.b32.xlu0 %v866, 103
      %v1022 = vpop.permute.xlu0 %1021
      %vm1023 = vcmask 842752
      %v1024 = vsel %vm1023, %v1016, %v1018
      %v1025 = vsel %vm1023, %v1018, %v1020
      %v1026 = vsel %vm1023, %v1020, %v1022
      %1031 = vrot.lane.b32.xlu0 %v883, 102
      %v1032 = vpop.permute.xlu0 %1031
      %1033 = vrot.lane.b32.xlu0 %v884, 102
      %v1034 = vpop.permute.xlu0 %1033
      %1035 = vrot.lane.b32.xlu0 %v885, 102
      %v1036 = vpop.permute.xlu0 %1035
      %1037 = vrot.lane.b32.xlu0 %v886, 102
      %v1038 = vpop.permute.xlu0 %1037
      %vm1039 = vcmask 834560
      %v1040 = vsel %vm1039, %v1032, %v1034
      %v1041 = vsel %vm1039, %v1034, %v1036
      %v1042 = vsel %vm1039, %v1036, %v1038
      %1047 = vrot.lane.b32.xlu0 %v903, 101
      %v1048 = vpop.permute.xlu0 %1047
      %1049 = vrot.lane.b32.xlu0 %v904, 101
      %v1050 = vpop.permute.xlu0 %1049
      %1051 = vrot.lane.b32.xlu0 %v905, 101
      %v1052 = vpop.permute.xlu0 %1051
      %1053 = vrot.lane.b32.xlu0 %v906, 101
      %v1054 = vpop.permute.xlu0 %1053
      %vm1055 = vcmask 826368
      %v1056 = vsel %vm1055, %v1048, %v1050
      %v1057 = vsel %vm1055, %v1050, %v1052
      %v1058 = vsel %vm1055, %v1052, %v1054
      %1063 = vrot.lane.b32.xlu0 %v923, 100
      %v1064 = vpop.permute.xlu0 %1063
      %1065 = vrot.lane.b32.xlu0 %v924, 100
      %v1066 = vpop.permute.xlu0 %1065
      %1067 = vrot.lane.b32.xlu0 %v925, 100
      %v1068 = vpop.permute.xlu0 %1067
      %1069 = vrot.lane.b32.xlu0 %v926, 100
      %v1070 = vpop.permute.xlu0 %1069
      %vm1071 = vcmask 818176
      %v1072 = vsel %vm1071, %v1064, %v1066
      %v1073 = vsel %vm1071, %v1066, %v1068
      %v1074 = vsel %vm1071, %v1068, %v1070
      %v1080 = vrot.slane %v838, 6
      %1081 = vrot.lane.b32.xlu0 %v943, 84
      %v1082 = vpop.permute.xlu0 %1081
      %1083 = vrot.lane.b32.xlu0 %v944, 84
      %v1084 = vpop.permute.xlu0 %1083
      %1085 = vrot.lane.b32.xlu0 %v945, 84
      %v1086 = vpop.permute.xlu0 %1085
      %1087 = vrot.lane.b32.xlu0 %v946, 84
      %v1088 = vpop.permute.xlu0 %1087
      %1089 = vrot.lane.b32.xlu0 %v1080, 84
      %v1090 = vpop.permute.xlu0 %1089
      %vm1091 = vcmask 687104
      %v1092 = vsel %vm1091, %v1082, %v1084
      %v1093 = vsel %vm1091, %v1084, %v1086
      %v1094 = vsel %vm1091, %v1086, %v1088
      %v1095 = vsel %vm1091, %v1088, %v1090
      %v1100 = vrot.slane %v838, 3
      %1101 = vrot.lane.b32.xlu0 %v963, 83
      %v1102 = vpop.permute.xlu0 %1101
      %1103 = vrot.lane.b32.xlu0 %v964, 83
      %v1104 = vpop.permute.xlu0 %1103
      %1105 = vrot.lane.b32.xlu0 %v965, 83
      %v1106 = vpop.permute.xlu0 %1105
      %1107 = vrot.lane.b32.xlu0 %v966, 83
      %v1108 = vpop.permute.xlu0 %1107
      %1109 = vrot.lane.b32.xlu0 %v1100, 83
      %v1110 = vpop.permute.xlu0 %1109
      %vm1111 = vcmask 678912
      %v1112 = vsel %vm1111, %v1102, %v1104
      %v1113 = vsel %vm1111, %v1104, %v1106
      %v1114 = vsel %vm1111, %v1106, %v1108
      %v1115 = vsel %vm1111, %v1108, %v1110
      %vm1120 = vcmask 1042432
      %v1121 = vsel %vm1120, %v834, %v856
      %v1122 = vsel %vm1120, %v835, %v857
      %v1123 = vsel %vm1120, %v836, %v858
      %v1124 = vsel %vm1120, %v837, %v854
      %vm1125 = vcmask 1045504
      %v1126 = vsel %vm1125, %v1121, %v876
      %v1127 = vsel %vm1125, %v1122, %v877
      %v1128 = vsel %vm1125, %v1123, %v878
      %v1129 = vsel %vm1125, %v1124, %v874
      %vm1130 = vcmask 1040384
      %v1131 = vsel %vm1130, %v876, %v896
      %v1132 = vsel %vm1130, %v877, %v897
      %v1133 = vsel %vm1130, %v878, %v898
      %v1134 = vsel %vm1130, %v874, %v894
      %vm1135 = vcmask 1043456
      %v1136 = vsel %vm1135, %v1131, %v916
      %v1137 = vsel %vm1135, %v1132, %v917
      %v1138 = vsel %vm1135, %v1133, %v918
      %v1139 = vsel %vm1135, %v1134, %v914
      %vm1140 = vcmask 1046528
      %v1141 = vsel %vm1140, %v1136, %v936
      %v1142 = vsel %vm1140, %v1137, %v937
      %v1143 = vsel %vm1140, %v1138, %v938
      %v1144 = vsel %vm1140, %v1139, %v934
      %vm1145 = vcmask 1041408
      %v1146 = vsel %vm1145, %v936, %v956
      %v1147 = vsel %vm1145, %v937, %v957
      %v1148 = vsel %vm1145, %v938, %v958
      %v1149 = vsel %vm1145, %v934, %v954
      %vm1150 = vcmask 1044480
      %v1151 = vsel %vm1150, %v1146, %v976
      %v1152 = vsel %vm1150, %v1147, %v977
      %v1153 = vsel %vm1150, %v1148, %v978
      %v1154 = vsel %vm1150, %v1149, %v974
      %v1155 = vsel %vm1120, %v992, %v1008
      %v1156 = vsel %vm1120, %v993, %v1009
      %v1157 = vsel %vm1120, %v994, %v1010
      %v1158 = vsel %vm1120, %v990, %v1006
      %v1159 = vsel %vm1125, %v1155, %v1024
      %v1160 = vsel %vm1125, %v1156, %v1025
      %v1161 = vsel %vm1125, %v1157, %v1026
      %v1162 = vsel %vm1125, %v1158, %v1022
      %v1163 = vsel %vm1130, %v1024, %v1040
      %v1164 = vsel %vm1130, %v1025, %v1041
      %v1165 = vsel %vm1130, %v1026, %v1042
      %v1166 = vsel %vm1130, %v1022, %v1038
      %v1167 = vsel %vm1135, %v1163, %v1056
      %v1168 = vsel %vm1135, %v1164, %v1057
      %v1169 = vsel %vm1135, %v1165, %v1058
      %v1170 = vsel %vm1135, %v1166, %v1054
      %v1171 = vsel %vm1140, %v1167, %v1072
      %v1172 = vsel %vm1140, %v1168, %v1073
      %v1173 = vsel %vm1140, %v1169, %v1074
      %v1174 = vsel %vm1140, %v1170, %v1070
      %v1175 = vsel %vm1145, %v1072, %v1092
      %v1176 = vsel %vm1145, %v1073, %v1093
      %v1177 = vsel %vm1145, %v1074, %v1094
      %v1178 = vsel %vm1145, %v1070, %v1095
      %v1179 = vsel %vm1150, %v1175, %v1112
      %v1180 = vsel %vm1150, %v1176, %v1113
      %v1181 = vsel %vm1150, %v1177, %v1114
      %v1182 = vsel %vm1150, %v1178, %v1115
      %v1183 = vrot.slane %v838, 5
      %1184 = vrot.lane.b32.xlu0 %v1183, 127
      %v1185 = vpop.permute.xlu0 %1184
      %v1186 = vsel %vm855, %v854, %v1185
      %v1189 = vrot.slane %v838, 2
      %1190 = vrot.lane.b32.xlu0 %v1189, 126
      %v1191 = vpop.permute.xlu0 %1190
      %v1192 = vsel %vm875, %v874, %v1191
      %v1195 = vrot.slane %v838, 7
      %1196 = vrot.lane.b32.xlu0 %v1195, 125
      %v1197 = vpop.permute.xlu0 %1196
      %v1198 = vsel %vm895, %v894, %v1197
      %v1201 = vrot.slane %v838, 4
      %1202 = vrot.lane.b32.xlu0 %v1201, 124
      %v1203 = vpop.permute.xlu0 %1202
      %v1204 = vsel %vm915, %v914, %v1203
      %v1207 = vrot.slane %v838, 1
      %1208 = vrot.lane.b32.xlu0 %v923, 108
      %v1209 = vpop.permute.xlu0 %1208
      %1210 = vrot.lane.b32.xlu0 %v924, 108
      %v1211 = vpop.permute.xlu0 %1210
      %1212 = vrot.lane.b32.xlu0 %v925, 108
      %v1213 = vpop.permute.xlu0 %1212
      %1214 = vrot.lane.b32.xlu0 %v926, 108
      %v1215 = vpop.permute.xlu0 %1214
      %1216 = vrot.lane.b32.xlu0 %v1207, 108
      %v1217 = vpop.permute.xlu0 %1216
      %vm1218 = vcmask 883712
      %v1219 = vsel %vm1218, %v1209, %v1211
      %v1220 = vsel %vm1218, %v1211, %v1213
      %v1221 = vsel %vm1218, %v1213, %v1215
      %v1222 = vsel %vm1218, %v1215, %v1217
      %1228 = vrot.lane.b32.xlu0 %v943, 107
      %v1229 = vpop.permute.xlu0 %1228
      %1230 = vrot.lane.b32.xlu0 %v944, 107
      %v1231 = vpop.permute.xlu0 %1230
      %1232 = vrot.lane.b32.xlu0 %v945, 107
      %v1233 = vpop.permute.xlu0 %1232
      %1234 = vrot.lane.b32.xlu0 %v946, 107
      %v1235 = vpop.permute.xlu0 %1234
      %1236 = vrot.lane.b32.xlu0 %v1080, 107
      %v1237 = vpop.permute.xlu0 %1236
      %vm1238 = vcmask 875520
      %v1239 = vsel %vm1238, %v1229, %v1231
      %v1240 = vsel %vm1238, %v1231, %v1233
      %v1241 = vsel %vm1238, %v1233, %v1235
      %v1242 = vsel %vm1238, %v1235, %v1237
      %1248 = vrot.lane.b32.xlu0 %v1100, 106
      %v1249 = vpop.permute.xlu0 %1248
      %v1250 = vsel %vm975, %v974, %v1249
      %1253 = vrot.lane.b32.xlu0 %v838, 105
      %v1254 = vpop.permute.xlu0 %1253
      %v1255 = vsel %vm991, %v990, %v1254
      %1258 = vrot.lane.b32.xlu0 %v1183, 104
      %v1259 = vpop.permute.xlu0 %1258
      %v1260 = vsel %vm1007, %v1006, %v1259
      %1263 = vrot.lane.b32.xlu0 %v1189, 103
      %v1264 = vpop.permute.xlu0 %1263
      %v1265 = vsel %vm1023, %v1022, %v1264
      %1268 = vrot.lane.b32.xlu0 %v1195, 102
      %v1269 = vpop.permute.xlu0 %1268
      %v1270 = vsel %vm1039, %v1038, %v1269
      %1273 = vrot.lane.b32.xlu0 %v903, 86
      %v1274 = vpop.permute.xlu0 %1273
      %1275 = vrot.lane.b32.xlu0 %v904, 86
      %v1276 = vpop.permute.xlu0 %1275
      %1277 = vrot.lane.b32.xlu0 %v905, 86
      %v1278 = vpop.permute.xlu0 %1277
      %1279 = vrot.lane.b32.xlu0 %v906, 86
      %v1280 = vpop.permute.xlu0 %1279
      %1281 = vrot.lane.b32.xlu0 %v1201, 86
      %v1282 = vpop.permute.xlu0 %1281
      %vm1283 = vcmask 703488
      %v1284 = vsel %vm1283, %v1274, %v1276
      %v1285 = vsel %vm1283, %v1276, %v1278
      %v1286 = vsel %vm1283, %v1278, %v1280
      %v1287 = vsel %vm1283, %v1280, %v1282
      %1293 = vrot.lane.b32.xlu0 %v923, 85
      %v1294 = vpop.permute.xlu0 %1293
      %1295 = vrot.lane.b32.xlu0 %v924, 85
      %v1296 = vpop.permute.xlu0 %1295
      %1297 = vrot.lane.b32.xlu0 %v925, 85
      %v1298 = vpop.permute.xlu0 %1297
      %1299 = vrot.lane.b32.xlu0 %v926, 85
      %v1300 = vpop.permute.xlu0 %1299
      %1301 = vrot.lane.b32.xlu0 %v1207, 85
      %v1302 = vpop.permute.xlu0 %1301
      %vm1303 = vcmask 695296
      %v1304 = vsel %vm1303, %v1294, %v1296
      %v1305 = vsel %vm1303, %v1296, %v1298
      %v1306 = vsel %vm1303, %v1298, %v1300
      %v1307 = vsel %vm1303, %v1300, %v1302
      %v1315 = vsel %vm1120, %v837, %v1186
      %v1316 = vsel %vm1120, %v838, %v1185
      %v1317 = vsel %vm1125, %v1315, %v1192
      %v1318 = vsel %vm1125, %v1316, %v1191
      %v1319 = vsel %vm1130, %v1192, %v1198
      %v1320 = vsel %vm1130, %v1191, %v1197
      %v1321 = vsel %vm1135, %v1319, %v1204
      %v1322 = vsel %vm1135, %v1320, %v1203
      %v1323 = vsel %vm1140, %v1136, %v1219
      %v1324 = vsel %vm1140, %v1137, %v1220
      %v1325 = vsel %vm1140, %v1138, %v1221
      %v1326 = vsel %vm1140, %v1321, %v1222
      %v1327 = vsel %vm1140, %v1322, %v1217
      %v1328 = vsel %vm1145, %v1219, %v1239
      %v1329 = vsel %vm1145, %v1220, %v1240
      %v1330 = vsel %vm1145, %v1221, %v1241
      %v1331 = vsel %vm1145, %v1222, %v1242
      %v1332 = vsel %vm1145, %v1217, %v1237
      %v1333 = vsel %vm1150, %v1328, %v976
      %v1334 = vsel %vm1150, %v1329, %v977
      %v1335 = vsel %vm1150, %v1330, %v978
      %v1336 = vsel %vm1150, %v1331, %v1250
      %v1337 = vsel %vm1150, %v1332, %v1249
      %v1338 = vsel %vm1120, %v1255, %v1260
      %v1339 = vsel %vm1120, %v1254, %v1259
      %v1340 = vsel %vm1125, %v1338, %v1265
      %v1341 = vsel %vm1125, %v1339, %v1264
      %v1342 = vsel %vm1130, %v1265, %v1270
      %v1343 = vsel %vm1130, %v1264, %v1269
      %v1344 = vsel %vm1135, %v1163, %v1284
      %v1345 = vsel %vm1135, %v1164, %v1285
      %v1346 = vsel %vm1135, %v1165, %v1286
      %v1347 = vsel %vm1135, %v1342, %v1287
      %v1348 = vsel %vm1135, %v1343, %v1282
      %v1349 = vsel %vm1140, %v1344, %v1304
      %v1350 = vsel %vm1140, %v1345, %v1305
      %v1351 = vsel %vm1140, %v1346, %v1306
      %v1352 = vsel %vm1140, %v1347, %v1307
      %v1353 = vsel %vm1140, %v1348, %v1302
      %v1354 = vsel %vm1145, %v1304, %v1092
      %v1355 = vsel %vm1145, %v1305, %v1093
      %v1356 = vsel %vm1145, %v1306, %v1094
      %v1357 = vsel %vm1145, %v1307, %v1095
      %v1358 = vsel %vm1145, %v1302, %v1090
      %v1359 = vsel %vm1150, %v1354, %v1112
      %v1360 = vsel %vm1150, %v1355, %v1113
      %v1361 = vsel %vm1150, %v1356, %v1114
      %v1362 = vsel %vm1150, %v1357, %v1115
      %v1363 = vsel %vm1150, %v1358, %v1110
      %1364 = vrot.lane.b32.xlu0 %v883, 110
      %v1365 = vpop.permute.xlu0 %1364
      %1366 = vrot.lane.b32.xlu0 %v884, 110
      %v1367 = vpop.permute.xlu0 %1366
      %1368 = vrot.lane.b32.xlu0 %v885, 110
      %v1369 = vpop.permute.xlu0 %1368
      %1370 = vrot.lane.b32.xlu0 %v886, 110
      %v1371 = vpop.permute.xlu0 %1370
      %1372 = vrot.lane.b32.xlu0 %v1195, 110
      %v1373 = vpop.permute.xlu0 %1372
      %vm1374 = vcmask 900096
      %v1375 = vsel %vm1374, %v1365, %v1367
      %v1376 = vsel %vm1374, %v1367, %v1369
      %v1377 = vsel %vm1374, %v1369, %v1371
      %v1378 = vsel %vm1374, %v1371, %v1373
      %1384 = vrot.lane.b32.xlu0 %v903, 109
      %v1385 = vpop.permute.xlu0 %1384
      %1386 = vrot.lane.b32.xlu0 %v904, 109
      %v1387 = vpop.permute.xlu0 %1386
      %1388 = vrot.lane.b32.xlu0 %v905, 109
      %v1389 = vpop.permute.xlu0 %1388
      %1390 = vrot.lane.b32.xlu0 %v906, 109
      %v1391 = vpop.permute.xlu0 %1390
      %1392 = vrot.lane.b32.xlu0 %v1201, 109
      %v1393 = vpop.permute.xlu0 %1392
      %vm1394 = vcmask 891904
      %v1395 = vsel %vm1394, %v1385, %v1387
      %v1396 = vsel %vm1394, %v1387, %v1389
      %v1397 = vsel %vm1394, %v1389, %v1391
      %v1398 = vsel %vm1394, %v1391, %v1393
      %1404 = vrot.lane.b32.xlu0 %v864, 88
      %v1405 = vpop.permute.xlu0 %1404
      %1406 = vrot.lane.b32.xlu0 %v865, 88
      %v1407 = vpop.permute.xlu0 %1406
      %1408 = vrot.lane.b32.xlu0 %v866, 88
      %v1409 = vpop.permute.xlu0 %1408
      %1410 = vrot.lane.b32.xlu0 %v1189, 88
      %v1411 = vpop.permute.xlu0 %1410
      %vm1412 = vcmask 719872
      %v1413 = vsel %vm1412, %v1405, %v1407
      %v1414 = vsel %vm1412, %v1407, %v1409
      %v1415 = vsel %vm1412, %v1409, %v1411
      %1421 = vrot.lane.b32.xlu0 %v884, 87
      %v1422 = vpop.permute.xlu0 %1421
      %1423 = vrot.lane.b32.xlu0 %v885, 87
      %v1424 = vpop.permute.xlu0 %1423
      %1425 = vrot.lane.b32.xlu0 %v886, 87
      %v1426 = vpop.permute.xlu0 %1425
      %1427 = vrot.lane.b32.xlu0 %v1195, 87
      %v1428 = vpop.permute.xlu0 %1427
      %vm1429 = vcmask 711680
      %v1430 = vsel %vm1429, %v1422, %v1424
      %v1431 = vsel %vm1429, %v1424, %v1426
      %v1432 = vsel %vm1429, %v1426, %v1428
      %v1442 = vsel %vm1130, %v876, %v1375
      %v1443 = vsel %vm1130, %v877, %v1376
      %v1444 = vsel %vm1130, %v878, %v1377
      %v1445 = vsel %vm1130, %v1192, %v1378
      %v1446 = vsel %vm1130, %v1191, %v1373
      %v1447 = vsel %vm1135, %v1442, %v1395
      %v1448 = vsel %vm1135, %v1443, %v1396
      %v1449 = vsel %vm1135, %v1444, %v1397
      %v1450 = vsel %vm1135, %v1445, %v1398
      %v1451 = vsel %vm1135, %v1446, %v1393
      %v1452 = vsel %vm1140, %v1447, %v1219
      %v1453 = vsel %vm1140, %v1448, %v1220
      %v1454 = vsel %vm1140, %v1449, %v1221
      %v1455 = vsel %vm1140, %v1450, %v1222
      %v1456 = vsel %vm1140, %v1451, %v1217
      %v1457 = vsel %vm1125, %v1155, %v1405
      %v1458 = vsel %vm1125, %v1156, %v1413
      %v1459 = vsel %vm1125, %v1157, %v1414
      %v1460 = vsel %vm1125, %v1338, %v1415
      %v1461 = vsel %vm1125, %v1339, %v1411
      %v1462 = vsel %vm1130, %v1405, %v1422
      %v1463 = vsel %vm1130, %v1413, %v1430
      %v1464 = vsel %vm1130, %v1414, %v1431
      %v1465 = vsel %vm1130, %v1415, %v1432
      %v1466 = vsel %vm1130, %v1411, %v1428
      %v1467 = vsel %vm1135, %v1462, %v1276
      %v1468 = vsel %vm1135, %v1463, %v1285
      %v1469 = vsel %vm1135, %v1464, %v1286
      %v1470 = vsel %vm1135, %v1465, %v1287
      %v1471 = vsel %vm1135, %v1466, %v1282
      %v1472 = vsel %vm1140, %v1467, %v1296
      %v1473 = vsel %vm1140, %v1468, %v1305
      %v1474 = vsel %vm1140, %v1469, %v1306
      %v1475 = vsel %vm1140, %v1470, %v1307
      %v1476 = vsel %vm1140, %v1471, %v1302
      %v1477 = vsel %vm1145, %v1296, %v1084
      %v1478 = vsel %vm1150, %v1477, %v1104
      %1509 = vrot.lane.b32.xlu0 %v1126, 82
      %v1510 = vpop.permute.xlu0 %1509
      %1511 = vrot.lane.b32.xlu0 %v1127, 82
      %v1512 = vpop.permute.xlu0 %1511
      %1513 = vrot.lane.b32.xlu0 %v1128, 82
      %v1514 = vpop.permute.xlu0 %1513
      %1515 = vrot.lane.b32.xlu0 %v1317, 82
      %v1516 = vpop.permute.xlu0 %1515
      %1517 = vrot.lane.b32.xlu0 %v1318, 82
      %v1518 = vpop.permute.xlu0 %1517
      %1519 = vrot.lane.b32.xlu0 %v1323, 82
      %v1520 = vpop.permute.xlu0 %1519
      %1521 = vrot.lane.b32.xlu0 %v1324, 82
      %v1522 = vpop.permute.xlu0 %1521
      %1523 = vrot.lane.b32.xlu0 %v1325, 82
      %v1524 = vpop.permute.xlu0 %1523
      %1525 = vrot.lane.b32.xlu0 %v1326, 82
      %v1526 = vpop.permute.xlu0 %1525
      %1527 = vrot.lane.b32.xlu0 %v1327, 82
      %v1528 = vpop.permute.xlu0 %1527
      %1529 = vrot.lane.b32.xlu0 %v1333, 82
      %v1530 = vpop.permute.xlu0 %1529
      %1531 = vrot.lane.b32.xlu0 %v1334, 82
      %v1532 = vpop.permute.xlu0 %1531
      %1533 = vrot.lane.b32.xlu0 %v1335, 82
      %v1534 = vpop.permute.xlu0 %1533
      %1535 = vrot.lane.b32.xlu0 %v1336, 82
      %v1536 = vpop.permute.xlu0 %1535
      %1537 = vrot.lane.b32.xlu0 %v1337, 82
      %v1538 = vpop.permute.xlu0 %1537
      %1539 = vrot.lane.b32.xlu0 %v1159, 82
      %v1540 = vpop.permute.xlu0 %1539
      %1541 = vrot.lane.b32.xlu0 %v1160, 82
      %v1542 = vpop.permute.xlu0 %1541
      %1543 = vrot.lane.b32.xlu0 %v1161, 82
      %v1544 = vpop.permute.xlu0 %1543
      %1545 = vrot.lane.b32.xlu0 %v1340, 82
      %v1546 = vpop.permute.xlu0 %1545
      %1547 = vrot.lane.b32.xlu0 %v1341, 82
      %v1548 = vpop.permute.xlu0 %1547
      %1549 = vrot.lane.b32.xlu0 %v1349, 82
      %v1550 = vpop.permute.xlu0 %1549
      %1551 = vrot.lane.b32.xlu0 %v1350, 82
      %v1552 = vpop.permute.xlu0 %1551
      %1553 = vrot.lane.b32.xlu0 %v1351, 82
      %v1554 = vpop.permute.xlu0 %1553
      %1555 = vrot.lane.b32.xlu0 %v1352, 82
      %v1556 = vpop.permute.xlu0 %1555
      %1557 = vrot.lane.b32.xlu0 %v1353, 82
      %v1558 = vpop.permute.xlu0 %1557
      %1559 = vrot.lane.b32.xlu0 %v1359, 82
      %v1560 = vpop.permute.xlu0 %1559
      %1561 = vrot.lane.b32.xlu0 %v1360, 82
      %v1562 = vpop.permute.xlu0 %1561
      %1563 = vrot.lane.b32.xlu0 %v1361, 82
      %v1564 = vpop.permute.xlu0 %1563
      %1565 = vrot.lane.b32.xlu0 %v1362, 82
      %v1566 = vpop.permute.xlu0 %1565
      %1567 = vrot.lane.b32.xlu0 %v1363, 82
      %v1568 = vpop.permute.xlu0 %1567
      %vm1569 = vcmask 670720
      %v1570 = vsel %vm1569, %v1510, %v1512
      %v1571 = vsel %vm1569, %v1512, %v1514
      %v1572 = vsel %vm1569, %v1514, %v1516
      %v1573 = vsel %vm1569, %v1516, %v1518
      %v1574 = vsel %vm1569, %v1520, %v1522
      %v1575 = vsel %vm1569, %v1522, %v1524
      %v1576 = vsel %vm1569, %v1524, %v1526
      %v1577 = vsel %vm1569, %v1526, %v1528
      %v1578 = vsel %vm1569, %v1530, %v1532
      %v1579 = vsel %vm1569, %v1532, %v1534
      %v1580 = vsel %vm1569, %v1534, %v1536
      %v1581 = vsel %vm1569, %v1536, %v1538
      %v1582 = vsel %vm1569, %v1540, %v1542
      %v1583 = vsel %vm1569, %v1542, %v1544
      %v1584 = vsel %vm1569, %v1544, %v1546
      %v1585 = vsel %vm1569, %v1546, %v1548
      %v1586 = vsel %vm1569, %v1550, %v1552
      %v1587 = vsel %vm1569, %v1552, %v1554
      %v1588 = vsel %vm1569, %v1554, %v1556
      %v1589 = vsel %vm1569, %v1556, %v1558
      %v1590 = vsel %vm1569, %v1560, %v1562
      %v1591 = vsel %vm1569, %v1562, %v1564
      %v1592 = vsel %vm1569, %v1564, %v1566
      %v1593 = vsel %vm1569, %v1566, %v1568
      %1634 = vrot.lane.b32.xlu0 %v1126, 36
      %v1635 = vpop.permute.xlu0 %1634
      %1636 = vrot.lane.b32.xlu0 %v1127, 36
      %v1637 = vpop.permute.xlu0 %1636
      %1638 = vrot.lane.b32.xlu0 %v1128, 36
      %v1639 = vpop.permute.xlu0 %1638
      %1640 = vrot.lane.b32.xlu0 %v1317, 36
      %v1641 = vpop.permute.xlu0 %1640
      %1642 = vrot.lane.b32.xlu0 %v1318, 36
      %v1643 = vpop.permute.xlu0 %1642
      %1644 = vrot.lane.b32.xlu0 %v1452, 36
      %v1645 = vpop.permute.xlu0 %1644
      %1646 = vrot.lane.b32.xlu0 %v1453, 36
      %v1647 = vpop.permute.xlu0 %1646
      %1648 = vrot.lane.b32.xlu0 %v1454, 36
      %v1649 = vpop.permute.xlu0 %1648
      %1650 = vrot.lane.b32.xlu0 %v1455, 36
      %v1651 = vpop.permute.xlu0 %1650
      %1652 = vrot.lane.b32.xlu0 %v1456, 36
      %v1653 = vpop.permute.xlu0 %1652
      %1654 = vrot.lane.b32.xlu0 %v1333, 36
      %v1655 = vpop.permute.xlu0 %1654
      %1656 = vrot.lane.b32.xlu0 %v1334, 36
      %v1657 = vpop.permute.xlu0 %1656
      %1658 = vrot.lane.b32.xlu0 %v1335, 36
      %v1659 = vpop.permute.xlu0 %1658
      %1660 = vrot.lane.b32.xlu0 %v1336, 36
      %v1661 = vpop.permute.xlu0 %1660
      %1662 = vrot.lane.b32.xlu0 %v1337, 36
      %v1663 = vpop.permute.xlu0 %1662
      %1664 = vrot.lane.b32.xlu0 %v1457, 36
      %v1665 = vpop.permute.xlu0 %1664
      %1666 = vrot.lane.b32.xlu0 %v1458, 36
      %v1667 = vpop.permute.xlu0 %1666
      %1668 = vrot.lane.b32.xlu0 %v1459, 36
      %v1669 = vpop.permute.xlu0 %1668
      %1670 = vrot.lane.b32.xlu0 %v1460, 36
      %v1671 = vpop.permute.xlu0 %1670
      %1672 = vrot.lane.b32.xlu0 %v1461, 36
      %v1673 = vpop.permute.xlu0 %1672
      %1674 = vrot.lane.b32.xlu0 %v1472, 36
      %v1675 = vpop.permute.xlu0 %1674
      %1676 = vrot.lane.b32.xlu0 %v1473, 36
      %v1677 = vpop.permute.xlu0 %1676
      %1678 = vrot.lane.b32.xlu0 %v1474, 36
      %v1679 = vpop.permute.xlu0 %1678
      %1680 = vrot.lane.b32.xlu0 %v1475, 36
      %v1681 = vpop.permute.xlu0 %1680
      %1682 = vrot.lane.b32.xlu0 %v1476, 36
      %v1683 = vpop.permute.xlu0 %1682
      %1684 = vrot.lane.b32.xlu0 %v1478, 36
      %v1685 = vpop.permute.xlu0 %1684
      %1686 = vrot.lane.b32.xlu0 %v1360, 36
      %v1687 = vpop.permute.xlu0 %1686
      %1688 = vrot.lane.b32.xlu0 %v1361, 36
      %v1689 = vpop.permute.xlu0 %1688
      %1690 = vrot.lane.b32.xlu0 %v1362, 36
      %v1691 = vpop.permute.xlu0 %1690
      %1692 = vrot.lane.b32.xlu0 %v1363, 36
      %v1693 = vpop.permute.xlu0 %1692
      %vm1694 = vcmask 293888
      %v1695 = vsel %vm1694, %v1635, %v1637
      %v1696 = vsel %vm1694, %v1637, %v1639
      %v1697 = vsel %vm1694, %v1639, %v1641
      %v1698 = vsel %vm1694, %v1641, %v1643
      %v1699 = vsel %vm1694, %v1645, %v1647
      %v1700 = vsel %vm1694, %v1647, %v1649
      %v1701 = vsel %vm1694, %v1649, %v1651
      %v1702 = vsel %vm1694, %v1651, %v1653
      %v1703 = vsel %vm1694, %v1655, %v1657
      %v1704 = vsel %vm1694, %v1657, %v1659
      %v1705 = vsel %vm1694, %v1659, %v1661
      %v1706 = vsel %vm1694, %v1661, %v1663
      %v1707 = vsel %vm1694, %v1665, %v1667
      %v1708 = vsel %vm1694, %v1667, %v1669
      %v1709 = vsel %vm1694, %v1669, %v1671
      %v1710 = vsel %vm1694, %v1671, %v1673
      %v1711 = vsel %vm1694, %v1675, %v1677
      %v1712 = vsel %vm1694, %v1677, %v1679
      %v1713 = vsel %vm1694, %v1679, %v1681
      %v1714 = vsel %vm1694, %v1681, %v1683
      %v1715 = vsel %vm1694, %v1685, %v1687
      %v1716 = vsel %vm1694, %v1687, %v1689
      %v1717 = vsel %vm1694, %v1689, %v1691
      %v1718 = vsel %vm1694, %v1691, %v1693
      %1743 = vrot.lane.b32.xlu0 %v835, 118
      %v1744 = vpop.permute.xlu0 %1743
      %1745 = vrot.lane.b32.xlu0 %v836, 118
      %v1746 = vpop.permute.xlu0 %1745
      %1747 = vrot.lane.b32.xlu0 %v837, 118
      %v1748 = vpop.permute.xlu0 %1747
      %1749 = vrot.lane.b32.xlu0 %v838, 118
      %v1750 = vpop.permute.xlu0 %1749
      %vm1751 = vcmask 965632
      %v1752 = vsel %vm1751, %v1744, %v1746
      %v1753 = vsel %vm1751, %v1746, %v1748
      %v1754 = vsel %vm1751, %v1748, %v1750
      %v1756 = vsel %vm288, %v253, 0
      %v1758 = vsel %vm1120, %v1752, 0
      %v1760 = vsel %vm1120, %v1753, 0
      %v1762 = vsel %vm1120, %v1754, 0
      %v1764 = vsel %vm1120, %v1750, 0
      %1766 = vmatprep.subr.mxu0 %v1127
      %1767 = vmatpush1.msra.mxu0 %v1126
      %1768 = vmatprep.subr.mxu0 %v1142
      %1769 = vmatpush1.msra.mxu0 %v1141
      %1770 = vmatprep.subr.mxu0 %v1152
      %1771 = vmatpush1.msra.mxu0 %v1151
      %1772 = vmatprep.subr.mxu0 %v1160
      %1773 = vmatpush1.msra.mxu0 %v1159
      %1774 = vmatprep.subr.mxu0 %v1172
      %1775 = vmatpush1.msra.mxu0 %v1171
      %1776 = vmatprep.subr.mxu0 %v1180
      %1777 = vmatpush1.msra.mxu0 %v1179
      %1778 = vmatprep.subr.mxu0 %v1571
      %1779 = vmatpush1.msra.mxu0 %v1570
      %1780 = vmatprep.subr.mxu0 %v1575
      %1781 = vmatpush1.msra.mxu0 %v1574
      %1782 = vmatprep.subr.mxu0 %v1579
      %1783 = vmatpush1.msra.mxu0 %v1578
      %1784 = vmatprep.subr.mxu0 %v1583
      %1785 = vmatpush1.msra.mxu0 %v1582
      %1786 = vmatprep.subr.mxu0 %v1587
      %1787 = vmatpush1.msra.mxu0 %v1586
      %1788 = vmatprep.subr.mxu0 %v1591
      %1789 = vmatpush1.msra.mxu0 %v1590
      %1790 = vmatprep.subr.mxu0 %v1696
      %1791 = vmatpush1.msra.mxu0 %v1695
      %1792 = vmatprep.subr.mxu0 %v1700
      %1793 = vmatpush1.msra.mxu0 %v1699
      %1794 = vmatprep.subr.mxu0 %v1704
      %1795 = vmatpush1.msra.mxu0 %v1703
      %1796 = vmatprep.subr.mxu0 %v1708
      %1797 = vmatpush1.msra.mxu0 %v1707
      %1798 = vmatprep.subr.mxu0 %v1712
      %1799 = vmatpush1.msra.mxu0 %v1711
      %1800 = vmatprep.subr.mxu0 %v1716
      %1801 = vmatpush1.msra.mxu0 %v1715
      %1802 = vmatprep.subr.mxu0 %v1760
      %1803 = vmatpush1.msra.mxu0 %v1758
      %1804 = vmatprep.subr.mxu0 0.0
      %1805 = vmatpush1.msra.mxu0 0.0
      %1806 = vmatprep.subr.mxu0 0.0
      %1807 = vmatpush1.msra.mxu0 0.0
      %1808 = vmatprep.subr.mxu0 0.0
      %1809 = vmatpush1.msra.mxu0 0.0
      %1810 = vmatprep.subr.mxu0 0.0
      %1811 = vmatpush1.msra.mxu0 0.0
      %1812 = vmatprep.subr.mxu0 0.0
      %1813 = vmatpush1.msra.mxu0 0.0
      %1814 = vmatprep.subr.mxu0 0.0
      %1815 = vmatpush1.msra.mxu0 0.0
      %1816 = vmatprep.subr.mxu0 0.0
      %1817 = vmatpush1.msra.mxu0 0.0
      %1818 = vmatprep.subr.mxu0 0.0
      %1819 = vmatpush1.msra.mxu0 0.0
      %1820 = vmatprep.subr.mxu0 0.0
      %1821 = vmatpush1.msra.mxu0 0.0
      %1822 = vmatprep.subr.mxu0 0.0
      %1823 = vmatpush1.msra.mxu0 0.0
      %1824 = vmatprep.subr.mxu0 0.0
      %1825 = vmatpush1.msra.mxu0 0.0
      %1826 = vmatprep.subr.mxu0 0.0
      %1827 = vmatpush1.msra.mxu0 0.0
      %1828 = vmatprep.subr.mxu0 0.0
      %1829 = vmatpush1.msra.mxu0 0.0
      %1830 = vmatprep.mubr.f32.mxu0 %v1756
      %1831 = vmatmul.mubr.f32.gmra.mrb[0].mxu0 %v252
      %v1832 = vpop.f32.mrb[0].mxu0
      %v1833 = vadd.f32 0.0, %v1832
      %v1834 = vpop.f32.mrb[0].mxu0
      %v1835 = vadd.f32 0.0, %v1834
      %1836 = vdwg.mxu0
      %1837 = vmatprep.subr.mxu0 %v1129
      %1838 = vmatpush1.msra.mxu0 %v1128
      %1839 = vmatprep.subr.mxu0 %v1144
      %1840 = vmatpush1.msra.mxu0 %v1143
      %1841 = vmatprep.subr.mxu0 %v1154
      %1842 = vmatpush1.msra.mxu0 %v1153
      %1843 = vmatprep.subr.mxu0 %v1162
      %1844 = vmatpush1.msra.mxu0 %v1161
      %1845 = vmatprep.subr.mxu0 %v1174
      %1846 = vmatpush1.msra.mxu0 %v1173
      %1847 = vmatprep.subr.mxu0 %v1182
      %1848 = vmatpush1.msra.mxu0 %v1181
      %1849 = vmatprep.subr.mxu0 %v1573
      %1850 = vmatpush1.msra.mxu0 %v1572
      %1851 = vmatprep.subr.mxu0 %v1577
      %1852 = vmatpush1.msra.mxu0 %v1576
      %1853 = vmatprep.subr.mxu0 %v1581
      %1854 = vmatpush1.msra.mxu0 %v1580
      %1855 = vmatprep.subr.mxu0 %v1585
      %1856 = vmatpush1.msra.mxu0 %v1584
      %1857 = vmatprep.subr.mxu0 %v1589
      %1858 = vmatpush1.msra.mxu0 %v1588
      %1859 = vmatprep.subr.mxu0 %v1593
      %1860 = vmatpush1.msra.mxu0 %v1592
      %1861 = vmatprep.subr.mxu0 %v1698
      %1862 = vmatpush1.msra.mxu0 %v1697
      %1863 = vmatprep.subr.mxu0 %v1702
      %1864 = vmatpush1.msra.mxu0 %v1701
      %1865 = vmatprep.subr.mxu0 %v1706
      %1866 = vmatpush1.msra.mxu0 %v1705
      %1867 = vmatprep.subr.mxu0 %v1710
      %1868 = vmatpush1.msra.mxu0 %v1709
      %1869 = vmatprep.subr.mxu0 %v1714
      %1870 = vmatpush1.msra.mxu0 %v1713
      %1871 = vmatprep.subr.mxu0 %v1718
      %1872 = vmatpush1.msra.mxu0 %v1717
      %1873 = vmatprep.subr.mxu0 %v1764
      %1874 = vmatpush1.msra.mxu0 %v1762
      %1875 = vmatprep.subr.mxu0 0.0
      %1876 = vmatpush1.msra.mxu0 0.0
      %1877 = vmatprep.subr.mxu0 0.0
      %1878 = vmatpush1.msra.mxu0 0.0
      %1879 = vmatprep.subr.mxu0 0.0
      %1880 = vmatpush1.msra.mxu0 0.0
      %1881 = vmatprep.subr.mxu0 0.0
      %1882 = vmatpush1.msra.mxu0 0.0
      %1883 = vmatprep.subr.mxu0 0.0
      %1884 = vmatpush1.msra.mxu0 0.0
      %1885 = vmatprep.subr.mxu0 0.0
      %1886 = vmatpush1.msra.mxu0 0.0
      %1887 = vmatprep.subr.mxu0 0.0
      %1888 = vmatpush1.msra.mxu0 0.0
      %1889 = vmatprep.subr.mxu0 0.0
      %1890 = vmatpush1.msra.mxu0 0.0
      %1891 = vmatprep.subr.mxu0 0.0
      %1892 = vmatpush1.msra.mxu0 0.0
      %1893 = vmatprep.subr.mxu0 0.0
      %1894 = vmatpush1.msra.mxu0 0.0
      %1895 = vmatprep.subr.mxu0 0.0
      %1896 = vmatpush1.msra.mxu0 0.0
      %1897 = vmatprep.subr.mxu0 0.0
      %1898 = vmatpush1.msra.mxu0 0.0
      %1899 = vmatprep.subr.mxu0 0.0
      %1900 = vmatpush1.msra.mxu0 0.0
      %1901 = vmatprep.mubr.f32.mxu0 %v1756
      %1902 = vmatmul.mubr.f32.gmra.mrb[0].mxu0 %v252
      %v1903 = vpop.f32.mrb[0].mxu0
      %v1904 = vadd.f32 0.0, %v1903
      %v1905 = vpop.f32.mrb[0].mxu0
      %v1906 = vadd.f32 0.0, %v1905
      %1907 = vdwg.mxu0
      %1909 = vrot.lane.b32.xlu0 %v1833, 59
      %v1910 = vpop.permute.xlu0 %1909
      %1912 = vrot.lane.b32.xlu0 %v1833, 53
      %v1913 = vpop.permute.xlu0 %1912
      %1916 = vrot.lane.b32.xlu0 %v1833, 47
      %v1917 = vpop.permute.xlu0 %1916
      %1918 = vrot.lane.b32.xlu0 %v1835, 47
      %v1919 = vpop.permute.xlu0 %1918
      %vm1920 = vcmask 384000
      %v1921 = vsel %vm1920, %v1917, %v1919
      %1923 = vrot.lane.b32.xlu0 %v1835, 41
      %v1924 = vpop.permute.xlu0 %1923
      %1926 = vrot.lane.b32.xlu0 %v1835, 35
      %v1927 = vpop.permute.xlu0 %1926
      %1929 = vrot.lane.b32.xlu0 %v1835, 29
      %v1930 = vpop.permute.xlu0 %1929
      %1932 = vrot.lane.b32.xlu0 %v1835, 23
      %v1933 = vpop.permute.xlu0 %1932
      %1935 = vrot.lane.b32.xlu0 %v1835, 17
      %v1936 = vpop.permute.xlu0 %1935
      %1939 = vrot.lane.b32.xlu0 %v1835, 11
      %v1940 = vpop.permute.xlu0 %1939
      %1941 = vrot.lane.b32.xlu0 %v1904, 11
      %v1942 = vpop.permute.xlu0 %1941
      %vm1943 = vcmask 89088
      %v1944 = vsel %vm1943, %v1940, %v1942
      %1946 = vrot.lane.b32.xlu0 %v1904, 5
      %v1947 = vpop.permute.xlu0 %1946
      %1949 = vrot.lane.b32.xlu0 %v1904, 127
      %v1950 = vpop.permute.xlu0 %1949
      %1952 = vrot.lane.b32.xlu0 %v1904, 121
      %v1953 = vpop.permute.xlu0 %1952
      %1955 = vrot.lane.b32.xlu0 %v1904, 115
      %v1956 = vpop.permute.xlu0 %1955
      %1958 = vrot.lane.b32.xlu0 %v1904, 109
      %v1959 = vpop.permute.xlu0 %1958
      %1962 = vrot.lane.b32.xlu0 %v1904, 103
      %v1963 = vpop.permute.xlu0 %1962
      %1964 = vrot.lane.b32.xlu0 %v1906, 103
      %v1965 = vpop.permute.xlu0 %1964
      %v1966 = vsel %vm1023, %v1963, %v1965
      %1968 = vrot.lane.b32.xlu0 %v1906, 97
      %v1969 = vpop.permute.xlu0 %1968
      %vm1971 = vcmask 130048
      %v1972 = vsel %vm1971, %v1910, %v1913
      %vm1973 = vcmask 261120
      %v1974 = vsel %vm1973, %v1972, %v1921
      %vm1975 = vcmask 392192
      %v1976 = vsel %vm1975, %v1974, %v1924
      %vm1977 = vcmask 523264
      %v1978 = vsel %vm1977, %v1976, %v1927
      %vm1979 = vcmask 654336
      %v1980 = vsel %vm1979, %v1978, %v1930
      %vm1981 = vcmask 785408
      %v1982 = vsel %vm1981, %v1980, %v1933
      %vm1983 = vcmask 916480
      %v1984 = vsel %vm1983, %v1982, %v1936
      %v1985 = vsel %vm1971, %v1944, %v1947
      %v1986 = vsel %vm1973, %v1985, %v1950
      %v1987 = vsel %vm1975, %v1986, %v1953
      %v1988 = vsel %vm1977, %v1987, %v1956
      %v1989 = vsel %vm1979, %v1988, %v1959
      %v1990 = vsel %vm1981, %v1989, %v1966
      %v1991 = vsel %vm1983, %v1990, %v1969
      %v1992 = vadd.f32 %v1984, %v1991
      %1993 = vadd.xlane.f32.xlu0 %v1992
      %v1994 = vpop.xlane.xlu0 %1993
      %v1995 = vrcp.pop 256.0
      %v1996 = vmul.f32 %v1994, %v1995
      %v1997 = vsub.f32 %v1984, %v1996
      %v1998 = vsub.f32 %v1991, %v1996
      %v1999 = vmul.f32 %v1997, %v1997
      %v2000 = vmul.f32 %v1998, %v1998
      %v2001 = vadd.f32 %v1999, %v2000
      %2002 = vadd.xlane.f32.xlu0 %v2001
      %v2003 = vpop.xlane.xlu0 %2002
      %v2004 = vmul.f32 %v2003, %v1995
      %v2005 = vadd.f32 %v2004, 1e-05
      %v2006 = vrsqrt.pop %v2005
      %v2007 = vmul.f32 %v1997, %v2006
      %v2008 = vmul.f32 %v1998, %v2006
      %2010 = vset.pattern.permute.xlu0 0
      %2011 = vperm.xlu0 %2010, %v258
      %v2012 = vpop.permute.xlu0 %2011
      %v2014 = vmul.f32 %v2007, %v2012
      %v2015 = vmul.f32 %v2008, %v2012
      %2016 = vset.pattern.permute.xlu0 1
      %2017 = vperm.xlu0 %2016, %v258
      %v2018 = vpop.permute.xlu0 %2017
      %v2020 = vadd.f32 %v2014, %v2018
      %v2021 = vadd.f32 %v2015, %v2018
      %v2022 = vmax.f32 %v2020, 0.0
      %v2023 = vmax.f32 %v2021, 0.0
      %2025 = vrot.lane.b32.xlu0 %v2022, 111
      %v2026 = vpop.permute.xlu0 %2025
      %2028 = vrot.lane.b32.xlu0 %v2022, 113
      %v2029 = vpop.permute.xlu0 %2028
      %2031 = vrot.lane.b32.xlu0 %v2022, 115
      %v2032 = vpop.permute.xlu0 %2031
      %v2034 = vsel %vm282, %v2026, %v2029
      %vm2035 = vcmask 138240
      %v2036 = vsel %vm2035, %v2034, %v2032
      %2038 = vrot.lane.b32.xlu0 %v2036, 19
      %v2039 = vpop.permute.xlu0 %2038
      %vm2041 = vcmask 302232
      %2042 = vst.msk [vmem:[#allocation2] sm:$0xff] %vm2041, %v2039
      %2043 = vrot.lane.b32.xlu0 %v2022, 127
      %v2044 = vpop.permute.xlu0 %2043
      %2046 = vrot.lane.b32.xlu0 %v2022, 1
      %v2047 = vpop.permute.xlu0 %2046
      %2049 = vrot.lane.b32.xlu0 %v2022, 3
      %v2050 = vpop.permute.xlu0 %2049
      %v2052 = vsel %vm282, %v2044, %v2047
      %v2053 = vsel %vm2035, %v2052, %v2050
      %2055 = vrot.lane.b32.xlu0 %v2053, 37
      %v2056 = vpop.permute.xlu0 %2055
      %vm2058 = vcmask 449832
      %2059 = vst.msk [vmem:[#allocation2] sm:$0xff] %vm2058, %v2056
      %2060 = vrot.lane.b32.xlu0 %v2036, 55
      %v2061 = vpop.permute.xlu0 %2060
      %vm2063 = vcmask 597432
      %2064 = vst.msk [vmem:[#allocation2] sm:$0xff] %vm2063, %v2061
      %2065 = vrot.lane.b32.xlu0 %v2022, 95
      %v2066 = vpop.permute.xlu0 %2065
      %2068 = vrot.lane.b32.xlu0 %v2022, 97
      %v2069 = vpop.permute.xlu0 %2068
      %2071 = vrot.lane.b32.xlu0 %v2022, 99
      %v2072 = vpop.permute.xlu0 %2071
      %v2074 = vsel %vm282, %v2066, %v2069
      %v2075 = vsel %vm2035, %v2074, %v2072
      %2077 = vrot.lane.b32.xlu0 %v2075, 73
      %v2078 = vpop.permute.xlu0 %2077
      %vm2080 = vcmask 745032
      %2081 = vst.msk [vmem:[#allocation2] sm:$0xff] %vm2080, %v2078
      %2082 = vrot.lane.b32.xlu0 %v2022, 79
      %v2083 = vpop.permute.xlu0 %2082
      %2085 = vrot.lane.b32.xlu0 %v2022, 81
      %v2086 = vpop.permute.xlu0 %2085
      %2088 = vrot.lane.b32.xlu0 %v2022, 83
      %v2089 = vpop.permute.xlu0 %2088
      %v2091 = vsel %vm282, %v2083, %v2086
      %v2092 = vsel %vm2035, %v2091, %v2089
      %2094 = vrot.lane.b32.xlu0 %v2092, 91
      %v2095 = vpop.permute.xlu0 %2094
      %vm2097 = vcmask 892632
      %2098 = vst.msk [vmem:[#allocation2] sm:$0xff] %vm2097, %v2095
      %2099 = vrot.lane.b32.xlu0 %v2022, 63
      %v2100 = vpop.permute.xlu0 %2099
      %2102 = vrot.lane.b32.xlu0 %v2022, 65
      %v2103 = vpop.permute.xlu0 %2102
      %2105 = vrot.lane.b32.xlu0 %v2022, 67
      %v2106 = vpop.permute.xlu0 %2105
      %v2108 = vsel %vm282, %v2100, %v2103
      %v2109 = vsel %vm2035, %v2108, %v2106
      %2111 = vrot.lane.b32.xlu0 %v2109, 109
      %v2112 = vpop.permute.xlu0 %2111
      %vm2114 = vcmask 1040232
      %2115 = vst.msk [vmem:[#allocation2] sm:$0xff] %vm2114, %v2112
      %2116 = vrot.lane.b32.xlu0 %v2022, 47
      %v2117 = vpop.permute.xlu0 %2116
      %2119 = vrot.lane.b32.xlu0 %v2022, 49
      %v2120 = vpop.permute.xlu0 %2119
      %2122 = vrot.lane.b32.xlu0 %v2022, 51
      %v2123 = vpop.permute.xlu0 %2122
      %v2125 = vsel %vm282, %v2117, %v2120
      %v2126 = vsel %vm2035, %v2125, %v2123
      %2128 = vrot.lane.b32.xlu0 %v2126, 127
      %v2129 = vpop.permute.xlu0 %2128
      %vm2131 = vcmask 1048568
      %2132 = vst.msk [vmem:[#allocation2] sm:$0xff] %vm2131, %v2129
      %2133 = vst.msk [vmem:[#allocation2 + $0x8] sm:$0xff] %vm2035, %v2129
      %2134 = vrot.lane.b32.xlu0 %v2022, 31
      %v2135 = vpop.permute.xlu0 %2134
      %2137 = vrot.lane.b32.xlu0 %v2022, 33
      %v2138 = vpop.permute.xlu0 %2137
      %2140 = vrot.lane.b32.xlu0 %v2022, 35
      %v2141 = vpop.permute.xlu0 %2140
      %v2143 = vsel %vm282, %v2135, %v2138
      %v2144 = vsel %vm2035, %v2143, %v2141
      %2146 = vrot.lane.b32.xlu0 %v2144, 17
      %v2147 = vpop.permute.xlu0 %2146
      %vm2149 = vcmask 285832
      %2150 = vst.msk [vmem:[#allocation2 + $0x8] sm:$0xff] %vm2149, %v2147
      %2151 = vrot.lane.b32.xlu0 %v2022, 15
      %v2152 = vpop.permute.xlu0 %2151
      %2154 = vrot.lane.b32.xlu0 %v2022, 17
      %v2155 = vpop.permute.xlu0 %2154
      %2157 = vrot.lane.b32.xlu0 %v2022, 19
      %v2158 = vpop.permute.xlu0 %2157
      %v2160 = vsel %vm282, %v2152, %v2155
      %v2161 = vsel %vm2035, %v2160, %v2158
      %2163 = vrot.lane.b32.xlu0 %v2161, 35
      %v2164 = vpop.permute.xlu0 %2163
      %vm2166 = vcmask 433432
      %2167 = vst.msk [vmem:[#allocation2 + $0x8] sm:$0xff] %vm2166, %v2164
      %2169 = vrot.lane.b32.xlu0 %v2023, 127
      %v2170 = vpop.permute.xlu0 %2169
      %2172 = vrot.lane.b32.xlu0 %v2023, 1
      %v2173 = vpop.permute.xlu0 %2172
      %2175 = vrot.lane.b32.xlu0 %v2023, 3
      %v2176 = vpop.permute.xlu0 %2175
      %v2178 = vsel %vm282, %v2170, %v2173
      %v2179 = vsel %vm2035, %v2178, %v2176
      %2181 = vrot.lane.b32.xlu0 %v2179, 53
      %v2182 = vpop.permute.xlu0 %2181
      %vm2184 = vcmask 581032
      %2185 = vst.msk [vmem:[#allocation2 + $0x8] sm:$0xff] %vm2184, %v2182
      %2186 = vrot.lane.b32.xlu0 %v2023, 111
      %v2187 = vpop.permute.xlu0 %2186
      %2189 = vrot.lane.b32.xlu0 %v2023, 113
      %v2190 = vpop.permute.xlu0 %2189
      %2192 = vrot.lane.b32.xlu0 %v2023, 115
      %v2193 = vpop.permute.xlu0 %2192
      %v2195 = vsel %vm282, %v2187, %v2190
      %v2196 = vsel %vm2035, %v2195, %v2193
      %2198 = vrot.lane.b32.xlu0 %v2196, 71
      %v2199 = vpop.permute.xlu0 %2198
      %vm2201 = vcmask 728632
      %2202 = vst.msk [vmem:[#allocation2 + $0x8] sm:$0xff] %vm2201, %v2199
      %2203 = vrot.lane.b32.xlu0 %v2023, 95
      %v2204 = vpop.permute.xlu0 %2203
      %2206 = vrot.lane.b32.xlu0 %v2023, 97
      %v2207 = vpop.permute.xlu0 %2206
      %2209 = vrot.lane.b32.xlu0 %v2023, 99
      %v2210 = vpop.permute.xlu0 %2209
      %v2212 = vsel %vm282, %v2204, %v2207
      %v2213 = vsel %vm2035, %v2212, %v2210
      %2215 = vrot.lane.b32.xlu0 %v2213, 89
      %v2216 = vpop.permute.xlu0 %2215
      %vm2218 = vcmask 876232
      %2219 = vst.msk [vmem:[#allocation2 + $0x8] sm:$0xff] %vm2218, %v2216
      %2220 = vrot.lane.b32.xlu0 %v2023, 79
      %v2221 = vpop.permute.xlu0 %2220
      %2223 = vrot.lane.b32.xlu0 %v2023, 81
      %v2224 = vpop.permute.xlu0 %2223
      %2226 = vrot.lane.b32.xlu0 %v2023, 83
      %v2227 = vpop.permute.xlu0 %2226
      %v2229 = vsel %vm282, %v2221, %v2224
      %v2230 = vsel %vm2035, %v2229, %v2227
      %2232 = vrot.lane.b32.xlu0 %v2230, 107
      %v2233 = vpop.permute.xlu0 %2232
      %vm2235 = vcmask 1023832
      %2236 = vst.msk [vmem:[#allocation2 + $0x8] sm:$0xff] %vm2235, %v2233
      %2237 = vrot.lane.b32.xlu0 %v2023, 63
      %v2238 = vpop.permute.xlu0 %2237
      %2240 = vrot.lane.b32.xlu0 %v2023, 65
      %v2241 = vpop.permute.xlu0 %2240
      %2243 = vrot.lane.b32.xlu0 %v2023, 67
      %v2244 = vpop.permute.xlu0 %2243
      %v2246 = vsel %vm282, %v2238, %v2241
      %v2247 = vsel %vm2035, %v2246, %v2244
      %2249 = vrot.lane.b32.xlu0 %v2247, 125
      %v2250 = vpop.permute.xlu0 %2249
      %vm2252 = vcmask 1048552
      %2253 = vst.msk [vmem:[#allocation2 + $0x8] sm:$0xff] %vm2252, %v2250
      %vm2254 = vcmask 121856
      %2255 = vst.msk [vmem:[#allocation2 + $0x10] sm:$0xff] %vm2254, %v2250
      %2256 = vrot.lane.b32.xlu0 %v2023, 47
      %v2257 = vpop.permute.xlu0 %2256
      %2259 = vrot.lane.b32.xlu0 %v2023, 49
      %v2260 = vpop.permute.xlu0 %2259
      %2262 = vrot.lane.b32.xlu0 %v2023, 51
      %v2263 = vpop.permute.xlu0 %2262
      %v2265 = vsel %vm282, %v2257, %v2260
      %v2266 = vsel %vm2035, %v2265, %v2263
      %2268 = vrot.lane.b32.xlu0 %v2266, 15
      %v2269 = vpop.permute.xlu0 %2268
      %vm2271 = vcmask 269432
      %2272 = vst.msk [vmem:[#allocation2 + $0x10] sm:$0xff] %vm2271, %v2269
      %2273 = vrot.lane.b32.xlu0 %v2023, 31
      %v2274 = vpop.permute.xlu0 %2273
      %2276 = vrot.lane.b32.xlu0 %v2023, 33
      %v2277 = vpop.permute.xlu0 %2276
      %2279 = vrot.lane.b32.xlu0 %v2023, 35
      %v2280 = vpop.permute.xlu0 %2279
      %v2282 = vsel %vm282, %v2274, %v2277
      %v2283 = vsel %vm2035, %v2282, %v2280
      %2285 = vrot.lane.b32.xlu0 %v2283, 33
      %v2286 = vpop.permute.xlu0 %2285
      %vm2288 = vcmask 417032
      %2289 = vst.msk [vmem:[#allocation2 + $0x10] sm:$0xff] %vm2288, %v2286
      %2290 = vrot.lane.b32.xlu0 %v2023, 15
      %v2291 = vpop.permute.xlu0 %2290
      %2293 = vrot.lane.b32.xlu0 %v2023, 17
      %v2294 = vpop.permute.xlu0 %2293
      %2296 = vrot.lane.b32.xlu0 %v2023, 19
      %v2297 = vpop.permute.xlu0 %2296
      %v2299 = vsel %vm282, %v2291, %v2294
      %v2300 = vsel %vm2035, %v2299, %v2297
      %2302 = vrot.lane.b32.xlu0 %v2300, 51
      %v2303 = vpop.permute.xlu0 %2302
      %vm2305 = vcmask 564632
      %2306 = vst.msk [vmem:[#allocation2 + $0x10] sm:$0xff] %vm2305, %v2303
      %2307 = vrot.lane.b32.xlu0 %v2283, 69
      %v2308 = vpop.permute.xlu0 %2307
      %vm2310 = vcmask 712232
      %2311 = vst.msk [vmem:[#allocation2 + $0x10] sm:$0xff] %vm2310, %v2308
      %v2312 = vld [vmem:[#allocation2] sm:$0xff]
      %v2313 = vld [vmem:[#allocation2 + $0x8] sm:$0xff]
      %v2314 = vld [vmem:[#allocation2 + $0x10] sm:$0xff]
      %2318 = vrot.lane.b32.xlu0 %v2312, 127
      %v2319 = vpop.permute.xlu0 %2318
      %2320 = vrot.lane.b32.xlu0 %v2313, 127
      %v2321 = vpop.permute.xlu0 %2320
      %2322 = vrot.lane.b32.xlu0 %v2314, 127
      %v2323 = vpop.permute.xlu0 %2322
      %v2324 = vsel %vm855, %v2319, %v2321
      %v2325 = vsel %vm855, %v2321, %v2323
      %2329 = vrot.lane.b32.xlu0 %v2312, 126
      %v2330 = vpop.permute.xlu0 %2329
      %2331 = vrot.lane.b32.xlu0 %v2313, 126
      %v2332 = vpop.permute.xlu0 %2331
      %2333 = vrot.lane.b32.xlu0 %v2314, 126
      %v2334 = vpop.permute.xlu0 %2333
      %v2335 = vsel %vm875, %v2330, %v2332
      %v2336 = vsel %vm875, %v2332, %v2334
      %2340 = vrot.lane.b32.xlu0 %v2312, 110
      %v2341 = vpop.permute.xlu0 %2340
      %2342 = vrot.lane.b32.xlu0 %v2313, 110
      %v2343 = vpop.permute.xlu0 %2342
      %2344 = vrot.lane.b32.xlu0 %v2314, 110
      %v2345 = vpop.permute.xlu0 %2344
      %v2346 = vsel %vm1374, %v2341, %v2343
      %v2347 = vsel %vm1374, %v2343, %v2345
      %2351 = vrot.lane.b32.xlu0 %v2312, 109
      %v2352 = vpop.permute.xlu0 %2351
      %2353 = vrot.lane.b32.xlu0 %v2313, 109
      %v2354 = vpop.permute.xlu0 %2353
      %2355 = vrot.lane.b32.xlu0 %v2314, 109
      %v2356 = vpop.permute.xlu0 %2355
      %v2357 = vsel %vm1394, %v2352, %v2354
      %v2358 = vsel %vm1394, %v2354, %v2356
      %2362 = vrot.lane.b32.xlu0 %v2312, 108
      %v2363 = vpop.permute.xlu0 %2362
      %2364 = vrot.lane.b32.xlu0 %v2313, 108
      %v2365 = vpop.permute.xlu0 %2364
      %2366 = vrot.lane.b32.xlu0 %v2314, 108
      %v2367 = vpop.permute.xlu0 %2366
      %v2368 = vsel %vm1218, %v2363, %v2365
      %v2369 = vsel %vm1218, %v2365, %v2367
      %2373 = vrot.lane.b32.xlu0 %v2312, 92
      %v2374 = vpop.permute.xlu0 %2373
      %2375 = vrot.lane.b32.xlu0 %v2313, 92
      %v2376 = vpop.permute.xlu0 %2375
      %2377 = vrot.lane.b32.xlu0 %v2314, 92
      %v2378 = vpop.permute.xlu0 %2377
      %vm2379 = vcmask 752640
      %v2380 = vsel %vm2379, %v2374, %v2376
      %v2381 = vsel %vm2379, %v2376, %v2378
      %2385 = vrot.lane.b32.xlu0 %v2312, 91
      %v2386 = vpop.permute.xlu0 %2385
      %2387 = vrot.lane.b32.xlu0 %v2313, 91
      %v2388 = vpop.permute.xlu0 %2387
      %2389 = vrot.lane.b32.xlu0 %v2314, 91
      %v2390 = vpop.permute.xlu0 %2389
      %vm2391 = vcmask 744448
      %v2392 = vsel %vm2391, %v2386, %v2388
      %v2393 = vsel %vm2391, %v2388, %v2390
      %2397 = vrot.lane.b32.xlu0 %v2312, 90
      %v2398 = vpop.permute.xlu0 %2397
      %2399 = vrot.lane.b32.xlu0 %v2313, 90
      %v2400 = vpop.permute.xlu0 %2399
      %2401 = vrot.lane.b32.xlu0 %v2314, 90
      %v2402 = vpop.permute.xlu0 %2401
      %vm2403 = vcmask 736256
      %v2404 = vsel %vm2403, %v2398, %v2400
      %v2405 = vsel %vm2403, %v2400, %v2402
      %vm2409 = vcmask 588800
      %v2411 = vsel %vm2409, %v254, 0
      %2413 = vmatprep.subr.mxu0 %v2313
      %2414 = vmatpush1.msra.mxu0 %v2312
      %2415 = vmatprep.subr.mxu0 %v2325
      %2416 = vmatpush1.msra.mxu0 %v2324
      %2417 = vmatprep.subr.mxu0 %v2336
      %2418 = vmatpush1.msra.mxu0 %v2335
      %2419 = vmatprep.subr.mxu0 %v2347
      %2420 = vmatpush1.msra.mxu0 %v2346
      %2421 = vmatprep.subr.mxu0 %v2358
      %2422 = vmatpush1.msra.mxu0 %v2357
      %2423 = vmatprep.subr.mxu0 %v2369
      %2424 = vmatpush1.msra.mxu0 %v2368
      %2425 = vmatprep.subr.mxu0 %v2381
      %2426 = vmatpush1.msra.mxu0 %v2380
      %2427 = vmatprep.subr.mxu0 %v2393
      %2428 = vmatpush1.msra.mxu0 %v2392
      %2429 = vmatprep.subr.mxu0 %v2405
      %2430 = vmatpush1.msra.mxu0 %v2404
      %2431 = vmatprep.subr.mxu0 0.0
      %2432 = vmatpush1.msra.mxu0 0.0
      %2433 = vmatprep.subr.mxu0 0.0
      %2434 = vmatpush1.msra.mxu0 0.0
      %2435 = vmatprep.subr.mxu0 0.0
      %2436 = vmatpush1.msra.mxu0 0.0
      %2437 = vmatprep.subr.mxu0 0.0
      %2438 = vmatpush1.msra.mxu0 0.0
      %2439 = vmatprep.subr.mxu0 0.0
      %2440 = vmatpush1.msra.mxu0 0.0
      %2441 = vmatprep.subr.mxu0 0.0
      %2442 = vmatpush1.msra.mxu0 0.0
      %2443 = vmatprep.subr.mxu0 0.0
      %2444 = vmatpush1.msra.mxu0 0.0
      %2445 = vmatprep.subr.mxu0 0.0
      %2446 = vmatpush1.msra.mxu0 0.0
      %2447 = vmatprep.subr.mxu0 0.0
      %2448 = vmatpush1.msra.mxu0 0.0
      %2449 = vmatprep.subr.mxu0 0.0
      %2450 = vmatpush1.msra.mxu0 0.0
      %2451 = vmatprep.subr.mxu0 0.0
      %2452 = vmatpush1.msra.mxu0 0.0
      %2453 = vmatprep.subr.mxu0 0.0
      %2454 = vmatpush1.msra.mxu0 0.0
      %2455 = vmatprep.subr.mxu0 0.0
      %2456 = vmatpush1.msra.mxu0 0.0
      %2457 = vmatprep.subr.mxu0 0.0
      %2458 = vmatpush1.msra.mxu0 0.0
      %2459 = vmatprep.subr.mxu0 0.0
      %2460 = vmatpush1.msra.mxu0 0.0
      %2461 = vmatprep.subr.mxu0 0.0
      %2462 = vmatpush1.msra.mxu0 0.0
      %2463 = vmatprep.subr.mxu0 0.0
      %2464 = vmatpush1.msra.mxu0 0.0
      %2465 = vmatprep.subr.mxu0 0.0
      %2466 = vmatpush1.msra.mxu0 0.0
      %2467 = vmatprep.subr.mxu0 0.0
      %2468 = vmatpush1.msra.mxu0 0.0
      %2469 = vmatprep.subr.mxu0 0.0
      %2470 = vmatpush1.msra.mxu0 0.0
      %2471 = vmatprep.subr.mxu0 0.0
      %2472 = vmatpush1.msra.mxu0 0.0
      %2473 = vmatprep.subr.mxu0 0.0
      %2474 = vmatpush1.msra.mxu0 0.0
      %2475 = vmatprep.subr.mxu0 0.0
      %2476 = vmatpush1.msra.mxu0 0.0
      %2477 = vmatprep.mubr.f32.mxu0 0.0
      %2478 = vmatmul.mubr.f32.gmra.mrb[0].mxu0 %v2411
      %v2479 = vpop.f32.mrb[0].mxu0
      %v2480 = vadd.f32 0.0, %v2479
      %v2481 = vpop.f32.mrb[0].mxu0
      %v2482 = vadd.f32 0.0, %v2481
      %2483 = vdwg.mxu0
      %2484 = vmatprep.subr.mxu0 0.0
      %2485 = vmatpush1.msra.mxu0 %v2314
      %2486 = vmatprep.subr.mxu0 0.0
      %2487 = vmatpush1.msra.mxu0 %v2323
      %2488 = vmatprep.subr.mxu0 0.0
      %2489 = vmatpush1.msra.mxu0 %v2334
      %2490 = vmatprep.subr.mxu0 0.0
      %2491 = vmatpush1.msra.mxu0 %v2345
      %2492 = vmatprep.subr.mxu0 0.0
      %2493 = vmatpush1.msra.mxu0 %v2356
      %2494 = vmatprep.subr.mxu0 0.0
      %2495 = vmatpush1.msra.mxu0 %v2367
      %2496 = vmatprep.subr.mxu0 0.0
      %2497 = vmatpush1.msra.mxu0 %v2378
      %2498 = vmatprep.subr.mxu0 0.0
      %2499 = vmatpush1.msra.mxu0 %v2390
      %2500 = vmatprep.subr.mxu0 0.0
      %2501 = vmatpush1.msra.mxu0 %v2402
      %2502 = vmatprep.subr.mxu0 0.0
      %2503 = vmatpush1.msra.mxu0 0.0
      %2504 = vmatprep.subr.mxu0 0.0
      %2505 = vmatpush1.msra.mxu0 0.0
      %2506 = vmatprep.subr.mxu0 0.0
      %2507 = vmatpush1.msra.mxu0 0.0
      %2508 = vmatprep.subr.mxu0 0.0
      %2509 = vmatpush1.msra.mxu0 0.0
      %2510 = vmatprep.subr.mxu0 0.0
      %2511 = vmatpush1.msra.mxu0 0.0
      %2512 = vmatprep.subr.mxu0 0.0
      %2513 = vmatpush1.msra.mxu0 0.0
      %2514 = vmatprep.subr.mxu0 0.0
      %2515 = vmatpush1.msra.mxu0 0.0
      %2516 = vmatprep.subr.mxu0 0.0
      %2517 = vmatpush1.msra.mxu0 0.0
      %2518 = vmatprep.subr.mxu0 0.0
      %2519 = vmatpush1.msra.mxu0 0.0
      %2520 = vmatprep.subr.mxu0 0.0
      %2521 = vmatpush1.msra.mxu0 0.0
      %2522 = vmatprep.subr.mxu0 0.0
      %2523 = vmatpush1.msra.mxu0 0.0
      %2524 = vmatprep.subr.mxu0 0.0
      %2525 = vmatpush1.msra.mxu0 0.0
      %2526 = vmatprep.subr.mxu0 0.0
      %2527 = vmatpush1.msra.mxu0 0.0
      %2528 = vmatprep.subr.mxu0 0.0
      %2529 = vmatpush1.msra.mxu0 0.0
      %2530 = vmatprep.subr.mxu0 0.0
      %2531 = vmatpush1.msra.mxu0 0.0
      %2532 = vmatprep.subr.mxu0 0.0
      %2533 = vmatpush1.msra.mxu0 0.0
      %2534 = vmatprep.subr.mxu0 0.0
      %2535 = vmatpush1.msra.mxu0 0.0
      %2536 = vmatprep.subr.mxu0 0.0
      %2537 = vmatpush1.msra.mxu0 0.0
      %2538 = vmatprep.subr.mxu0 0.0
      %2539 = vmatpush1.msra.mxu0 0.0
      %2540 = vmatprep.subr.mxu0 0.0
      %2541 = vmatpush1.msra.mxu0 0.0
      %2542 = vmatprep.subr.mxu0 0.0
      %2543 = vmatpush1.msra.mxu0 0.0
      %2544 = vmatprep.subr.mxu0 0.0
      %2545 = vmatpush1.msra.mxu0 0.0
      %2546 = vmatprep.subr.mxu0 0.0
      %2547 = vmatpush1.msra.mxu0 0.0
      %2548 = vmatprep.mubr.f32.mxu0 0.0
      %2549 = vmatmul.mubr.f32.gmra.mrb[0].mxu0 %v2411
      %v2550 = vpop.f32.mrb[0].mxu0
      %v2551 = vadd.f32 0.0, %v2550
      %v2552 = vpop.f32.mrb[0].mxu0
      %2553 = vdwg.mxu0
      %2555 = vrot.lane.b32.xlu0 %v2480, 109
      %v2556 = vpop.permute.xlu0 %2555
      %2558 = vrot.lane.b32.xlu0 %v2480, 107
      %v2559 = vpop.permute.xlu0 %2558
      %2561 = vrot.lane.b32.xlu0 %v2480, 105
      %v2562 = vpop.permute.xlu0 %2561
      %2564 = vrot.lane.b32.xlu0 %v2480, 103
      %v2565 = vpop.permute.xlu0 %2564
      %2567 = vrot.lane.b32.xlu0 %v2480, 101
      %v2568 = vpop.permute.xlu0 %2567
      %2570 = vrot.lane.b32.xlu0 %v2480, 99
      %v2571 = vpop.permute.xlu0 %2570
      %2574 = vrot.lane.b32.xlu0 %v2480, 97
      %v2575 = vpop.permute.xlu0 %2574
      %2576 = vrot.lane.b32.xlu0 %v2482, 97
      %v2577 = vpop.permute.xlu0 %2576
      %vm2578 = vcmask 793600
      %v2579 = vsel %vm2578, %v2575, %v2577
      %2581 = vrot.lane.b32.xlu0 %v2482, 95
      %v2582 = vpop.permute.xlu0 %2581
      %2584 = vrot.lane.b32.xlu0 %v2482, 93
      %v2585 = vpop.permute.xlu0 %2584
      %2587 = vrot.lane.b32.xlu0 %v2482, 91
      %v2588 = vpop.permute.xlu0 %2587
      %2590 = vrot.lane.b32.xlu0 %v2482, 89
      %v2591 = vpop.permute.xlu0 %2590
      %2593 = vrot.lane.b32.xlu0 %v2482, 87
      %v2594 = vpop.permute.xlu0 %2593
      %2596 = vrot.lane.b32.xlu0 %v2482, 85
      %v2597 = vpop.permute.xlu0 %2596
      %2600 = vrot.lane.b32.xlu0 %v2482, 83
      %v2601 = vpop.permute.xlu0 %2600
      %2602 = vrot.lane.b32.xlu0 %v2551, 83
      %v2603 = vpop.permute.xlu0 %2602
      %v2604 = vsel %vm1111, %v2601, %v2603
      %2606 = vrot.lane.b32.xlu0 %v2551, 81
      %v2607 = vpop.permute.xlu0 %2606
      %2609 = vrot.lane.b32.xlu0 %v2551, 79
      %v2610 = vpop.permute.xlu0 %2609
      %v2612 = vsel %vm1971, %v2556, %v2559
      %v2613 = vsel %vm1973, %v2612, %v2562
      %v2614 = vsel %vm1975, %v2613, %v2565
      %v2615 = vsel %vm1977, %v2614, %v2568
      %v2616 = vsel %vm1979, %v2615, %v2571
      %v2617 = vsel %vm1981, %v2616, %v2579
      %v2618 = vsel %vm1983, %v2617, %v2582
      %v2619 = vsel %vm1971, %v2585, %v2588
      %v2620 = vsel %vm1973, %v2619, %v2591
      %v2621 = vsel %vm1975, %v2620, %v2594
      %v2622 = vsel %vm1977, %v2621, %v2597
      %v2623 = vsel %vm1979, %v2622, %v2604
      %v2624 = vsel %vm1981, %v2623, %v2607
      %v2625 = vsel %vm1983, %v2624, %v2610
      %v2626 = vadd.f32 %v2618, %v2625
      %2627 = vadd.xlane.f32.xlu0 %v2626
      %v2628 = vpop.xlane.xlu0 %2627
      %v2629 = vmul.f32 %v2628, %v1995
      %v2630 = vsub.f32 %v2618, %v2629
      %v2631 = vsub.f32 %v2625, %v2629
      %v2632 = vmul.f32 %v2630, %v2630
      %v2633 = vmul.f32 %v2631, %v2631
      %v2634 = vadd.f32 %v2632, %v2633
      %2635 = vadd.xlane.f32.xlu0 %v2634
      %v2636 = vpop.xlane.xlu0 %2635
      %v2637 = vmul.f32 %v2636, %v1995
      %v2638 = vadd.f32 %v2637, 1e-05
      %v2639 = vrsqrt.pop %v2638
      %v2640 = vmul.f32 %v2630, %v2639
      %v2641 = vmul.f32 %v2631, %v2639
      %2642 = vset.pattern.permute.xlu0 2
      %2643 = vperm.xlu0 %2642, %v258
      %v2644 = vpop.permute.xlu0 %2643
      %v2646 = vmul.f32 %v2640, %v2644
      %v2647 = vmul.f32 %v2641, %v2644
      %2648 = vset.pattern.permute.xlu0 3
      %2649 = vperm.xlu0 %2648, %v258
      %v2650 = vpop.permute.xlu0 %2649
      %v2652 = vadd.f32 %v2646, %v2650
      %v2653 = vadd.f32 %v2647, %v2650
      %v2654 = vmax.f32 %v2652, 0.0
      %v2655 = vmax.f32 %v2653, 0.0
      %2657 = vrot.lane.b32.xlu0 %v2654, 111
      %v2658 = vpop.permute.xlu0 %2657
      %2660 = vrot.lane.b32.xlu0 %v2654, 113
      %v2661 = vpop.permute.xlu0 %2660
      %2663 = vrot.lane.b32.xlu0 %v2654, 115
      %v2664 = vpop.permute.xlu0 %2663
      %v2666 = vsel %vm282, %v2658, %v2661
      %v2667 = vsel %vm2035, %v2666, %v2664
      %2669 = vrot.lane.b32.xlu0 %v2667, 19
      %v2670 = vpop.permute.xlu0 %2669
      %2672 = vst.msk [vmem:[#allocation2] sm:$0xff] %vm2041, %v2670
      %2673 = vrot.lane.b32.xlu0 %v2654, 127
      %v2674 = vpop.permute.xlu0 %2673
      %2676 = vrot.lane.b32.xlu0 %v2654, 1
      %v2677 = vpop.permute.xlu0 %2676
      %2679 = vrot.lane.b32.xlu0 %v2654, 3
      %v2680 = vpop.permute.xlu0 %2679
      %v2682 = vsel %vm282, %v2674, %v2677
      %v2683 = vsel %vm2035, %v2682, %v2680
      %2685 = vrot.lane.b32.xlu0 %v2683, 37
      %v2686 = vpop.permute.xlu0 %2685
      %2688 = vst.msk [vmem:[#allocation2] sm:$0xff] %vm2058, %v2686
      %2689 = vrot.lane.b32.xlu0 %v2667, 55
      %v2690 = vpop.permute.xlu0 %2689
      %2692 = vst.msk [vmem:[#allocation2] sm:$0xff] %vm2063, %v2690
      %2693 = vrot.lane.b32.xlu0 %v2654, 95
      %v2694 = vpop.permute.xlu0 %2693
      %2696 = vrot.lane.b32.xlu0 %v2654, 97
      %v2697 = vpop.permute.xlu0 %2696
      %2699 = vrot.lane.b32.xlu0 %v2654, 99
      %v2700 = vpop.permute.xlu0 %2699
      %v2702 = vsel %vm282, %v2694, %v2697
      %v2703 = vsel %vm2035, %v2702, %v2700
      %2705 = vrot.lane.b32.xlu0 %v2703, 73
      %v2706 = vpop.permute.xlu0 %2705
      %2708 = vst.msk [vmem:[#allocation2] sm:$0xff] %vm2080, %v2706
      %2709 = vrot.lane.b32.xlu0 %v2654, 79
      %v2710 = vpop.permute.xlu0 %2709
      %2712 = vrot.lane.b32.xlu0 %v2654, 81
      %v2713 = vpop.permute.xlu0 %2712
      %2715 = vrot.lane.b32.xlu0 %v2654, 83
      %v2716 = vpop.permute.xlu0 %2715
      %v2718 = vsel %vm282, %v2710, %v2713
      %v2719 = vsel %vm2035, %v2718, %v2716
      %2721 = vrot.lane.b32.xlu0 %v2719, 91
      %v2722 = vpop.permute.xlu0 %2721
      %2724 = vst.msk [vmem:[#allocation2] sm:$0xff] %vm2097, %v2722
      %2725 = vrot.lane.b32.xlu0 %v2654, 63
      %v2726 = vpop.permute.xlu0 %2725
      %2728 = vrot.lane.b32.xlu0 %v2654, 65
      %v2729 = vpop.permute.xlu0 %2728
      %2731 = vrot.lane.b32.xlu0 %v2654, 67
      %v2732 = vpop.permute.xlu0 %2731
      %v2734 = vsel %vm282, %v2726, %v2729
      %v2735 = vsel %vm2035, %v2734, %v2732
      %2737 = vrot.lane.b32.xlu0 %v2735, 109
      %v2738 = vpop.permute.xlu0 %2737
      %2740 = vst.msk [vmem:[#allocation2] sm:$0xff] %vm2114, %v2738
      %2741 = vrot.lane.b32.xlu0 %v2654, 47
      %v2742 = vpop.permute.xlu0 %2741
      %2744 = vrot.lane.b32.xlu0 %v2654, 49
      %v2745 = vpop.permute.xlu0 %2744
      %2747 = vrot.lane.b32.xlu0 %v2654, 51
      %v2748 = vpop.permute.xlu0 %2747
      %v2750 = vsel %vm282, %v2742, %v2745
      %v2751 = vsel %vm2035, %v2750, %v2748
      %2753 = vrot.lane.b32.xlu0 %v2751, 127
      %v2754 = vpop.permute.xlu0 %2753
      %2756 = vst.msk [vmem:[#allocation2] sm:$0xff] %vm2131, %v2754
      %2757 = vst.msk [vmem:[#allocation2 + $0x8] sm:$0xff] %vm2035, %v2754
      %2758 = vrot.lane.b32.xlu0 %v2654, 31
      %v2759 = vpop.permute.xlu0 %2758
      %2761 = vrot.lane.b32.xlu0 %v2654, 33
      %v2762 = vpop.permute.xlu0 %2761
      %2764 = vrot.lane.b32.xlu0 %v2654, 35
      %v2765 = vpop.permute.xlu0 %2764
      %v2767 = vsel %vm282, %v2759, %v2762
      %v2768 = vsel %vm2035, %v2767, %v2765
      %2770 = vrot.lane.b32.xlu0 %v2768, 17
      %v2771 = vpop.permute.xlu0 %2770
      %2773 = vst.msk [vmem:[#allocation2 + $0x8] sm:$0xff] %vm2149, %v2771
      %2774 = vrot.lane.b32.xlu0 %v2654, 15
      %v2775 = vpop.permute.xlu0 %2774
      %2777 = vrot.lane.b32.xlu0 %v2654, 17
      %v2778 = vpop.permute.xlu0 %2777
      %2780 = vrot.lane.b32.xlu0 %v2654, 19
      %v2781 = vpop.permute.xlu0 %2780
      %v2783 = vsel %vm282, %v2775, %v2778
      %v2784 = vsel %vm2035, %v2783, %v2781
      %2786 = vrot.lane.b32.xlu0 %v2784, 35
      %v2787 = vpop.permute.xlu0 %2786
      %2789 = vst.msk [vmem:[#allocation2 + $0x8] sm:$0xff] %vm2166, %v2787
      %2791 = vrot.lane.b32.xlu0 %v2655, 127
      %v2792 = vpop.permute.xlu0 %2791
      %2794 = vrot.lane.b32.xlu0 %v2655, 1
      %v2795 = vpop.permute.xlu0 %2794
      %2797 = vrot.lane.b32.xlu0 %v2655, 3
      %v2798 = vpop.permute.xlu0 %2797
      %v2800 = vsel %vm282, %v2792, %v2795
      %v2801 = vsel %vm2035, %v2800, %v2798
      %2803 = vrot.lane.b32.xlu0 %v2801, 53
      %v2804 = vpop.permute.xlu0 %2803
      %2806 = vst.msk [vmem:[#allocation2 + $0x8] sm:$0xff] %vm2184, %v2804
      %2807 = vrot.lane.b32.xlu0 %v2655, 111
      %v2808 = vpop.permute.xlu0 %2807
      %2810 = vrot.lane.b32.xlu0 %v2655, 113
      %v2811 = vpop.permute.xlu0 %2810
      %2813 = vrot.lane.b32.xlu0 %v2655, 115
      %v2814 = vpop.permute.xlu0 %2813
      %v2816 = vsel %vm282, %v2808, %v2811
      %v2817 = vsel %vm2035, %v2816, %v2814
      %2819 = vrot.lane.b32.xlu0 %v2817, 71
      %v2820 = vpop.permute.xlu0 %2819
      %2822 = vst.msk [vmem:[#allocation2 + $0x8] sm:$0xff] %vm2201, %v2820
      %2823 = vrot.lane.b32.xlu0 %v2655, 95
      %v2824 = vpop.permute.xlu0 %2823
      %2826 = vrot.lane.b32.xlu0 %v2655, 97
      %v2827 = vpop.permute.xlu0 %2826
      %2829 = vrot.lane.b32.xlu0 %v2655, 99
      %v2830 = vpop.permute.xlu0 %2829
      %v2832 = vsel %vm282, %v2824, %v2827
      %v2833 = vsel %vm2035, %v2832, %v2830
      %2835 = vrot.lane.b32.xlu0 %v2833, 89
      %v2836 = vpop.permute.xlu0 %2835
      %2838 = vst.msk [vmem:[#allocation2 + $0x8] sm:$0xff] %vm2218, %v2836
      %2839 = vrot.lane.b32.xlu0 %v2655, 79
      %v2840 = vpop.permute.xlu0 %2839
      %2842 = vrot.lane.b32.xlu0 %v2655, 81
      %v2843 = vpop.permute.xlu0 %2842
      %2845 = vrot.lane.b32.xlu0 %v2655, 83
      %v2846 = vpop.permute.xlu0 %2845
      %v2848 = vsel %vm282, %v2840, %v2843
      %v2849 = vsel %vm2035, %v2848, %v2846
      %2851 = vrot.lane.b32.xlu0 %v2849, 107
      %v2852 = vpop.permute.xlu0 %2851
      %2854 = vst.msk [vmem:[#allocation2 + $0x8] sm:$0xff] %vm2235, %v2852
      %2855 = vrot.lane.b32.xlu0 %v2655, 63
      %v2856 = vpop.permute.xlu0 %2855
      %2858 = vrot.lane.b32.xlu0 %v2655, 65
      %v2859 = vpop.permute.xlu0 %2858
      %2861 = vrot.lane.b32.xlu0 %v2655, 67
      %v2862 = vpop.permute.xlu0 %2861
      %v2864 = vsel %vm282, %v2856, %v2859
      %v2865 = vsel %vm2035, %v2864, %v2862
      %2867 = vrot.lane.b32.xlu0 %v2865, 125
      %v2868 = vpop.permute.xlu0 %2867
      %2870 = vst.msk [vmem:[#allocation2 + $0x8] sm:$0xff] %vm2252, %v2868
      %2871 = vst.msk [vmem:[#allocation2 + $0x10] sm:$0xff] %vm2254, %v2868
      %2872 = vrot.lane.b32.xlu0 %v2655, 47
      %v2873 = vpop.permute.xlu0 %2872
      %2875 = vrot.lane.b32.xlu0 %v2655, 49
      %v2876 = vpop.permute.xlu0 %2875
      %2878 = vrot.lane.b32.xlu0 %v2655, 51
      %v2879 = vpop.permute.xlu0 %2878
      %v2881 = vsel %vm282, %v2873, %v2876
      %v2882 = vsel %vm2035, %v2881, %v2879
      %2884 = vrot.lane.b32.xlu0 %v2882, 15
      %v2885 = vpop.permute.xlu0 %2884
      %2887 = vst.msk [vmem:[#allocation2 + $0x10] sm:$0xff] %vm2271, %v2885
      %2888 = vrot.lane.b32.xlu0 %v2655, 31
      %v2889 = vpop.permute.xlu0 %2888
      %2891 = vrot.lane.b32.xlu0 %v2655, 33
      %v2892 = vpop.permute.xlu0 %2891
      %2894 = vrot.lane.b32.xlu0 %v2655, 35
      %v2895 = vpop.permute.xlu0 %2894
      %v2897 = vsel %vm282, %v2889, %v2892
      %v2898 = vsel %vm2035, %v2897, %v2895
      %2900 = vrot.lane.b32.xlu0 %v2898, 33
      %v2901 = vpop.permute.xlu0 %2900
      %2903 = vst.msk [vmem:[#allocation2 + $0x10] sm:$0xff] %vm2288, %v2901
      %2904 = vrot.lane.b32.xlu0 %v2655, 15
      %v2905 = vpop.permute.xlu0 %2904
      %2907 = vrot.lane.b32.xlu0 %v2655, 17
      %v2908 = vpop.permute.xlu0 %2907
      %2910 = vrot.lane.b32.xlu0 %v2655, 19
      %v2911 = vpop.permute.xlu0 %2910
      %v2913 = vsel %vm282, %v2905, %v2908
      %v2914 = vsel %vm2035, %v2913, %v2911
      %2916 = vrot.lane.b32.xlu0 %v2914, 51
      %v2917 = vpop.permute.xlu0 %2916
      %2919 = vst.msk [vmem:[#allocation2 + $0x10] sm:$0xff] %vm2305, %v2917
      %2920 = vrot.lane.b32.xlu0 %v2898, 69
      %v2921 = vpop.permute.xlu0 %2920
      %2923 = vst.msk [vmem:[#allocation2 + $0x10] sm:$0xff] %vm2310, %v2921
      %v2924 = vld [vmem:[#allocation2] sm:$0xff]
      %v2925 = vld [vmem:[#allocation2 + $0x8] sm:$0xff]
      %v2926 = vld [vmem:[#allocation2 + $0x10] sm:$0xff]
      %2930 = vrot.lane.b32.xlu0 %v2924, 127
      %v2931 = vpop.permute.xlu0 %2930
      %2932 = vrot.lane.b32.xlu0 %v2925, 127
      %v2933 = vpop.permute.xlu0 %2932
      %2934 = vrot.lane.b32.xlu0 %v2926, 127
      %v2935 = vpop.permute.xlu0 %2934
      %v2936 = vsel %vm855, %v2931, %v2933
      %v2937 = vsel %vm855, %v2933, %v2935
      %2941 = vrot.lane.b32.xlu0 %v2924, 126
      %v2942 = vpop.permute.xlu0 %2941
      %2943 = vrot.lane.b32.xlu0 %v2925, 126
      %v2944 = vpop.permute.xlu0 %2943
      %2945 = vrot.lane.b32.xlu0 %v2926, 126
      %v2946 = vpop.permute.xlu0 %2945
      %v2947 = vsel %vm875, %v2942, %v2944
      %v2948 = vsel %vm875, %v2944, %v2946
      %2952 = vrot.lane.b32.xlu0 %v2924, 110
      %v2953 = vpop.permute.xlu0 %2952
      %2954 = vrot.lane.b32.xlu0 %v2925, 110
      %v2955 = vpop.permute.xlu0 %2954
      %2956 = vrot.lane.b32.xlu0 %v2926, 110
      %v2957 = vpop.permute.xlu0 %2956
      %v2958 = vsel %vm1374, %v2953, %v2955
      %v2959 = vsel %vm1374, %v2955, %v2957
      %2963 = vrot.lane.b32.xlu0 %v2924, 109
      %v2964 = vpop.permute.xlu0 %2963
      %2965 = vrot.lane.b32.xlu0 %v2925, 109
      %v2966 = vpop.permute.xlu0 %2965
      %2967 = vrot.lane.b32.xlu0 %v2926, 109
      %v2968 = vpop.permute.xlu0 %2967
      %v2969 = vsel %vm1394, %v2964, %v2966
      %v2970 = vsel %vm1394, %v2966, %v2968
      %2974 = vrot.lane.b32.xlu0 %v2924, 108
      %v2975 = vpop.permute.xlu0 %2974
      %2976 = vrot.lane.b32.xlu0 %v2925, 108
      %v2977 = vpop.permute.xlu0 %2976
      %2978 = vrot.lane.b32.xlu0 %v2926, 108
      %v2979 = vpop.permute.xlu0 %2978
      %v2980 = vsel %vm1218, %v2975, %v2977
      %v2981 = vsel %vm1218, %v2977, %v2979
      %2985 = vrot.lane.b32.xlu0 %v2924, 92
      %v2986 = vpop.permute.xlu0 %2985
      %2987 = vrot.lane.b32.xlu0 %v2925, 92
      %v2988 = vpop.permute.xlu0 %2987
      %2989 = vrot.lane.b32.xlu0 %v2926, 92
      %v2990 = vpop.permute.xlu0 %2989
      %v2991 = vsel %vm2379, %v2986, %v2988
      %v2992 = vsel %vm2379, %v2988, %v2990
      %2996 = vrot.lane.b32.xlu0 %v2924, 91
      %v2997 = vpop.permute.xlu0 %2996
      %2998 = vrot.lane.b32.xlu0 %v2925, 91
      %v2999 = vpop.permute.xlu0 %2998
      %3000 = vrot.lane.b32.xlu0 %v2926, 91
      %v3001 = vpop.permute.xlu0 %3000
      %v3002 = vsel %vm2391, %v2997, %v2999
      %v3003 = vsel %vm2391, %v2999, %v3001
      %3007 = vrot.lane.b32.xlu0 %v2924, 90
      %v3008 = vpop.permute.xlu0 %3007
      %3009 = vrot.lane.b32.xlu0 %v2925, 90
      %v3010 = vpop.permute.xlu0 %3009
      %3011 = vrot.lane.b32.xlu0 %v2926, 90
      %v3012 = vpop.permute.xlu0 %3011
      %v3013 = vsel %vm2403, %v3008, %v3010
      %v3014 = vsel %vm2403, %v3010, %v3012
      %v3019 = vsel %vm2409, %v255, 0
      %3021 = vmatprep.subr.mxu0 %v2925
      %3022 = vmatpush1.msra.mxu0 %v2924
      %3023 = vmatprep.subr.mxu0 %v2937
      %3024 = vmatpush1.msra.mxu0 %v2936
      %3025 = vmatprep.subr.mxu0 %v2948
      %3026 = vmatpush1.msra.mxu0 %v2947
      %3027 = vmatprep.subr.mxu0 %v2959
      %3028 = vmatpush1.msra.mxu0 %v2958
      %3029 = vmatprep.subr.mxu0 %v2970
      %3030 = vmatpush1.msra.mxu0 %v2969
      %3031 = vmatprep.subr.mxu0 %v2981
      %3032 = vmatpush1.msra.mxu0 %v2980
      %3033 = vmatprep.subr.mxu0 %v2992
      %3034 = vmatpush1.msra.mxu0 %v2991
      %3035 = vmatprep.subr.mxu0 %v3003
      %3036 = vmatpush1.msra.mxu0 %v3002
      %3037 = vmatprep.subr.mxu0 %v3014
      %3038 = vmatpush1.msra.mxu0 %v3013
      %3039 = vmatprep.subr.mxu0 0.0
      %3040 = vmatpush1.msra.mxu0 0.0
      %3041 = vmatprep.subr.mxu0 0.0
      %3042 = vmatpush1.msra.mxu0 0.0
      %3043 = vmatprep.subr.mxu0 0.0
      %3044 = vmatpush1.msra.mxu0 0.0
      %3045 = vmatprep.subr.mxu0 0.0
      %3046 = vmatpush1.msra.mxu0 0.0
      %3047 = vmatprep.subr.mxu0 0.0
      %3048 = vmatpush1.msra.mxu0 0.0
      %3049 = vmatprep.subr.mxu0 0.0
      %3050 = vmatpush1.msra.mxu0 0.0
      %3051 = vmatprep.subr.mxu0 0.0
      %3052 = vmatpush1.msra.mxu0 0.0
      %3053 = vmatprep.subr.mxu0 0.0
      %3054 = vmatpush1.msra.mxu0 0.0
      %3055 = vmatprep.subr.mxu0 0.0
      %3056 = vmatpush1.msra.mxu0 0.0
      %3057 = vmatprep.subr.mxu0 0.0
      %3058 = vmatpush1.msra.mxu0 0.0
      %3059 = vmatprep.subr.mxu0 0.0
      %3060 = vmatpush1.msra.mxu0 0.0
      %3061 = vmatprep.subr.mxu0 0.0
      %3062 = vmatpush1.msra.mxu0 0.0
      %3063 = vmatprep.subr.mxu0 0.0
      %3064 = vmatpush1.msra.mxu0 0.0
      %3065 = vmatprep.subr.mxu0 0.0
      %3066 = vmatpush1.msra.mxu0 0.0
      %3067 = vmatprep.subr.mxu0 0.0
      %3068 = vmatpush1.msra.mxu0 0.0
      %3069 = vmatprep.subr.mxu0 0.0
      %3070 = vmatpush1.msra.mxu0 0.0
      %3071 = vmatprep.subr.mxu0 0.0
      %3072 = vmatpush1.msra.mxu0 0.0
      %3073 = vmatprep.subr.mxu0 0.0
      %3074 = vmatpush1.msra.mxu0 0.0
      %3075 = vmatprep.subr.mxu0 0.0
      %3076 = vmatpush1.msra.mxu0 0.0
      %3077 = vmatprep.subr.mxu0 0.0
      %3078 = vmatpush1.msra.mxu0 0.0
      %3079 = vmatprep.subr.mxu0 0.0
      %3080 = vmatpush1.msra.mxu0 0.0
      %3081 = vmatprep.subr.mxu0 0.0
      %3082 = vmatpush1.msra.mxu0 0.0
      %3083 = vmatprep.subr.mxu0 0.0
      %3084 = vmatpush1.msra.mxu0 0.0
      %3085 = vmatprep.mubr.f32.mxu0 0.0
      %3086 = vmatmul.mubr.f32.gmra.mrb[0].mxu0 %v3019
      %v3087 = vpop.f32.mrb[0].mxu0
      %v3088 = vadd.f32 0.0, %v3087
      %v3089 = vpop.f32.mrb[0].mxu0
      %v3090 = vadd.f32 0.0, %v3089
      %3091 = vdwg.mxu0
      %3092 = vmatprep.subr.mxu0 0.0
      %3093 = vmatpush1.msra.mxu0 %v2926
      %3094 = vmatprep.subr.mxu0 0.0
      %3095 = vmatpush1.msra.mxu0 %v2935
      %3096 = vmatprep.subr.mxu0 0.0
      %3097 = vmatpush1.msra.mxu0 %v2946
      %3098 = vmatprep.subr.mxu0 0.0
      %3099 = vmatpush1.msra.mxu0 %v2957
      %3100 = vmatprep.subr.mxu0 0.0
      %3101 = vmatpush1.msra.mxu0 %v2968
      %3102 = vmatprep.subr.mxu0 0.0
      %3103 = vmatpush1.msra.mxu0 %v2979
      %3104 = vmatprep.subr.mxu0 0.0
      %3105 = vmatpush1.msra.mxu0 %v2990
      %3106 = vmatprep.subr.mxu0 0.0
      %3107 = vmatpush1.msra.mxu0 %v3001
      %3108 = vmatprep.subr.mxu0 0.0
      %3109 = vmatpush1.msra.mxu0 %v3012
      %3110 = vmatprep.subr.mxu0 0.0
      %3111 = vmatpush1.msra.mxu0 0.0
      %3112 = vmatprep.subr.mxu0 0.0
      %3113 = vmatpush1.msra.mxu0 0.0
      %3114 = vmatprep.subr.mxu0 0.0
      %3115 = vmatpush1.msra.mxu0 0.0
      %3116 = vmatprep.subr.mxu0 0.0
      %3117 = vmatpush1.msra.mxu0 0.0
      %3118 = vmatprep.subr.mxu0 0.0
      %3119 = vmatpush1.msra.mxu0 0.0
      %3120 = vmatprep.subr.mxu0 0.0
      %3121 = vmatpush1.msra.mxu0 0.0
      %3122 = vmatprep.subr.mxu0 0.0
      %3123 = vmatpush1.msra.mxu0 0.0
      %3124 = vmatprep.subr.mxu0 0.0
      %3125 = vmatpush1.msra.mxu0 0.0
      %3126 = vmatprep.subr.mxu0 0.0
      %3127 = vmatpush1.msra.mxu0 0.0
      %3128 = vmatprep.subr.mxu0 0.0
      %3129 = vmatpush1.msra.mxu0 0.0
      %3130 = vmatprep.subr.mxu0 0.0
      %3131 = vmatpush1.msra.mxu0 0.0
      %3132 = vmatprep.subr.mxu0 0.0
      %3133 = vmatpush1.msra.mxu0 0.0
      %3134 = vmatprep.subr.mxu0 0.0
      %3135 = vmatpush1.msra.mxu0 0.0
      %3136 = vmatprep.subr.mxu0 0.0
      %3137 = vmatpush1.msra.mxu0 0.0
      %3138 = vmatprep.subr.mxu0 0.0
      %3139 = vmatpush1.msra.mxu0 0.0
      %3140 = vmatprep.subr.mxu0 0.0
      %3141 = vmatpush1.msra.mxu0 0.0
      %3142 = vmatprep.subr.mxu0 0.0
      %3143 = vmatpush1.msra.mxu0 0.0
      %3144 = vmatprep.subr.mxu0 0.0
      %3145 = vmatpush1.msra.mxu0 0.0
      %3146 = vmatprep.subr.mxu0 0.0
      %3147 = vmatpush1.msra.mxu0 0.0
      %3148 = vmatprep.subr.mxu0 0.0
      %3149 = vmatpush1.msra.mxu0 0.0
      %3150 = vmatprep.subr.mxu0 0.0
      %3151 = vmatpush1.msra.mxu0 0.0
      %3152 = vmatprep.subr.mxu0 0.0
      %3153 = vmatpush1.msra.mxu0 0.0
      %3154 = vmatprep.subr.mxu0 0.0
      %3155 = vmatpush1.msra.mxu0 0.0
      %3156 = vmatprep.mubr.f32.mxu0 0.0
      %3157 = vmatmul.mubr.f32.gmra.mrb[0].mxu0 %v3019
      %v3158 = vpop.f32.mrb[0].mxu0
      %v3159 = vadd.f32 0.0, %v3158
      %v3160 = vpop.f32.mrb[0].mxu0
      %3161 = vdwg.mxu0
      %3163 = vrot.lane.b32.xlu0 %v3088, 109
      %v3164 = vpop.permute.xlu0 %3163
      %3166 = vrot.lane.b32.xlu0 %v3088, 107
      %v3167 = vpop.permute.xlu0 %3166
      %3169 = vrot.lane.b32.xlu0 %v3088, 105
      %v3170 = vpop.permute.xlu0 %3169
      %3172 = vrot.lane.b32.xlu0 %v3088, 103
      %v3173 = vpop.permute.xlu0 %3172
      %3175 = vrot.lane.b32.xlu0 %v3088, 101
      %v3176 = vpop.permute.xlu0 %3175
      %3178 = vrot.lane.b32.xlu0 %v3088, 99
      %v3179 = vpop.permute.xlu0 %3178
      %3182 = vrot.lane.b32.xlu0 %v3088, 97
      %v3183 = vpop.permute.xlu0 %3182
      %3184 = vrot.lane.b32.xlu0 %v3090, 97
      %v3185 = vpop.permute.xlu0 %3184
      %v3186 = vsel %vm2578, %v3183, %v3185
      %3188 = vrot.lane.b32.xlu0 %v3090, 95
      %v3189 = vpop.permute.xlu0 %3188
      %3191 = vrot.lane.b32.xlu0 %v3090, 93
      %v3192 = vpop.permute.xlu0 %3191
      %3194 = vrot.lane.b32.xlu0 %v3090, 91
      %v3195 = vpop.permute.xlu0 %3194
      %3197 = vrot.lane.b32.xlu0 %v3090, 89
      %v3198 = vpop.permute.xlu0 %3197
      %3200 = vrot.lane.b32.xlu0 %v3090, 87
      %v3201 = vpop.permute.xlu0 %3200
      %3203 = vrot.lane.b32.xlu0 %v3090, 85
      %v3204 = vpop.permute.xlu0 %3203
      %3207 = vrot.lane.b32.xlu0 %v3090, 83
      %v3208 = vpop.permute.xlu0 %3207
      %3209 = vrot.lane.b32.xlu0 %v3159, 83
      %v3210 = vpop.permute.xlu0 %3209
      %v3211 = vsel %vm1111, %v3208, %v3210
      %3213 = vrot.lane.b32.xlu0 %v3159, 81
      %v3214 = vpop.permute.xlu0 %3213
      %3216 = vrot.lane.b32.xlu0 %v3159, 79
      %v3217 = vpop.permute.xlu0 %3216
      %v3219 = vsel %vm1971, %v3164, %v3167
      %v3220 = vsel %vm1973, %v3219, %v3170
      %v3221 = vsel %vm1975, %v3220, %v3173
      %v3222 = vsel %vm1977, %v3221, %v3176
      %v3223 = vsel %vm1979, %v3222, %v3179
      %v3224 = vsel %vm1981, %v3223, %v3186
      %v3225 = vsel %vm1983, %v3224, %v3189
      %v3226 = vsel %vm1971, %v3192, %v3195
      %v3227 = vsel %vm1973, %v3226, %v3198
      %v3228 = vsel %vm1975, %v3227, %v3201
      %v3229 = vsel %vm1977, %v3228, %v3204
      %v3230 = vsel %vm1979, %v3229, %v3211
      %v3231 = vsel %vm1981, %v3230, %v3214
      %v3232 = vsel %vm1983, %v3231, %v3217
      %v3233 = vadd.f32 %v3225, %v3232
      %3234 = vadd.xlane.f32.xlu0 %v3233
      %v3235 = vpop.xlane.xlu0 %3234
      %v3236 = vmul.f32 %v3235, %v1995
      %v3237 = vsub.f32 %v3225, %v3236
      %v3238 = vsub.f32 %v3232, %v3236
      %v3239 = vmul.f32 %v3237, %v3237
      %v3240 = vmul.f32 %v3238, %v3238
      %v3241 = vadd.f32 %v3239, %v3240
      %3242 = vadd.xlane.f32.xlu0 %v3241
      %v3243 = vpop.xlane.xlu0 %3242
      %v3244 = vmul.f32 %v3243, %v1995
      %v3245 = vadd.f32 %v3244, 1e-05
      %v3246 = vrsqrt.pop %v3245
      %v3247 = vmul.f32 %v3237, %v3246
      %v3248 = vmul.f32 %v3238, %v3246
      %3249 = vset.pattern.permute.xlu0 4
      %3250 = vperm.xlu0 %3249, %v258
      %v3251 = vpop.permute.xlu0 %3250
      %v3253 = vmul.f32 %v3247, %v3251
      %v3254 = vmul.f32 %v3248, %v3251
      %3255 = vset.pattern.permute.xlu0 5
      %3256 = vperm.xlu0 %3255, %v258
      %v3257 = vpop.permute.xlu0 %3256
      %v3259 = vadd.f32 %v3253, %v3257
      %v3260 = vadd.f32 %v3254, %v3257
      %v3261 = vadd.f32 %v3259, %v2022
      %v3262 = vadd.f32 %v3260, %v2023
      %3264 = vrot.lane.b32.xlu0 %v3261, 77
      %v3265 = vpop.permute.xlu0 %3264
      %3267 = vrot.lane.b32.xlu0 %v3261, 79
      %v3268 = vpop.permute.xlu0 %3267
      %3270 = vrot.lane.b32.xlu0 %v3261, 81
      %v3271 = vpop.permute.xlu0 %3270
      %3273 = vrot.lane.b32.xlu0 %v3261, 83
      %v3274 = vpop.permute.xlu0 %3273
      %3276 = vrot.lane.b32.xlu0 %v3261, 85
      %v3277 = vpop.permute.xlu0 %3276
      %3279 = vrot.lane.b32.xlu0 %v3261, 87
      %v3280 = vpop.permute.xlu0 %3279
      %3282 = vrot.lane.b32.xlu0 %v3261, 89
      %v3283 = vpop.permute.xlu0 %3282
      %v3285 = vsel %vm282, %v3265, %v3268
      %v3286 = vsel %vm284, %v3285, %v3271
      %v3287 = vsel %vm286, %v3286, %v3274
      %v3288 = vsel %vm288, %v3287, %v3277
      %v3289 = vsel %vm290, %v3288, %v3280
      %v3290 = vsel %vm292, %v3289, %v3283
      %3292 = vrot.lane.b32.xlu0 %v3290, 69
      %v3293 = vpop.permute.xlu0 %3292
      %vm3295 = vcmask 745000
      %3296 = vst.msk [vmem:[#allocation2] sm:$0xff] %vm3295, %v3293
      %3297 = vrot.lane.b32.xlu0 %v3261, 93
      %v3298 = vpop.permute.xlu0 %3297
      %3300 = vrot.lane.b32.xlu0 %v3261, 95
      %v3301 = vpop.permute.xlu0 %3300
      %3303 = vrot.lane.b32.xlu0 %v3261, 97
      %v3304 = vpop.permute.xlu0 %3303
      %3306 = vrot.lane.b32.xlu0 %v3261, 99
      %v3307 = vpop.permute.xlu0 %3306
      %3309 = vrot.lane.b32.xlu0 %v3261, 101
      %v3310 = vpop.permute.xlu0 %3309
      %3312 = vrot.lane.b32.xlu0 %v3261, 103
      %v3313 = vpop.permute.xlu0 %3312
      %3315 = vrot.lane.b32.xlu0 %v3261, 105
      %v3316 = vpop.permute.xlu0 %3315
      %v3318 = vsel %vm282, %v3298, %v3301
      %v3319 = vsel %vm284, %v3318, %v3304
      %v3320 = vsel %vm286, %v3319, %v3307
      %v3321 = vsel %vm288, %v3320, %v3310
      %v3322 = vsel %vm290, %v3321, %v3313
      %v3323 = vsel %vm292, %v3322, %v3316
      %3325 = vrot.lane.b32.xlu0 %v3323, 91
      %v3326 = vpop.permute.xlu0 %3325
      %vm3328 = vcmask 925400
      %3329 = vst.msk [vmem:[#allocation2] sm:$0xff] %vm3328, %v3326
      %3330 = vrot.lane.b32.xlu0 %v3261, 109
      %v3331 = vpop.permute.xlu0 %3330
      %3333 = vrot.lane.b32.xlu0 %v3261, 111
      %v3334 = vpop.permute.xlu0 %3333
      %3336 = vrot.lane.b32.xlu0 %v3261, 113
      %v3337 = vpop.permute.xlu0 %3336
      %3339 = vrot.lane.b32.xlu0 %v3261, 115
      %v3340 = vpop.permute.xlu0 %3339
      %3342 = vrot.lane.b32.xlu0 %v3261, 117
      %v3343 = vpop.permute.xlu0 %3342
      %3345 = vrot.lane.b32.xlu0 %v3261, 119
      %v3346 = vpop.permute.xlu0 %3345
      %3348 = vrot.lane.b32.xlu0 %v3261, 121
      %v3349 = vpop.permute.xlu0 %3348
      %v3351 = vsel %vm282, %v3331, %v3334
      %v3352 = vsel %vm284, %v3351, %v3337
      %v3353 = vsel %vm286, %v3352, %v3340
      %v3354 = vsel %vm288, %v3353, %v3343
      %v3355 = vsel %vm290, %v3354, %v3346
      %v3356 = vsel %vm292, %v3355, %v3349
      %3358 = vrot.lane.b32.xlu0 %v3356, 113
      %v3359 = vpop.permute.xlu0 %3358
      %vm3361 = vcmask 1048456
      %3362 = vst.msk [vmem:[#allocation2] sm:$0xff] %vm3361, %v3359
      %vm3363 = vcmask 56320
      %3364 = vst.msk [vmem:[#allocation2 + $0x8] sm:$0xff] %vm3363, %v3359
      %3365 = vrot.lane.b32.xlu0 %v3261, 125
      %v3366 = vpop.permute.xlu0 %3365
      %3368 = vrot.lane.b32.xlu0 %v3261, 127
      %v3369 = vpop.permute.xlu0 %3368
      %3371 = vrot.lane.b32.xlu0 %v3261, 1
      %v3372 = vpop.permute.xlu0 %3371
      %3374 = vrot.lane.b32.xlu0 %v3261, 3
      %v3375 = vpop.permute.xlu0 %3374
      %3377 = vrot.lane.b32.xlu0 %v3261, 5
      %v3378 = vpop.permute.xlu0 %3377
      %3380 = vrot.lane.b32.xlu0 %v3261, 7
      %v3381 = vpop.permute.xlu0 %3380
      %3383 = vrot.lane.b32.xlu0 %v3261, 9
      %v3384 = vpop.permute.xlu0 %3383
      %v3386 = vsel %vm282, %v3366, %v3369
      %v3387 = vsel %vm284, %v3386, %v3372
      %v3388 = vsel %vm286, %v3387, %v3375
      %v3389 = vsel %vm288, %v3388, %v3378
      %v3390 = vsel %vm290, %v3389, %v3381
      %v3391 = vsel %vm292, %v3390, %v3384
      %3393 = vrot.lane.b32.xlu0 %v3391, 7
      %v3394 = vpop.permute.xlu0 %3393
      %vm3396 = vcmask 236600
      %3397 = vst.msk [vmem:[#allocation2 + $0x8] sm:$0xff] %vm3396, %v3394
      %3398 = vrot.lane.b32.xlu0 %v3356, 29
      %v3399 = vpop.permute.xlu0 %3398
      %vm3401 = vcmask 417000
      %3402 = vst.msk [vmem:[#allocation2 + $0x8] sm:$0xff] %vm3401, %v3399
      %3403 = vrot.lane.b32.xlu0 %v3323, 51
      %v3404 = vpop.permute.xlu0 %3403
      %vm3406 = vcmask 597400
      %3407 = vst.msk [vmem:[#allocation2 + $0x8] sm:$0xff] %vm3406, %v3404
      %3408 = vrot.lane.b32.xlu0 %v3290, 73
      %v3409 = vpop.permute.xlu0 %3408
      %vm3411 = vcmask 777800
      %3412 = vst.msk [vmem:[#allocation2 + $0x8] sm:$0xff] %vm3411, %v3409
      %3413 = vrot.lane.b32.xlu0 %v3261, 61
      %v3414 = vpop.permute.xlu0 %3413
      %3416 = vrot.lane.b32.xlu0 %v3261, 63
      %v3417 = vpop.permute.xlu0 %3416
      %3419 = vrot.lane.b32.xlu0 %v3261, 65
      %v3420 = vpop.permute.xlu0 %3419
      %3422 = vrot.lane.b32.xlu0 %v3261, 67
      %v3423 = vpop.permute.xlu0 %3422
      %3425 = vrot.lane.b32.xlu0 %v3261, 69
      %v3426 = vpop.permute.xlu0 %3425
      %3428 = vrot.lane.b32.xlu0 %v3261, 71
      %v3429 = vpop.permute.xlu0 %3428
      %3431 = vrot.lane.b32.xlu0 %v3261, 73
      %v3432 = vpop.permute.xlu0 %3431
      %v3434 = vsel %vm282, %v3414, %v3417
      %v3435 = vsel %vm284, %v3434, %v3420
      %v3436 = vsel %vm286, %v3435, %v3423
      %v3437 = vsel %vm288, %v3436, %v3426
      %v3438 = vsel %vm290, %v3437, %v3429
      %v3439 = vsel %vm292, %v3438, %v3432
      %3441 = vrot.lane.b32.xlu0 %v3439, 95
      %v3442 = vpop.permute.xlu0 %3441
      %vm3444 = vcmask 958200
      %3445 = vst.msk [vmem:[#allocation2 + $0x8] sm:$0xff] %vm3444, %v3442
      %3446 = vrot.lane.b32.xlu0 %v3261, 45
      %v3447 = vpop.permute.xlu0 %3446
      %3449 = vrot.lane.b32.xlu0 %v3261, 47
      %v3450 = vpop.permute.xlu0 %3449
      %3452 = vrot.lane.b32.xlu0 %v3261, 49
      %v3453 = vpop.permute.xlu0 %3452
      %3455 = vrot.lane.b32.xlu0 %v3261, 51
      %v3456 = vpop.permute.xlu0 %3455
      %3458 = vrot.lane.b32.xlu0 %v3261, 53
      %v3459 = vpop.permute.xlu0 %3458
      %3461 = vrot.lane.b32.xlu0 %v3261, 55
      %v3462 = vpop.permute.xlu0 %3461
      %3464 = vrot.lane.b32.xlu0 %v3261, 57
      %v3465 = vpop.permute.xlu0 %3464
      %v3467 = vsel %vm282, %v3447, %v3450
      %v3468 = vsel %vm284, %v3467, %v3453
      %v3469 = vsel %vm286, %v3468, %v3456
      %v3470 = vsel %vm288, %v3469, %v3459
      %v3471 = vsel %vm290, %v3470, %v3462
      %v3472 = vsel %vm292, %v3471, %v3465
      %3474 = vrot.lane.b32.xlu0 %v3472, 117
      %v3475 = vpop.permute.xlu0 %3474
      %vm3477 = vcmask 1048488
      %3478 = vst.msk [vmem:[#allocation2 + $0x8] sm:$0xff] %vm3477, %v3475
      %3479 = vst.msk [vmem:[#allocation2 + $0x10] sm:$0xff] %vm1943, %v3475
      %3480 = vrot.lane.b32.xlu0 %v3261, 29
      %v3481 = vpop.permute.xlu0 %3480
      %3483 = vrot.lane.b32.xlu0 %v3261, 31
      %v3484 = vpop.permute.xlu0 %3483
      %3486 = vrot.lane.b32.xlu0 %v3261, 33
      %v3487 = vpop.permute.xlu0 %3486
      %3489 = vrot.lane.b32.xlu0 %v3261, 35
      %v3490 = vpop.permute.xlu0 %3489
      %3492 = vrot.lane.b32.xlu0 %v3261, 37
      %v3493 = vpop.permute.xlu0 %3492
      %3495 = vrot.lane.b32.xlu0 %v3261, 39
      %v3496 = vpop.permute.xlu0 %3495
      %3498 = vrot.lane.b32.xlu0 %v3261, 41
      %v3499 = vpop.permute.xlu0 %3498
      %v3501 = vsel %vm282, %v3481, %v3484
      %v3502 = vsel %vm284, %v3501, %v3487
      %v3503 = vsel %vm286, %v3502, %v3490
      %v3504 = vsel %vm288, %v3503, %v3493
      %v3505 = vsel %vm290, %v3504, %v3496
      %v3506 = vsel %vm292, %v3505, %v3499
      %3508 = vrot.lane.b32.xlu0 %v3506, 11
      %v3509 = vpop.permute.xlu0 %3508
      %vm3511 = vcmask 269400
      %3512 = vst.msk [vmem:[#allocation2 + $0x10] sm:$0xff] %vm3511, %v3509
      %3513 = vrot.lane.b32.xlu0 %v3261, 13
      %v3514 = vpop.permute.xlu0 %3513
      %3516 = vrot.lane.b32.xlu0 %v3261, 15
      %v3517 = vpop.permute.xlu0 %3516
      %3519 = vrot.lane.b32.xlu0 %v3261, 17
      %v3520 = vpop.permute.xlu0 %3519
      %3522 = vrot.lane.b32.xlu0 %v3261, 19
      %v3523 = vpop.permute.xlu0 %3522
      %3525 = vrot.lane.b32.xlu0 %v3261, 21
      %v3526 = vpop.permute.xlu0 %3525
      %3528 = vrot.lane.b32.xlu0 %v3261, 23
      %v3529 = vpop.permute.xlu0 %3528
      %3531 = vrot.lane.b32.xlu0 %v3261, 25
      %v3532 = vpop.permute.xlu0 %3531
      %v3534 = vsel %vm282, %v3514, %v3517
      %v3535 = vsel %vm284, %v3534, %v3520
      %v3536 = vsel %vm286, %v3535, %v3523
      %v3537 = vsel %vm288, %v3536, %v3526
      %v3538 = vsel %vm290, %v3537, %v3529
      %v3539 = vsel %vm292, %v3538, %v3532
      %3541 = vrot.lane.b32.xlu0 %v3539, 33
      %v3542 = vpop.permute.xlu0 %3541
      %vm3544 = vcmask 449800
      %3545 = vst.msk [vmem:[#allocation2 + $0x10] sm:$0xff] %vm3544, %v3542
      %3547 = vrot.lane.b32.xlu0 %v3262, 125
      %v3548 = vpop.permute.xlu0 %3547
      %3550 = vrot.lane.b32.xlu0 %v3262, 127
      %v3551 = vpop.permute.xlu0 %3550
      %3553 = vrot.lane.b32.xlu0 %v3262, 1
      %v3554 = vpop.permute.xlu0 %3553
      %3556 = vrot.lane.b32.xlu0 %v3262, 3
      %v3557 = vpop.permute.xlu0 %3556
      %3559 = vrot.lane.b32.xlu0 %v3262, 5
      %v3560 = vpop.permute.xlu0 %3559
      %3562 = vrot.lane.b32.xlu0 %v3262, 7
      %v3563 = vpop.permute.xlu0 %3562
      %3565 = vrot.lane.b32.xlu0 %v3262, 9
      %v3566 = vpop.permute.xlu0 %3565
      %v3568 = vsel %vm282, %v3548, %v3551
      %v3569 = vsel %vm284, %v3568, %v3554
      %v3570 = vsel %vm286, %v3569, %v3557
      %v3571 = vsel %vm288, %v3570, %v3560
      %v3572 = vsel %vm290, %v3571, %v3563
      %v3573 = vsel %vm292, %v3572, %v3566
      %3575 = vrot.lane.b32.xlu0 %v3573, 55
      %v3576 = vpop.permute.xlu0 %3575
      %vm3578 = vcmask 630200
      %3579 = vst.msk [vmem:[#allocation2 + $0x10] sm:$0xff] %vm3578, %v3576
      %3580 = vrot.lane.b32.xlu0 %v3262, 109
      %v3581 = vpop.permute.xlu0 %3580
      %3583 = vrot.lane.b32.xlu0 %v3262, 111
      %v3584 = vpop.permute.xlu0 %3583
      %3586 = vrot.lane.b32.xlu0 %v3262, 113
      %v3587 = vpop.permute.xlu0 %3586
      %3589 = vrot.lane.b32.xlu0 %v3262, 115
      %v3590 = vpop.permute.xlu0 %3589
      %3592 = vrot.lane.b32.xlu0 %v3262, 117
      %v3593 = vpop.permute.xlu0 %3592
      %3595 = vrot.lane.b32.xlu0 %v3262, 119
      %v3596 = vpop.permute.xlu0 %3595
      %3598 = vrot.lane.b32.xlu0 %v3262, 121
      %v3599 = vpop.permute.xlu0 %3598
      %v3601 = vsel %vm282, %v3581, %v3584
      %v3602 = vsel %vm284, %v3601, %v3587
      %v3603 = vsel %vm286, %v3602, %v3590
      %v3604 = vsel %vm288, %v3603, %v3593
      %v3605 = vsel %vm290, %v3604, %v3596
      %v3606 = vsel %vm292, %v3605, %v3599
      %3608 = vrot.lane.b32.xlu0 %v3606, 77
      %v3609 = vpop.permute.xlu0 %3608
      %vm3611 = vcmask 810600
      %3612 = vst.msk [vmem:[#allocation2 + $0x10] sm:$0xff] %vm3611, %v3609
      %3613 = vrot.lane.b32.xlu0 %v3262, 93
      %v3614 = vpop.permute.xlu0 %3613
      %3616 = vrot.lane.b32.xlu0 %v3262, 95
      %v3617 = vpop.permute.xlu0 %3616
      %3619 = vrot.lane.b32.xlu0 %v3262, 97
      %v3620 = vpop.permute.xlu0 %3619
      %3622 = vrot.lane.b32.xlu0 %v3262, 99
      %v3623 = vpop.permute.xlu0 %3622
      %3625 = vrot.lane.b32.xlu0 %v3262, 101
      %v3626 = vpop.permute.xlu0 %3625
      %3628 = vrot.lane.b32.xlu0 %v3262, 103
      %v3629 = vpop.permute.xlu0 %3628
      %3631 = vrot.lane.b32.xlu0 %v3262, 105
      %v3632 = vpop.permute.xlu0 %3631
      %v3634 = vsel %vm282, %v3614, %v3617
      %v3635 = vsel %vm284, %v3634, %v3620
      %v3636 = vsel %vm286, %v3635, %v3623
      %v3637 = vsel %vm288, %v3636, %v3626
      %v3638 = vsel %vm290, %v3637, %v3629
      %v3639 = vsel %vm292, %v3638, %v3632
      %3641 = vrot.lane.b32.xlu0 %v3639, 99
      %v3642 = vpop.permute.xlu0 %3641
      %vm3644 = vcmask 991000
      %3645 = vst.msk [vmem:[#allocation2 + $0x10] sm:$0xff] %vm3644, %v3642
      %3646 = vrot.lane.b32.xlu0 %v3262, 77
      %v3647 = vpop.permute.xlu0 %3646
      %3649 = vrot.lane.b32.xlu0 %v3262, 79
      %v3650 = vpop.permute.xlu0 %3649
      %3652 = vrot.lane.b32.xlu0 %v3262, 81
      %v3653 = vpop.permute.xlu0 %3652
      %3655 = vrot.lane.b32.xlu0 %v3262, 83
      %v3656 = vpop.permute.xlu0 %3655
      %3658 = vrot.lane.b32.xlu0 %v3262, 85
      %v3659 = vpop.permute.xlu0 %3658
      %3661 = vrot.lane.b32.xlu0 %v3262, 87
      %v3662 = vpop.permute.xlu0 %3661
      %3664 = vrot.lane.b32.xlu0 %v3262, 89
      %v3665 = vpop.permute.xlu0 %3664
      %v3667 = vsel %vm282, %v3647, %v3650
      %v3668 = vsel %vm284, %v3667, %v3653
      %v3669 = vsel %vm286, %v3668, %v3656
      %v3670 = vsel %vm288, %v3669, %v3659
      %v3671 = vsel %vm290, %v3670, %v3662
      %v3672 = vsel %vm292, %v3671, %v3665
      %3674 = vrot.lane.b32.xlu0 %v3672, 121
      %v3675 = vpop.permute.xlu0 %3674
      %vm3677 = vcmask 1048520
      %3678 = vst.msk [vmem:[#allocation2 + $0x10] sm:$0xff] %vm3677, %v3675
      %3679 = vst.msk [vmem:[#allocation2 + $0x18] sm:$0xff] %vm2254, %v3675
      %3680 = vrot.lane.b32.xlu0 %v3262, 61
      %v3681 = vpop.permute.xlu0 %3680
      %3683 = vrot.lane.b32.xlu0 %v3262, 63
      %v3684 = vpop.permute.xlu0 %3683
      %3686 = vrot.lane.b32.xlu0 %v3262, 65
      %v3687 = vpop.permute.xlu0 %3686
      %3689 = vrot.lane.b32.xlu0 %v3262, 67
      %v3690 = vpop.permute.xlu0 %3689
      %3692 = vrot.lane.b32.xlu0 %v3262, 69
      %v3693 = vpop.permute.xlu0 %3692
      %3695 = vrot.lane.b32.xlu0 %v3262, 71
      %v3696 = vpop.permute.xlu0 %3695
      %3698 = vrot.lane.b32.xlu0 %v3262, 73
      %v3699 = vpop.permute.xlu0 %3698
      %v3701 = vsel %vm282, %v3681, %v3684
      %v3702 = vsel %vm284, %v3701, %v3687
      %v3703 = vsel %vm286, %v3702, %v3690
      %v3704 = vsel %vm288, %v3703, %v3693
      %v3705 = vsel %vm290, %v3704, %v3696
      %v3706 = vsel %vm292, %v3705, %v3699
      %3708 = vrot.lane.b32.xlu0 %v3706, 15
      %v3709 = vpop.permute.xlu0 %3708
      %vm3711 = vcmask 302200
      %3712 = vst.msk [vmem:[#allocation2 + $0x18] sm:$0xff] %vm3711, %v3709
      %3713 = vrot.lane.b32.xlu0 %v3262, 45
      %v3714 = vpop.permute.xlu0 %3713
      %3716 = vrot.lane.b32.xlu0 %v3262, 47
      %v3717 = vpop.permute.xlu0 %3716
      %3719 = vrot.lane.b32.xlu0 %v3262, 49
      %v3720 = vpop.permute.xlu0 %3719
      %3722 = vrot.lane.b32.xlu0 %v3262, 51
      %v3723 = vpop.permute.xlu0 %3722
      %3725 = vrot.lane.b32.xlu0 %v3262, 53
      %v3726 = vpop.permute.xlu0 %3725
      %3728 = vrot.lane.b32.xlu0 %v3262, 55
      %v3729 = vpop.permute.xlu0 %3728
      %3731 = vrot.lane.b32.xlu0 %v3262, 57
      %v3732 = vpop.permute.xlu0 %3731
      %v3734 = vsel %vm282, %v3714, %v3717
      %v3735 = vsel %vm284, %v3734, %v3720
      %v3736 = vsel %vm286, %v3735, %v3723
      %v3737 = vsel %vm288, %v3736, %v3726
      %v3738 = vsel %vm290, %v3737, %v3729
      %v3739 = vsel %vm292, %v3738, %v3732
      %3741 = vrot.lane.b32.xlu0 %v3739, 37
      %v3742 = vpop.permute.xlu0 %3741
      %vm3744 = vcmask 482600
      %3745 = vst.msk [vmem:[#allocation2 + $0x18] sm:$0xff] %vm3744, %v3742
      %3746 = vrot.lane.b32.xlu0 %v3262, 29
      %v3747 = vpop.permute.xlu0 %3746
      %3749 = vrot.lane.b32.xlu0 %v3262, 31
      %v3750 = vpop.permute.xlu0 %3749
      %3752 = vrot.lane.b32.xlu0 %v3262, 33
      %v3753 = vpop.permute.xlu0 %3752
      %3755 = vrot.lane.b32.xlu0 %v3262, 35
      %v3756 = vpop.permute.xlu0 %3755
      %3758 = vrot.lane.b32.xlu0 %v3262, 37
      %v3759 = vpop.permute.xlu0 %3758
      %3761 = vrot.lane.b32.xlu0 %v3262, 39
      %v3762 = vpop.permute.xlu0 %3761
      %3764 = vrot.lane.b32.xlu0 %v3262, 41
      %v3765 = vpop.permute.xlu0 %3764
      %v3767 = vsel %vm282, %v3747, %v3750
      %v3768 = vsel %vm284, %v3767, %v3753
      %v3769 = vsel %vm286, %v3768, %v3756
      %v3770 = vsel %vm288, %v3769, %v3759
      %v3771 = vsel %vm290, %v3770, %v3762
      %v3772 = vsel %vm292, %v3771, %v3765
      %3774 = vrot.lane.b32.xlu0 %v3772, 59
      %v3775 = vpop.permute.xlu0 %3774
      %vm3777 = vcmask 663000
      %3778 = vst.msk [vmem:[#allocation2 + $0x18] sm:$0xff] %vm3777, %v3775
      %3779 = vrot.lane.b32.xlu0 %v3262, 13
      %v3780 = vpop.permute.xlu0 %3779
      %3782 = vrot.lane.b32.xlu0 %v3262, 15
      %v3783 = vpop.permute.xlu0 %3782
      %3785 = vrot.lane.b32.xlu0 %v3262, 17
      %v3786 = vpop.permute.xlu0 %3785
      %3788 = vrot.lane.b32.xlu0 %v3262, 19
      %v3789 = vpop.permute.xlu0 %3788
      %3791 = vrot.lane.b32.xlu0 %v3262, 21
      %v3792 = vpop.permute.xlu0 %3791
      %3794 = vrot.lane.b32.xlu0 %v3262, 23
      %v3795 = vpop.permute.xlu0 %3794
      %3797 = vrot.lane.b32.xlu0 %v3262, 25
      %v3798 = vpop.permute.xlu0 %3797
      %v3800 = vsel %vm282, %v3780, %v3783
      %v3801 = vsel %vm284, %v3800, %v3786
      %v3802 = vsel %vm286, %v3801, %v3789
      %v3803 = vsel %vm288, %v3802, %v3792
      %v3804 = vsel %vm290, %v3803, %v3795
      %v3805 = vsel %vm292, %v3804, %v3798
      %3807 = vrot.lane.b32.xlu0 %v3805, 81
      %v3808 = vpop.permute.xlu0 %3807
      %vm3810 = vcmask 843400
      %3811 = vst.msk [vmem:[#allocation2 + $0x18] sm:$0xff] %vm3810, %v3808
      %3812 = vrot.lane.b32.xlu0 %v3772, 103
      %v3813 = vpop.permute.xlu0 %3812
      %vm3815 = vcmask 1023800
      %3816 = vst.msk [vmem:[#allocation2 + $0x18] sm:$0xff] %vm3815, %v3813
      %3817 = vrot.lane.b32.xlu0 %v3739, 125
      %v3818 = vpop.permute.xlu0 %3817
      %3820 = vst.msk [vmem:[#allocation2 + $0x18] sm:$0xff] %vm2252, %v3818
      %3821 = vst.msk [vmem:[#allocation2 + $0x20] sm:$0xff] %vm288, %v3818
      %3822 = vrot.lane.b32.xlu0 %v3706, 19
      %v3823 = vpop.permute.xlu0 %3822
      %vm3825 = vcmask 335000
      %3826 = vst.msk [vmem:[#allocation2 + $0x20] sm:$0xff] %vm3825, %v3823
      %v3827 = vld [vmem:[#allocation2] sm:$0xff]
      %v3828 = vld [vmem:[#allocation2 + $0x8] sm:$0xff]
      %v3829 = vld [vmem:[#allocation2 + $0x10] sm:$0xff]
      %v3830 = vld [vmem:[#allocation2 + $0x18] sm:$0xff]
      %v3831 = vld [vmem:[#allocation2 + $0x20] sm:$0xff]
      %3836 = vrot.lane.b32.xlu0 %v3827, 127
      %v3837 = vpop.permute.xlu0 %3836
      %3838 = vrot.lane.b32.xlu0 %v3828, 127
      %v3839 = vpop.permute.xlu0 %3838
      %3840 = vrot.lane.b32.xlu0 %v3829, 127
      %v3841 = vpop.permute.xlu0 %3840
      %3842 = vrot.lane.b32.xlu0 %v3830, 127
      %v3843 = vpop.permute.xlu0 %3842
      %v3844 = vsel %vm855, %v3837, %v3839
      %v3845 = vsel %vm855, %v3839, %v3841
      %v3846 = vsel %vm855, %v3841, %v3843
      %3851 = vrot.lane.b32.xlu0 %v3827, 126
      %v3852 = vpop.permute.xlu0 %3851
      %3853 = vrot.lane.b32.xlu0 %v3828, 126
      %v3854 = vpop.permute.xlu0 %3853
      %3855 = vrot.lane.b32.xlu0 %v3829, 126
      %v3856 = vpop.permute.xlu0 %3855
      %3857 = vrot.lane.b32.xlu0 %v3830, 126
      %v3858 = vpop.permute.xlu0 %3857
      %v3859 = vsel %vm875, %v3852, %v3854
      %v3860 = vsel %vm875, %v3854, %v3856
      %v3861 = vsel %vm875, %v3856, %v3858
      %3866 = vrot.lane.b32.xlu0 %v3827, 125
      %v3867 = vpop.permute.xlu0 %3866
      %3868 = vrot.lane.b32.xlu0 %v3828, 125
      %v3869 = vpop.permute.xlu0 %3868
      %3870 = vrot.lane.b32.xlu0 %v3829, 125
      %v3871 = vpop.permute.xlu0 %3870
      %3872 = vrot.lane.b32.xlu0 %v3830, 125
      %v3873 = vpop.permute.xlu0 %3872
      %v3874 = vsel %vm895, %v3867, %v3869
      %v3875 = vsel %vm895, %v3869, %v3871
      %v3876 = vsel %vm895, %v3871, %v3873
      %3881 = vrot.lane.b32.xlu0 %v3827, 124
      %v3882 = vpop.permute.xlu0 %3881
      %3883 = vrot.lane.b32.xlu0 %v3828, 124
      %v3884 = vpop.permute.xlu0 %3883
      %3885 = vrot.lane.b32.xlu0 %v3829, 124
      %v3886 = vpop.permute.xlu0 %3885
      %3887 = vrot.lane.b32.xlu0 %v3830, 124
      %v3888 = vpop.permute.xlu0 %3887
      %v3889 = vsel %vm915, %v3882, %v3884
      %v3890 = vsel %vm915, %v3884, %v3886
      %v3891 = vsel %vm915, %v3886, %v3888
      %3896 = vrot.lane.b32.xlu0 %v3827, 123
      %v3897 = vpop.permute.xlu0 %3896
      %3898 = vrot.lane.b32.xlu0 %v3828, 123
      %v3899 = vpop.permute.xlu0 %3898
      %3900 = vrot.lane.b32.xlu0 %v3829, 123
      %v3901 = vpop.permute.xlu0 %3900
      %3902 = vrot.lane.b32.xlu0 %v3830, 123
      %v3903 = vpop.permute.xlu0 %3902
      %v3904 = vsel %vm935, %v3897, %v3899
      %v3905 = vsel %vm935, %v3899, %v3901
      %v3906 = vsel %vm935, %v3901, %v3903
      %3911 = vrot.lane.b32.xlu0 %v3827, 122
      %v3912 = vpop.permute.xlu0 %3911
      %3913 = vrot.lane.b32.xlu0 %v3828, 122
      %v3914 = vpop.permute.xlu0 %3913
      %3915 = vrot.lane.b32.xlu0 %v3829, 122
      %v3916 = vpop.permute.xlu0 %3915
      %3917 = vrot.lane.b32.xlu0 %v3830, 122
      %v3918 = vpop.permute.xlu0 %3917
      %v3919 = vsel %vm955, %v3912, %v3914
      %v3920 = vsel %vm955, %v3914, %v3916
      %v3921 = vsel %vm955, %v3916, %v3918
      %3926 = vrot.lane.b32.xlu0 %v3827, 106
      %v3927 = vpop.permute.xlu0 %3926
      %3928 = vrot.lane.b32.xlu0 %v3828, 106
      %v3929 = vpop.permute.xlu0 %3928
      %3930 = vrot.lane.b32.xlu0 %v3829, 106
      %v3931 = vpop.permute.xlu0 %3930
      %3932 = vrot.lane.b32.xlu0 %v3830, 106
      %v3933 = vpop.permute.xlu0 %3932
      %v3934 = vsel %vm975, %v3927, %v3929
      %v3935 = vsel %vm975, %v3929, %v3931
      %v3936 = vsel %vm975, %v3931, %v3933
      %3941 = vrot.lane.b32.xlu0 %v3827, 105
      %v3942 = vpop.permute.xlu0 %3941
      %3943 = vrot.lane.b32.xlu0 %v3828, 105
      %v3944 = vpop.permute.xlu0 %3943
      %3945 = vrot.lane.b32.xlu0 %v3829, 105
      %v3946 = vpop.permute.xlu0 %3945
      %3947 = vrot.lane.b32.xlu0 %v3830, 105
      %v3948 = vpop.permute.xlu0 %3947
      %v3949 = vsel %vm991, %v3942, %v3944
      %v3950 = vsel %vm991, %v3944, %v3946
      %v3951 = vsel %vm991, %v3946, %v3948
      %3956 = vrot.lane.b32.xlu0 %v3827, 104
      %v3957 = vpop.permute.xlu0 %3956
      %3958 = vrot.lane.b32.xlu0 %v3828, 104
      %v3959 = vpop.permute.xlu0 %3958
      %3960 = vrot.lane.b32.xlu0 %v3829, 104
      %v3961 = vpop.permute.xlu0 %3960
      %3962 = vrot.lane.b32.xlu0 %v3830, 104
      %v3963 = vpop.permute.xlu0 %3962
      %v3964 = vsel %vm1007, %v3957, %v3959
      %v3965 = vsel %vm1007, %v3959, %v3961
      %v3966 = vsel %vm1007, %v3961, %v3963
      %3971 = vrot.lane.b32.xlu0 %v3827, 103
      %v3972 = vpop.permute.xlu0 %3971
      %3973 = vrot.lane.b32.xlu0 %v3828, 103
      %v3974 = vpop.permute.xlu0 %3973
      %3975 = vrot.lane.b32.xlu0 %v3829, 103
      %v3976 = vpop.permute.xlu0 %3975
      %3977 = vrot.lane.b32.xlu0 %v3830, 103
      %v3978 = vpop.permute.xlu0 %3977
      %v3979 = vsel %vm1023, %v3972, %v3974
      %v3980 = vsel %vm1023, %v3974, %v3976
      %v3981 = vsel %vm1023, %v3976, %v3978
      %3986 = vrot.lane.b32.xlu0 %v3827, 102
      %v3987 = vpop.permute.xlu0 %3986
      %3988 = vrot.lane.b32.xlu0 %v3828, 102
      %v3989 = vpop.permute.xlu0 %3988
      %3990 = vrot.lane.b32.xlu0 %v3829, 102
      %v3991 = vpop.permute.xlu0 %3990
      %3992 = vrot.lane.b32.xlu0 %v3830, 102
      %v3993 = vpop.permute.xlu0 %3992
      %v3994 = vsel %vm1039, %v3987, %v3989
      %v3995 = vsel %vm1039, %v3989, %v3991
      %v3996 = vsel %vm1039, %v3991, %v3993
      %4001 = vrot.lane.b32.xlu0 %v3827, 101
      %v4002 = vpop.permute.xlu0 %4001
      %4003 = vrot.lane.b32.xlu0 %v3828, 101
      %v4004 = vpop.permute.xlu0 %4003
      %4005 = vrot.lane.b32.xlu0 %v3829, 101
      %v4006 = vpop.permute.xlu0 %4005
      %4007 = vrot.lane.b32.xlu0 %v3830, 101
      %v4008 = vpop.permute.xlu0 %4007
      %v4009 = vsel %vm1055, %v4002, %v4004
      %v4010 = vsel %vm1055, %v4004, %v4006
      %v4011 = vsel %vm1055, %v4006, %v4008
      %4016 = vrot.lane.b32.xlu0 %v3827, 100
      %v4017 = vpop.permute.xlu0 %4016
      %4018 = vrot.lane.b32.xlu0 %v3828, 100
      %v4019 = vpop.permute.xlu0 %4018
      %4020 = vrot.lane.b32.xlu0 %v3829, 100
      %v4021 = vpop.permute.xlu0 %4020
      %4022 = vrot.lane.b32.xlu0 %v3830, 100
      %v4023 = vpop.permute.xlu0 %4022
      %v4024 = vsel %vm1071, %v4017, %v4019
      %v4025 = vsel %vm1071, %v4019, %v4021
      %v4026 = vsel %vm1071, %v4021, %v4023
      %4032 = vrot.lane.b32.xlu0 %v3827, 84
      %v4033 = vpop.permute.xlu0 %4032
      %4034 = vrot.lane.b32.xlu0 %v3828, 84
      %v4035 = vpop.permute.xlu0 %4034
      %4036 = vrot.lane.b32.xlu0 %v3829, 84
      %v4037 = vpop.permute.xlu0 %4036
      %4038 = vrot.lane.b32.xlu0 %v3830, 84
      %v4039 = vpop.permute.xlu0 %4038
      %4040 = vrot.lane.b32.xlu0 %v3831, 84
      %v4041 = vpop.permute.xlu0 %4040
      %v4042 = vsel %vm1091, %v4033, %v4035
      %v4043 = vsel %vm1091, %v4035, %v4037
      %v4044 = vsel %vm1091, %v4037, %v4039
      %v4045 = vsel %vm1091, %v4039, %v4041
      %4050 = vrot.lane.b32.xlu0 %v3827, 83
      %v4051 = vpop.permute.xlu0 %4050
      %4052 = vrot.lane.b32.xlu0 %v3828, 83
      %v4053 = vpop.permute.xlu0 %4052
      %4054 = vrot.lane.b32.xlu0 %v3829, 83
      %v4055 = vpop.permute.xlu0 %4054
      %4056 = vrot.lane.b32.xlu0 %v3830, 83
      %v4057 = vpop.permute.xlu0 %4056
      %4058 = vrot.lane.b32.xlu0 %v3831, 83
      %v4059 = vpop.permute.xlu0 %4058
      %v4060 = vsel %vm1111, %v4051, %v4053
      %v4061 = vsel %vm1111, %v4053, %v4055
      %v4062 = vsel %vm1111, %v4055, %v4057
      %v4063 = vsel %vm1111, %v4057, %v4059
      %4068 = vrot.lane.b32.xlu0 %v3831, 127
      %v4069 = vpop.permute.xlu0 %4068
      %v4070 = vsel %vm855, %v3843, %v4069
      %4071 = vrot.lane.b32.xlu0 %v3831, 126
      %v4072 = vpop.permute.xlu0 %4071
      %v4073 = vsel %vm875, %v3858, %v4072
      %4074 = vrot.lane.b32.xlu0 %v3831, 125
      %v4075 = vpop.permute.xlu0 %4074
      %v4076 = vsel %vm895, %v3873, %v4075
      %4077 = vrot.lane.b32.xlu0 %v3831, 124
      %v4078 = vpop.permute.xlu0 %4077
      %v4079 = vsel %vm915, %v3888, %v4078
      %4080 = vrot.lane.b32.xlu0 %v3827, 108
      %v4081 = vpop.permute.xlu0 %4080
      %4082 = vrot.lane.b32.xlu0 %v3828, 108
      %v4083 = vpop.permute.xlu0 %4082
      %4084 = vrot.lane.b32.xlu0 %v3829, 108
      %v4085 = vpop.permute.xlu0 %4084
      %4086 = vrot.lane.b32.xlu0 %v3830, 108
      %v4087 = vpop.permute.xlu0 %4086
      %4088 = vrot.lane.b32.xlu0 %v3831, 108
      %v4089 = vpop.permute.xlu0 %4088
      %v4090 = vsel %vm1218, %v4081, %v4083
      %v4091 = vsel %vm1218, %v4083, %v4085
      %v4092 = vsel %vm1218, %v4085, %v4087
      %v4093 = vsel %vm1218, %v4087, %v4089
      %4094 = vrot.lane.b32.xlu0 %v3827, 107
      %v4095 = vpop.permute.xlu0 %4094
      %4096 = vrot.lane.b32.xlu0 %v3828, 107
      %v4097 = vpop.permute.xlu0 %4096
      %4098 = vrot.lane.b32.xlu0 %v3829, 107
      %v4099 = vpop.permute.xlu0 %4098
      %4100 = vrot.lane.b32.xlu0 %v3830, 107
      %v4101 = vpop.permute.xlu0 %4100
      %4102 = vrot.lane.b32.xlu0 %v3831, 107
      %v4103 = vpop.permute.xlu0 %4102
      %v4104 = vsel %vm1238, %v4095, %v4097
      %v4105 = vsel %vm1238, %v4097, %v4099
      %v4106 = vsel %vm1238, %v4099, %v4101
      %v4107 = vsel %vm1238, %v4101, %v4103
      %4108 = vrot.lane.b32.xlu0 %v3831, 106
      %v4109 = vpop.permute.xlu0 %4108
      %v4110 = vsel %vm975, %v3933, %v4109
      %4111 = vrot.lane.b32.xlu0 %v3831, 105
      %v4112 = vpop.permute.xlu0 %4111
      %v4113 = vsel %vm991, %v3948, %v4112
      %4114 = vrot.lane.b32.xlu0 %v3831, 104
      %v4115 = vpop.permute.xlu0 %4114
      %v4116 = vsel %vm1007, %v3963, %v4115
      %4117 = vrot.lane.b32.xlu0 %v3831, 103
      %v4118 = vpop.permute.xlu0 %4117
      %v4119 = vsel %vm1023, %v3978, %v4118
      %4120 = vrot.lane.b32.xlu0 %v3831, 102
      %v4121 = vpop.permute.xlu0 %4120
      %v4122 = vsel %vm1039, %v3993, %v4121
      %4123 = vrot.lane.b32.xlu0 %v3827, 86
      %v4124 = vpop.permute.xlu0 %4123
      %4125 = vrot.lane.b32.xlu0 %v3828, 86
      %v4126 = vpop.permute.xlu0 %4125
      %4127 = vrot.lane.b32.xlu0 %v3829, 86
      %v4128 = vpop.permute.xlu0 %4127
      %4129 = vrot.lane.b32.xlu0 %v3830, 86
      %v4130 = vpop.permute.xlu0 %4129
      %4131 = vrot.lane.b32.xlu0 %v3831, 86
      %v4132 = vpop.permute.xlu0 %4131
      %v4133 = vsel %vm1283, %v4124, %v4126
      %v4134 = vsel %vm1283, %v4126, %v4128
      %v4135 = vsel %vm1283, %v4128, %v4130
      %v4136 = vsel %vm1283, %v4130, %v4132
      %4137 = vrot.lane.b32.xlu0 %v3827, 85
      %v4138 = vpop.permute.xlu0 %4137
      %4139 = vrot.lane.b32.xlu0 %v3828, 85
      %v4140 = vpop.permute.xlu0 %4139
      %4141 = vrot.lane.b32.xlu0 %v3829, 85
      %v4142 = vpop.permute.xlu0 %4141
      %4143 = vrot.lane.b32.xlu0 %v3830, 85
      %v4144 = vpop.permute.xlu0 %4143
      %4145 = vrot.lane.b32.xlu0 %v3831, 85
      %v4146 = vpop.permute.xlu0 %4145
      %v4147 = vsel %vm1303, %v4138, %v4140
      %v4148 = vsel %vm1303, %v4140, %v4142
      %v4149 = vsel %vm1303, %v4142, %v4144
      %v4150 = vsel %vm1303, %v4144, %v4146
      %4151 = vrot.lane.b32.xlu0 %v3827, 110
      %v4152 = vpop.permute.xlu0 %4151
      %4153 = vrot.lane.b32.xlu0 %v3828, 110
      %v4154 = vpop.permute.xlu0 %4153
      %4155 = vrot.lane.b32.xlu0 %v3829, 110
      %v4156 = vpop.permute.xlu0 %4155
      %4157 = vrot.lane.b32.xlu0 %v3830, 110
      %v4158 = vpop.permute.xlu0 %4157
      %4159 = vrot.lane.b32.xlu0 %v3831, 110
      %v4160 = vpop.permute.xlu0 %4159
      %v4161 = vsel %vm1374, %v4152, %v4154
      %v4162 = vsel %vm1374, %v4154, %v4156
      %v4163 = vsel %vm1374, %v4156, %v4158
      %v4164 = vsel %vm1374, %v4158, %v4160
      %4165 = vrot.lane.b32.xlu0 %v3827, 109
      %v4166 = vpop.permute.xlu0 %4165
      %4167 = vrot.lane.b32.xlu0 %v3828, 109
      %v4168 = vpop.permute.xlu0 %4167
      %4169 = vrot.lane.b32.xlu0 %v3829, 109
      %v4170 = vpop.permute.xlu0 %4169
      %4171 = vrot.lane.b32.xlu0 %v3830, 109
      %v4172 = vpop.permute.xlu0 %4171
      %4173 = vrot.lane.b32.xlu0 %v3831, 109
      %v4174 = vpop.permute.xlu0 %4173
      %v4175 = vsel %vm1394, %v4166, %v4168
      %v4176 = vsel %vm1394, %v4168, %v4170
      %v4177 = vsel %vm1394, %v4170, %v4172
      %v4178 = vsel %vm1394, %v4172, %v4174
      %4179 = vrot.lane.b32.xlu0 %v3828, 88
      %v4180 = vpop.permute.xlu0 %4179
      %4181 = vrot.lane.b32.xlu0 %v3829, 88
      %v4182 = vpop.permute.xlu0 %4181
      %4183 = vrot.lane.b32.xlu0 %v3830, 88
      %v4184 = vpop.permute.xlu0 %4183
      %4185 = vrot.lane.b32.xlu0 %v3831, 88
      %v4186 = vpop.permute.xlu0 %4185
      %v4187 = vsel %vm1412, %v4180, %v4182
      %v4188 = vsel %vm1412, %v4182, %v4184
      %v4189 = vsel %vm1412, %v4184, %v4186
      %4190 = vrot.lane.b32.xlu0 %v3828, 87
      %v4191 = vpop.permute.xlu0 %4190
      %4192 = vrot.lane.b32.xlu0 %v3829, 87
      %v4193 = vpop.permute.xlu0 %4192
      %4194 = vrot.lane.b32.xlu0 %v3830, 87
      %v4195 = vpop.permute.xlu0 %4194
      %4196 = vrot.lane.b32.xlu0 %v3831, 87
      %v4197 = vpop.permute.xlu0 %4196
      %v4198 = vsel %vm1429, %v4191, %v4193
      %v4199 = vsel %vm1429, %v4193, %v4195
      %v4200 = vsel %vm1429, %v4195, %v4197
      %4201 = vrot.lane.b32.xlu0 %v3827, 82
      %v4202 = vpop.permute.xlu0 %4201
      %4203 = vrot.lane.b32.xlu0 %v3828, 82
      %v4204 = vpop.permute.xlu0 %4203
      %4205 = vrot.lane.b32.xlu0 %v3829, 82
      %v4206 = vpop.permute.xlu0 %4205
      %4207 = vrot.lane.b32.xlu0 %v3830, 82
      %v4208 = vpop.permute.xlu0 %4207
      %4209 = vrot.lane.b32.xlu0 %v3831, 82
      %v4210 = vpop.permute.xlu0 %4209
      %4211 = vrot.lane.b32.xlu0 %v3844, 82
      %v4212 = vpop.permute.xlu0 %4211
      %4213 = vrot.lane.b32.xlu0 %v3845, 82
      %v4214 = vpop.permute.xlu0 %4213
      %4215 = vrot.lane.b32.xlu0 %v3846, 82
      %v4216 = vpop.permute.xlu0 %4215
      %4217 = vrot.lane.b32.xlu0 %v4070, 82
      %v4218 = vpop.permute.xlu0 %4217
      %4219 = vrot.lane.b32.xlu0 %v4069, 82
      %v4220 = vpop.permute.xlu0 %4219
      %4221 = vrot.lane.b32.xlu0 %v3859, 82
      %v4222 = vpop.permute.xlu0 %4221
      %4223 = vrot.lane.b32.xlu0 %v3860, 82
      %v4224 = vpop.permute.xlu0 %4223
      %4225 = vrot.lane.b32.xlu0 %v3861, 82
      %v4226 = vpop.permute.xlu0 %4225
      %4227 = vrot.lane.b32.xlu0 %v4073, 82
      %v4228 = vpop.permute.xlu0 %4227
      %4229 = vrot.lane.b32.xlu0 %v4072, 82
      %v4230 = vpop.permute.xlu0 %4229
      %4231 = vrot.lane.b32.xlu0 %v3874, 82
      %v4232 = vpop.permute.xlu0 %4231
      %4233 = vrot.lane.b32.xlu0 %v3875, 82
      %v4234 = vpop.permute.xlu0 %4233
      %4235 = vrot.lane.b32.xlu0 %v3876, 82
      %v4236 = vpop.permute.xlu0 %4235
      %4237 = vrot.lane.b32.xlu0 %v4076, 82
      %v4238 = vpop.permute.xlu0 %4237
      %4239 = vrot.lane.b32.xlu0 %v4075, 82
      %v4240 = vpop.permute.xlu0 %4239
      %4241 = vrot.lane.b32.xlu0 %v3889, 82
      %v4242 = vpop.permute.xlu0 %4241
      %4243 = vrot.lane.b32.xlu0 %v3890, 82
      %v4244 = vpop.permute.xlu0 %4243
      %4245 = vrot.lane.b32.xlu0 %v3891, 82
      %v4246 = vpop.permute.xlu0 %4245
      %4247 = vrot.lane.b32.xlu0 %v4079, 82
      %v4248 = vpop.permute.xlu0 %4247
      %4249 = vrot.lane.b32.xlu0 %v4078, 82
      %v4250 = vpop.permute.xlu0 %4249
      %4251 = vrot.lane.b32.xlu0 %v4090, 82
      %v4252 = vpop.permute.xlu0 %4251
      %4253 = vrot.lane.b32.xlu0 %v4091, 82
      %v4254 = vpop.permute.xlu0 %4253
      %4255 = vrot.lane.b32.xlu0 %v4092, 82
      %v4256 = vpop.permute.xlu0 %4255
      %4257 = vrot.lane.b32.xlu0 %v4093, 82
      %v4258 = vpop.permute.xlu0 %4257
      %4259 = vrot.lane.b32.xlu0 %v4089, 82
      %v4260 = vpop.permute.xlu0 %4259
      %4261 = vrot.lane.b32.xlu0 %v4104, 82
      %v4262 = vpop.permute.xlu0 %4261
      %4263 = vrot.lane.b32.xlu0 %v4105, 82
      %v4264 = vpop.permute.xlu0 %4263
      %4265 = vrot.lane.b32.xlu0 %v4106, 82
      %v4266 = vpop.permute.xlu0 %4265
      %4267 = vrot.lane.b32.xlu0 %v4107, 82
      %v4268 = vpop.permute.xlu0 %4267
      %4269 = vrot.lane.b32.xlu0 %v4103, 82
      %v4270 = vpop.permute.xlu0 %4269
      %4271 = vrot.lane.b32.xlu0 %v3934, 82
      %v4272 = vpop.permute.xlu0 %4271
      %4273 = vrot.lane.b32.xlu0 %v3935, 82
      %v4274 = vpop.permute.xlu0 %4273
      %4275 = vrot.lane.b32.xlu0 %v3936, 82
      %v4276 = vpop.permute.xlu0 %4275
      %4277 = vrot.lane.b32.xlu0 %v4110, 82
      %v4278 = vpop.permute.xlu0 %4277
      %4279 = vrot.lane.b32.xlu0 %v4109, 82
      %v4280 = vpop.permute.xlu0 %4279
      %4281 = vrot.lane.b32.xlu0 %v3949, 82
      %v4282 = vpop.permute.xlu0 %4281
      %4283 = vrot.lane.b32.xlu0 %v3950, 82
      %v4284 = vpop.permute.xlu0 %4283
      %4285 = vrot.lane.b32.xlu0 %v3951, 82
      %v4286 = vpop.permute.xlu0 %4285
      %4287 = vrot.lane.b32.xlu0 %v4113, 82
      %v4288 = vpop.permute.xlu0 %4287
      %4289 = vrot.lane.b32.xlu0 %v4112, 82
      %v4290 = vpop.permute.xlu0 %4289
      %4291 = vrot.lane.b32.xlu0 %v3964, 82
      %v4292 = vpop.permute.xlu0 %4291
      %4293 = vrot.lane.b32.xlu0 %v3965, 82
      %v4294 = vpop.permute.xlu0 %4293
      %4295 = vrot.lane.b32.xlu0 %v3966, 82
      %v4296 = vpop.permute.xlu0 %4295
      %4297 = vrot.lane.b32.xlu0 %v4116, 82
      %v4298 = vpop.permute.xlu0 %4297
      %4299 = vrot.lane.b32.xlu0 %v4115, 82
      %v4300 = vpop.permute.xlu0 %4299
      %4301 = vrot.lane.b32.xlu0 %v3979, 82
      %v4302 = vpop.permute.xlu0 %4301
      %4303 = vrot.lane.b32.xlu0 %v3980, 82
      %v4304 = vpop.permute.xlu0 %4303
      %4305 = vrot.lane.b32.xlu0 %v3981, 82
      %v4306 = vpop.permute.xlu0 %4305
      %4307 = vrot.lane.b32.xlu0 %v4119, 82
      %v4308 = vpop.permute.xlu0 %4307
      %4309 = vrot.lane.b32.xlu0 %v4118, 82
      %v4310 = vpop.permute.xlu0 %4309
      %4311 = vrot.lane.b32.xlu0 %v3994, 82
      %v4312 = vpop.permute.xlu0 %4311
      %4313 = vrot.lane.b32.xlu0 %v3995, 82
      %v4314 = vpop.permute.xlu0 %4313
      %4315 = vrot.lane.b32.xlu0 %v3996, 82
      %v4316 = vpop.permute.xlu0 %4315
      %4317 = vrot.lane.b32.xlu0 %v4122, 82
      %v4318 = vpop.permute.xlu0 %4317
      %4319 = vrot.lane.b32.xlu0 %v4121, 82
      %v4320 = vpop.permute.xlu0 %4319
      %4321 = vrot.lane.b32.xlu0 %v4133, 82
      %v4322 = vpop.permute.xlu0 %4321
      %4323 = vrot.lane.b32.xlu0 %v4134, 82
      %v4324 = vpop.permute.xlu0 %4323
      %4325 = vrot.lane.b32.xlu0 %v4135, 82
      %v4326 = vpop.permute.xlu0 %4325
      %4327 = vrot.lane.b32.xlu0 %v4136, 82
      %v4328 = vpop.permute.xlu0 %4327
      %4329 = vrot.lane.b32.xlu0 %v4132, 82
      %v4330 = vpop.permute.xlu0 %4329
      %4331 = vrot.lane.b32.xlu0 %v4147, 82
      %v4332 = vpop.permute.xlu0 %4331
      %4333 = vrot.lane.b32.xlu0 %v4148, 82
      %v4334 = vpop.permute.xlu0 %4333
      %4335 = vrot.lane.b32.xlu0 %v4149, 82
      %v4336 = vpop.permute.xlu0 %4335
      %4337 = vrot.lane.b32.xlu0 %v4150, 82
      %v4338 = vpop.permute.xlu0 %4337
      %4339 = vrot.lane.b32.xlu0 %v4146, 82
      %v4340 = vpop.permute.xlu0 %4339
      %4341 = vrot.lane.b32.xlu0 %v4042, 82
      %v4342 = vpop.permute.xlu0 %4341
      %4343 = vrot.lane.b32.xlu0 %v4043, 82
      %v4344 = vpop.permute.xlu0 %4343
      %4345 = vrot.lane.b32.xlu0 %v4044, 82
      %v4346 = vpop.permute.xlu0 %4345
      %4347 = vrot.lane.b32.xlu0 %v4045, 82
      %v4348 = vpop.permute.xlu0 %4347
      %4349 = vrot.lane.b32.xlu0 %v4041, 82
      %v4350 = vpop.permute.xlu0 %4349
      %4351 = vrot.lane.b32.xlu0 %v4060, 82
      %v4352 = vpop.permute.xlu0 %4351
      %4353 = vrot.lane.b32.xlu0 %v4061, 82
      %v4354 = vpop.permute.xlu0 %4353
      %4355 = vrot.lane.b32.xlu0 %v4062, 82
      %v4356 = vpop.permute.xlu0 %4355
      %4357 = vrot.lane.b32.xlu0 %v4063, 82
      %v4358 = vpop.permute.xlu0 %4357
      %4359 = vrot.lane.b32.xlu0 %v4059, 82
      %v4360 = vpop.permute.xlu0 %4359
      %v4361 = vsel %vm1569, %v4202, %v4204
      %v4362 = vsel %vm1569, %v4204, %v4206
      %v4363 = vsel %vm1569, %v4206, %v4208
      %v4364 = vsel %vm1569, %v4208, %v4210
      %v4365 = vsel %vm1569, %v4212, %v4214
      %v4366 = vsel %vm1569, %v4214, %v4216
      %v4367 = vsel %vm1569, %v4216, %v4218
      %v4368 = vsel %vm1569, %v4218, %v4220
      %v4369 = vsel %vm1569, %v4222, %v4224
      %v4370 = vsel %vm1569, %v4224, %v4226
      %v4371 = vsel %vm1569, %v4226, %v4228
      %v4372 = vsel %vm1569, %v4228, %v4230
      %v4373 = vsel %vm1569, %v4232, %v4234
      %v4374 = vsel %vm1569, %v4234, %v4236
      %v4375 = vsel %vm1569, %v4236, %v4238
      %v4376 = vsel %vm1569, %v4238, %v4240
      %v4377 = vsel %vm1569, %v4242, %v4244
      %v4378 = vsel %vm1569, %v4244, %v4246
      %v4379 = vsel %vm1569, %v4246, %v4248
      %v4380 = vsel %vm1569, %v4248, %v4250
      %v4381 = vsel %vm1569, %v4252, %v4254
      %v4382 = vsel %vm1569, %v4254, %v4256
      %v4383 = vsel %vm1569, %v4256, %v4258
      %v4384 = vsel %vm1569, %v4258, %v4260
      %v4385 = vsel %vm1569, %v4262, %v4264
      %v4386 = vsel %vm1569, %v4264, %v4266
      %v4387 = vsel %vm1569, %v4266, %v4268
      %v4388 = vsel %vm1569, %v4268, %v4270
      %v4389 = vsel %vm1569, %v4272, %v4274
      %v4390 = vsel %vm1569, %v4274, %v4276
      %v4391 = vsel %vm1569, %v4276, %v4278
      %v4392 = vsel %vm1569, %v4278, %v4280
      %v4393 = vsel %vm1569, %v4282, %v4284
      %v4394 = vsel %vm1569, %v4284, %v4286
      %v4395 = vsel %vm1569, %v4286, %v4288
      %v4396 = vsel %vm1569, %v4288, %v4290
      %v4397 = vsel %vm1569, %v4292, %v4294
      %v4398 = vsel %vm1569, %v4294, %v4296
      %v4399 = vsel %vm1569, %v4296, %v4298
      %v4400 = vsel %vm1569, %v4298, %v4300
      %v4401 = vsel %vm1569, %v4302, %v4304
      %v4402 = vsel %vm1569, %v4304, %v4306
      %v4403 = vsel %vm1569, %v4306, %v4308
      %v4404 = vsel %vm1569, %v4308, %v4310
      %v4405 = vsel %vm1569, %v4312, %v4314
      %v4406 = vsel %vm1569, %v4314, %v4316
      %v4407 = vsel %vm1569, %v4316, %v4318
      %v4408 = vsel %vm1569, %v4318, %v4320
      %v4409 = vsel %vm1569, %v4322, %v4324
      %v4410 = vsel %vm1569, %v4324, %v4326
      %v4411 = vsel %vm1569, %v4326, %v4328
      %v4412 = vsel %vm1569, %v4328, %v4330
      %v4413 = vsel %vm1569, %v4332, %v4334
      %v4414 = vsel %vm1569, %v4334, %v4336
      %v4415 = vsel %vm1569, %v4336, %v4338
      %v4416 = vsel %vm1569, %v4338, %v4340
      %v4417 = vsel %vm1569, %v4342, %v4344
      %v4418 = vsel %vm1569, %v4344, %v4346
      %v4419 = vsel %vm1569, %v4346, %v4348
      %v4420 = vsel %vm1569, %v4348, %v4350
      %v4421 = vsel %vm1569, %v4352, %v4354
      %v4422 = vsel %vm1569, %v4354, %v4356
      %v4423 = vsel %vm1569, %v4356, %v4358
      %v4424 = vsel %vm1569, %v4358, %v4360
      %4489 = vrot.lane.b32.xlu0 %v3827, 36
      %v4490 = vpop.permute.xlu0 %4489
      %4491 = vrot.lane.b32.xlu0 %v3828, 36
      %v4492 = vpop.permute.xlu0 %4491
      %4493 = vrot.lane.b32.xlu0 %v3829, 36
      %v4494 = vpop.permute.xlu0 %4493
      %4495 = vrot.lane.b32.xlu0 %v3830, 36
      %v4496 = vpop.permute.xlu0 %4495
      %4497 = vrot.lane.b32.xlu0 %v3831, 36
      %v4498 = vpop.permute.xlu0 %4497
      %4499 = vrot.lane.b32.xlu0 %v3844, 36
      %v4500 = vpop.permute.xlu0 %4499
      %4501 = vrot.lane.b32.xlu0 %v3845, 36
      %v4502 = vpop.permute.xlu0 %4501
      %4503 = vrot.lane.b32.xlu0 %v3846, 36
      %v4504 = vpop.permute.xlu0 %4503
      %4505 = vrot.lane.b32.xlu0 %v4070, 36
      %v4506 = vpop.permute.xlu0 %4505
      %4507 = vrot.lane.b32.xlu0 %v4069, 36
      %v4508 = vpop.permute.xlu0 %4507
      %4509 = vrot.lane.b32.xlu0 %v3859, 36
      %v4510 = vpop.permute.xlu0 %4509
      %4511 = vrot.lane.b32.xlu0 %v3860, 36
      %v4512 = vpop.permute.xlu0 %4511
      %4513 = vrot.lane.b32.xlu0 %v3861, 36
      %v4514 = vpop.permute.xlu0 %4513
      %4515 = vrot.lane.b32.xlu0 %v4073, 36
      %v4516 = vpop.permute.xlu0 %4515
      %4517 = vrot.lane.b32.xlu0 %v4072, 36
      %v4518 = vpop.permute.xlu0 %4517
      %4519 = vrot.lane.b32.xlu0 %v4161, 36
      %v4520 = vpop.permute.xlu0 %4519
      %4521 = vrot.lane.b32.xlu0 %v4162, 36
      %v4522 = vpop.permute.xlu0 %4521
      %4523 = vrot.lane.b32.xlu0 %v4163, 36
      %v4524 = vpop.permute.xlu0 %4523
      %4525 = vrot.lane.b32.xlu0 %v4164, 36
      %v4526 = vpop.permute.xlu0 %4525
      %4527 = vrot.lane.b32.xlu0 %v4160, 36
      %v4528 = vpop.permute.xlu0 %4527
      %4529 = vrot.lane.b32.xlu0 %v4175, 36
      %v4530 = vpop.permute.xlu0 %4529
      %4531 = vrot.lane.b32.xlu0 %v4176, 36
      %v4532 = vpop.permute.xlu0 %4531
      %4533 = vrot.lane.b32.xlu0 %v4177, 36
      %v4534 = vpop.permute.xlu0 %4533
      %4535 = vrot.lane.b32.xlu0 %v4178, 36
      %v4536 = vpop.permute.xlu0 %4535
      %4537 = vrot.lane.b32.xlu0 %v4174, 36
      %v4538 = vpop.permute.xlu0 %4537
      %4539 = vrot.lane.b32.xlu0 %v4090, 36
      %v4540 = vpop.permute.xlu0 %4539
      %4541 = vrot.lane.b32.xlu0 %v4091, 36
      %v4542 = vpop.permute.xlu0 %4541
      %4543 = vrot.lane.b32.xlu0 %v4092, 36
      %v4544 = vpop.permute.xlu0 %4543
      %4545 = vrot.lane.b32.xlu0 %v4093, 36
      %v4546 = vpop.permute.xlu0 %4545
      %4547 = vrot.lane.b32.xlu0 %v4089, 36
      %v4548 = vpop.permute.xlu0 %4547
      %4549 = vrot.lane.b32.xlu0 %v4104, 36
      %v4550 = vpop.permute.xlu0 %4549
      %4551 = vrot.lane.b32.xlu0 %v4105, 36
      %v4552 = vpop.permute.xlu0 %4551
      %4553 = vrot.lane.b32.xlu0 %v4106, 36
      %v4554 = vpop.permute.xlu0 %4553
      %4555 = vrot.lane.b32.xlu0 %v4107, 36
      %v4556 = vpop.permute.xlu0 %4555
      %4557 = vrot.lane.b32.xlu0 %v4103, 36
      %v4558 = vpop.permute.xlu0 %4557
      %4559 = vrot.lane.b32.xlu0 %v3934, 36
      %v4560 = vpop.permute.xlu0 %4559
      %4561 = vrot.lane.b32.xlu0 %v3935, 36
      %v4562 = vpop.permute.xlu0 %4561
      %4563 = vrot.lane.b32.xlu0 %v3936, 36
      %v4564 = vpop.permute.xlu0 %4563
      %4565 = vrot.lane.b32.xlu0 %v4110, 36
      %v4566 = vpop.permute.xlu0 %4565
      %4567 = vrot.lane.b32.xlu0 %v4109, 36
      %v4568 = vpop.permute.xlu0 %4567
      %4569 = vrot.lane.b32.xlu0 %v3949, 36
      %v4570 = vpop.permute.xlu0 %4569
      %4571 = vrot.lane.b32.xlu0 %v3950, 36
      %v4572 = vpop.permute.xlu0 %4571
      %4573 = vrot.lane.b32.xlu0 %v3951, 36
      %v4574 = vpop.permute.xlu0 %4573
      %4575 = vrot.lane.b32.xlu0 %v4113, 36
      %v4576 = vpop.permute.xlu0 %4575
      %4577 = vrot.lane.b32.xlu0 %v4112, 36
      %v4578 = vpop.permute.xlu0 %4577
      %4579 = vrot.lane.b32.xlu0 %v3964, 36
      %v4580 = vpop.permute.xlu0 %4579
      %4581 = vrot.lane.b32.xlu0 %v3965, 36
      %v4582 = vpop.permute.xlu0 %4581
      %4583 = vrot.lane.b32.xlu0 %v3966, 36
      %v4584 = vpop.permute.xlu0 %4583
      %4585 = vrot.lane.b32.xlu0 %v4116, 36
      %v4586 = vpop.permute.xlu0 %4585
      %4587 = vrot.lane.b32.xlu0 %v4115, 36
      %v4588 = vpop.permute.xlu0 %4587
      %4589 = vrot.lane.b32.xlu0 %v4180, 36
      %v4590 = vpop.permute.xlu0 %4589
      %4591 = vrot.lane.b32.xlu0 %v4187, 36
      %v4592 = vpop.permute.xlu0 %4591
      %4593 = vrot.lane.b32.xlu0 %v4188, 36
      %v4594 = vpop.permute.xlu0 %4593
      %4595 = vrot.lane.b32.xlu0 %v4189, 36
      %v4596 = vpop.permute.xlu0 %4595
      %4597 = vrot.lane.b32.xlu0 %v4186, 36
      %v4598 = vpop.permute.xlu0 %4597
      %4599 = vrot.lane.b32.xlu0 %v4191, 36
      %v4600 = vpop.permute.xlu0 %4599
      %4601 = vrot.lane.b32.xlu0 %v4198, 36
      %v4602 = vpop.permute.xlu0 %4601
      %4603 = vrot.lane.b32.xlu0 %v4199, 36
      %v4604 = vpop.permute.xlu0 %4603
      %4605 = vrot.lane.b32.xlu0 %v4200, 36
      %v4606 = vpop.permute.xlu0 %4605
      %4607 = vrot.lane.b32.xlu0 %v4197, 36
      %v4608 = vpop.permute.xlu0 %4607
      %4609 = vrot.lane.b32.xlu0 %v4126, 36
      %v4610 = vpop.permute.xlu0 %4609
      %4611 = vrot.lane.b32.xlu0 %v4134, 36
      %v4612 = vpop.permute.xlu0 %4611
      %4613 = vrot.lane.b32.xlu0 %v4135, 36
      %v4614 = vpop.permute.xlu0 %4613
      %4615 = vrot.lane.b32.xlu0 %v4136, 36
      %v4616 = vpop.permute.xlu0 %4615
      %4617 = vrot.lane.b32.xlu0 %v4132, 36
      %v4618 = vpop.permute.xlu0 %4617
      %4619 = vrot.lane.b32.xlu0 %v4140, 36
      %v4620 = vpop.permute.xlu0 %4619
      %4621 = vrot.lane.b32.xlu0 %v4148, 36
      %v4622 = vpop.permute.xlu0 %4621
      %4623 = vrot.lane.b32.xlu0 %v4149, 36
      %v4624 = vpop.permute.xlu0 %4623
      %4625 = vrot.lane.b32.xlu0 %v4150, 36
      %v4626 = vpop.permute.xlu0 %4625
      %4627 = vrot.lane.b32.xlu0 %v4146, 36
      %v4628 = vpop.permute.xlu0 %4627
      %4629 = vrot.lane.b32.xlu0 %v4035, 36
      %v4630 = vpop.permute.xlu0 %4629
      %4631 = vrot.lane.b32.xlu0 %v4043, 36
      %v4632 = vpop.permute.xlu0 %4631
      %4633 = vrot.lane.b32.xlu0 %v4044, 36
      %v4634 = vpop.permute.xlu0 %4633
      %4635 = vrot.lane.b32.xlu0 %v4045, 36
      %v4636 = vpop.permute.xlu0 %4635
      %4637 = vrot.lane.b32.xlu0 %v4041, 36
      %v4638 = vpop.permute.xlu0 %4637
      %4639 = vrot.lane.b32.xlu0 %v4053, 36
      %v4640 = vpop.permute.xlu0 %4639
      %4641 = vrot.lane.b32.xlu0 %v4061, 36
      %v4642 = vpop.permute.xlu0 %4641
      %4643 = vrot.lane.b32.xlu0 %v4062, 36
      %v4644 = vpop.permute.xlu0 %4643
      %4645 = vrot.lane.b32.xlu0 %v4063, 36
      %v4646 = vpop.permute.xlu0 %4645
      %4647 = vrot.lane.b32.xlu0 %v4059, 36
      %v4648 = vpop.permute.xlu0 %4647
      %v4649 = vsel %vm1694, %v4490, %v4492
      %v4650 = vsel %vm1694, %v4492, %v4494
      %v4651 = vsel %vm1694, %v4494, %v4496
      %v4652 = vsel %vm1694, %v4496, %v4498
      %v4653 = vsel %vm1694, %v4500, %v4502
      %v4654 = vsel %vm1694, %v4502, %v4504
      %v4655 = vsel %vm1694, %v4504, %v4506
      %v4656 = vsel %vm1694, %v4506, %v4508
      %v4657 = vsel %vm1694, %v4510, %v4512
      %v4658 = vsel %vm1694, %v4512, %v4514
      %v4659 = vsel %vm1694, %v4514, %v4516
      %v4660 = vsel %vm1694, %v4516, %v4518
      %v4661 = vsel %vm1694, %v4520, %v4522
      %v4662 = vsel %vm1694, %v4522, %v4524
      %v4663 = vsel %vm1694, %v4524, %v4526
      %v4664 = vsel %vm1694, %v4526, %v4528
      %v4665 = vsel %vm1694, %v4530, %v4532
      %v4666 = vsel %vm1694, %v4532, %v4534
      %v4667 = vsel %vm1694, %v4534, %v4536
      %v4668 = vsel %vm1694, %v4536, %v4538
      %v4669 = vsel %vm1694, %v4540, %v4542
      %v4670 = vsel %vm1694, %v4542, %v4544
      %v4671 = vsel %vm1694, %v4544, %v4546
      %v4672 = vsel %vm1694, %v4546, %v4548
      %v4673 = vsel %vm1694, %v4550, %v4552
      %v4674 = vsel %vm1694, %v4552, %v4554
      %v4675 = vsel %vm1694, %v4554, %v4556
      %v4676 = vsel %vm1694, %v4556, %v4558
      %v4677 = vsel %vm1694, %v4560, %v4562
      %v4678 = vsel %vm1694, %v4562, %v4564
      %v4679 = vsel %vm1694, %v4564, %v4566
      %v4680 = vsel %vm1694, %v4566, %v4568
      %v4681 = vsel %vm1694, %v4570, %v4572
      %v4682 = vsel %vm1694, %v4572, %v4574
      %v4683 = vsel %vm1694, %v4574, %v4576
      %v4684 = vsel %vm1694, %v4576, %v4578
      %v4685 = vsel %vm1694, %v4580, %v4582
      %v4686 = vsel %vm1694, %v4582, %v4584
      %v4687 = vsel %vm1694, %v4584, %v4586
      %v4688 = vsel %vm1694, %v4586, %v4588
      %v4689 = vsel %vm1694, %v4590, %v4592
      %v4690 = vsel %vm1694, %v4592, %v4594
      %v4691 = vsel %vm1694, %v4594, %v4596
      %v4692 = vsel %vm1694, %v4596, %v4598
      %v4693 = vsel %vm1694, %v4600, %v4602
      %v4694 = vsel %vm1694, %v4602, %v4604
      %v4695 = vsel %vm1694, %v4604, %v4606
      %v4696 = vsel %vm1694, %v4606, %v4608
      %v4697 = vsel %vm1694, %v4610, %v4612
      %v4698 = vsel %vm1694, %v4612, %v4614
      %v4699 = vsel %vm1694, %v4614, %v4616
      %v4700 = vsel %vm1694, %v4616, %v4618
      %v4701 = vsel %vm1694, %v4620, %v4622
      %v4702 = vsel %vm1694, %v4622, %v4624
      %v4703 = vsel %vm1694, %v4624, %v4626
      %v4704 = vsel %vm1694, %v4626, %v4628
      %v4705 = vsel %vm1694, %v4630, %v4632
      %v4706 = vsel %vm1694, %v4632, %v4634
      %v4707 = vsel %vm1694, %v4634, %v4636
      %v4708 = vsel %vm1694, %v4636, %v4638
      %v4709 = vsel %vm1694, %v4640, %v4642
      %v4710 = vsel %vm1694, %v4642, %v4644
      %v4711 = vsel %vm1694, %v4644, %v4646
      %v4712 = vsel %vm1694, %v4646, %v4648
      %4777 = vrot.lane.b32.xlu0 %v3828, 118
      %v4778 = vpop.permute.xlu0 %4777
      %4779 = vrot.lane.b32.xlu0 %v3829, 118
      %v4780 = vpop.permute.xlu0 %4779
      %4781 = vrot.lane.b32.xlu0 %v3830, 118
      %v4782 = vpop.permute.xlu0 %4781
      %4783 = vrot.lane.b32.xlu0 %v3831, 118
      %v4784 = vpop.permute.xlu0 %4783
      %v4785 = vsel %vm1751, %v4778, %v4780
      %v4786 = vsel %vm1751, %v4780, %v4782
      %v4787 = vsel %vm1751, %v4782, %v4784
      %4792 = vset.pattern.permute.xlu0 6
      %4793 = vperm.xlu0 %4792, %v258
      %v4794 = vpop.permute.xlu0 %4793
      %v4798 = vcombine.high %v256, %v256
      %v4799 = vcombine.high %v257, %v257
      %vm4801 = vcmask 64512
      %v4802 = vsel %vm4801, %v4799, 0
      %4804 = vmatprep.subr.mxu0 %v3828
      %4805 = vmatpush1.msra.mxu0 %v3827
      %4806 = vmatprep.subr.mxu0 %v3845
      %4807 = vmatpush1.msra.mxu0 %v3844
      %4808 = vmatprep.subr.mxu0 %v3860
      %4809 = vmatpush1.msra.mxu0 %v3859
      %4810 = vmatprep.subr.mxu0 %v3875
      %4811 = vmatpush1.msra.mxu0 %v3874
      %4812 = vmatprep.subr.mxu0 %v3890
      %4813 = vmatpush1.msra.mxu0 %v3889
      %4814 = vmatprep.subr.mxu0 %v3905
      %4815 = vmatpush1.msra.mxu0 %v3904
      %4816 = vmatprep.subr.mxu0 %v3920
      %4817 = vmatpush1.msra.mxu0 %v3919
      %4818 = vmatprep.subr.mxu0 %v3935
      %4819 = vmatpush1.msra.mxu0 %v3934
      %4820 = vmatprep.subr.mxu0 %v3950
      %4821 = vmatpush1.msra.mxu0 %v3949
      %4822 = vmatprep.subr.mxu0 %v3965
      %4823 = vmatpush1.msra.mxu0 %v3964
      %4824 = vmatprep.subr.mxu0 %v3980
      %4825 = vmatpush1.msra.mxu0 %v3979
      %4826 = vmatprep.subr.mxu0 %v3995
      %4827 = vmatpush1.msra.mxu0 %v3994
      %4828 = vmatprep.subr.mxu0 %v4010
      %4829 = vmatpush1.msra.mxu0 %v4009
      %4830 = vmatprep.subr.mxu0 %v4025
      %4831 = vmatpush1.msra.mxu0 %v4024
      %4832 = vmatprep.subr.mxu0 %v4043
      %4833 = vmatpush1.msra.mxu0 %v4042
      %4834 = vmatprep.subr.mxu0 %v4061
      %4835 = vmatpush1.msra.mxu0 %v4060
      %4836 = vmatprep.subr.mxu0 %v4362
      %4837 = vmatpush1.msra.mxu0 %v4361
      %4838 = vmatprep.subr.mxu0 %v4366
      %4839 = vmatpush1.msra.mxu0 %v4365
      %4840 = vmatprep.subr.mxu0 %v4370
      %4841 = vmatpush1.msra.mxu0 %v4369
      %4842 = vmatprep.subr.mxu0 %v4374
      %4843 = vmatpush1.msra.mxu0 %v4373
      %4844 = vmatprep.subr.mxu0 %v4378
      %4845 = vmatpush1.msra.mxu0 %v4377
      %4846 = vmatprep.subr.mxu0 %v4382
      %4847 = vmatpush1.msra.mxu0 %v4381
      %4848 = vmatprep.subr.mxu0 %v4386
      %4849 = vmatpush1.msra.mxu0 %v4385
      %4850 = vmatprep.subr.mxu0 %v4390
      %4851 = vmatpush1.msra.mxu0 %v4389
      %4852 = vmatprep.subr.mxu0 %v4394
      %4853 = vmatpush1.msra.mxu0 %v4393
      %4854 = vmatprep.subr.mxu0 %v4398
      %4855 = vmatpush1.msra.mxu0 %v4397
      %4856 = vmatprep.subr.mxu0 %v4402
      %4857 = vmatpush1.msra.mxu0 %v4401
      %4858 = vmatprep.subr.mxu0 %v4406
      %4859 = vmatpush1.msra.mxu0 %v4405
      %4860 = vmatprep.subr.mxu0 %v4410
      %4861 = vmatpush1.msra.mxu0 %v4409
      %4862 = vmatprep.subr.mxu0 %v4414
      %4863 = vmatpush1.msra.mxu0 %v4413
      %4864 = vmatprep.subr.mxu0 %v4418
      %4865 = vmatpush1.msra.mxu0 %v4417
      %4866 = vmatprep.subr.mxu0 %v4422
      %4867 = vmatpush1.msra.mxu0 %v4421
      %4868 = vmatprep.mubr.f32.mxu0 %v4798
      %4869 = vmatmul.mubr.f32.gmra.mrb[0].mxu0 %v256
      %v4870 = vpop.f32.mrb[0].mxu0
      %v4871 = vadd.f32 %v4794, %v4870
      %v4872 = vpop.f32.mrb[0].mxu0
      %v4873 = vadd.f32 %v4794, %v4872
      %4874 = vdwg.mxu0
      %4875 = vmatprep.subr.mxu0 %v4650
      %4876 = vmatpush1.msra.mxu0 %v4649
      %4877 = vmatprep.subr.mxu0 %v4654
      %4878 = vmatpush1.msra.mxu0 %v4653
      %4879 = vmatprep.subr.mxu0 %v4658
      %4880 = vmatpush1.msra.mxu0 %v4657
      %4881 = vmatprep.subr.mxu0 %v4662
      %4882 = vmatpush1.msra.mxu0 %v4661
      %4883 = vmatprep.subr.mxu0 %v4666
      %4884 = vmatpush1.msra.mxu0 %v4665
      %4885 = vmatprep.subr.mxu0 %v4670
      %4886 = vmatpush1.msra.mxu0 %v4669
      %4887 = vmatprep.subr.mxu0 %v4674
      %4888 = vmatpush1.msra.mxu0 %v4673
      %4889 = vmatprep.subr.mxu0 %v4678
      %4890 = vmatpush1.msra.mxu0 %v4677
      %4891 = vmatprep.subr.mxu0 %v4682
      %4892 = vmatpush1.msra.mxu0 %v4681
      %4893 = vmatprep.subr.mxu0 %v4686
      %4894 = vmatpush1.msra.mxu0 %v4685
      %4895 = vmatprep.subr.mxu0 %v4690
      %4896 = vmatpush1.msra.mxu0 %v4689
      %4897 = vmatprep.subr.mxu0 %v4694
      %4898 = vmatpush1.msra.mxu0 %v4693
      %4899 = vmatprep.subr.mxu0 %v4698
      %4900 = vmatpush1.msra.mxu0 %v4697
      %4901 = vmatprep.subr.mxu0 %v4702
      %4902 = vmatpush1.msra.mxu0 %v4701
      %4903 = vmatprep.subr.mxu0 %v4706
      %4904 = vmatpush1.msra.mxu0 %v4705
      %4905 = vmatprep.subr.mxu0 %v4710
      %4906 = vmatpush1.msra.mxu0 %v4709
      %4907 = vmatprep.subr.mxu0 %v4786
      %4908 = vmatpush1.msra.mxu0 %v4785
      %4909 = vmatprep.subr.mxu0 0.0
      %4910 = vmatpush1.msra.mxu0 0.0
      %4911 = vmatprep.subr.mxu0 0.0
      %4912 = vmatpush1.msra.mxu0 0.0
      %4913 = vmatprep.subr.mxu0 0.0
      %4914 = vmatpush1.msra.mxu0 0.0
      %4915 = vmatprep.subr.mxu0 0.0
      %4916 = vmatpush1.msra.mxu0 0.0
      %4917 = vmatprep.subr.mxu0 0.0
      %4918 = vmatpush1.msra.mxu0 0.0
      %4919 = vmatprep.subr.mxu0 0.0
      %4920 = vmatpush1.msra.mxu0 0.0
      %4921 = vmatprep.subr.mxu0 0.0
      %4922 = vmatpush1.msra.mxu0 0.0
      %4923 = vmatprep.subr.mxu0 0.0
      %4924 = vmatpush1.msra.mxu0 0.0
      %4925 = vmatprep.subr.mxu0 0.0
      %4926 = vmatpush1.msra.mxu0 0.0
      %4927 = vmatprep.subr.mxu0 0.0
      %4928 = vmatpush1.msra.mxu0 0.0
      %4929 = vmatprep.subr.mxu0 0.0
      %4930 = vmatpush1.msra.mxu0 0.0
      %4931 = vmatprep.subr.mxu0 0.0
      %4932 = vmatpush1.msra.mxu0 0.0
      %4933 = vmatprep.subr.mxu0 0.0
      %4934 = vmatpush1.msra.mxu0 0.0
      %4935 = vmatprep.subr.mxu0 0.0
      %4936 = vmatpush1.msra.mxu0 0.0
      %4937 = vmatprep.subr.mxu0 0.0
      %4938 = vmatpush1.msra.mxu0 0.0
      %4939 = vmatprep.mubr.f32.mxu0 %v4802
      %4940 = vmatmul.mubr.f32.gmra.mrb[0].mxu0 %v257
      %v4941 = vpop.f32.mrb[0].mxu0
      %v4942 = vadd.f32 %v4871, %v4941
      %v4943 = vpop.f32.mrb[0].mxu0
      %v4944 = vadd.f32 %v4873, %v4943
      %4945 = vdwg.mxu0
      %4946 = vmatprep.subr.mxu0 %v3830
      %4947 = vmatpush1.msra.mxu0 %v3829
      %4948 = vmatprep.subr.mxu0 %v3843
      %4949 = vmatpush1.msra.mxu0 %v3846
      %4950 = vmatprep.subr.mxu0 %v3858
      %4951 = vmatpush1.msra.mxu0 %v3861
      %4952 = vmatprep.subr.mxu0 %v3873
      %4953 = vmatpush1.msra.mxu0 %v3876
      %4954 = vmatprep.subr.mxu0 %v3888
      %4955 = vmatpush1.msra.mxu0 %v3891
      %4956 = vmatprep.subr.mxu0 %v3903
      %4957 = vmatpush1.msra.mxu0 %v3906
      %4958 = vmatprep.subr.mxu0 %v3918
      %4959 = vmatpush1.msra.mxu0 %v3921
      %4960 = vmatprep.subr.mxu0 %v3933
      %4961 = vmatpush1.msra.mxu0 %v3936
      %4962 = vmatprep.subr.mxu0 %v3948
      %4963 = vmatpush1.msra.mxu0 %v3951
      %4964 = vmatprep.subr.mxu0 %v3963
      %4965 = vmatpush1.msra.mxu0 %v3966
      %4966 = vmatprep.subr.mxu0 %v3978
      %4967 = vmatpush1.msra.mxu0 %v3981
      %4968 = vmatprep.subr.mxu0 %v3993
      %4969 = vmatpush1.msra.mxu0 %v3996
      %4970 = vmatprep.subr.mxu0 %v4008
      %4971 = vmatpush1.msra.mxu0 %v4011
      %4972 = vmatprep.subr.mxu0 %v4023
      %4973 = vmatpush1.msra.mxu0 %v4026
      %4974 = vmatprep.subr.mxu0 %v4045
      %4975 = vmatpush1.msra.mxu0 %v4044
      %4976 = vmatprep.subr.mxu0 %v4063
      %4977 = vmatpush1.msra.mxu0 %v4062
      %4978 = vmatprep.subr.mxu0 %v4364
      %4979 = vmatpush1.msra.mxu0 %v4363
      %4980 = vmatprep.subr.mxu0 %v4368
      %4981 = vmatpush1.msra.mxu0 %v4367
      %4982 = vmatprep.subr.mxu0 %v4372
      %4983 = vmatpush1.msra.mxu0 %v4371
      %4984 = vmatprep.subr.mxu0 %v4376
      %4985 = vmatpush1.msra.mxu0 %v4375
      %4986 = vmatprep.subr.mxu0 %v4380
      %4987 = vmatpush1.msra.mxu0 %v4379
      %4988 = vmatprep.subr.mxu0 %v4384
      %4989 = vmatpush1.msra.mxu0 %v4383
      %4990 = vmatprep.subr.mxu0 %v4388
      %4991 = vmatpush1.msra.mxu0 %v4387
      %4992 = vmatprep.subr.mxu0 %v4392
      %4993 = vmatpush1.msra.mxu0 %v4391
      %4994 = vmatprep.subr.mxu0 %v4396
      %4995 = vmatpush1.msra.mxu0 %v4395
      %4996 = vmatprep.subr.mxu0 %v4400
      %4997 = vmatpush1.msra.mxu0 %v4399
      %4998 = vmatprep.subr.mxu0 %v4404
      %4999 = vmatpush1.msra.mxu0 %v4403
      %5000 = vmatprep.subr.mxu0 %v4408
      %5001 = vmatpush1.msra.mxu0 %v4407
      %5002 = vmatprep.subr.mxu0 %v4412
      %5003 = vmatpush1.msra.mxu0 %v4411
      %5004 = vmatprep.subr.mxu0 %v4416
      %5005 = vmatpush1.msra.mxu0 %v4415
      %5006 = vmatprep.subr.mxu0 %v4420
      %5007 = vmatpush1.msra.mxu0 %v4419
      %5008 = vmatprep.subr.mxu0 %v4424
      %5009 = vmatpush1.msra.mxu0 %v4423
      %5010 = vmatprep.mubr.f32.mxu0 %v4798
      %5011 = vmatmul.mubr.f32.gmra.mrb[0].mxu0 %v256
      %v5012 = vpop.f32.mrb[0].mxu0
      %v5013 = vadd.f32 %v4794, %v5012
      %v5014 = vpop.f32.mrb[0].mxu0
      %v5015 = vadd.f32 %v4794, %v5014
      %5016 = vdwg.mxu0
      %5017 = vmatprep.subr.mxu0 %v4652
      %5018 = vmatpush1.msra.mxu0 %v4651
      %5019 = vmatprep.subr.mxu0 %v4656
      %5020 = vmatpush1.msra.mxu0 %v4655
      %5021 = vmatprep.subr.mxu0 %v4660
      %5022 = vmatpush1.msra.mxu0 %v4659
      %5023 = vmatprep.subr.mxu0 %v4664
      %5024 = vmatpush1.msra.mxu0 %v4663
      %5025 = vmatprep.subr.mxu0 %v4668
      %5026 = vmatpush1.msra.mxu0 %v4667
      %5027 = vmatprep.subr.mxu0 %v4672
      %5028 = vmatpush1.msra.mxu0 %v4671
      %5029 = vmatprep.subr.mxu0 %v4676
      %5030 = vmatpush1.msra.mxu0 %v4675
      %5031 = vmatprep.subr.mxu0 %v4680
      %5032 = vmatpush1.msra.mxu0 %v4679
      %5033 = vmatprep.subr.mxu0 %v4684
      %5034 = vmatpush1.msra.mxu0 %v4683
      %5035 = vmatprep.subr.mxu0 %v4688
      %5036 = vmatpush1.msra.mxu0 %v4687
      %5037 = vmatprep.subr.mxu0 %v4692
      %5038 = vmatpush1.msra.mxu0 %v4691
      %5039 = vmatprep.subr.mxu0 %v4696
      %5040 = vmatpush1.msra.mxu0 %v4695
      %5041 = vmatprep.subr.mxu0 %v4700
      %5042 = vmatpush1.msra.mxu0 %v4699
      %5043 = vmatprep.subr.mxu0 %v4704
      %5044 = vmatpush1.msra.mxu0 %v4703
      %5045 = vmatprep.subr.mxu0 %v4708
      %5046 = vmatpush1.msra.mxu0 %v4707
      %5047 = vmatprep.subr.mxu0 %v4712
      %5048 = vmatpush1.msra.mxu0 %v4711
      %5049 = vmatprep.subr.mxu0 %v4784
      %5050 = vmatpush1.msra.mxu0 %v4787
      %5051 = vmatprep.subr.mxu0 0.0
      %5052 = vmatpush1.msra.mxu0 0.0
      %5053 = vmatprep.subr.mxu0 0.0
      %5054 = vmatpush1.msra.mxu0 0.0
      %5055 = vmatprep.subr.mxu0 0.0
      %5056 = vmatpush1.msra.mxu0 0.0
      %5057 = vmatprep.subr.mxu0 0.0
      %5058 = vmatpush1.msra.mxu0 0.0
      %5059 = vmatprep.subr.mxu0 0.0
      %5060 = vmatpush1.msra.mxu0 0.0
      %5061 = vmatprep.subr.mxu0 0.0
      %5062 = vmatpush1.msra.mxu0 0.0
      %5063 = vmatprep.subr.mxu0 0.0
      %5064 = vmatpush1.msra.mxu0 0.0
      %5065 = vmatprep.subr.mxu0 0.0
      %5066 = vmatpush1.msra.mxu0 0.0
      %5067 = vmatprep.subr.mxu0 0.0
      %5068 = vmatpush1.msra.mxu0 0.0
      %5069 = vmatprep.subr.mxu0 0.0
      %5070 = vmatpush1.msra.mxu0 0.0
      %5071 = vmatprep.subr.mxu0 0.0
      %5072 = vmatpush1.msra.mxu0 0.0
      %5073 = vmatprep.subr.mxu0 0.0
      %5074 = vmatpush1.msra.mxu0 0.0
      %5075 = vmatprep.subr.mxu0 0.0
      %5076 = vmatpush1.msra.mxu0 0.0
      %5077 = vmatprep.subr.mxu0 0.0
      %5078 = vmatpush1.msra.mxu0 0.0
      %5079 = vmatprep.subr.mxu0 0.0
      %5080 = vmatpush1.msra.mxu0 0.0
      %5081 = vmatprep.mubr.f32.mxu0 %v4802
      %5082 = vmatmul.mubr.f32.gmra.mrb[0].mxu0 %v257
      %v5083 = vpop.f32.mrb[0].mxu0
      %v5084 = vadd.f32 %v5013, %v5083
      %v5085 = vpop.f32.mrb[0].mxu0
      %v5086 = vadd.f32 %v5015, %v5085
      %5087 = vdwg.mxu0
      %5089 = vrot.lane.b32.xlu0 %v4942, 59
      %v5090 = vpop.permute.xlu0 %5089
      %5092 = vrot.lane.b32.xlu0 %v4942, 53
      %v5093 = vpop.permute.xlu0 %5092
      %5096 = vrot.lane.b32.xlu0 %v4942, 47
      %v5097 = vpop.permute.xlu0 %5096
      %5098 = vrot.lane.b32.xlu0 %v4944, 47
      %v5099 = vpop.permute.xlu0 %5098
      %v5100 = vsel %vm1920, %v5097, %v5099
      %5102 = vrot.lane.b32.xlu0 %v4944, 41
      %v5103 = vpop.permute.xlu0 %5102
      %5105 = vrot.lane.b32.xlu0 %v4944, 35
      %v5106 = vpop.permute.xlu0 %5105
      %5108 = vrot.lane.b32.xlu0 %v4944, 29
      %v5109 = vpop.permute.xlu0 %5108
      %5111 = vrot.lane.b32.xlu0 %v4944, 23
      %v5112 = vpop.permute.xlu0 %5111
      %5114 = vrot.lane.b32.xlu0 %v4944, 17
      %v5115 = vpop.permute.xlu0 %5114
      %5118 = vrot.lane.b32.xlu0 %v4944, 11
      %v5119 = vpop.permute.xlu0 %5118
      %5120 = vrot.lane.b32.xlu0 %v5084, 11
      %v5121 = vpop.permute.xlu0 %5120
      %v5122 = vsel %vm1943, %v5119, %v5121
      %5124 = vrot.lane.b32.xlu0 %v5084, 5
      %v5125 = vpop.permute.xlu0 %5124
      %5127 = vrot.lane.b32.xlu0 %v5084, 127
      %v5128 = vpop.permute.xlu0 %5127
      %5130 = vrot.lane.b32.xlu0 %v5084, 121
      %v5131 = vpop.permute.xlu0 %5130
      %5133 = vrot.lane.b32.xlu0 %v5084, 115
      %v5134 = vpop.permute.xlu0 %5133
      %5136 = vrot.lane.b32.xlu0 %v5084, 109
      %v5137 = vpop.permute.xlu0 %5136
      %5140 = vrot.lane.b32.xlu0 %v5084, 103
      %v5141 = vpop.permute.xlu0 %5140
      %5142 = vrot.lane.b32.xlu0 %v5086, 103
      %v5143 = vpop.permute.xlu0 %5142
      %v5144 = vsel %vm1023, %v5141, %v5143
      %5146 = vrot.lane.b32.xlu0 %v5086, 97
      %v5147 = vpop.permute.xlu0 %5146
      %v5149 = vsel %vm1971, %v5090, %v5093
      %v5150 = vsel %vm1973, %v5149, %v5100
      %v5151 = vsel %vm1975, %v5150, %v5103
      %v5152 = vsel %vm1977, %v5151, %v5106
      %v5153 = vsel %vm1979, %v5152, %v5109
      %v5154 = vsel %vm1981, %v5153, %v5112
      %v5155 = vsel %vm1983, %v5154, %v5115
      %v5156 = vsel %vm1971, %v5122, %v5125
      %v5157 = vsel %vm1973, %v5156, %v5128
      %v5158 = vsel %vm1975, %v5157, %v5131
      %v5159 = vsel %vm1977, %v5158, %v5134
      %v5160 = vsel %vm1979, %v5159, %v5137
      %v5161 = vsel %vm1981, %v5160, %v5144
      %v5162 = vsel %vm1983, %v5161, %v5147
      %v5165 = vcombine.low %v5155, %v5162
      %5167 = vst [vmem:[%s251] sm:$0x77] %v5165
      %p5168 = scmp.lt.s32.totalorder %s17, 1
      %s5169 = scalar_select %p5168, %s17, 1
      %s5170 = smul.addr %s5169, 2
      %s5171 = smul.addr %s5170, 4
      %s5172 = scalar_lea.vmem %s6, %s5171
      // Predicated region
      $region45: #{transformer_net_forward.1} parent=43 // pred_check
        %p5173 = pneg %p166
      $region46: #{transformer_net_forward.1} parent=43 // pred_check_branch
        %5175 = sbr.rel (%p5173) target = $region48
      $region47: #{transformer_net_forward.1} parent=43 // pred_region
        _
      $region48: #{transformer_net_forward.1} parent=43 // pred_fallthru
        _
    $region44: #{transformer_net_forward.1} parent=5 // pred_fallthru
      _
    %p5176 = scmp.le.s32.totalorder 2, %s12
    // Predicated region
    $region49: #{transformer_net_forward.1} parent=5 // pred_check
      %p5177 = pneg %p5176
    $region50: #{transformer_net_forward.1} parent=5 // pred_check_branch
      %5179 = sbr.rel (%p5177) target = $region52
    $region51: #{transformer_net_forward.1} parent=5 // pred_region
      %s5180 = ssub.s32 %s12, 2
      // Predicated region
      $region53: #{transformer_net_forward.1} parent=51 // pred_check
        %p5181 = pneg %p172
      $region54: #{transformer_net_forward.1} parent=51 // pred_check_branch
        %5183 = sbr.rel (%p5181) target = $region56
      $region55: #{transformer_net_forward.1} parent=51 // pred_region
        %p5184 = scmp.lt.s32.totalorder %s18, 1
        %s5185 = scalar_select %p5184, %s18, 1
        %s5186 = smul.addr %s5185, 2
        %s5187 = smul.addr %s5186, 4
        %s5188 = scalar_lea.vmem %s6, %s5187
      $region56: #{transformer_net_forward.1} parent=51 // pred_fallthru
        _
    $region52: #{transformer_net_forward.1} parent=5 // pred_fallthru
      _
  $region6: #{transformer_net_forward.1} parent=0 // loop_footer
    %s16 = sadd.s32 1, %s12
  $region7: #{transformer_net_forward.1} parent=0 // loop_footer_branch
    %11 = sbr.rel target = $region3
  $region8: #{transformer_net_forward.1} parent=0 // loop_exit
    _

</llo_original>
